<compile_context>
chip_gen: v6e
topology: v6e:2x2x1
jax: 0.10.0
libtpu: 0.0.40
codegen_flags: <defaults>
</compile_context>

<pallas_src>
import functools
import math

import jax
import jax.numpy as jnp
from jax.experimental import pallas as pl
from jax.experimental.pallas import tpu as pltpu

NEG_BIG = -1e30  # finite "-inf" sentinel: avoids (-inf) - (-inf) = NaN in online softmax


def _gat_heads_kernel(prelu_ref, mask_ref, h_dst_ref, h_src_ref, h_srcT_ref,
                      wz_ref, wad_ref, wasT_ref, out_ref,
                      m_sc, l_sc, acc_sc, *,
                      num_heads, head_dim, neg_slope, apply_prelu):
    k = pl.program_id(1)
    nk = pl.num_programs(1)

    # ---- init running max / denom / accumulator on the first src tile ----
    @pl.when(k == 0)
    def _():
        m_sc[...] = jnp.full_like(m_sc, NEG_BIG)
        l_sc[...] = jnp.zeros_like(l_sc)
        acc_sc[...] = jnp.zeros_like(acc_sc)

    # ---- packed adjacency/edge-mask tile: value >= 0 <=> edge exists, value = train*fixed ----
    mask = mask_ref[...].astype(jnp.float32)            # [TM, TK]
    edge = mask >= 0.0
    ew = jnp.maximum(mask, 0.0)

    # ---- per-source-tile projections (bf16 MXU inputs, f32 accumulation) ----
    z_src = jnp.dot(h_src_ref[...], wz_ref[...],
                    preferred_element_type=jnp.float32)          # [TK, H*D] f32
    z_src_b = z_src.astype(jnp.bfloat16)
    # attention partial scores (attention vectors pre-folded into fc weights):
    e_src = jnp.dot(wasT_ref[...], h_srcT_ref[...],
                    preferred_element_type=jnp.float32)          # [H, TK]  row layout
    e_dst = jnp.dot(h_dst_ref[...], wad_ref[...],
                    preferred_element_type=jnp.float32)          # [TM, H]  column layout

    # ---- online softmax + aggregation, per head (static unroll) ----
    for hh in range(num_heads):
        e = e_dst[:, hh:hh + 1] + e_src[hh:hh + 1, :]            # [TM, TK]
        e = jnp.where(e > 0, e, neg_slope * e)                   # F.leaky_relu
        e = e * ew                                               # * train_mask * fixed_mask
        logits = jnp.where(edge, e, NEG_BIG)

        m_prev = m_sc[:, hh:hh + 1]                              # [TM, 1]
        m_new = jnp.maximum(m_prev, jnp.max(logits, axis=-1, keepdims=True))
        m_safe = jnp.where(m_new > 0.5 * NEG_BIG, m_new, 0.0)    # guard rows with no edge yet
        p = jnp.where(edge, jnp.exp(e - m_safe), 0.0)            # [TM, TK] f32
        c = jnp.exp(m_prev - m_new)                              # correction (==1 only when l,acc == 0)

        m_sc[:, hh:hh + 1] = m_new
        l_sc[:, hh:hh + 1] = c * l_sc[:, hh:hh + 1] + jnp.sum(p, axis=-1, keepdims=True)

        sl = slice(hh * head_dim, (hh + 1) * head_dim)
        acc_sc[:, sl] = c * acc_sc[:, sl] + jnp.dot(
            p.astype(jnp.bfloat16), z_src_b[:, sl],
            preferred_element_type=jnp.float32)                  # [TM, D]

    # ---- finalize: normalize, PReLU, single lane-dense (H*D-wide) store ----
    @pl.when(k == nk - 1)
    def _():
        outs = []
        for hh in range(num_heads):
            sl = slice(hh * head_dim, (hh + 1) * head_dim)
            l_h = l_sc[:, hh:hh + 1]
            inv = pl.reciprocal(jnp.maximum(l_h, 1e-30), approx=True)
            inv = jnp.where(l_h > 0.0, inv, 0.0)                 # degree-0 node -> 0 (matches ref)
            o_h = acc_sc[:, sl] * inv
            if apply_prelu:
                o_h = jnp.where(o_h > 0, o_h, prelu_ref[hh] * o_h)
            outs.append(o_h)
        out_ref[...] = jnp.concatenate(outs, axis=1).astype(out_ref.dtype)


def gat_heads_forward(h, W, a_src, a_dst, adj, edge_mask, prelu, *,
                      heads, tile_m=128, tile_k=128):
    """Fused multi-head GATHeadLayer forward over a dense adjacency.

    h:         [N, in_dim]            node features (f32)
    W:         [H, in_dim, out_dim]   per-head fc weight (already transposed: z = h @ W_h)
    a_src/dst: [H, out_dim]           per-head attn_fc weight split (src half / dst half)
    adj:       [N, N]                 adj[i, j] = 1 iff edge j -> i
    edge_mask: [N, N]                 train_mask * fixed_mask per edge
    prelu:     [H]                    per-head PReLU slope
    returns:   [N, H*out_dim] f32     (head h -> columns h*out_dim:(h+1)*out_dim)
    """
    N, in_dim = h.shape
    H, _, D = W.shape
    assert H == heads
    HD = H * D

    # pad node count to the tile grid; padded nodes are isolated (mask = -1)
    L = math.lcm(tile_m, tile_k)
    Np = ((N + L - 1) // L) * L
    pad = Np - N

    # pack adjacency + edge mask into one bf16 array (edge exists <=> value >= 0)
    mask = jnp.where(adj > 0, edge_mask, -1.0)
    mask = jnp.pad(mask, ((0, pad), (0, pad)), constant_values=-1.0).astype(jnp.bfloat16)

    hb = jnp.pad(h, ((0, pad), (0, 0))).astype(jnp.bfloat16)     # [Np, in_dim]
    hTb = hb.T                                                   # [in_dim, Np]

    # fold attention vectors into the fc weights:  e_src = h @ (W a_src), e_dst = h @ (W a_dst)
    w_z = jnp.transpose(W, (1, 0, 2)).reshape(in_dim, HD).astype(jnp.bfloat16)   # [in_dim, H*D]
    w_asT = jnp.einsum('hcd,hd->hc', W, a_src).astype(jnp.bfloat16)              # [H, in_dim]
    w_ad = jnp.einsum('hcd,hd->ch', W, a_dst).astype(jnp.bfloat16)               # [in_dim, H]
    prelu = prelu.astype(jnp.float32)

    kernel = functools.partial(
        _gat_heads_kernel, num_heads=H, head_dim=D,
        neg_slope=0.01, apply_prelu=(heads != 1))

    out = pl.pallas_call(
        kernel,
        out_shape=jax.ShapeDtypeStruct((Np, HD), jnp.float32),
        grid=(Np // tile_m, Np // tile_k),
        in_specs=[
            pl.BlockSpec(memory_space=pltpu.MemorySpace.SMEM),        # prelu slopes [H]
            pl.BlockSpec((tile_m, tile_k), lambda i, k: (i, k)),      # packed mask tile
            pl.BlockSpec((tile_m, in_dim), lambda i, k: (i, 0)),      # h (dst rows)
            pl.BlockSpec((tile_k, in_dim), lambda i, k: (k, 0)),      # h (src rows)
            pl.BlockSpec((in_dim, tile_k), lambda i, k: (0, k)),      # h.T (src cols, row-layout e_src)
            pl.BlockSpec((in_dim, HD), lambda i, k: (0, 0)),          # w_z
            pl.BlockSpec((in_dim, H), lambda i, k: (0, 0)),           # w_ad (folded)
            pl.BlockSpec((H, in_dim), lambda i, k: (0, 0)),           # w_asT (folded)
        ],
        out_specs=pl.BlockSpec((tile_m, HD), lambda i, k: (i, 0)),
        scratch_shapes=[
            pltpu.VMEM((tile_m, H), jnp.float32),    # running max per head
            pltpu.VMEM((tile_m, H), jnp.float32),    # running denom per head
            pltpu.VMEM((tile_m, HD), jnp.float32),   # running weighted sum
        ],
        compiler_params=pltpu.CompilerParams(
            dimension_semantics=("parallel", "arbitrary"),
            vmem_limit_bytes=32 * 1024 * 1024),
    )(prelu, mask, hb, hb, hTb, w_z, w_ad, w_asT)
    return out[:N]


def gat_head_reference(h, W, a_src, a_dst, adj, edge_mask, prelu_a, *, apply_prelu):
    """Pure-JAX f32 reference for a single GATHeadLayer forward on a dense graph."""
    z = h @ W                                            # [N, D]
    e_src = z @ a_src                                    # [N]
    e_dst = z @ a_dst                                    # [N]
    e = e_dst[:, None] + e_src[None, :]                  # e[i, j] for edge j -> i
    e = jnp.where(e > 0, e, 0.01 * e)                    # F.leaky_relu
    e = e * edge_mask                                    # * train_mask * fixed_mask
    logits = jnp.where(adj > 0, e, -jnp.inf)
    m = jnp.max(logits, axis=-1, keepdims=True)
    m = jnp.where(jnp.isfinite(m), m, 0.0)
    p = jnp.where(adj > 0, jnp.exp(logits - m), 0.0)
    denom = jnp.sum(p, axis=-1, keepdims=True)
    alpha = jnp.where(denom > 0, p / jnp.maximum(denom, 1e-30), 0.0)
    h_out = alpha @ z
    if apply_prelu:
        h_out = jnp.where(h_out > 0, h_out, prelu_a * h_out)
    return h_out


if __name__ == "__main__":
    N, in_dim, out_dim, heads = 256, 16, 32, 8

    key = jax.random.PRNGKey(0)
    k_h, k_w, k_a, k_adj, k_tm, k_fm = jax.random.split(key, 6)

    # node features
    h = jax.random.normal(k_h, (N, in_dim), dtype=jnp.float32)

    # per-head fc: nn.Linear(in_dim, out_dim, bias=False) -> weight [out_dim, in_dim]
    fc_w = jax.random.normal(k_w, (heads, out_dim, in_dim), dtype=jnp.float32) * 0.1
    W = jnp.transpose(fc_w, (0, 2, 1))                   # [H, in_dim, out_dim]

    # per-head attn_fc: nn.Linear(2*out_dim, 1, bias=False) -> weight [1, 2*out_dim]
    attn_w = jax.random.normal(k_a, (heads, 2 * out_dim), dtype=jnp.float32) * 0.1
    a_src = attn_w[:, :out_dim]                          # multiplies edges.src['z']
    a_dst = attn_w[:, out_dim:]                          # multiplies edges.dst['z']

    # dense adjacency: adj[i, j] = 1 iff edge j -> i; self-loops guarantee in-degree >= 1
    rand_adj = (jax.random.uniform(k_adj, (N, N)) < 0.05).astype(jnp.float32)
    adj = jnp.maximum(rand_adj, jnp.eye(N, dtype=jnp.float32))

    # per-edge 0/1 masks, combined as in forward: e * train_mask * fixed_mask
    train_mask = (jax.random.uniform(k_tm, (N, N)) < 0.8).astype(jnp.float32)
    fixed_mask = (jax.random.uniform(k_fm, (N, N)) < 0.9).astype(jnp.float32)
    edge_mask = train_mask * fixed_mask

    # nn.PReLU() default init 0.25, one parameter per head layer
    prelu = jnp.full((heads,), 0.25, dtype=jnp.float32)

    out = gat_heads_forward(h, W, a_src, a_dst, adj, edge_mask, prelu, heads=heads)
    out = jax.block_until_ready(out)
    assert out.shape == (N, heads * out_dim)

    # reference at the same operand precision the kernel uses (bf16-rounded weights/features)
    r = lambda x: x.astype(jnp.bfloat16).astype(jnp.float32)
    ref = jnp.concatenate([
        gat_head_reference(r(h), r(W[hh]), r(a_src[hh]), r(a_dst[hh]),
                           adj, edge_mask, prelu[hh], apply_prelu=(heads != 1))
        for hh in range(heads)], axis=1)

    max_err = float(jnp.max(jnp.abs(out - ref)))
    assert jnp.allclose(out, ref, atol=3e-2, rtol=3e-2), \
        f"mismatch vs reference (max abs err {max_err})"
    print("KERNEL_OK")
</pallas_src>

<mosaic_0001>
module attributes {stable_mosaic.version = 11 : i64} {
  func.func @_gat_heads_kernel(%arg0: i32, %arg1: i32, %arg2: memref<8xf32, #tpu.memory_space<smem>>, %arg3: memref<128x128xbf16, #tpu.memory_space<vmem>>, %arg4: memref<128x16xbf16, #tpu.memory_space<vmem>>, %arg5: memref<128x16xbf16, #tpu.memory_space<vmem>>, %arg6: memref<16x128xbf16, #tpu.memory_space<vmem>>, %arg7: memref<16x256xbf16, #tpu.memory_space<vmem>>, %arg8: memref<16x8xbf16, #tpu.memory_space<vmem>>, %arg9: memref<8x16xbf16, #tpu.memory_space<vmem>>, %arg10: memref<128x256xf32, #tpu.memory_space<vmem>>, %arg11: memref<128x8xf32, #tpu.memory_space<vmem>>, %arg12: memref<128x8xf32, #tpu.memory_space<vmem>>, %arg13: memref<128x256xf32, #tpu.memory_space<vmem>>) attributes {dimension_semantics = [#tpu.dimension_semantics<parallel>, #tpu.dimension_semantics<arbitrary>], iteration_bounds = array<i64: 2, 2>, scalar_prefetch = 0 : i64, scratch_operands = 3 : i64, tpu.core_type = #tpu.core_type<tc>, window_params = [{transform_indices = @transform_0, window_bounds = array<i64: 8>}, {transform_indices = @transform_1, window_bounds = array<i64: 128, 128>}, {transform_indices = @transform_2, window_bounds = array<i64: 128, 16>}, {transform_indices = @transform_3, window_bounds = array<i64: 128, 16>}, {transform_indices = @transform_4, window_bounds = array<i64: 16, 128>}, {pipeline_mode = #tpu.pipeline_mode<synchronous>, transform_indices = @transform_5, window_bounds = array<i64: 16, 256>}, {pipeline_mode = #tpu.pipeline_mode<synchronous>, transform_indices = @transform_6, window_bounds = array<i64: 16, 8>}, {pipeline_mode = #tpu.pipeline_mode<synchronous>, transform_indices = @transform_7, window_bounds = array<i64: 8, 16>}, {transform_indices = @transform_8, window_bounds = array<i64: 128, 256>}]} {
    %c0_i32 = arith.constant 0 : i32
    %0 = arith.cmpi eq, %arg1, %c0_i32 : i32
    %1 = arith.extui %0 : i1 to i32
    %c0_i32_0 = arith.constant 0 : i32
    %2 = arith.cmpi ne, %1, %c0_i32_0 : i32
    scf.if %2 {
      %cst_173 = arith.constant -1.000000e+30 : f32
      %366 = vector.broadcast %cst_173 : f32 to vector<128x8xf32>
      %c0_174 = arith.constant 0 : index
      %c0_175 = arith.constant 0 : index
      %367 = vector.load %arg11[%c0_174, %c0_175] : memref<128x8xf32, #tpu.memory_space<vmem>>, vector<128x8xf32>
      tpu.vector_store %arg11[%c0_174, %c0_175], %366 {strides = array<i32>} : memref<128x8xf32, #tpu.memory_space<vmem>>, vector<128x8xf32>,
      %cst_176 = arith.constant 0.000000e+00 : f32
      %368 = vector.broadcast %cst_176 : f32 to vector<128x8xf32>
      %c0_177 = arith.constant 0 : index
      %c0_178 = arith.constant 0 : index
      %369 = vector.load %arg12[%c0_177, %c0_178] : memref<128x8xf32, #tpu.memory_space<vmem>>, vector<128x8xf32>
      tpu.vector_store %arg12[%c0_177, %c0_178], %368 {strides = array<i32>} : memref<128x8xf32, #tpu.memory_space<vmem>>, vector<128x8xf32>,
      %cst_179 = arith.constant 0.000000e+00 : f32
      %370 = vector.broadcast %cst_179 : f32 to vector<128x256xf32>
      %c0_180 = arith.constant 0 : index
      %c0_181 = arith.constant 0 : index
      %371 = vector.load %arg13[%c0_180, %c0_181] : memref<128x256xf32, #tpu.memory_space<vmem>>, vector<128x256xf32>
      tpu.vector_store %arg13[%c0_180, %c0_181], %370 {strides = array<i32>} : memref<128x256xf32, #tpu.memory_space<vmem>>, vector<128x256xf32>,
    } else {
    }
    %c0 = arith.constant 0 : index
    %c0_1 = arith.constant 0 : index
    %3 = vector.load %arg3[%c0, %c0_1] : memref<128x128xbf16, #tpu.memory_space<vmem>>, vector<128x128xbf16>
    %4 = arith.extf %3 : vector<128x128xbf16> to vector<128x128xf32>
    %cst = arith.constant 0.000000e+00 : f32
    %5 = vector.broadcast %cst : f32 to vector<128x128xf32>
    %6 = arith.cmpf oge, %4, %5 : vector<128x128xf32>
    %cst_2 = arith.constant 0.000000e+00 : f32
    %7 = vector.broadcast %cst_2 : f32 to vector<128x128xf32>
    %8 = arith.maximumf %4, %7 : vector<128x128xf32>
    %c0_3 = arith.constant 0 : index
    %c0_4 = arith.constant 0 : index
    %9 = vector.load %arg5[%c0_3, %c0_4] : memref<128x16xbf16, #tpu.memory_space<vmem>>, vector<128x16xbf16>
    %c0_5 = arith.constant 0 : index
    %c0_6 = arith.constant 0 : index
    %10 = vector.load %arg7[%c0_5, %c0_6] : memref<16x256xbf16, #tpu.memory_space<vmem>>, vector<16x256xbf16>
    %cst_7 = arith.constant dense<0.000000e+00> : vector<128x256xf32>
    %11 = tpu.matmul %9, %10, %cst_7 {dimension_numbers = #tpu.dot_dimension_numbers<[1], [0], [0], [1], [0, 0, 1, 1], [], []>} : vector<128x16xbf16>, vector<16x256xbf16>, vector<128x256xf32> -> vector<128x256xf32>
    %12 = arith.truncf %11 : vector<128x256xf32> to vector<128x256xbf16>
    %c0_8 = arith.constant 0 : index
    %c0_9 = arith.constant 0 : index
    %13 = vector.load %arg9[%c0_8, %c0_9] : memref<8x16xbf16, #tpu.memory_space<vmem>>, vector<8x16xbf16>
    %c0_10 = arith.constant 0 : index
    %c0_11 = arith.constant 0 : index
    %14 = vector.load %arg6[%c0_10, %c0_11] : memref<16x128xbf16, #tpu.memory_space<vmem>>, vector<16x128xbf16>
    %cst_12 = arith.constant dense<0.000000e+00> : vector<8x128xf32>
    %15 = tpu.matmul %13, %14, %cst_12 {dimension_numbers = #tpu.dot_dimension_numbers<[1], [0], [0], [1], [0, 0, 1, 1], [], []>} : vector<8x16xbf16>, vector<16x128xbf16>, vector<8x128xf32> -> vector<8x128xf32>
    %c0_13 = arith.constant 0 : index
    %c0_14 = arith.constant 0 : index
    %16 = vector.load %arg4[%c0_13, %c0_14] : memref<128x16xbf16, #tpu.memory_space<vmem>>, vector<128x16xbf16>
    %c0_15 = arith.constant 0 : index
    %c0_16 = arith.constant 0 : index
    %17 = vector.load %arg8[%c0_15, %c0_16] : memref<16x8xbf16, #tpu.memory_space<vmem>>, vector<16x8xbf16>
    %cst_17 = arith.constant dense<0.000000e+00> : vector<128x8xf32>
    %18 = tpu.matmul %16, %17, %cst_17 {dimension_numbers = #tpu.dot_dimension_numbers<[1], [0], [0], [1], [0, 0, 1, 1], [], []>} : vector<128x16xbf16>, vector<16x8xbf16>, vector<128x8xf32> -> vector<128x8xf32>
    %19 = vector.extract_strided_slice %18 {offsets = [0, 0], sizes = [128, 1], strides = [1, 1]} : vector<128x8xf32> to vector<128x1xf32>
    %20 = vector.extract_strided_slice %15 {offsets = [0, 0], sizes = [1, 128], strides = [1, 1]} : vector<8x128xf32> to vector<1x128xf32>
    %21 = vector.broadcast %19 : vector<128x1xf32> to vector<128x128xf32>
    %22 = vector.broadcast %20 : vector<1x128xf32> to vector<128x128xf32>
    %23 = arith.addf %21, %22 : vector<128x128xf32>
    %cst_18 = arith.constant 0.000000e+00 : f32
    %24 = vector.broadcast %cst_18 : f32 to vector<128x128xf32>
    %25 = arith.cmpf ogt, %23, %24 : vector<128x128xf32>
    %cst_19 = arith.constant 0.00999999977 : f32
    %26 = vector.broadcast %cst_19 : f32 to vector<128x128xf32>
    %27 = arith.mulf %26, %23 : vector<128x128xf32>
    %28 = arith.select %25, %23, %27 : vector<128x128xi1>, vector<128x128xf32>
    %29 = arith.mulf %28, %8 : vector<128x128xf32>
    %cst_20 = arith.constant -1.000000e+30 : f32
    %30 = vector.broadcast %cst_20 : f32 to vector<128x128xf32>
    %31 = arith.select %6, %29, %30 : vector<128x128xi1>, vector<128x128xf32>
    %c0_21 = arith.constant 0 : index
    %c0_22 = arith.constant 0 : index
    %32 = vector.load %arg11[%c0_21, %c0_22] : memref<128x8xf32, #tpu.memory_space<vmem>>, vector<128x1xf32>
    %cst_23 = arith.constant dense<0xFF800000> : vector<128xf32>
    %33 = vector.multi_reduction <maximumf>, %31, %cst_23 [1] : vector<128x128xf32> to vector<128xf32>
    %34 = vector.shape_cast %33 : vector<128xf32> to vector<128x1xf32>
    %35 = arith.maximumf %32, %34 : vector<128x1xf32>
    %cst_24 = arith.constant -5.000000e+29 : f32
    %36 = vector.broadcast %cst_24 : f32 to vector<128x1xf32>
    %37 = arith.cmpf ogt, %35, %36 : vector<128x1xf32>
    %cst_25 = arith.constant 0.000000e+00 : f32
    %38 = vector.broadcast %cst_25 : f32 to vector<128x1xf32>
    %39 = arith.select %37, %35, %38 : vector<128x1xi1>, vector<128x1xf32>
    %40 = vector.broadcast %39 : vector<128x1xf32> to vector<128x128xf32>
    %41 = arith.subf %29, %40 : vector<128x128xf32>
    %42 = math.exp %41 : vector<128x128xf32>
    %cst_26 = arith.constant 0.000000e+00 : f32
    %43 = vector.broadcast %cst_26 : f32 to vector<128x128xf32>
    %44 = arith.select %6, %42, %43 : vector<128x128xi1>, vector<128x128xf32>
    %45 = arith.subf %32, %35 : vector<128x1xf32>
    %46 = math.exp %45 : vector<128x1xf32>
    %c0_27 = arith.constant 0 : index
    %c0_28 = arith.constant 0 : index
    %47 = vector.load %arg11[%c0_27, %c0_28] : memref<128x8xf32, #tpu.memory_space<vmem>>, vector<128x1xf32>
    tpu.vector_store %arg11[%c0_27, %c0_28], %35 {strides = array<i32>} : memref<128x8xf32, #tpu.memory_space<vmem>>, vector<128x1xf32>,
    %c0_29 = arith.constant 0 : index
    %c0_30 = arith.constant 0 : index
    %48 = vector.load %arg12[%c0_29, %c0_30] : memref<128x8xf32, #tpu.memory_space<vmem>>, vector<128x1xf32>
    %49 = arith.mulf %46, %48 : vector<128x1xf32>
    %cst_31 = arith.constant dense<0.000000e+00> : vector<128xf32>
    %50 = vector.multi_reduction <add>, %44, %cst_31 [1] : vector<128x128xf32> to vector<128xf32>
    %51 = vector.shape_cast %50 : vector<128xf32> to vector<128x1xf32>
    %52 = arith.addf %49, %51 : vector<128x1xf32>
    %c0_32 = arith.constant 0 : index
    %c0_33 = arith.constant 0 : index
    %53 = vector.load %arg12[%c0_32, %c0_33] : memref<128x8xf32, #tpu.memory_space<vmem>>, vector<128x1xf32>
    tpu.vector_store %arg12[%c0_32, %c0_33], %52 {strides = array<i32>} : memref<128x8xf32, #tpu.memory_space<vmem>>, vector<128x1xf32>,
    %c0_34 = arith.constant 0 : index
    %c0_35 = arith.constant 0 : index
    %54 = vector.load %arg13[%c0_34, %c0_35] : memref<128x256xf32, #tpu.memory_space<vmem>>, vector<128x32xf32>
    %55 = vector.broadcast %46 : vector<128x1xf32> to vector<128x32xf32>
    %56 = arith.mulf %55, %54 : vector<128x32xf32>
    %57 = arith.truncf %44 : vector<128x128xf32> to vector<128x128xbf16>
    %58 = vector.extract_strided_slice %12 {offsets = [0, 0], sizes = [128, 32], strides = [1, 1]} : vector<128x256xbf16> to vector<128x32xbf16>
    %cst_36 = arith.constant dense<0.000000e+00> : vector<128x32xf32>
    %59 = tpu.matmul %57, %58, %cst_36 {dimension_numbers = #tpu.dot_dimension_numbers<[1], [0], [0], [1], [0, 0, 1, 1], [], []>} : vector<128x128xbf16>, vector<128x32xbf16>, vector<128x32xf32> -> vector<128x32xf32>
    %60 = arith.addf %56, %59 : vector<128x32xf32>
    %c0_37 = arith.constant 0 : index
    %c0_38 = arith.constant 0 : index
    %61 = vector.load %arg13[%c0_37, %c0_38] : memref<128x256xf32, #tpu.memory_space<vmem>>, vector<128x32xf32>
    tpu.vector_store %arg13[%c0_37, %c0_38], %60 {strides = array<i32>} : memref<128x256xf32, #tpu.memory_space<vmem>>, vector<128x32xf32>,
    %62 = vector.extract_strided_slice %18 {offsets = [0, 1], sizes = [128, 1], strides = [1, 1]} : vector<128x8xf32> to vector<128x1xf32>
    %63 = vector.extract_strided_slice %15 {offsets = [1, 0], sizes = [1, 128], strides = [1, 1]} : vector<8x128xf32> to vector<1x128xf32>
    %64 = vector.broadcast %62 : vector<128x1xf32> to vector<128x128xf32>
    %65 = vector.broadcast %63 : vector<1x128xf32> to vector<128x128xf32>
    %66 = arith.addf %64, %65 : vector<128x128xf32>
    %cst_39 = arith.constant 0.000000e+00 : f32
    %67 = vector.broadcast %cst_39 : f32 to vector<128x128xf32>
    %68 = arith.cmpf ogt, %66, %67 : vector<128x128xf32>
    %cst_40 = arith.constant 0.00999999977 : f32
    %69 = vector.broadcast %cst_40 : f32 to vector<128x128xf32>
    %70 = arith.mulf %69, %66 : vector<128x128xf32>
    %71 = arith.select %68, %66, %70 : vector<128x128xi1>, vector<128x128xf32>
    %72 = arith.mulf %71, %8 : vector<128x128xf32>
    %cst_41 = arith.constant -1.000000e+30 : f32
    %73 = vector.broadcast %cst_41 : f32 to vector<128x128xf32>
    %74 = arith.select %6, %72, %73 : vector<128x128xi1>, vector<128x128xf32>
    %c0_42 = arith.constant 0 : index
    %c1 = arith.constant 1 : index
    %75 = vector.load %arg11[%c0_42, %c1] : memref<128x8xf32, #tpu.memory_space<vmem>>, vector<128x1xf32>
    %cst_43 = arith.constant dense<0xFF800000> : vector<128xf32>
    %76 = vector.multi_reduction <maximumf>, %74, %cst_43 [1] : vector<128x128xf32> to vector<128xf32>
    %77 = vector.shape_cast %76 : vector<128xf32> to vector<128x1xf32>
    %78 = arith.maximumf %75, %77 : vector<128x1xf32>
    %cst_44 = arith.constant -5.000000e+29 : f32
    %79 = vector.broadcast %cst_44 : f32 to vector<128x1xf32>
    %80 = arith.cmpf ogt, %78, %79 : vector<128x1xf32>
    %cst_45 = arith.constant 0.000000e+00 : f32
    %81 = vector.broadcast %cst_45 : f32 to vector<128x1xf32>
    %82 = arith.select %80, %78, %81 : vector<128x1xi1>, vector<128x1xf32>
    %83 = vector.broadcast %82 : vector<128x1xf32> to vector<128x128xf32>
    %84 = arith.subf %72, %83 : vector<128x128xf32>
    %85 = math.exp %84 : vector<128x128xf32>
    %cst_46 = arith.constant 0.000000e+00 : f32
    %86 = vector.broadcast %cst_46 : f32 to vector<128x128xf32>
    %87 = arith.select %6, %85, %86 : vector<128x128xi1>, vector<128x128xf32>
    %88 = arith.subf %75, %78 : vector<128x1xf32>
    %89 = math.exp %88 : vector<128x1xf32>
    %c0_47 = arith.constant 0 : index
    %c1_48 = arith.constant 1 : index
    %90 = vector.load %arg11[%c0_47, %c1_48] : memref<128x8xf32, #tpu.memory_space<vmem>>, vector<128x1xf32>
    tpu.vector_store %arg11[%c0_47, %c1_48], %78 {strides = array<i32>} : memref<128x8xf32, #tpu.memory_space<vmem>>, vector<128x1xf32>,
    %c0_49 = arith.constant 0 : index
    %c1_50 = arith.constant 1 : index
    %91 = vector.load %arg12[%c0_49, %c1_50] : memref<128x8xf32, #tpu.memory_space<vmem>>, vector<128x1xf32>
    %92 = arith.mulf %89, %91 : vector<128x1xf32>
    %cst_51 = arith.constant dense<0.000000e+00> : vector<128xf32>
    %93 = vector.multi_reduction <add>, %87, %cst_51 [1] : vector<128x128xf32> to vector<128xf32>
    %94 = vector.shape_cast %93 : vector<128xf32> to vector<128x1xf32>
    %95 = arith.addf %92, %94 : vector<128x1xf32>
    %c0_52 = arith.constant 0 : index
    %c1_53 = arith.constant 1 : index
    %96 = vector.load %arg12[%c0_52, %c1_53] : memref<128x8xf32, #tpu.memory_space<vmem>>, vector<128x1xf32>
    tpu.vector_store %arg12[%c0_52, %c1_53], %95 {strides = array<i32>} : memref<128x8xf32, #tpu.memory_space<vmem>>, vector<128x1xf32>,
    %c0_54 = arith.constant 0 : index
    %c32 = arith.constant 32 : index
    %97 = vector.load %arg13[%c0_54, %c32] : memref<128x256xf32, #tpu.memory_space<vmem>>, vector<128x32xf32>
    %98 = vector.broadcast %89 : vector<128x1xf32> to vector<128x32xf32>
    %99 = arith.mulf %98, %97 : vector<128x32xf32>
    %100 = arith.truncf %87 : vector<128x128xf32> to vector<128x128xbf16>
    %101 = vector.extract_strided_slice %12 {offsets = [0, 32], sizes = [128, 32], strides = [1, 1]} : vector<128x256xbf16> to vector<128x32xbf16>
    %cst_55 = arith.constant dense<0.000000e+00> : vector<128x32xf32>
    %102 = tpu.matmul %100, %101, %cst_55 {dimension_numbers = #tpu.dot_dimension_numbers<[1], [0], [0], [1], [0, 0, 1, 1], [], []>} : vector<128x128xbf16>, vector<128x32xbf16>, vector<128x32xf32> -> vector<128x32xf32>
    %103 = arith.addf %99, %102 : vector<128x32xf32>
    %c0_56 = arith.constant 0 : index
    %c32_57 = arith.constant 32 : index
    %104 = vector.load %arg13[%c0_56, %c32_57] : memref<128x256xf32, #tpu.memory_space<vmem>>, vector<128x32xf32>
    tpu.vector_store %arg13[%c0_56, %c32_57], %103 {strides = array<i32>} : memref<128x256xf32, #tpu.memory_space<vmem>>, vector<128x32xf32>,
    %105 = vector.extract_strided_slice %18 {offsets = [0, 2], sizes = [128, 1], strides = [1, 1]} : vector<128x8xf32> to vector<128x1xf32>
    %106 = vector.extract_strided_slice %15 {offsets = [2, 0], sizes = [1, 128], strides = [1, 1]} : vector<8x128xf32> to vector<1x128xf32>
    %107 = vector.broadcast %105 : vector<128x1xf32> to vector<128x128xf32>
    %108 = vector.broadcast %106 : vector<1x128xf32> to vector<128x128xf32>
    %109 = arith.addf %107, %108 : vector<128x128xf32>
    %cst_58 = arith.constant 0.000000e+00 : f32
    %110 = vector.broadcast %cst_58 : f32 to vector<128x128xf32>
    %111 = arith.cmpf ogt, %109, %110 : vector<128x128xf32>
    %cst_59 = arith.constant 0.00999999977 : f32
    %112 = vector.broadcast %cst_59 : f32 to vector<128x128xf32>
    %113 = arith.mulf %112, %109 : vector<128x128xf32>
    %114 = arith.select %111, %109, %113 : vector<128x128xi1>, vector<128x128xf32>
    %115 = arith.mulf %114, %8 : vector<128x128xf32>
    %cst_60 = arith.constant -1.000000e+30 : f32
    %116 = vector.broadcast %cst_60 : f32 to vector<128x128xf32>
    %117 = arith.select %6, %115, %116 : vector<128x128xi1>, vector<128x128xf32>
    %c0_61 = arith.constant 0 : index
    %c2 = arith.constant 2 : index
    %118 = vector.load %arg11[%c0_61, %c2] : memref<128x8xf32, #tpu.memory_space<vmem>>, vector<128x1xf32>
    %cst_62 = arith.constant dense<0xFF800000> : vector<128xf32>
    %119 = vector.multi_reduction <maximumf>, %117, %cst_62 [1] : vector<128x128xf32> to vector<128xf32>
    %120 = vector.shape_cast %119 : vector<128xf32> to vector<128x1xf32>
    %121 = arith.maximumf %118, %120 : vector<128x1xf32>
    %cst_63 = arith.constant -5.000000e+29 : f32
    %122 = vector.broadcast %cst_63 : f32 to vector<128x1xf32>
    %123 = arith.cmpf ogt, %121, %122 : vector<128x1xf32>
    %cst_64 = arith.constant 0.000000e+00 : f32
    %124 = vector.broadcast %cst_64 : f32 to vector<128x1xf32>
    %125 = arith.select %123, %121, %124 : vector<128x1xi1>, vector<128x1xf32>
    %126 = vector.broadcast %125 : vector<128x1xf32> to vector<128x128xf32>
    %127 = arith.subf %115, %126 : vector<128x128xf32>
    %128 = math.exp %127 : vector<128x128xf32>
    %cst_65 = arith.constant 0.000000e+00 : f32
    %129 = vector.broadcast %cst_65 : f32 to vector<128x128xf32>
    %130 = arith.select %6, %128, %129 : vector<128x128xi1>, vector<128x128xf32>
    %131 = arith.subf %118, %121 : vector<128x1xf32>
    %132 = math.exp %131 : vector<128x1xf32>
    %c0_66 = arith.constant 0 : index
    %c2_67 = arith.constant 2 : index
    %133 = vector.load %arg11[%c0_66, %c2_67] : memref<128x8xf32, #tpu.memory_space<vmem>>, vector<128x1xf32>
    tpu.vector_store %arg11[%c0_66, %c2_67], %121 {strides = array<i32>} : memref<128x8xf32, #tpu.memory_space<vmem>>, vector<128x1xf32>,
    %c0_68 = arith.constant 0 : index
    %c2_69 = arith.constant 2 : index
    %134 = vector.load %arg12[%c0_68, %c2_69] : memref<128x8xf32, #tpu.memory_space<vmem>>, vector<128x1xf32>
    %135 = arith.mulf %132, %134 : vector<128x1xf32>
    %cst_70 = arith.constant dense<0.000000e+00> : vector<128xf32>
    %136 = vector.multi_reduction <add>, %130, %cst_70 [1] : vector<128x128xf32> to vector<128xf32>
    %137 = vector.shape_cast %136 : vector<128xf32> to vector<128x1xf32>
    %138 = arith.addf %135, %137 : vector<128x1xf32>
    %c0_71 = arith.constant 0 : index
    %c2_72 = arith.constant 2 : index
    %139 = vector.load %arg12[%c0_71, %c2_72] : memref<128x8xf32, #tpu.memory_space<vmem>>, vector<128x1xf32>
    tpu.vector_store %arg12[%c0_71, %c2_72], %138 {strides = array<i32>} : memref<128x8xf32, #tpu.memory_space<vmem>>, vector<128x1xf32>,
    %c0_73 = arith.constant 0 : index
    %c64 = arith.constant 64 : index
    %140 = vector.load %arg13[%c0_73, %c64] : memref<128x256xf32, #tpu.memory_space<vmem>>, vector<128x32xf32>
    %141 = vector.broadcast %132 : vector<128x1xf32> to vector<128x32xf32>
    %142 = arith.mulf %141, %140 : vector<128x32xf32>
    %143 = arith.truncf %130 : vector<128x128xf32> to vector<128x128xbf16>
    %144 = vector.extract_strided_slice %12 {offsets = [0, 64], sizes = [128, 32], strides = [1, 1]} : vector<128x256xbf16> to vector<128x32xbf16>
    %cst_74 = arith.constant dense<0.000000e+00> : vector<128x32xf32>
    %145 = tpu.matmul %143, %144, %cst_74 {dimension_numbers = #tpu.dot_dimension_numbers<[1], [0], [0], [1], [0, 0, 1, 1], [], []>} : vector<128x128xbf16>, vector<128x32xbf16>, vector<128x32xf32> -> vector<128x32xf32>
    %146 = arith.addf %142, %145 : vector<128x32xf32>
    %c0_75 = arith.constant 0 : index
    %c64_76 = arith.constant 64 : index
    %147 = vector.load %arg13[%c0_75, %c64_76] : memref<128x256xf32, #tpu.memory_space<vmem>>, vector<128x32xf32>
    tpu.vector_store %arg13[%c0_75, %c64_76], %146 {strides = array<i32>} : memref<128x256xf32, #tpu.memory_space<vmem>>, vector<128x32xf32>,
    %148 = vector.extract_strided_slice %18 {offsets = [0, 3], sizes = [128, 1], strides = [1, 1]} : vector<128x8xf32> to vector<128x1xf32>
    %149 = vector.extract_strided_slice %15 {offsets = [3, 0], sizes = [1, 128], strides = [1, 1]} : vector<8x128xf32> to vector<1x128xf32>
    %150 = vector.broadcast %148 : vector<128x1xf32> to vector<128x128xf32>
    %151 = vector.broadcast %149 : vector<1x128xf32> to vector<128x128xf32>
    %152 = arith.addf %150, %151 : vector<128x128xf32>
    %cst_77 = arith.constant 0.000000e+00 : f32
    %153 = vector.broadcast %cst_77 : f32 to vector<128x128xf32>
    %154 = arith.cmpf ogt, %152, %153 : vector<128x128xf32>
    %cst_78 = arith.constant 0.00999999977 : f32
    %155 = vector.broadcast %cst_78 : f32 to vector<128x128xf32>
    %156 = arith.mulf %155, %152 : vector<128x128xf32>
    %157 = arith.select %154, %152, %156 : vector<128x128xi1>, vector<128x128xf32>
    %158 = arith.mulf %157, %8 : vector<128x128xf32>
    %cst_79 = arith.constant -1.000000e+30 : f32
    %159 = vector.broadcast %cst_79 : f32 to vector<128x128xf32>
    %160 = arith.select %6, %158, %159 : vector<128x128xi1>, vector<128x128xf32>
    %c0_80 = arith.constant 0 : index
    %c3 = arith.constant 3 : index
    %161 = vector.load %arg11[%c0_80, %c3] : memref<128x8xf32, #tpu.memory_space<vmem>>, vector<128x1xf32>
    %cst_81 = arith.constant dense<0xFF800000> : vector<128xf32>
    %162 = vector.multi_reduction <maximumf>, %160, %cst_81 [1] : vector<128x128xf32> to vector<128xf32>
    %163 = vector.shape_cast %162 : vector<128xf32> to vector<128x1xf32>
    %164 = arith.maximumf %161, %163 : vector<128x1xf32>
    %cst_82 = arith.constant -5.000000e+29 : f32
    %165 = vector.broadcast %cst_82 : f32 to vector<128x1xf32>
    %166 = arith.cmpf ogt, %164, %165 : vector<128x1xf32>
    %cst_83 = arith.constant 0.000000e+00 : f32
    %167 = vector.broadcast %cst_83 : f32 to vector<128x1xf32>
    %168 = arith.select %166, %164, %167 : vector<128x1xi1>, vector<128x1xf32>
    %169 = vector.broadcast %168 : vector<128x1xf32> to vector<128x128xf32>
    %170 = arith.subf %158, %169 : vector<128x128xf32>
    %171 = math.exp %170 : vector<128x128xf32>
    %cst_84 = arith.constant 0.000000e+00 : f32
    %172 = vector.broadcast %cst_84 : f32 to vector<128x128xf32>
    %173 = arith.select %6, %171, %172 : vector<128x128xi1>, vector<128x128xf32>
    %174 = arith.subf %161, %164 : vector<128x1xf32>
    %175 = math.exp %174 : vector<128x1xf32>
    %c0_85 = arith.constant 0 : index
    %c3_86 = arith.constant 3 : index
    %176 = vector.load %arg11[%c0_85, %c3_86] : memref<128x8xf32, #tpu.memory_space<vmem>>, vector<128x1xf32>
    tpu.vector_store %arg11[%c0_85, %c3_86], %164 {strides = array<i32>} : memref<128x8xf32, #tpu.memory_space<vmem>>, vector<128x1xf32>,
    %c0_87 = arith.constant 0 : index
    %c3_88 = arith.constant 3 : index
    %177 = vector.load %arg12[%c0_87, %c3_88] : memref<128x8xf32, #tpu.memory_space<vmem>>, vector<128x1xf32>
    %178 = arith.mulf %175, %177 : vector<128x1xf32>
    %cst_89 = arith.constant dense<0.000000e+00> : vector<128xf32>
    %179 = vector.multi_reduction <add>, %173, %cst_89 [1] : vector<128x128xf32> to vector<128xf32>
    %180 = vector.shape_cast %179 : vector<128xf32> to vector<128x1xf32>
    %181 = arith.addf %178, %180 : vector<128x1xf32>
    %c0_90 = arith.constant 0 : index
    %c3_91 = arith.constant 3 : index
    %182 = vector.load %arg12[%c0_90, %c3_91] : memref<128x8xf32, #tpu.memory_space<vmem>>, vector<128x1xf32>
    tpu.vector_store %arg12[%c0_90, %c3_91], %181 {strides = array<i32>} : memref<128x8xf32, #tpu.memory_space<vmem>>, vector<128x1xf32>,
    %c0_92 = arith.constant 0 : index
    %c96 = arith.constant 96 : index
    %183 = vector.load %arg13[%c0_92, %c96] : memref<128x256xf32, #tpu.memory_space<vmem>>, vector<128x32xf32>
    %184 = vector.broadcast %175 : vector<128x1xf32> to vector<128x32xf32>
    %185 = arith.mulf %184, %183 : vector<128x32xf32>
    %186 = arith.truncf %173 : vector<128x128xf32> to vector<128x128xbf16>
    %187 = vector.extract_strided_slice %12 {offsets = [0, 96], sizes = [128, 32], strides = [1, 1]} : vector<128x256xbf16> to vector<128x32xbf16>
    %cst_93 = arith.constant dense<0.000000e+00> : vector<128x32xf32>
    %188 = tpu.matmul %186, %187, %cst_93 {dimension_numbers = #tpu.dot_dimension_numbers<[1], [0], [0], [1], [0, 0, 1, 1], [], []>} : vector<128x128xbf16>, vector<128x32xbf16>, vector<128x32xf32> -> vector<128x32xf32>
    %189 = arith.addf %185, %188 : vector<128x32xf32>
    %c0_94 = arith.constant 0 : index
    %c96_95 = arith.constant 96 : index
    %190 = vector.load %arg13[%c0_94, %c96_95] : memref<128x256xf32, #tpu.memory_space<vmem>>, vector<128x32xf32>
    tpu.vector_store %arg13[%c0_94, %c96_95], %189 {strides = array<i32>} : memref<128x256xf32, #tpu.memory_space<vmem>>, vector<128x32xf32>,
    %191 = vector.extract_strided_slice %18 {offsets = [0, 4], sizes = [128, 1], strides = [1, 1]} : vector<128x8xf32> to vector<128x1xf32>
    %192 = vector.extract_strided_slice %15 {offsets = [4, 0], sizes = [1, 128], strides = [1, 1]} : vector<8x128xf32> to vector<1x128xf32>
    %193 = vector.broadcast %191 : vector<128x1xf32> to vector<128x128xf32>
    %194 = vector.broadcast %192 : vector<1x128xf32> to vector<128x128xf32>
    %195 = arith.addf %193, %194 : vector<128x128xf32>
    %cst_96 = arith.constant 0.000000e+00 : f32
    %196 = vector.broadcast %cst_96 : f32 to vector<128x128xf32>
    %197 = arith.cmpf ogt, %195, %196 : vector<128x128xf32>
    %cst_97 = arith.constant 0.00999999977 : f32
    %198 = vector.broadcast %cst_97 : f32 to vector<128x128xf32>
    %199 = arith.mulf %198, %195 : vector<128x128xf32>
    %200 = arith.select %197, %195, %199 : vector<128x128xi1>, vector<128x128xf32>
    %201 = arith.mulf %200, %8 : vector<128x128xf32>
    %cst_98 = arith.constant -1.000000e+30 : f32
    %202 = vector.broadcast %cst_98 : f32 to vector<128x128xf32>
    %203 = arith.select %6, %201, %202 : vector<128x128xi1>, vector<128x128xf32>
    %c0_99 = arith.constant 0 : index
    %c4 = arith.constant 4 : index
    %204 = vector.load %arg11[%c0_99, %c4] : memref<128x8xf32, #tpu.memory_space<vmem>>, vector<128x1xf32>
    %cst_100 = arith.constant dense<0xFF800000> : vector<128xf32>
    %205 = vector.multi_reduction <maximumf>, %203, %cst_100 [1] : vector<128x128xf32> to vector<128xf32>
    %206 = vector.shape_cast %205 : vector<128xf32> to vector<128x1xf32>
    %207 = arith.maximumf %204, %206 : vector<128x1xf32>
    %cst_101 = arith.constant -5.000000e+29 : f32
    %208 = vector.broadcast %cst_101 : f32 to vector<128x1xf32>
    %209 = arith.cmpf ogt, %207, %208 : vector<128x1xf32>
    %cst_102 = arith.constant 0.000000e+00 : f32
    %210 = vector.broadcast %cst_102 : f32 to vector<128x1xf32>
    %211 = arith.select %209, %207, %210 : vector<128x1xi1>, vector<128x1xf32>
    %212 = vector.broadcast %211 : vector<128x1xf32> to vector<128x128xf32>
    %213 = arith.subf %201, %212 : vector<128x128xf32>
    %214 = math.exp %213 : vector<128x128xf32>
    %cst_103 = arith.constant 0.000000e+00 : f32
    %215 = vector.broadcast %cst_103 : f32 to vector<128x128xf32>
    %216 = arith.select %6, %214, %215 : vector<128x128xi1>, vector<128x128xf32>
    %217 = arith.subf %204, %207 : vector<128x1xf32>
    %218 = math.exp %217 : vector<128x1xf32>
    %c0_104 = arith.constant 0 : index
    %c4_105 = arith.constant 4 : index
    %219 = vector.load %arg11[%c0_104, %c4_105] : memref<128x8xf32, #tpu.memory_space<vmem>>, vector<128x1xf32>
    tpu.vector_store %arg11[%c0_104, %c4_105], %207 {strides = array<i32>} : memref<128x8xf32, #tpu.memory_space<vmem>>, vector<128x1xf32>,
    %c0_106 = arith.constant 0 : index
    %c4_107 = arith.constant 4 : index
    %220 = vector.load %arg12[%c0_106, %c4_107] : memref<128x8xf32, #tpu.memory_space<vmem>>, vector<128x1xf32>
    %221 = arith.mulf %218, %220 : vector<128x1xf32>
    %cst_108 = arith.constant dense<0.000000e+00> : vector<128xf32>
    %222 = vector.multi_reduction <add>, %216, %cst_108 [1] : vector<128x128xf32> to vector<128xf32>
    %223 = vector.shape_cast %222 : vector<128xf32> to vector<128x1xf32>
    %224 = arith.addf %221, %223 : vector<128x1xf32>
    %c0_109 = arith.constant 0 : index
    %c4_110 = arith.constant 4 : index
    %225 = vector.load %arg12[%c0_109, %c4_110] : memref<128x8xf32, #tpu.memory_space<vmem>>, vector<128x1xf32>
    tpu.vector_store %arg12[%c0_109, %c4_110], %224 {strides = array<i32>} : memref<128x8xf32, #tpu.memory_space<vmem>>, vector<128x1xf32>,
    %c0_111 = arith.constant 0 : index
    %c128 = arith.constant 128 : index
    %226 = vector.load %arg13[%c0_111, %c128] : memref<128x256xf32, #tpu.memory_space<vmem>>, vector<128x32xf32>
    %227 = vector.broadcast %218 : vector<128x1xf32> to vector<128x32xf32>
    %228 = arith.mulf %227, %226 : vector<128x32xf32>
    %229 = arith.truncf %216 : vector<128x128xf32> to vector<128x128xbf16>
    %230 = vector.extract_strided_slice %12 {offsets = [0, 128], sizes = [128, 32], strides = [1, 1]} : vector<128x256xbf16> to vector<128x32xbf16>
    %cst_112 = arith.constant dense<0.000000e+00> : vector<128x32xf32>
    %231 = tpu.matmul %229, %230, %cst_112 {dimension_numbers = #tpu.dot_dimension_numbers<[1], [0], [0], [1], [0, 0, 1, 1], [], []>} : vector<128x128xbf16>, vector<128x32xbf16>, vector<128x32xf32> -> vector<128x32xf32>
    %232 = arith.addf %228, %231 : vector<128x32xf32>
    %c0_113 = arith.constant 0 : index
    %c128_114 = arith.constant 128 : index
    %233 = vector.load %arg13[%c0_113, %c128_114] : memref<128x256xf32, #tpu.memory_space<vmem>>, vector<128x32xf32>
    tpu.vector_store %arg13[%c0_113, %c128_114], %232 {strides = array<i32>} : memref<128x256xf32, #tpu.memory_space<vmem>>, vector<128x32xf32>,
    %234 = vector.extract_strided_slice %18 {offsets = [0, 5], sizes = [128, 1], strides = [1, 1]} : vector<128x8xf32> to vector<128x1xf32>
    %235 = vector.extract_strided_slice %15 {offsets = [5, 0], sizes = [1, 128], strides = [1, 1]} : vector<8x128xf32> to vector<1x128xf32>
    %236 = vector.broadcast %234 : vector<128x1xf32> to vector<128x128xf32>
    %237 = vector.broadcast %235 : vector<1x128xf32> to vector<128x128xf32>
    %238 = arith.addf %236, %237 : vector<128x128xf32>
    %cst_115 = arith.constant 0.000000e+00 : f32
    %239 = vector.broadcast %cst_115 : f32 to vector<128x128xf32>
    %240 = arith.cmpf ogt, %238, %239 : vector<128x128xf32>
    %cst_116 = arith.constant 0.00999999977 : f32
    %241 = vector.broadcast %cst_116 : f32 to vector<128x128xf32>
    %242 = arith.mulf %241, %238 : vector<128x128xf32>
    %243 = arith.select %240, %238, %242 : vector<128x128xi1>, vector<128x128xf32>
    %244 = arith.mulf %243, %8 : vector<128x128xf32>
    %cst_117 = arith.constant -1.000000e+30 : f32
    %245 = vector.broadcast %cst_117 : f32 to vector<128x128xf32>
    %246 = arith.select %6, %244, %245 : vector<128x128xi1>, vector<128x128xf32>
    %c0_118 = arith.constant 0 : index
    %c5 = arith.constant 5 : index
    %247 = vector.load %arg11[%c0_118, %c5] : memref<128x8xf32, #tpu.memory_space<vmem>>, vector<128x1xf32>
    %cst_119 = arith.constant dense<0xFF800000> : vector<128xf32>
    %248 = vector.multi_reduction <maximumf>, %246, %cst_119 [1] : vector<128x128xf32> to vector<128xf32>
    %249 = vector.shape_cast %248 : vector<128xf32> to vector<128x1xf32>
    %250 = arith.maximumf %247, %249 : vector<128x1xf32>
    %cst_120 = arith.constant -5.000000e+29 : f32
    %251 = vector.broadcast %cst_120 : f32 to vector<128x1xf32>
    %252 = arith.cmpf ogt, %250, %251 : vector<128x1xf32>
    %cst_121 = arith.constant 0.000000e+00 : f32
    %253 = vector.broadcast %cst_121 : f32 to vector<128x1xf32>
    %254 = arith.select %252, %250, %253 : vector<128x1xi1>, vector<128x1xf32>
    %255 = vector.broadcast %254 : vector<128x1xf32> to vector<128x128xf32>
    %256 = arith.subf %244, %255 : vector<128x128xf32>
    %257 = math.exp %256 : vector<128x128xf32>
    %cst_122 = arith.constant 0.000000e+00 : f32
    %258 = vector.broadcast %cst_122 : f32 to vector<128x128xf32>
    %259 = arith.select %6, %257, %258 : vector<128x128xi1>, vector<128x128xf32>
    %260 = arith.subf %247, %250 : vector<128x1xf32>
    %261 = math.exp %260 : vector<128x1xf32>
    %c0_123 = arith.constant 0 : index
    %c5_124 = arith.constant 5 : index
    %262 = vector.load %arg11[%c0_123, %c5_124] : memref<128x8xf32, #tpu.memory_space<vmem>>, vector<128x1xf32>
    tpu.vector_store %arg11[%c0_123, %c5_124], %250 {strides = array<i32>} : memref<128x8xf32, #tpu.memory_space<vmem>>, vector<128x1xf32>,
    %c0_125 = arith.constant 0 : index
    %c5_126 = arith.constant 5 : index
    %263 = vector.load %arg12[%c0_125, %c5_126] : memref<128x8xf32, #tpu.memory_space<vmem>>, vector<128x1xf32>
    %264 = arith.mulf %261, %263 : vector<128x1xf32>
    %cst_127 = arith.constant dense<0.000000e+00> : vector<128xf32>
    %265 = vector.multi_reduction <add>, %259, %cst_127 [1] : vector<128x128xf32> to vector<128xf32>
    %266 = vector.shape_cast %265 : vector<128xf32> to vector<128x1xf32>
    %267 = arith.addf %264, %266 : vector<128x1xf32>
    %c0_128 = arith.constant 0 : index
    %c5_129 = arith.constant 5 : index
    %268 = vector.load %arg12[%c0_128, %c5_129] : memref<128x8xf32, #tpu.memory_space<vmem>>, vector<128x1xf32>
    tpu.vector_store %arg12[%c0_128, %c5_129], %267 {strides = array<i32>} : memref<128x8xf32, #tpu.memory_space<vmem>>, vector<128x1xf32>,
    %c0_130 = arith.constant 0 : index
    %c160 = arith.constant 160 : index
    %269 = vector.load %arg13[%c0_130, %c160] : memref<128x256xf32, #tpu.memory_space<vmem>>, vector<128x32xf32>
    %270 = vector.broadcast %261 : vector<128x1xf32> to vector<128x32xf32>
    %271 = arith.mulf %270, %269 : vector<128x32xf32>
    %272 = arith.truncf %259 : vector<128x128xf32> to vector<128x128xbf16>
    %273 = vector.extract_strided_slice %12 {offsets = [0, 160], sizes = [128, 32], strides = [1, 1]} : vector<128x256xbf16> to vector<128x32xbf16>
    %cst_131 = arith.constant dense<0.000000e+00> : vector<128x32xf32>
    %274 = tpu.matmul %272, %273, %cst_131 {dimension_numbers = #tpu.dot_dimension_numbers<[1], [0], [0], [1], [0, 0, 1, 1], [], []>} : vector<128x128xbf16>, vector<128x32xbf16>, vector<128x32xf32> -> vector<128x32xf32>
    %275 = arith.addf %271, %274 : vector<128x32xf32>
    %c0_132 = arith.constant 0 : index
    %c160_133 = arith.constant 160 : index
    %276 = vector.load %arg13[%c0_132, %c160_133] : memref<128x256xf32, #tpu.memory_space<vmem>>, vector<128x32xf32>
    tpu.vector_store %arg13[%c0_132, %c160_133], %275 {strides = array<i32>} : memref<128x256xf32, #tpu.memory_space<vmem>>, vector<128x32xf32>,
    %277 = vector.extract_strided_slice %18 {offsets = [0, 6], sizes = [128, 1], strides = [1, 1]} : vector<128x8xf32> to vector<128x1xf32>
    %278 = vector.extract_strided_slice %15 {offsets = [6, 0], sizes = [1, 128], strides = [1, 1]} : vector<8x128xf32> to vector<1x128xf32>
    %279 = vector.broadcast %277 : vector<128x1xf32> to vector<128x128xf32>
    %280 = vector.broadcast %278 : vector<1x128xf32> to vector<128x128xf32>
    %281 = arith.addf %279, %280 : vector<128x128xf32>
    %cst_134 = arith.constant 0.000000e+00 : f32
    %282 = vector.broadcast %cst_134 : f32 to vector<128x128xf32>
    %283 = arith.cmpf ogt, %281, %282 : vector<128x128xf32>
    %cst_135 = arith.constant 0.00999999977 : f32
    %284 = vector.broadcast %cst_135 : f32 to vector<128x128xf32>
    %285 = arith.mulf %284, %281 : vector<128x128xf32>
    %286 = arith.select %283, %281, %285 : vector<128x128xi1>, vector<128x128xf32>
    %287 = arith.mulf %286, %8 : vector<128x128xf32>
    %cst_136 = arith.constant -1.000000e+30 : f32
    %288 = vector.broadcast %cst_136 : f32 to vector<128x128xf32>
    %289 = arith.select %6, %287, %288 : vector<128x128xi1>, vector<128x128xf32>
    %c0_137 = arith.constant 0 : index
    %c6 = arith.constant 6 : index
    %290 = vector.load %arg11[%c0_137, %c6] : memref<128x8xf32, #tpu.memory_space<vmem>>, vector<128x1xf32>
    %cst_138 = arith.constant dense<0xFF800000> : vector<128xf32>
    %291 = vector.multi_reduction <maximumf>, %289, %cst_138 [1] : vector<128x128xf32> to vector<128xf32>
    %292 = vector.shape_cast %291 : vector<128xf32> to vector<128x1xf32>
    %293 = arith.maximumf %290, %292 : vector<128x1xf32>
    %cst_139 = arith.constant -5.000000e+29 : f32
    %294 = vector.broadcast %cst_139 : f32 to vector<128x1xf32>
    %295 = arith.cmpf ogt, %293, %294 : vector<128x1xf32>
    %cst_140 = arith.constant 0.000000e+00 : f32
    %296 = vector.broadcast %cst_140 : f32 to vector<128x1xf32>
    %297 = arith.select %295, %293, %296 : vector<128x1xi1>, vector<128x1xf32>
    %298 = vector.broadcast %297 : vector<128x1xf32> to vector<128x128xf32>
    %299 = arith.subf %287, %298 : vector<128x128xf32>
    %300 = math.exp %299 : vector<128x128xf32>
    %cst_141 = arith.constant 0.000000e+00 : f32
    %301 = vector.broadcast %cst_141 : f32 to vector<128x128xf32>
    %302 = arith.select %6, %300, %301 : vector<128x128xi1>, vector<128x128xf32>
    %303 = arith.subf %290, %293 : vector<128x1xf32>
    %304 = math.exp %303 : vector<128x1xf32>
    %c0_142 = arith.constant 0 : index
    %c6_143 = arith.constant 6 : index
    %305 = vector.load %arg11[%c0_142, %c6_143] : memref<128x8xf32, #tpu.memory_space<vmem>>, vector<128x1xf32>
    tpu.vector_store %arg11[%c0_142, %c6_143], %293 {strides = array<i32>} : memref<128x8xf32, #tpu.memory_space<vmem>>, vector<128x1xf32>,
    %c0_144 = arith.constant 0 : index
    %c6_145 = arith.constant 6 : index
    %306 = vector.load %arg12[%c0_144, %c6_145] : memref<128x8xf32, #tpu.memory_space<vmem>>, vector<128x1xf32>
    %307 = arith.mulf %304, %306 : vector<128x1xf32>
    %cst_146 = arith.constant dense<0.000000e+00> : vector<128xf32>
    %308 = vector.multi_reduction <add>, %302, %cst_146 [1] : vector<128x128xf32> to vector<128xf32>
    %309 = vector.shape_cast %308 : vector<128xf32> to vector<128x1xf32>
    %310 = arith.addf %307, %309 : vector<128x1xf32>
    %c0_147 = arith.constant 0 : index
    %c6_148 = arith.constant 6 : index
    %311 = vector.load %arg12[%c0_147, %c6_148] : memref<128x8xf32, #tpu.memory_space<vmem>>, vector<128x1xf32>
    tpu.vector_store %arg12[%c0_147, %c6_148], %310 {strides = array<i32>} : memref<128x8xf32, #tpu.memory_space<vmem>>, vector<128x1xf32>,
    %c0_149 = arith.constant 0 : index
    %c192 = arith.constant 192 : index
    %312 = vector.load %arg13[%c0_149, %c192] : memref<128x256xf32, #tpu.memory_space<vmem>>, vector<128x32xf32>
    %313 = vector.broadcast %304 : vector<128x1xf32> to vector<128x32xf32>
    %314 = arith.mulf %313, %312 : vector<128x32xf32>
    %315 = arith.truncf %302 : vector<128x128xf32> to vector<128x128xbf16>
    %316 = vector.extract_strided_slice %12 {offsets = [0, 192], sizes = [128, 32], strides = [1, 1]} : vector<128x256xbf16> to vector<128x32xbf16>
    %cst_150 = arith.constant dense<0.000000e+00> : vector<128x32xf32>
    %317 = tpu.matmul %315, %316, %cst_150 {dimension_numbers = #tpu.dot_dimension_numbers<[1], [0], [0], [1], [0, 0, 1, 1], [], []>} : vector<128x128xbf16>, vector<128x32xbf16>, vector<128x32xf32> -> vector<128x32xf32>
    %318 = arith.addf %314, %317 : vector<128x32xf32>
    %c0_151 = arith.constant 0 : index
    %c192_152 = arith.constant 192 : index
    %319 = vector.load %arg13[%c0_151, %c192_152] : memref<128x256xf32, #tpu.memory_space<vmem>>, vector<128x32xf32>
    tpu.vector_store %arg13[%c0_151, %c192_152], %318 {strides = array<i32>} : memref<128x256xf32, #tpu.memory_space<vmem>>, vector<128x32xf32>,
    %320 = vector.extract_strided_slice %18 {offsets = [0, 7], sizes = [128, 1], strides = [1, 1]} : vector<128x8xf32> to vector<128x1xf32>
    %321 = vector.extract_strided_slice %15 {offsets = [7, 0], sizes = [1, 128], strides = [1, 1]} : vector<8x128xf32> to vector<1x128xf32>
    %322 = vector.broadcast %320 : vector<128x1xf32> to vector<128x128xf32>
    %323 = vector.broadcast %321 : vector<1x128xf32> to vector<128x128xf32>
    %324 = arith.addf %322, %323 : vector<128x128xf32>
    %cst_153 = arith.constant 0.000000e+00 : f32
    %325 = vector.broadcast %cst_153 : f32 to vector<128x128xf32>
    %326 = arith.cmpf ogt, %324, %325 : vector<128x128xf32>
    %cst_154 = arith.constant 0.00999999977 : f32
    %327 = vector.broadcast %cst_154 : f32 to vector<128x128xf32>
    %328 = arith.mulf %327, %324 : vector<128x128xf32>
    %329 = arith.select %326, %324, %328 : vector<128x128xi1>, vector<128x128xf32>
    %330 = arith.mulf %329, %8 : vector<128x128xf32>
    %cst_155 = arith.constant -1.000000e+30 : f32
    %331 = vector.broadcast %cst_155 : f32 to vector<128x128xf32>
    %332 = arith.select %6, %330, %331 : vector<128x128xi1>, vector<128x128xf32>
    %c0_156 = arith.constant 0 : index
    %c7 = arith.constant 7 : index
    %333 = vector.load %arg11[%c0_156, %c7] : memref<128x8xf32, #tpu.memory_space<vmem>>, vector<128x1xf32>
    %cst_157 = arith.constant dense<0xFF800000> : vector<128xf32>
    %334 = vector.multi_reduction <maximumf>, %332, %cst_157 [1] : vector<128x128xf32> to vector<128xf32>
    %335 = vector.shape_cast %334 : vector<128xf32> to vector<128x1xf32>
    %336 = arith.maximumf %333, %335 : vector<128x1xf32>
    %cst_158 = arith.constant -5.000000e+29 : f32
    %337 = vector.broadcast %cst_158 : f32 to vector<128x1xf32>
    %338 = arith.cmpf ogt, %336, %337 : vector<128x1xf32>
    %cst_159 = arith.constant 0.000000e+00 : f32
    %339 = vector.broadcast %cst_159 : f32 to vector<128x1xf32>
    %340 = arith.select %338, %336, %339 : vector<128x1xi1>, vector<128x1xf32>
    %341 = vector.broadcast %340 : vector<128x1xf32> to vector<128x128xf32>
    %342 = arith.subf %330, %341 : vector<128x128xf32>
    %343 = math.exp %342 : vector<128x128xf32>
    %cst_160 = arith.constant 0.000000e+00 : f32
    %344 = vector.broadcast %cst_160 : f32 to vector<128x128xf32>
    %345 = arith.select %6, %343, %344 : vector<128x128xi1>, vector<128x128xf32>
    %346 = arith.subf %333, %336 : vector<128x1xf32>
    %347 = math.exp %346 : vector<128x1xf32>
    %c0_161 = arith.constant 0 : index
    %c7_162 = arith.constant 7 : index
    %348 = vector.load %arg11[%c0_161, %c7_162] : memref<128x8xf32, #tpu.memory_space<vmem>>, vector<128x1xf32>
    tpu.vector_store %arg11[%c0_161, %c7_162], %336 {strides = array<i32>} : memref<128x8xf32, #tpu.memory_space<vmem>>, vector<128x1xf32>,
    %c0_163 = arith.constant 0 : index
    %c7_164 = arith.constant 7 : index
    %349 = vector.load %arg12[%c0_163, %c7_164] : memref<128x8xf32, #tpu.memory_space<vmem>>, vector<128x1xf32>
    %350 = arith.mulf %347, %349 : vector<128x1xf32>
    %cst_165 = arith.constant dense<0.000000e+00> : vector<128xf32>
    %351 = vector.multi_reduction <add>, %345, %cst_165 [1] : vector<128x128xf32> to vector<128xf32>
    %352 = vector.shape_cast %351 : vector<128xf32> to vector<128x1xf32>
    %353 = arith.addf %350, %352 : vector<128x1xf32>
    %c0_166 = arith.constant 0 : index
    %c7_167 = arith.constant 7 : index
    %354 = vector.load %arg12[%c0_166, %c7_167] : memref<128x8xf32, #tpu.memory_space<vmem>>, vector<128x1xf32>
    tpu.vector_store %arg12[%c0_166, %c7_167], %353 {strides = array<i32>} : memref<128x8xf32, #tpu.memory_space<vmem>>, vector<128x1xf32>,
    %c0_168 = arith.constant 0 : index
    %c224 = arith.constant 224 : index
    %355 = vector.load %arg13[%c0_168, %c224] : memref<128x256xf32, #tpu.memory_space<vmem>>, vector<128x32xf32>
    %356 = vector.broadcast %347 : vector<128x1xf32> to vector<128x32xf32>
    %357 = arith.mulf %356, %355 : vector<128x32xf32>
    %358 = arith.truncf %345 : vector<128x128xf32> to vector<128x128xbf16>
    %359 = vector.extract_strided_slice %12 {offsets = [0, 224], sizes = [128, 32], strides = [1, 1]} : vector<128x256xbf16> to vector<128x32xbf16>
    %cst_169 = arith.constant dense<0.000000e+00> : vector<128x32xf32>
    %360 = tpu.matmul %358, %359, %cst_169 {dimension_numbers = #tpu.dot_dimension_numbers<[1], [0], [0], [1], [0, 0, 1, 1], [], []>} : vector<128x128xbf16>, vector<128x32xbf16>, vector<128x32xf32> -> vector<128x32xf32>
    %361 = arith.addf %357, %360 : vector<128x32xf32>
    %c0_170 = arith.constant 0 : index
    %c224_171 = arith.constant 224 : index
    %362 = vector.load %arg13[%c0_170, %c224_171] : memref<128x256xf32, #tpu.memory_space<vmem>>, vector<128x32xf32>
    tpu.vector_store %arg13[%c0_170, %c224_171], %361 {strides = array<i32>} : memref<128x256xf32, #tpu.memory_space<vmem>>, vector<128x32xf32>,
    %c1_i32 = arith.constant 1 : i32
    %363 = arith.cmpi eq, %arg1, %c1_i32 : i32
    %364 = arith.extui %363 : i1 to i32
    %c0_i32_172 = arith.constant 0 : i32
    %365 = arith.cmpi ne, %364, %c0_i32_172 : i32
    scf.if %365 {
      %c0_173 = arith.constant 0 : index
      %c0_174 = arith.constant 0 : index
      %366 = vector.load %arg12[%c0_173, %c0_174] : memref<128x8xf32, #tpu.memory_space<vmem>>, vector<128x1xf32>
      %cst_175 = arith.constant 1.000000e-30 : f32
      %367 = vector.broadcast %cst_175 : f32 to vector<128x1xf32>
      %368 = arith.maximumf %366, %367 : vector<128x1xf32>
      %369 = tpu.reciprocal %368 {approx = true} : vector<128x1xf32> -> vector<128x1xf32>
      %cst_176 = arith.constant 0.000000e+00 : f32
      %370 = vector.broadcast %cst_176 : f32 to vector<128x1xf32>
      %371 = arith.cmpf ogt, %366, %370 : vector<128x1xf32>
      %cst_177 = arith.constant 0.000000e+00 : f32
      %372 = vector.broadcast %cst_177 : f32 to vector<128x1xf32>
      %373 = arith.select %371, %369, %372 : vector<128x1xi1>, vector<128x1xf32>
      %c0_178 = arith.constant 0 : index
      %c0_179 = arith.constant 0 : index
      %374 = vector.load %arg13[%c0_178, %c0_179] : memref<128x256xf32, #tpu.memory_space<vmem>>, vector<128x32xf32>
      %375 = vector.broadcast %373 : vector<128x1xf32> to vector<128x32xf32>
      %376 = arith.mulf %374, %375 : vector<128x32xf32>
      %cst_180 = arith.constant 0.000000e+00 : f32
      %377 = vector.broadcast %cst_180 : f32 to vector<128x32xf32>
      %378 = arith.cmpf ogt, %376, %377 : vector<128x32xf32>
      %c0_181 = arith.constant 0 : index
      %379 = memref.load %arg2[%c0_181] : memref<8xf32, #tpu.memory_space<smem>>
      %380 = vector.broadcast %379 : f32 to vector<128x32xf32>
      %381 = arith.mulf %380, %376 : vector<128x32xf32>
      %382 = arith.select %378, %376, %381 : vector<128x32xi1>, vector<128x32xf32>
      %c0_182 = arith.constant 0 : index
      %c1_183 = arith.constant 1 : index
      %383 = vector.load %arg12[%c0_182, %c1_183] : memref<128x8xf32, #tpu.memory_space<vmem>>, vector<128x1xf32>
      %cst_184 = arith.constant 1.000000e-30 : f32
      %384 = vector.broadcast %cst_184 : f32 to vector<128x1xf32>
      %385 = arith.maximumf %383, %384 : vector<128x1xf32>
      %386 = tpu.reciprocal %385 {approx = true} : vector<128x1xf32> -> vector<128x1xf32>
      %cst_185 = arith.constant 0.000000e+00 : f32
      %387 = vector.broadcast %cst_185 : f32 to vector<128x1xf32>
      %388 = arith.cmpf ogt, %383, %387 : vector<128x1xf32>
      %cst_186 = arith.constant 0.000000e+00 : f32
      %389 = vector.broadcast %cst_186 : f32 to vector<128x1xf32>
      %390 = arith.select %388, %386, %389 : vector<128x1xi1>, vector<128x1xf32>
      %c0_187 = arith.constant 0 : index
      %c32_188 = arith.constant 32 : index
      %391 = vector.load %arg13[%c0_187, %c32_188] : memref<128x256xf32, #tpu.memory_space<vmem>>, vector<128x32xf32>
      %392 = vector.broadcast %390 : vector<128x1xf32> to vector<128x32xf32>
      %393 = arith.mulf %391, %392 : vector<128x32xf32>
      %cst_189 = arith.constant 0.000000e+00 : f32
      %394 = vector.broadcast %cst_189 : f32 to vector<128x32xf32>
      %395 = arith.cmpf ogt, %393, %394 : vector<128x32xf32>
      %c1_190 = arith.constant 1 : index
      %396 = memref.load %arg2[%c1_190] : memref<8xf32, #tpu.memory_space<smem>>
      %397 = vector.broadcast %396 : f32 to vector<128x32xf32>
      %398 = arith.mulf %397, %393 : vector<128x32xf32>
      %399 = arith.select %395, %393, %398 : vector<128x32xi1>, vector<128x32xf32>
      %c0_191 = arith.constant 0 : index
      %c2_192 = arith.constant 2 : index
      %400 = vector.load %arg12[%c0_191, %c2_192] : memref<128x8xf32, #tpu.memory_space<vmem>>, vector<128x1xf32>
      %cst_193 = arith.constant 1.000000e-30 : f32
      %401 = vector.broadcast %cst_193 : f32 to vector<128x1xf32>
      %402 = arith.maximumf %400, %401 : vector<128x1xf32>
      %403 = tpu.reciprocal %402 {approx = true} : vector<128x1xf32> -> vector<128x1xf32>
      %cst_194 = arith.constant 0.000000e+00 : f32
      %404 = vector.broadcast %cst_194 : f32 to vector<128x1xf32>
      %405 = arith.cmpf ogt, %400, %404 : vector<128x1xf32>
      %cst_195 = arith.constant 0.000000e+00 : f32
      %406 = vector.broadcast %cst_195 : f32 to vector<128x1xf32>
      %407 = arith.select %405, %403, %406 : vector<128x1xi1>, vector<128x1xf32>
      %c0_196 = arith.constant 0 : index
      %c64_197 = arith.constant 64 : index
      %408 = vector.load %arg13[%c0_196, %c64_197] : memref<128x256xf32, #tpu.memory_space<vmem>>, vector<128x32xf32>
      %409 = vector.broadcast %407 : vector<128x1xf32> to vector<128x32xf32>
      %410 = arith.mulf %408, %409 : vector<128x32xf32>
      %cst_198 = arith.constant 0.000000e+00 : f32
      %411 = vector.broadcast %cst_198 : f32 to vector<128x32xf32>
      %412 = arith.cmpf ogt, %410, %411 : vector<128x32xf32>
      %c2_199 = arith.constant 2 : index
      %413 = memref.load %arg2[%c2_199] : memref<8xf32, #tpu.memory_space<smem>>
      %414 = vector.broadcast %413 : f32 to vector<128x32xf32>
      %415 = arith.mulf %414, %410 : vector<128x32xf32>
      %416 = arith.select %412, %410, %415 : vector<128x32xi1>, vector<128x32xf32>
      %c0_200 = arith.constant 0 : index
      %c3_201 = arith.constant 3 : index
      %417 = vector.load %arg12[%c0_200, %c3_201] : memref<128x8xf32, #tpu.memory_space<vmem>>, vector<128x1xf32>
      %cst_202 = arith.constant 1.000000e-30 : f32
      %418 = vector.broadcast %cst_202 : f32 to vector<128x1xf32>
      %419 = arith.maximumf %417, %418 : vector<128x1xf32>
      %420 = tpu.reciprocal %419 {approx = true} : vector<128x1xf32> -> vector<128x1xf32>
      %cst_203 = arith.constant 0.000000e+00 : f32
      %421 = vector.broadcast %cst_203 : f32 to vector<128x1xf32>
      %422 = arith.cmpf ogt, %417, %421 : vector<128x1xf32>
      %cst_204 = arith.constant 0.000000e+00 : f32
      %423 = vector.broadcast %cst_204 : f32 to vector<128x1xf32>
      %424 = arith.select %422, %420, %423 : vector<128x1xi1>, vector<128x1xf32>
      %c0_205 = arith.constant 0 : index
      %c96_206 = arith.constant 96 : index
      %425 = vector.load %arg13[%c0_205, %c96_206] : memref<128x256xf32, #tpu.memory_space<vmem>>, vector<128x32xf32>
      %426 = vector.broadcast %424 : vector<128x1xf32> to vector<128x32xf32>
      %427 = arith.mulf %425, %426 : vector<128x32xf32>
      %cst_207 = arith.constant 0.000000e+00 : f32
      %428 = vector.broadcast %cst_207 : f32 to vector<128x32xf32>
      %429 = arith.cmpf ogt, %427, %428 : vector<128x32xf32>
      %c3_208 = arith.constant 3 : index
      %430 = memref.load %arg2[%c3_208] : memref<8xf32, #tpu.memory_space<smem>>
      %431 = vector.broadcast %430 : f32 to vector<128x32xf32>
      %432 = arith.mulf %431, %427 : vector<128x32xf32>
      %433 = arith.select %429, %427, %432 : vector<128x32xi1>, vector<128x32xf32>
      %c0_209 = arith.constant 0 : index
      %c4_210 = arith.constant 4 : index
      %434 = vector.load %arg12[%c0_209, %c4_210] : memref<128x8xf32, #tpu.memory_space<vmem>>, vector<128x1xf32>
      %cst_211 = arith.constant 1.000000e-30 : f32
      %435 = vector.broadcast %cst_211 : f32 to vector<128x1xf32>
      %436 = arith.maximumf %434, %435 : vector<128x1xf32>
      %437 = tpu.reciprocal %436 {approx = true} : vector<128x1xf32> -> vector<128x1xf32>
      %cst_212 = arith.constant 0.000000e+00 : f32
      %438 = vector.broadcast %cst_212 : f32 to vector<128x1xf32>
      %439 = arith.cmpf ogt, %434, %438 : vector<128x1xf32>
      %cst_213 = arith.constant 0.000000e+00 : f32
      %440 = vector.broadcast %cst_213 : f32 to vector<128x1xf32>
      %441 = arith.select %439, %437, %440 : vector<128x1xi1>, vector<128x1xf32>
      %c0_214 = arith.constant 0 : index
      %c128_215 = arith.constant 128 : index
      %442 = vector.load %arg13[%c0_214, %c128_215] : memref<128x256xf32, #tpu.memory_space<vmem>>, vector<128x32xf32>
      %443 = vector.broadcast %441 : vector<128x1xf32> to vector<128x32xf32>
      %444 = arith.mulf %442, %443 : vector<128x32xf32>
      %cst_216 = arith.constant 0.000000e+00 : f32
      %445 = vector.broadcast %cst_216 : f32 to vector<128x32xf32>
      %446 = arith.cmpf ogt, %444, %445 : vector<128x32xf32>
      %c4_217 = arith.constant 4 : index
      %447 = memref.load %arg2[%c4_217] : memref<8xf32, #tpu.memory_space<smem>>
      %448 = vector.broadcast %447 : f32 to vector<128x32xf32>
      %449 = arith.mulf %448, %444 : vector<128x32xf32>
      %450 = arith.select %446, %444, %449 : vector<128x32xi1>, vector<128x32xf32>
      %c0_218 = arith.constant 0 : index
      %c5_219 = arith.constant 5 : index
      %451 = vector.load %arg12[%c0_218, %c5_219] : memref<128x8xf32, #tpu.memory_space<vmem>>, vector<128x1xf32>
      %cst_220 = arith.constant 1.000000e-30 : f32
      %452 = vector.broadcast %cst_220 : f32 to vector<128x1xf32>
      %453 = arith.maximumf %451, %452 : vector<128x1xf32>
      %454 = tpu.reciprocal %453 {approx = true} : vector<128x1xf32> -> vector<128x1xf32>
      %cst_221 = arith.constant 0.000000e+00 : f32
      %455 = vector.broadcast %cst_221 : f32 to vector<128x1xf32>
      %456 = arith.cmpf ogt, %451, %455 : vector<128x1xf32>
      %cst_222 = arith.constant 0.000000e+00 : f32
      %457 = vector.broadcast %cst_222 : f32 to vector<128x1xf32>
      %458 = arith.select %456, %454, %457 : vector<128x1xi1>, vector<128x1xf32>
      %c0_223 = arith.constant 0 : index
      %c160_224 = arith.constant 160 : index
      %459 = vector.load %arg13[%c0_223, %c160_224] : memref<128x256xf32, #tpu.memory_space<vmem>>, vector<128x32xf32>
      %460 = vector.broadcast %458 : vector<128x1xf32> to vector<128x32xf32>
      %461 = arith.mulf %459, %460 : vector<128x32xf32>
      %cst_225 = arith.constant 0.000000e+00 : f32
      %462 = vector.broadcast %cst_225 : f32 to vector<128x32xf32>
      %463 = arith.cmpf ogt, %461, %462 : vector<128x32xf32>
      %c5_226 = arith.constant 5 : index
      %464 = memref.load %arg2[%c5_226] : memref<8xf32, #tpu.memory_space<smem>>
      %465 = vector.broadcast %464 : f32 to vector<128x32xf32>
      %466 = arith.mulf %465, %461 : vector<128x32xf32>
      %467 = arith.select %463, %461, %466 : vector<128x32xi1>, vector<128x32xf32>
      %c0_227 = arith.constant 0 : index
      %c6_228 = arith.constant 6 : index
      %468 = vector.load %arg12[%c0_227, %c6_228] : memref<128x8xf32, #tpu.memory_space<vmem>>, vector<128x1xf32>
      %cst_229 = arith.constant 1.000000e-30 : f32
      %469 = vector.broadcast %cst_229 : f32 to vector<128x1xf32>
      %470 = arith.maximumf %468, %469 : vector<128x1xf32>
      %471 = tpu.reciprocal %470 {approx = true} : vector<128x1xf32> -> vector<128x1xf32>
      %cst_230 = arith.constant 0.000000e+00 : f32
      %472 = vector.broadcast %cst_230 : f32 to vector<128x1xf32>
      %473 = arith.cmpf ogt, %468, %472 : vector<128x1xf32>
      %cst_231 = arith.constant 0.000000e+00 : f32
      %474 = vector.broadcast %cst_231 : f32 to vector<128x1xf32>
      %475 = arith.select %473, %471, %474 : vector<128x1xi1>, vector<128x1xf32>
      %c0_232 = arith.constant 0 : index
      %c192_233 = arith.constant 192 : index
      %476 = vector.load %arg13[%c0_232, %c192_233] : memref<128x256xf32, #tpu.memory_space<vmem>>, vector<128x32xf32>
      %477 = vector.broadcast %475 : vector<128x1xf32> to vector<128x32xf32>
      %478 = arith.mulf %476, %477 : vector<128x32xf32>
      %cst_234 = arith.constant 0.000000e+00 : f32
      %479 = vector.broadcast %cst_234 : f32 to vector<128x32xf32>
      %480 = arith.cmpf ogt, %478, %479 : vector<128x32xf32>
      %c6_235 = arith.constant 6 : index
      %481 = memref.load %arg2[%c6_235] : memref<8xf32, #tpu.memory_space<smem>>
      %482 = vector.broadcast %481 : f32 to vector<128x32xf32>
      %483 = arith.mulf %482, %478 : vector<128x32xf32>
      %484 = arith.select %480, %478, %483 : vector<128x32xi1>, vector<128x32xf32>
      %c0_236 = arith.constant 0 : index
      %c7_237 = arith.constant 7 : index
      %485 = vector.load %arg12[%c0_236, %c7_237] : memref<128x8xf32, #tpu.memory_space<vmem>>, vector<128x1xf32>
      %cst_238 = arith.constant 1.000000e-30 : f32
      %486 = vector.broadcast %cst_238 : f32 to vector<128x1xf32>
      %487 = arith.maximumf %485, %486 : vector<128x1xf32>
      %488 = tpu.reciprocal %487 {approx = true} : vector<128x1xf32> -> vector<128x1xf32>
      %cst_239 = arith.constant 0.000000e+00 : f32
      %489 = vector.broadcast %cst_239 : f32 to vector<128x1xf32>
      %490 = arith.cmpf ogt, %485, %489 : vector<128x1xf32>
      %cst_240 = arith.constant 0.000000e+00 : f32
      %491 = vector.broadcast %cst_240 : f32 to vector<128x1xf32>
      %492 = arith.select %490, %488, %491 : vector<128x1xi1>, vector<128x1xf32>
      %c0_241 = arith.constant 0 : index
      %c224_242 = arith.constant 224 : index
      %493 = vector.load %arg13[%c0_241, %c224_242] : memref<128x256xf32, #tpu.memory_space<vmem>>, vector<128x32xf32>
      %494 = vector.broadcast %492 : vector<128x1xf32> to vector<128x32xf32>
      %495 = arith.mulf %493, %494 : vector<128x32xf32>
      %cst_243 = arith.constant 0.000000e+00 : f32
      %496 = vector.broadcast %cst_243 : f32 to vector<128x32xf32>
      %497 = arith.cmpf ogt, %495, %496 : vector<128x32xf32>
      %c7_244 = arith.constant 7 : index
      %498 = memref.load %arg2[%c7_244] : memref<8xf32, #tpu.memory_space<smem>>
      %499 = vector.broadcast %498 : f32 to vector<128x32xf32>
      %500 = arith.mulf %499, %495 : vector<128x32xf32>
      %501 = arith.select %497, %495, %500 : vector<128x32xi1>, vector<128x32xf32>
      %502 = tpu.concatenate %382, %399, %416, %433, %450, %467, %484, %501 in 1 : vector<128x32xf32>, vector<128x32xf32>, vector<128x32xf32>, vector<128x32xf32>, vector<128x32xf32>, vector<128x32xf32>, vector<128x32xf32>, vector<128x32xf32> -> vector<128x256xf32>
      %c0_245 = arith.constant 0 : index
      %c0_246 = arith.constant 0 : index
      %503 = vector.load %arg10[%c0_245, %c0_246] : memref<128x256xf32, #tpu.memory_space<vmem>>, vector<128x256xf32>
      tpu.vector_store %arg10[%c0_245, %c0_246], %502 {strides = array<i32>} : memref<128x256xf32, #tpu.memory_space<vmem>>, vector<128x256xf32>,
    } else {
    }
    return
  }
  func.func @transform_0(%arg0: i32, %arg1: i32) -> i32 {
    %c0_i32 = arith.constant 0 : i32
    %c0_i32_0 = arith.constant 0 : i32
    return %c0_i32 : i32
  }
  func.func @transform_1(%arg0: i32, %arg1: i32) -> (i32, i32) {
    %c0_i32 = arith.constant 0 : i32
    return %arg0, %arg1 : i32, i32
  }
  func.func @transform_2(%arg0: i32, %arg1: i32) -> (i32, i32) {
    %c0_i32 = arith.constant 0 : i32
    %c0_i32_0 = arith.constant 0 : i32
    return %arg0, %c0_i32 : i32, i32
  }
  func.func @transform_3(%arg0: i32, %arg1: i32) -> (i32, i32) {
    %c0_i32 = arith.constant 0 : i32
    %c0_i32_0 = arith.constant 0 : i32
    return %arg1, %c0_i32 : i32, i32
  }
  func.func @transform_4(%arg0: i32, %arg1: i32) -> (i32, i32) {
    %c0_i32 = arith.constant 0 : i32
    %c0_i32_0 = arith.constant 0 : i32
    return %c0_i32, %arg1 : i32, i32
  }
  func.func @transform_5(%arg0: i32, %arg1: i32) -> (i32, i32) {
    %c0_i32 = arith.constant 0 : i32
    %c0_i32_0 = arith.constant 0 : i32
    %c0_i32_1 = arith.constant 0 : i32
    return %c0_i32, %c0_i32_0 : i32, i32
  }
  func.func @transform_6(%arg0: i32, %arg1: i32) -> (i32, i32) {
    %c0_i32 = arith.constant 0 : i32
    %c0_i32_0 = arith.constant 0 : i32
    %c0_i32_1 = arith.constant 0 : i32
    return %c0_i32, %c0_i32_0 : i32, i32
  }
  func.func @transform_7(%arg0: i32, %arg1: i32) -> (i32, i32) {
    %c0_i32 = arith.constant 0 : i32
    %c0_i32_0 = arith.constant 0 : i32
    %c0_i32_1 = arith.constant 0 : i32
    return %c0_i32, %c0_i32_0 : i32, i32
  }
  func.func @transform_8(%arg0: i32, %arg1: i32) -> (i32, i32) {
    %c0_i32 = arith.constant 0 : i32
    %c0_i32_0 = arith.constant 0 : i32
    return %arg0, %c0_i32 : i32, i32
  }
}

</mosaic_0001>

<llo_original>
// kernel: tpu_custom_call.1
$region0: #{tpu_custom_call.1}
  #allocation0 [shape = 'u32[]', space=smem, size = 0x4, offset = 0x4, fixed_abs, tag = 'smem constant byte address 0x4 - core index']
  #allocation1 [shape = 'u32[144,128]{1,0:T(1,128)}', space=vmem, size = 0x12000, scoped, tag = 'internal scratch']
  #allocation2 [shape = 'f32[128,8]{1,0:T(8,128)}', space=vmem, size = 0x10000, scoped, tag = 'scratch operand']
  #allocation3 [shape = 'f32[128,8]{1,0:T(8,128)}', space=vmem, size = 0x10000, scoped, tag = 'scratch operand']
  #allocation4 [shape = 'f32[128,256]{1,0:T(8,128)}', space=vmem, size = 0x20000, scoped, tag = 'scratch operand']
  %s0 = inlined_call_operand.vmem [shape: f32[8], index: 0, kind: input, shape index: {}]
  %s1 = inlined_call_operand.vmem [shape: bf16[256,256], index: 1, kind: input, shape index: {}]
  %s2 = inlined_call_operand.vmem [shape: bf16[256,16], index: 2, kind: input, shape index: {}]
  %s3 = inlined_call_operand.vmem [shape: bf16[256,16], index: 3, kind: input, shape index: {}]
  %s4 = inlined_call_operand.vmem [shape: bf16[16,256], index: 4, kind: input, shape index: {}]
  %s5 = inlined_call_operand.vmem [shape: bf16[16,256], index: 5, kind: input, shape index: {}]
  %s6 = inlined_call_operand.vmem [shape: bf16[16,8], index: 6, kind: input, shape index: {}]
  %s7 = inlined_call_operand.vmem [shape: bf16[8,16], index: 7, kind: input, shape index: {}]
  %s8 = inlined_call_operand.hbm [shape: f32[256,256], index: 8, kind: output, shape index: {}]
  %s9 = sld [smem:[#allocation0]]
  $region159: #{tpu_custom_call.1} parent=0
    _
  %s11 = ssub.s32 1, %s9
  %s12 = scalar_select 0, %s11, %s9
  $region1: #{tpu_custom_call.1} parent=0
    #allocation5 [shape = 'u8[512]{0}', space=smem, size = 0x200, scoped, tag = 'input window, operand 0, single buffered']
    #allocation6 [shape = 's32[2]{0}', space=sflag, size = 0x8, scoped, tag = 'scoped memory for tpu_custom_call.1']
    #allocation7 [shape = 's32[2]{0}', space=sflag, size = 0x8, scoped, tag = 'scoped memory for tpu_custom_call.1']
    #allocation8 [shape = 'u8[65536]{0}', space=vmem, size = 0x10000, scoped, tag = 'input window, operand 1']
    #allocation9 [shape = 'u8[8192]{0}', space=vmem, size = 0x2000, scoped, tag = 'input window, operand 4']
    #allocation10 [shape = 'u8[262144]{0}', space=vmem, size = 0x40000, scoped, tag = 'output window, operand 0']
    %13 = vsyncpa [#allocation7], 0
    %14 = vsyncpa [#allocation6], 0
    %s15 = scalar_lea.sflag [#allocation6], 1
    %16 = vsyncpa %s15, 0
    loop: start=0, step=1, limit=6
    $region2: #{tpu_custom_call.1} parent=1 // loop_pre_header
      _
    $region3: #{tpu_custom_call.1} parent=1 // loop_header
      %s18 = sphi 0, %s22
      %p19 = scmp.ge.s32.totalorder %s18, 6
      %s25 = sphi 0, %s37
      %s26 = sphi 0, %s33
      %s27 = sphi 0, %s25
      %s28 = sphi 0, %s26
      %s29 = sphi 0, %s27
      %s30 = sphi 0, %s28
      %s38 = sphi 0, %s38
      %s40 = sphi 0, %s38
      %s41 = sphi 0, %s40
      %s55 = sphi 0, %s41
      %s63 = sphi 0, %s65
      %s66 = sphi 0, %s63
      %s67 = sphi 0, %s66
      %s83 = sphi 0, %s67
      %s89 = sphi 0, %s91
      %s92 = sphi 0, %s89
      %s93 = sphi 0, %s92
      %s109 = sphi 0, %s93
      %s115 = sphi 0, %s117
      %s118 = sphi 0, %s115
      %s119 = sphi 0, %s118
      %s135 = sphi 0, %s119
      %s141 = sphi 0, %s143
      %s144 = sphi 0, %s141
      %s145 = sphi 0, %s144
      %s161 = sphi 0, %s145
      %s165 = sphi 0, %s165
      %s167 = sphi 0, %s165
      %s168 = sphi 0, %s167
      %s182 = sphi 0, %s168
      %s186 = sphi 0, %s186
      %s188 = sphi 0, %s186
      %s189 = sphi 0, %s188
      %s203 = sphi 0, %s189
      %s207 = sphi 0, %s207
      %s209 = sphi 0, %s207
      %s210 = sphi 0, %s209
      %s224 = sphi 0, %s210
      %s230 = sphi 0, %s232
      %s233 = sphi 0, %s230
      %s234 = sphi 0, %s233
      %s250 = sphi 0, %s234
    $region4: #{tpu_custom_call.1} parent=1 // loop_header_branch
      %21 = sbr.rel (%p19) target = $region8
    $region5: #{tpu_custom_call.1} parent=1 // loop_body
      %s23 = ssub.s32 %s18, 1
      %s24 = ssub.s32 %s18, 2
      %s31 = sadd.s32 1, %s26
      %p32 = scmp.ge.s32.totalorder %s31, 2
      %s33 = scalar_select %p32, 0, %s31
      %s34 = sadd.s32 1, %s25
      %s35 = scalar_select %p32, %s34, %s25
      %p36 = scmp.ge.s32.totalorder %s35, 2
      %s37 = scalar_select %p36, 0, %s35
      %s39 = sadd.s32 %s38, 1
      %p42 = scmp.eq.s32.totalorder %s18, 3
      %p43 = scmp.ne.s32.totalorder %s38, %s40
      %p44 = scmp.eq.s32.totalorder %s18, 0
      %p45 = por %p43, %p44
      %p46 = scmp.ne.s32.totalorder %s38, %s40
      %p47 = scmp.eq.s32.totalorder %s23, 3
      %p48 = por %p46, %p47
      %p49 = scmp.ne.s32.totalorder %s40, %s41
      %p50 = scmp.eq.s32.totalorder %s23, 0
      %p51 = por %p49, %p50
      %p52 = scmp.ne.s32.totalorder %s40, %s41
      %p53 = scmp.eq.s32.totalorder %s24, 3
      %p54 = por %p52, %p53
      %p56 = scmp.ne.s32.totalorder %s41, %s55
      %p57 = scmp.eq.s32.totalorder %s24, 0
      %p58 = por %p56, %p57
      %s59 = ssub.s32 %s25, %s37
      %s60 = ssub.s32 %s26, %s33
      %s61 = sor.u32 %s59, %s60
      %p62 = scmp.eq.s32.totalorder %s61, 0
      %s64 = sadd.s32 %s63, 1
      %s65 = scalar_select %p62, %s63, %s64
      %p68 = pneg %p62
      %p69 = scmp.eq.s32.totalorder %s18, 3
      %p70 = por %p68, %p69
      %p71 = scmp.ne.s32.totalorder %s63, %s66
      %p72 = scmp.eq.s32.totalorder %s18, 0
      %p73 = por %p71, %p72
      %p74 = scmp.ne.s32.totalorder %s63, %s66
      %p75 = scmp.eq.s32.totalorder %s23, 3
      %p76 = por %p74, %p75
      %p77 = scmp.ne.s32.totalorder %s66, %s67
      %p78 = scmp.eq.s32.totalorder %s23, 0
      %p79 = por %p77, %p78
      %p80 = scmp.ne.s32.totalorder %s66, %s67
      %p81 = scmp.eq.s32.totalorder %s24, 3
      %p82 = por %p80, %p81
      %p84 = scmp.ne.s32.totalorder %s67, %s83
      %p85 = scmp.eq.s32.totalorder %s24, 0
      %p86 = por %p84, %p85
      %s87 = ssub.s32 %s25, %s37
      %p88 = scmp.eq.s32.totalorder %s87, 0
      %s90 = sadd.s32 %s89, 1
      %s91 = scalar_select %p88, %s89, %s90
      %p94 = pneg %p88
      %p95 = scmp.eq.s32.totalorder %s18, 3
      %p96 = por %p94, %p95
      %p97 = scmp.ne.s32.totalorder %s89, %s92
      %p98 = scmp.eq.s32.totalorder %s18, 0
      %p99 = por %p97, %p98
      %p100 = scmp.ne.s32.totalorder %s89, %s92
      %p101 = scmp.eq.s32.totalorder %s23, 3
      %p102 = por %p100, %p101
      %p103 = scmp.ne.s32.totalorder %s92, %s93
      %p104 = scmp.eq.s32.totalorder %s23, 0
      %p105 = por %p103, %p104
      %p106 = scmp.ne.s32.totalorder %s92, %s93
      %p107 = scmp.eq.s32.totalorder %s24, 3
      %p108 = por %p106, %p107
      %p110 = scmp.ne.s32.totalorder %s93, %s109
      %p111 = scmp.eq.s32.totalorder %s24, 0
      %p112 = por %p110, %p111
      %s113 = ssub.s32 %s26, %s33
      %p114 = scmp.eq.s32.totalorder %s113, 0
      %s116 = sadd.s32 %s115, 1
      %s117 = scalar_select %p114, %s115, %s116
      %p120 = pneg %p114
      %p121 = scmp.eq.s32.totalorder %s18, 3
      %p122 = por %p120, %p121
      %p123 = scmp.ne.s32.totalorder %s115, %s118
      %p124 = scmp.eq.s32.totalorder %s18, 0
      %p125 = por %p123, %p124
      %p126 = scmp.ne.s32.totalorder %s115, %s118
      %p127 = scmp.eq.s32.totalorder %s23, 3
      %p128 = por %p126, %p127
      %p129 = scmp.ne.s32.totalorder %s118, %s119
      %p130 = scmp.eq.s32.totalorder %s23, 0
      %p131 = por %p129, %p130
      %p132 = scmp.ne.s32.totalorder %s118, %s119
      %p133 = scmp.eq.s32.totalorder %s24, 3
      %p134 = por %p132, %p133
      %p136 = scmp.ne.s32.totalorder %s119, %s135
      %p137 = scmp.eq.s32.totalorder %s24, 0
      %p138 = por %p136, %p137
      %s139 = ssub.s32 %s26, %s33
      %p140 = scmp.eq.s32.totalorder %s139, 0
      %s142 = sadd.s32 %s141, 1
      %s143 = scalar_select %p140, %s141, %s142
      %p146 = pneg %p140
      %p147 = scmp.eq.s32.totalorder %s18, 3
      %p148 = por %p146, %p147
      %p149 = scmp.ne.s32.totalorder %s141, %s144
      %p150 = scmp.eq.s32.totalorder %s18, 0
      %p151 = por %p149, %p150
      %p152 = scmp.ne.s32.totalorder %s141, %s144
      %p153 = scmp.eq.s32.totalorder %s23, 3
      %p154 = por %p152, %p153
      %p155 = scmp.ne.s32.totalorder %s144, %s145
      %p156 = scmp.eq.s32.totalorder %s23, 0
      %p157 = por %p155, %p156
      %p158 = scmp.ne.s32.totalorder %s144, %s145
      %p159 = scmp.eq.s32.totalorder %s24, 3
      %p160 = por %p158, %p159
      %p162 = scmp.ne.s32.totalorder %s145, %s161
      %p163 = scmp.eq.s32.totalorder %s24, 0
      %p164 = por %p162, %p163
      %s166 = sadd.s32 %s165, 1
      %p169 = scmp.eq.s32.totalorder %s18, 3
      %p170 = scmp.ne.s32.totalorder %s165, %s167
      %p171 = scmp.eq.s32.totalorder %s18, 0
      %p172 = por %p170, %p171
      %p173 = scmp.ne.s32.totalorder %s165, %s167
      %p174 = scmp.eq.s32.totalorder %s23, 3
      %p175 = por %p173, %p174
      %p176 = scmp.ne.s32.totalorder %s167, %s168
      %p177 = scmp.eq.s32.totalorder %s23, 0
      %p178 = por %p176, %p177
      %p179 = scmp.ne.s32.totalorder %s167, %s168
      %p180 = scmp.eq.s32.totalorder %s24, 3
      %p181 = por %p179, %p180
      %p183 = scmp.ne.s32.totalorder %s168, %s182
      %p184 = scmp.eq.s32.totalorder %s24, 0
      %p185 = por %p183, %p184
      %s187 = sadd.s32 %s186, 1
      %p190 = scmp.eq.s32.totalorder %s18, 3
      %p191 = scmp.ne.s32.totalorder %s186, %s188
      %p192 = scmp.eq.s32.totalorder %s18, 0
      %p193 = por %p191, %p192
      %p194 = scmp.ne.s32.totalorder %s186, %s188
      %p195 = scmp.eq.s32.totalorder %s23, 3
      %p196 = por %p194, %p195
      %p197 = scmp.ne.s32.totalorder %s188, %s189
      %p198 = scmp.eq.s32.totalorder %s23, 0
      %p199 = por %p197, %p198
      %p200 = scmp.ne.s32.totalorder %s188, %s189
      %p201 = scmp.eq.s32.totalorder %s24, 3
      %p202 = por %p200, %p201
      %p204 = scmp.ne.s32.totalorder %s189, %s203
      %p205 = scmp.eq.s32.totalorder %s24, 0
      %p206 = por %p204, %p205
      %s208 = sadd.s32 %s207, 1
      %p211 = scmp.eq.s32.totalorder %s18, 3
      %p212 = scmp.ne.s32.totalorder %s207, %s209
      %p213 = scmp.eq.s32.totalorder %s18, 0
      %p214 = por %p212, %p213
      %p215 = scmp.ne.s32.totalorder %s207, %s209
      %p216 = scmp.eq.s32.totalorder %s23, 3
      %p217 = por %p215, %p216
      %p218 = scmp.ne.s32.totalorder %s209, %s210
      %p219 = scmp.eq.s32.totalorder %s23, 0
      %p220 = por %p218, %p219
      %p221 = scmp.ne.s32.totalorder %s209, %s210
      %p222 = scmp.eq.s32.totalorder %s24, 3
      %p223 = por %p221, %p222
      %p225 = scmp.ne.s32.totalorder %s210, %s224
      %p226 = scmp.eq.s32.totalorder %s24, 0
      %p227 = por %p225, %p226
      %s228 = ssub.s32 %s25, %s37
      %p229 = scmp.eq.s32.totalorder %s228, 0
      %s231 = sadd.s32 %s230, 1
      %s232 = scalar_select %p229, %s230, %s231
      %p235 = pneg %p229
      %p236 = scmp.eq.s32.totalorder %s18, 3
      %p237 = por %p235, %p236
      %p238 = scmp.ne.s32.totalorder %s230, %s233
      %p239 = scmp.eq.s32.totalorder %s18, 0
      %p240 = por %p238, %p239
      %p241 = scmp.ne.s32.totalorder %s230, %s233
      %p242 = scmp.eq.s32.totalorder %s23, 3
      %p243 = por %p241, %p242
      %p244 = scmp.ne.s32.totalorder %s233, %s234
      %p245 = scmp.eq.s32.totalorder %s23, 0
      %p246 = por %p244, %p245
      %p247 = scmp.ne.s32.totalorder %s233, %s234
      %p248 = scmp.eq.s32.totalorder %s24, 3
      %p249 = por %p247, %p248
      %p251 = scmp.ne.s32.totalorder %s234, %s250
      %p252 = scmp.eq.s32.totalorder %s24, 0
      %p253 = por %p251, %p252
      %p254 = scmp.le.s32.totalorder 1, %s18
      %p255 = scmp.lt.s32.totalorder %s18, 5
      %p256 = pnand %p254, %p255
      %p257 = pneg %p256
      // Predicated region
      $region9: #{tpu_custom_call.1} parent=5 // pred_check
        _
      $region10: #{tpu_custom_call.1} parent=5 // pred_check_branch
        %259 = sbr.rel (%p256) target = $region12
      $region11: #{tpu_custom_call.1} parent=5 // pred_region
        %s260 = ssub.s32 %s18, 1
        // Predicated region
        $region13: #{tpu_custom_call.1} parent=11 // pred_check
          %p261 = pneg %p51
        $region14: #{tpu_custom_call.1} parent=11 // pred_check_branch
          %263 = sbr.rel (%p261) target = $region16
        $region15: #{tpu_custom_call.1} parent=11 // pred_region
          %s265 = ssub.s32 16, 16
          %266 = vsyncadd [#allocation7], %s265
          %s268 = sshll.u32 %s0, 4
          %s269 = int_to_ptr.vmem [resolvable:$true] %s268
          %271 = dma.vmem_to_smem %s269, 16, [#allocation5], [#allocation7]
        $region16: #{tpu_custom_call.1} parent=11 // pred_fallthru
          _
        // Predicated region
        $region17: #{tpu_custom_call.1} parent=11 // pred_check
          %p272 = pneg %p178
        $region18: #{tpu_custom_call.1} parent=11 // pred_check_branch
          %274 = sbr.rel (%p272) target = $region20
        $region19: #{tpu_custom_call.1} parent=11 // pred_region
          _
        $region20: #{tpu_custom_call.1} parent=11 // pred_fallthru
          _
        // Predicated region
        $region21: #{tpu_custom_call.1} parent=11 // pred_check
          %p275 = pneg %p199
        $region22: #{tpu_custom_call.1} parent=11 // pred_check_branch
          %277 = sbr.rel (%p275) target = $region24
        $region23: #{tpu_custom_call.1} parent=11 // pred_region
          _
        $region24: #{tpu_custom_call.1} parent=11 // pred_fallthru
          _
        // Predicated region
        $region25: #{tpu_custom_call.1} parent=11 // pred_check
          %p278 = pneg %p220
        $region26: #{tpu_custom_call.1} parent=11 // pred_check_branch
          %280 = sbr.rel (%p278) target = $region28
        $region27: #{tpu_custom_call.1} parent=11 // pred_region
          _
        $region28: #{tpu_custom_call.1} parent=11 // pred_fallthru
          _
      $region12: #{tpu_custom_call.1} parent=5 // pred_fallthru
        _
      %p281 = scmp.lt.s32.totalorder %s18, 4
      // Predicated region
      $region29: #{tpu_custom_call.1} parent=5 // pred_check
        %p282 = pneg %p281
      $region30: #{tpu_custom_call.1} parent=5 // pred_check_branch
        %284 = sbr.rel (%p282) target = $region32
      $region31: #{tpu_custom_call.1} parent=5 // pred_region
        // Predicated region
        $region33: #{tpu_custom_call.1} parent=31 // pred_check
          %p285 = pneg %p73
        $region34: #{tpu_custom_call.1} parent=31 // pred_check_branch
          %287 = sbr.rel (%p285) target = $region36
        $region35: #{tpu_custom_call.1} parent=31 // pred_region
          %s288 = sand.u32 %s63, 1
          %s289 = sand.u32 %s63, 1
          %s290 = smul.addr %s289, 64
          %s291 = scalar_lea.vmem [#allocation8], %s290
          %s292 = smul.u32 16, %s25
          %s293 = smul.addr %s292, 2
          %s294 = sadd.s32 %s26, %s293
          %s295 = smul.addr %s294, 4
          %s296 = scalar_lea.vmem %s1, %s295
          // Predicated region
          $region37: #{tpu_custom_call.1} parent=35 // pred_check
            _
          $region38: #{tpu_custom_call.1} parent=35 // pred_check_branch
            %298 = sbr.rel (0) target = $region40
          $region39: #{tpu_custom_call.1} parent=35 // pred_region
            // Predicated region
            $region41: #{tpu_custom_call.1} parent=39 // pred_check
              _
            $region42: #{tpu_custom_call.1} parent=39 // pred_check_branch
              %300 = sbr.rel target = $region44
            $region43: #{tpu_custom_call.1} parent=39 // pred_region
              // Predicated region
              $region56: #{tpu_custom_call.1} parent=43 // pred_check
                _
              $region57: #{tpu_custom_call.1} parent=43 // pred_check_branch
                %346 = sbr.rel (0) target = $region59
              $region58: #{tpu_custom_call.1} parent=43 // pred_region
                loop: start=0, step=1, limit=1
                $region60: #{tpu_custom_call.1} parent=58 // loop_pre_header
                  _
                $region61: #{tpu_custom_call.1} parent=58 // loop_header
                  %s348 = sphi 0, %s352
                  %p349 = scmp.ge.s32.totalorder %s348, 1
                  %s353 = sphi %s296, %s296
                  %s354 = sphi %s291, %s291
                $region62: #{tpu_custom_call.1} parent=58 // loop_header_branch
                  %351 = sbr.rel (%p349) target = $region66
                $region63: #{tpu_custom_call.1} parent=58 // loop_body
                  _
                $region64: #{tpu_custom_call.1} parent=58 // loop_footer
                  %s352 = sadd.s32 1, %s348
                $region65: #{tpu_custom_call.1} parent=58 // loop_footer_branch
                  %347 = sbr.rel target = $region61
                $region66: #{tpu_custom_call.1} parent=58 // loop_exit
                  _
                %s356 = ssub.s32 16, 1
                loop: start=0, step=1, limit=1
                $region67: #{tpu_custom_call.1} parent=58 // loop_pre_header
                  _
                $region68: #{tpu_custom_call.1} parent=58 // loop_header
                  %s358 = sphi 0, %s362
                  %p359 = scmp.ge.s32.totalorder %s358, 1
                  %s363 = sphi %s296, %s296
                  %s364 = sphi %s291, %s291
                $region69: #{tpu_custom_call.1} parent=58 // loop_header_branch
                  %361 = sbr.rel (%p359) target = $region73
                $region70: #{tpu_custom_call.1} parent=58 // loop_body
                  %v365 = vld [vmem:[%s363] sm:%s356]
                  %366 = vst [vmem:[%s364] sm:%s356] %v365
                  %v367 = vld [vmem:[%s363 + $0x8] sm:%s356]
                  %368 = vst [vmem:[%s364 + $0x4] sm:%s356] %v367
                  %v369 = vld [vmem:[%s363 + $0x10] sm:%s356]
                  %370 = vst [vmem:[%s364 + $0x8] sm:%s356] %v369
                  %v371 = vld [vmem:[%s363 + $0x18] sm:%s356]
                  %372 = vst [vmem:[%s364 + $0xc] sm:%s356] %v371
                  %v373 = vld [vmem:[%s363 + $0x20] sm:%s356]
                  %374 = vst [vmem:[%s364 + $0x10] sm:%s356] %v373
                  %v375 = vld [vmem:[%s363 + $0x28] sm:%s356]
                  %376 = vst [vmem:[%s364 + $0x14] sm:%s356] %v375
                  %v377 = vld [vmem:[%s363 + $0x30] sm:%s356]
                  %378 = vst [vmem:[%s364 + $0x18] sm:%s356] %v377
                  %v379 = vld [vmem:[%s363 + $0x38] sm:%s356]
                  %380 = vst [vmem:[%s364 + $0x1c] sm:%s356] %v379
                  %v381 = vld [vmem:[%s363 + $0x40] sm:%s356]
                  %382 = vst [vmem:[%s364 + $0x20] sm:%s356] %v381
                  %v383 = vld [vmem:[%s363 + $0x48] sm:%s356]
                  %384 = vst [vmem:[%s364 + $0x24] sm:%s356] %v383
                  %v385 = vld [vmem:[%s363 + $0x50] sm:%s356]
                  %386 = vst [vmem:[%s364 + $0x28] sm:%s356] %v385
                  %v387 = vld [vmem:[%s363 + $0x58] sm:%s356]
                  %388 = vst [vmem:[%s364 + $0x2c] sm:%s356] %v387
                  %v389 = vld [vmem:[%s363 + $0x60] sm:%s356]
                  %390 = vst [vmem:[%s364 + $0x30] sm:%s356] %v389
                  %v391 = vld [vmem:[%s363 + $0x68] sm:%s356]
                  %392 = vst [vmem:[%s364 + $0x34] sm:%s356] %v391
                  %v393 = vld [vmem:[%s363 + $0x70] sm:%s356]
                  %394 = vst [vmem:[%s364 + $0x38] sm:%s356] %v393
                  %v395 = vld [vmem:[%s363 + $0x78] sm:%s356]
                  %396 = vst [vmem:[%s364 + $0x3c] sm:%s356] %v395
                $region71: #{tpu_custom_call.1} parent=58 // loop_footer
                  %s362 = sadd.s32 1, %s358
                $region72: #{tpu_custom_call.1} parent=58 // loop_footer_branch
                  %357 = sbr.rel target = $region68
                $region73: #{tpu_custom_call.1} parent=58 // loop_exit
                  _
              $region59: #{tpu_custom_call.1} parent=43 // pred_fallthru
                _
            $region44: #{tpu_custom_call.1} parent=39 // pred_fallthru
              _
            // Predicated region
            $region45: #{tpu_custom_call.1} parent=39 // pred_check
              _
            $region46: #{tpu_custom_call.1} parent=39 // pred_check_branch
              %302 = sbr.rel (0) target = $region48
            $region47: #{tpu_custom_call.1} parent=39 // pred_region
              %s304 = ssub.s32 16, 1
              loop: start=0, step=1, limit=1
              $region49: #{tpu_custom_call.1} parent=47 // loop_pre_header
                _
              $region50: #{tpu_custom_call.1} parent=47 // loop_header
                %s306 = sphi 0, %s310
                %p307 = scmp.ge.s32.totalorder %s306, 1
                %s311 = sphi %s296, %s296
                %s312 = sphi %s291, %s291
              $region51: #{tpu_custom_call.1} parent=47 // loop_header_branch
                %309 = sbr.rel (%p307) target = $region55
              $region52: #{tpu_custom_call.1} parent=47 // loop_body
                %v313 = vld [vmem:[%s311] sm:%s304]
                %314 = vst [vmem:[%s312] sm:%s304] %v313
                %v315 = vld [vmem:[%s311 + $0x8] sm:%s304]
                %316 = vst [vmem:[%s312 + $0x4] sm:%s304] %v315
                %v317 = vld [vmem:[%s311 + $0x10] sm:%s304]
                %318 = vst [vmem:[%s312 + $0x8] sm:%s304] %v317
                %v319 = vld [vmem:[%s311 + $0x18] sm:%s304]
                %320 = vst [vmem:[%s312 + $0xc] sm:%s304] %v319
                %v321 = vld [vmem:[%s311 + $0x20] sm:%s304]
                %322 = vst [vmem:[%s312 + $0x10] sm:%s304] %v321
                %v323 = vld [vmem:[%s311 + $0x28] sm:%s304]
                %324 = vst [vmem:[%s312 + $0x14] sm:%s304] %v323
                %v325 = vld [vmem:[%s311 + $0x30] sm:%s304]
                %326 = vst [vmem:[%s312 + $0x18] sm:%s304] %v325
                %v327 = vld [vmem:[%s311 + $0x38] sm:%s304]
                %328 = vst [vmem:[%s312 + $0x1c] sm:%s304] %v327
                %v329 = vld [vmem:[%s311 + $0x40] sm:%s304]
                %330 = vst [vmem:[%s312 + $0x20] sm:%s304] %v329
                %v331 = vld [vmem:[%s311 + $0x48] sm:%s304]
                %332 = vst [vmem:[%s312 + $0x24] sm:%s304] %v331
                %v333 = vld [vmem:[%s311 + $0x50] sm:%s304]
                %334 = vst [vmem:[%s312 + $0x28] sm:%s304] %v333
                %v335 = vld [vmem:[%s311 + $0x58] sm:%s304]
                %336 = vst [vmem:[%s312 + $0x2c] sm:%s304] %v335
                %v337 = vld [vmem:[%s311 + $0x60] sm:%s304]
                %338 = vst [vmem:[%s312 + $0x30] sm:%s304] %v337
                %v339 = vld [vmem:[%s311 + $0x68] sm:%s304]
                %340 = vst [vmem:[%s312 + $0x34] sm:%s304] %v339
                %v341 = vld [vmem:[%s311 + $0x70] sm:%s304]
                %342 = vst [vmem:[%s312 + $0x38] sm:%s304] %v341
                %v343 = vld [vmem:[%s311 + $0x78] sm:%s304]
                %344 = vst [vmem:[%s312 + $0x3c] sm:%s304] %v343
              $region53: #{tpu_custom_call.1} parent=47 // loop_footer
                %s310 = sadd.s32 1, %s306
              $region54: #{tpu_custom_call.1} parent=47 // loop_footer_branch
                %305 = sbr.rel target = $region50
              $region55: #{tpu_custom_call.1} parent=47 // loop_exit
                _
            $region48: #{tpu_custom_call.1} parent=39 // pred_fallthru
              _
          $region40: #{tpu_custom_call.1} parent=35 // pred_fallthru
            _
          %397 = vnop
        $region36: #{tpu_custom_call.1} parent=31 // pred_fallthru
          _
        // Predicated region
        $region74: #{tpu_custom_call.1} parent=31 // pred_check
          %p398 = pneg %p99
        $region75: #{tpu_custom_call.1} parent=31 // pred_check_branch
          %400 = sbr.rel (%p398) target = $region77
        $region76: #{tpu_custom_call.1} parent=31 // pred_region
          %s401 = smul.u32 16, %s25
          %p402 = scmp.lt.s32.totalorder %s401, 31
          %s403 = scalar_select %p402, %s401, 31
          %s404 = smul.addr %s403, 4
          %s405 = scalar_lea.vmem %s2, %s404
          %s406 = smul.u32 16, %s25
        $region77: #{tpu_custom_call.1} parent=31 // pred_fallthru
          _
        // Predicated region
        $region78: #{tpu_custom_call.1} parent=31 // pred_check
          %p407 = pneg %p125
        $region79: #{tpu_custom_call.1} parent=31 // pred_check_branch
          %409 = sbr.rel (%p407) target = $region81
        $region80: #{tpu_custom_call.1} parent=31 // pred_region
          %s410 = smul.u32 16, %s26
          %p411 = scmp.lt.s32.totalorder %s410, 31
          %s412 = scalar_select %p411, %s410, 31
          %s413 = smul.addr %s412, 4
          %s414 = scalar_lea.vmem %s3, %s413
          %s415 = smul.u32 16, %s26
        $region81: #{tpu_custom_call.1} parent=31 // pred_fallthru
          _
        // Predicated region
        $region82: #{tpu_custom_call.1} parent=31 // pred_check
          %p416 = pneg %p151
        $region83: #{tpu_custom_call.1} parent=31 // pred_check_branch
          %418 = sbr.rel (%p416) target = $region85
        $region84: #{tpu_custom_call.1} parent=31 // pred_region
          %s419 = sand.u32 %s141, 1
          %s420 = sand.u32 %s141, 1
          %s421 = smul.addr %s420, 8
          %s422 = scalar_lea.vmem [#allocation9], %s421
          %s423 = smul.addr %s26, 4
          %s424 = scalar_lea.vmem %s4, %s423
          // Predicated region
          $region86: #{tpu_custom_call.1} parent=84 // pred_check
            _
          $region87: #{tpu_custom_call.1} parent=84 // pred_check_branch
            %426 = sbr.rel (0) target = $region89
          $region88: #{tpu_custom_call.1} parent=84 // pred_region
            // Predicated region
            $region90: #{tpu_custom_call.1} parent=88 // pred_check
              _
            $region91: #{tpu_custom_call.1} parent=88 // pred_check_branch
              %428 = sbr.rel target = $region93
            $region92: #{tpu_custom_call.1} parent=88 // pred_region
              // Predicated region
              $region105: #{tpu_custom_call.1} parent=92 // pred_check
                _
              $region106: #{tpu_custom_call.1} parent=92 // pred_check_branch
                %446 = sbr.rel (0) target = $region108
              $region107: #{tpu_custom_call.1} parent=92 // pred_region
                loop: start=0, step=1, limit=1
                $region109: #{tpu_custom_call.1} parent=107 // loop_pre_header
                  _
                $region110: #{tpu_custom_call.1} parent=107 // loop_header
                  %s448 = sphi 0, %s452
                  %p449 = scmp.ge.s32.totalorder %s448, 1
                  %s453 = sphi %s424, %s424
                  %s454 = sphi %s422, %s422
                $region111: #{tpu_custom_call.1} parent=107 // loop_header_branch
                  %451 = sbr.rel (%p449) target = $region115
                $region112: #{tpu_custom_call.1} parent=107 // loop_body
                  _
                $region113: #{tpu_custom_call.1} parent=107 // loop_footer
                  %s452 = sadd.s32 1, %s448
                $region114: #{tpu_custom_call.1} parent=107 // loop_footer_branch
                  %447 = sbr.rel target = $region110
                $region115: #{tpu_custom_call.1} parent=107 // loop_exit
                  _
                %s456 = ssub.s32 16, 1
                loop: start=0, step=1, limit=1
                $region116: #{tpu_custom_call.1} parent=107 // loop_pre_header
                  _
                $region117: #{tpu_custom_call.1} parent=107 // loop_header
                  %s458 = sphi 0, %s462
                  %p459 = scmp.ge.s32.totalorder %s458, 1
                  %s463 = sphi %s424, %s424
                  %s464 = sphi %s422, %s422
                $region118: #{tpu_custom_call.1} parent=107 // loop_header_branch
                  %461 = sbr.rel (%p459) target = $region122
                $region119: #{tpu_custom_call.1} parent=107 // loop_body
                  %v465 = vld [vmem:[%s463] sm:%s456]
                  %466 = vst [vmem:[%s464] sm:%s456] %v465
                  %v467 = vld [vmem:[%s463 + $0x8] sm:%s456]
                  %468 = vst [vmem:[%s464 + $0x4] sm:%s456] %v467
                $region120: #{tpu_custom_call.1} parent=107 // loop_footer
                  %s462 = sadd.s32 1, %s458
                $region121: #{tpu_custom_call.1} parent=107 // loop_footer_branch
                  %457 = sbr.rel target = $region117
                $region122: #{tpu_custom_call.1} parent=107 // loop_exit
                  _
              $region108: #{tpu_custom_call.1} parent=92 // pred_fallthru
                _
            $region93: #{tpu_custom_call.1} parent=88 // pred_fallthru
              _
            // Predicated region
            $region94: #{tpu_custom_call.1} parent=88 // pred_check
              _
            $region95: #{tpu_custom_call.1} parent=88 // pred_check_branch
              %430 = sbr.rel (0) target = $region97
            $region96: #{tpu_custom_call.1} parent=88 // pred_region
              %s432 = ssub.s32 16, 1
              loop: start=0, step=1, limit=1
              $region98: #{tpu_custom_call.1} parent=96 // loop_pre_header
                _
              $region99: #{tpu_custom_call.1} parent=96 // loop_header
                %s434 = sphi 0, %s438
                %p435 = scmp.ge.s32.totalorder %s434, 1
                %s439 = sphi %s424, %s424
                %s440 = sphi %s422, %s422
              $region100: #{tpu_custom_call.1} parent=96 // loop_header_branch
                %437 = sbr.rel (%p435) target = $region104
              $region101: #{tpu_custom_call.1} parent=96 // loop_body
                %v441 = vld [vmem:[%s439] sm:%s432]
                %442 = vst [vmem:[%s440] sm:%s432] %v441
                %v443 = vld [vmem:[%s439 + $0x8] sm:%s432]
                %444 = vst [vmem:[%s440 + $0x4] sm:%s432] %v443
              $region102: #{tpu_custom_call.1} parent=96 // loop_footer
                %s438 = sadd.s32 1, %s434
              $region103: #{tpu_custom_call.1} parent=96 // loop_footer_branch
                %433 = sbr.rel target = $region99
              $region104: #{tpu_custom_call.1} parent=96 // loop_exit
                _
            $region97: #{tpu_custom_call.1} parent=88 // pred_fallthru
              _
          $region89: #{tpu_custom_call.1} parent=84 // pred_fallthru
            _
          %469 = vnop
        $region85: #{tpu_custom_call.1} parent=31 // pred_fallthru
          _
      $region32: #{tpu_custom_call.1} parent=5 // pred_fallthru
        _
      %p470 = scmp.le.s32.totalorder 1, %s18
      %p471 = scmp.lt.s32.totalorder %s18, 5
      %p472 = pnand %p470, %p471
      %p473 = pneg %p472
      // Predicated region
      $region123: #{tpu_custom_call.1} parent=5 // pred_check
        _
      $region124: #{tpu_custom_call.1} parent=5 // pred_check_branch
        %475 = sbr.rel (%p472) target = $region126
      $region125: #{tpu_custom_call.1} parent=5 // pred_region
        %s476 = ssub.s32 %s18, 1
        // Predicated region
        $region127: #{tpu_custom_call.1} parent=125 // pred_check
          %p477 = pneg %p51
        $region128: #{tpu_custom_call.1} parent=125 // pred_check_branch
          %479 = sbr.rel (%p477) target = $region130
        $region129: #{tpu_custom_call.1} parent=125 // pred_region
          %480 = dma.done [#allocation7], 16
        $region130: #{tpu_custom_call.1} parent=125 // pred_fallthru
          _
        %s481 = sand.u32 %s66, 1
        %s482 = sand.u32 %s66, 1
        %s483 = smul.addr %s482, 64
        %s484 = scalar_lea.vmem [#allocation8], %s483
        // Predicated region
        $region131: #{tpu_custom_call.1} parent=125 // pred_check
          %p485 = pneg %p79
        $region132: #{tpu_custom_call.1} parent=125 // pred_check_branch
          %487 = sbr.rel (%p485) target = $region134
        $region133: #{tpu_custom_call.1} parent=125 // pred_region
          _
        $region134: #{tpu_custom_call.1} parent=125 // pred_fallthru
          _
        %s488 = sand.u32 %s144, 1
        %s489 = sand.u32 %s144, 1
        %s490 = smul.addr %s489, 8
        %s491 = scalar_lea.vmem [#allocation9], %s490
        // Predicated region
        $region135: #{tpu_custom_call.1} parent=125 // pred_check
          %p492 = pneg %p157
        $region136: #{tpu_custom_call.1} parent=125 // pred_check_branch
          %494 = sbr.rel (%p492) target = $region138
        $region137: #{tpu_custom_call.1} parent=125 // pred_region
          _
        $region138: #{tpu_custom_call.1} parent=125 // pred_fallthru
          _
        %495 = sfence
        %p496 = pneg %p51
        %p497 = pneg %p48
        %s498 = sand.u32 %s66, 1
        %s499 = sand.u32 %s66, 1
        %s500 = smul.addr %s499, 64
        %s501 = scalar_lea.vmem [#allocation8], %s500
        %p502 = pneg %p79
        %p503 = pneg %p76
        %s504 = smul.u32 16, %s27
        %p505 = scmp.lt.s32.totalorder %s504, 31
        %s506 = scalar_select %p505, %s504, 31
        %s507 = smul.addr %s506, 4
        %s508 = scalar_lea.vmem %s2, %s507
        %p509 = pneg %p105
        %p510 = pneg %p102
        %s511 = smul.u32 16, %s28
        %p512 = scmp.lt.s32.totalorder %s511, 31
        %s513 = scalar_select %p512, %s511, 31
        %s514 = smul.addr %s513, 4
        %s515 = scalar_lea.vmem %s3, %s514
        %p516 = pneg %p131
        %p517 = pneg %p128
        %s518 = sand.u32 %s144, 1
        %s519 = sand.u32 %s144, 1
        %s520 = smul.addr %s519, 8
        %s521 = scalar_lea.vmem [#allocation9], %s520
        %p522 = pneg %p157
        %p523 = pneg %p154
        %p524 = pneg %p178
        %p525 = pneg %p175
        %p526 = pneg %p199
        %p527 = pneg %p196
        %p528 = pneg %p220
        %p529 = pneg %p217
        %p530 = pneg %p246
        %p531 = pneg %p243
        %s532 = sand.u32 %s233, 1
        %s533 = scalar_lea.sflag [#allocation6], %s532
        %s534 = sand.u32 %s233, 1
        %s535 = smul.addr %s534, 256
        %s536 = scalar_lea.vmem [#allocation10], %s535
        %s537 = smul.u32 16, %s27
        %s538 = smul.u32 16, %s27
        %p539 = scmp.lt.s32.totalorder %s538, 31
        %s540 = scalar_select %p539, %s538, 31
        %s541 = smul.addr %s540, 4
        %s542 = scalar_lea.vmem %s2, %s541
        %s543 = smul.u32 16, %s27
        %s544 = smul.u32 16, %s28
        %p545 = scmp.lt.s32.totalorder %s544, 31
        %s546 = scalar_select %p545, %s544, 31
        %s547 = smul.addr %s546, 4
        %s548 = scalar_lea.vmem %s3, %s547
        %s549 = smul.u32 16, %s28
        %s550 = smul.u32 16, %s27
        %p552 = scmp.eq.s32.totalorder %s28, 0
        // Predicated region
        $region139: #{tpu_custom_call.1} parent=125 // pred_check
          %p553 = pneg %p552
        $region140: #{tpu_custom_call.1} parent=125 // pred_check_branch
          %555 = sbr.rel (%p553) target = $region142
        $region141: #{tpu_custom_call.1} parent=125 // pred_region
          %vm556 = vcmask 64512
          %557 = vst.msk [vmem:[#allocation2] sm:$0xff] %vm556, -1e+30
          %558 = vst.msk [vmem:[#allocation2 + $0x8] sm:$0xff] %vm556, -1e+30
          %559 = vst.msk [vmem:[#allocation2 + $0x10] sm:$0xff] %vm556, -1e+30
          %560 = vst.msk [vmem:[#allocation2 + $0x18] sm:$0xff] %vm556, -1e+30
          %561 = vst.msk [vmem:[#allocation2 + $0x20] sm:$0xff] %vm556, -1e+30
          %562 = vst.msk [vmem:[#allocation2 + $0x28] sm:$0xff] %vm556, -1e+30
          %563 = vst.msk [vmem:[#allocation2 + $0x30] sm:$0xff] %vm556, -1e+30
          %564 = vst.msk [vmem:[#allocation2 + $0x38] sm:$0xff] %vm556, -1e+30
          %565 = vst.msk [vmem:[#allocation2 + $0x40] sm:$0xff] %vm556, -1e+30
          %566 = vst.msk [vmem:[#allocation2 + $0x48] sm:$0xff] %vm556, -1e+30
          %567 = vst.msk [vmem:[#allocation2 + $0x50] sm:$0xff] %vm556, -1e+30
          %568 = vst.msk [vmem:[#allocation2 + $0x58] sm:$0xff] %vm556, -1e+30
          %569 = vst.msk [vmem:[#allocation2 + $0x60] sm:$0xff] %vm556, -1e+30
          %570 = vst.msk [vmem:[#allocation2 + $0x68] sm:$0xff] %vm556, -1e+30
          %571 = vst.msk [vmem:[#allocation2 + $0x70] sm:$0xff] %vm556, -1e+30
          %572 = vst.msk [vmem:[#allocation2 + $0x78] sm:$0xff] %vm556, -1e+30
          %573 = vst.msk [vmem:[#allocation3] sm:$0xff] %vm556, 0.0
          %574 = vst.msk [vmem:[#allocation3 + $0x8] sm:$0xff] %vm556, 0.0
          %575 = vst.msk [vmem:[#allocation3 + $0x10] sm:$0xff] %vm556, 0.0
          %576 = vst.msk [vmem:[#allocation3 + $0x18] sm:$0xff] %vm556, 0.0
          %577 = vst.msk [vmem:[#allocation3 + $0x20] sm:$0xff] %vm556, 0.0
          %578 = vst.msk [vmem:[#allocation3 + $0x28] sm:$0xff] %vm556, 0.0
          %579 = vst.msk [vmem:[#allocation3 + $0x30] sm:$0xff] %vm556, 0.0
          %580 = vst.msk [vmem:[#allocation3 + $0x38] sm:$0xff] %vm556, 0.0
          %581 = vst.msk [vmem:[#allocation3 + $0x40] sm:$0xff] %vm556, 0.0
          %582 = vst.msk [vmem:[#allocation3 + $0x48] sm:$0xff] %vm556, 0.0
          %583 = vst.msk [vmem:[#allocation3 + $0x50] sm:$0xff] %vm556, 0.0
          %584 = vst.msk [vmem:[#allocation3 + $0x58] sm:$0xff] %vm556, 0.0
          %585 = vst.msk [vmem:[#allocation3 + $0x60] sm:$0xff] %vm556, 0.0
          %586 = vst.msk [vmem:[#allocation3 + $0x68] sm:$0xff] %vm556, 0.0
          %587 = vst.msk [vmem:[#allocation3 + $0x70] sm:$0xff] %vm556, 0.0
          %588 = vst.msk [vmem:[#allocation3 + $0x78] sm:$0xff] %vm556, 0.0
          %589 = vst [vmem:[#allocation4] sm:$0xff] 0.0
          %590 = vst [vmem:[#allocation4 + $0x8] sm:$0xff] 0.0
          %591 = vst [vmem:[#allocation4 + $0x10] sm:$0xff] 0.0
          %592 = vst [vmem:[#allocation4 + $0x18] sm:$0xff] 0.0
          %593 = vst [vmem:[#allocation4 + $0x20] sm:$0xff] 0.0
          %594 = vst [vmem:[#allocation4 + $0x28] sm:$0xff] 0.0
          %595 = vst [vmem:[#allocation4 + $0x30] sm:$0xff] 0.0
          %596 = vst [vmem:[#allocation4 + $0x38] sm:$0xff] 0.0
          %597 = vst [vmem:[#allocation4 + $0x40] sm:$0xff] 0.0
          %598 = vst [vmem:[#allocation4 + $0x48] sm:$0xff] 0.0
          %599 = vst [vmem:[#allocation4 + $0x50] sm:$0xff] 0.0
          %600 = vst [vmem:[#allocation4 + $0x58] sm:$0xff] 0.0
          %601 = vst [vmem:[#allocation4 + $0x60] sm:$0xff] 0.0
          %602 = vst [vmem:[#allocation4 + $0x68] sm:$0xff] 0.0
          %603 = vst [vmem:[#allocation4 + $0x70] sm:$0xff] 0.0
          %604 = vst [vmem:[#allocation4 + $0x78] sm:$0xff] 0.0
          %605 = vst [vmem:[#allocation4 + $0x80] sm:$0xff] 0.0
          %606 = vst [vmem:[#allocation4 + $0x88] sm:$0xff] 0.0
          %607 = vst [vmem:[#allocation4 + $0x90] sm:$0xff] 0.0
          %608 = vst [vmem:[#allocation4 + $0x98] sm:$0xff] 0.0
          %609 = vst [vmem:[#allocation4 + $0xa0] sm:$0xff] 0.0
          %610 = vst [vmem:[#allocation4 + $0xa8] sm:$0xff] 0.0
          %611 = vst [vmem:[#allocation4 + $0xb0] sm:$0xff] 0.0
          %612 = vst [vmem:[#allocation4 + $0xb8] sm:$0xff] 0.0
          %613 = vst [vmem:[#allocation4 + $0xc0] sm:$0xff] 0.0
          %614 = vst [vmem:[#allocation4 + $0xc8] sm:$0xff] 0.0
          %615 = vst [vmem:[#allocation4 + $0xd0] sm:$0xff] 0.0
          %616 = vst [vmem:[#allocation4 + $0xd8] sm:$0xff] 0.0
          %617 = vst [vmem:[#allocation4 + $0xe0] sm:$0xff] 0.0
          %618 = vst [vmem:[#allocation4 + $0xe8] sm:$0xff] 0.0
          %619 = vst [vmem:[#allocation4 + $0xf0] sm:$0xff] 0.0
          %620 = vst [vmem:[#allocation4 + $0xf8] sm:$0xff] 0.0
        $region142: #{tpu_custom_call.1} parent=125 // pred_fallthru
          _
        %v621 = vld [vmem:[%s484] sm:$0xf]
        %v622 = vld [vmem:[%s484 + $0x4] sm:$0xf]
        %v623 = vld [vmem:[%s484 + $0x8] sm:$0xf]
        %v624 = vld [vmem:[%s484 + $0xc] sm:$0xf]
        %v625 = vld [vmem:[%s484 + $0x10] sm:$0xf]
        %v626 = vld [vmem:[%s484 + $0x14] sm:$0xf]
        %v627 = vld [vmem:[%s484 + $0x18] sm:$0xf]
        %v628 = vld [vmem:[%s484 + $0x1c] sm:$0xf]
        %v629 = vld [vmem:[%s484 + $0x20] sm:$0xf]
        %v630 = vld [vmem:[%s484 + $0x24] sm:$0xf]
        %v631 = vld [vmem:[%s484 + $0x28] sm:$0xf]
        %v632 = vld [vmem:[%s484 + $0x2c] sm:$0xf]
        %v633 = vld [vmem:[%s484 + $0x30] sm:$0xf]
        %v634 = vld [vmem:[%s484 + $0x34] sm:$0xf]
        %v635 = vld [vmem:[%s484 + $0x38] sm:$0xf]
        %v636 = vld [vmem:[%s484 + $0x3c] sm:$0xf]
        %v637 = vunpack.c.l.bf16 %v621
        %v638 = vunpack.c.l.bf16 %v622
        %v639 = vunpack.c.l.bf16 %v623
        %v640 = vunpack.c.l.bf16 %v624
        %v641 = vunpack.c.l.bf16 %v625
        %v642 = vunpack.c.l.bf16 %v626
        %v643 = vunpack.c.l.bf16 %v627
        %v644 = vunpack.c.l.bf16 %v628
        %v645 = vunpack.c.l.bf16 %v629
        %v646 = vunpack.c.l.bf16 %v630
        %v647 = vunpack.c.l.bf16 %v631
        %v648 = vunpack.c.l.bf16 %v632
        %v649 = vunpack.c.l.bf16 %v633
        %v650 = vunpack.c.l.bf16 %v634
        %v651 = vunpack.c.l.bf16 %v635
        %v652 = vunpack.c.l.bf16 %v636
        %vm653 = vcmp.ge.f32.partialorder %v637, 0.0
        %vm654 = vcmp.ge.f32.partialorder %v638, 0.0
        %vm655 = vcmp.ge.f32.partialorder %v639, 0.0
        %vm656 = vcmp.ge.f32.partialorder %v640, 0.0
        %vm657 = vcmp.ge.f32.partialorder %v641, 0.0
        %vm658 = vcmp.ge.f32.partialorder %v642, 0.0
        %vm659 = vcmp.ge.f32.partialorder %v643, 0.0
        %vm660 = vcmp.ge.f32.partialorder %v644, 0.0
        %vm661 = vcmp.ge.f32.partialorder %v645, 0.0
        %vm662 = vcmp.ge.f32.partialorder %v646, 0.0
        %vm663 = vcmp.ge.f32.partialorder %v647, 0.0
        %vm664 = vcmp.ge.f32.partialorder %v648, 0.0
        %vm665 = vcmp.ge.f32.partialorder %v649, 0.0
        %vm666 = vcmp.ge.f32.partialorder %v650, 0.0
        %vm667 = vcmp.ge.f32.partialorder %v651, 0.0
        %vm668 = vcmp.ge.f32.partialorder %v652, 0.0
        %v669 = vmax.f32 %v637, 0.0
        %v670 = vmax.f32 %v638, 0.0
        %v671 = vmax.f32 %v639, 0.0
        %v672 = vmax.f32 %v640, 0.0
        %v673 = vmax.f32 %v641, 0.0
        %v674 = vmax.f32 %v642, 0.0
        %v675 = vmax.f32 %v643, 0.0
        %v676 = vmax.f32 %v644, 0.0
        %v677 = vmax.f32 %v645, 0.0
        %v678 = vmax.f32 %v646, 0.0
        %v679 = vmax.f32 %v647, 0.0
        %v680 = vmax.f32 %v648, 0.0
        %v681 = vmax.f32 %v649, 0.0
        %v682 = vmax.f32 %v650, 0.0
        %v683 = vmax.f32 %v651, 0.0
        %v684 = vmax.f32 %v652, 0.0
        %v685 = vld [vmem:[%s548] sm:$0xf]
        %v686 = vld [vmem:[%s548 + $0x4] sm:$0xf]
        %v687 = vld [vmem:[%s548 + $0x8] sm:$0xf]
        %v688 = vld [vmem:[%s548 + $0xc] sm:$0xf]
        %v689 = vld [vmem:[%s548 + $0x10] sm:$0xf]
        %v690 = vld [vmem:[%s548 + $0x14] sm:$0xf]
        %v691 = vld [vmem:[%s548 + $0x18] sm:$0xf]
        %v692 = vld [vmem:[%s548 + $0x1c] sm:$0xf]
        %v693 = vld [vmem:[%s548 + $0x20] sm:$0xf]
        %v694 = vld [vmem:[%s548 + $0x24] sm:$0xf]
        %v695 = vld [vmem:[%s548 + $0x28] sm:$0xf]
        %v696 = vld [vmem:[%s548 + $0x2c] sm:$0xf]
        %v697 = vld [vmem:[%s548 + $0x30] sm:$0xf]
        %v698 = vld [vmem:[%s548 + $0x34] sm:$0xf]
        %v699 = vld [vmem:[%s548 + $0x38] sm:$0xf]
        %v700 = vld [vmem:[%s548 + $0x3c] sm:$0xf]
        %v701 = vld [vmem:[%s5] sm:$0xff]
        %v702 = vld [vmem:[%s5 + $0x8] sm:$0xff]
        %v719 = vunpack.c.l.b16 %v685
        %v720 = vunpack.c.l.b16 %v686
        %v721 = vunpack.c.l.b16 %v687
        %v722 = vunpack.c.l.b16 %v688
        %v723 = vunpack.c.l.b16 %v689
        %v724 = vunpack.c.l.b16 %v690
        %v725 = vunpack.c.l.b16 %v691
        %v726 = vunpack.c.l.b16 %v692
        %v727 = vunpack.c.l.b16 %v693
        %v728 = vunpack.c.l.b16 %v694
        %v729 = vunpack.c.l.b16 %v695
        %v730 = vunpack.c.l.b16 %v696
        %v731 = vunpack.c.l.b16 %v697
        %v732 = vunpack.c.l.b16 %v698
        %v733 = vunpack.c.l.b16 %v699
        %v734 = vunpack.c.l.b16 %v700
        %v735 = vpack.c.b16 %v720, %v719
        %v736 = vpack.c.b16 %v722, %v721
        %v737 = vpack.c.b16 %v724, %v723
        %v738 = vpack.c.b16 %v726, %v725
        %v739 = vpack.c.b16 %v728, %v727
        %v740 = vpack.c.b16 %v730, %v729
        %v741 = vpack.c.b16 %v732, %v731
        %v742 = vpack.c.b16 %v734, %v733
        %v745 = vunpack.c.l.b16 %v701
        %v746 = vunpack.c.h.b16 %v701
        %v747 = vunpack.c.l.b16 %v702
        %v748 = vunpack.c.h.b16 %v702
        %v749 = vpack.c.b16 %v747, %v745
        %v750 = vpack.c.b16 %v748, %v746
        %vm753 = vcmask 130048
        %v755 = vsel %vm753, %v735, 0
        %v758 = vsel %vm753, %v736, 0
        %v761 = vsel %vm753, %v737, 0
        %v764 = vsel %vm753, %v738, 0
        %v767 = vsel %vm753, %v739, 0
        %v770 = vsel %vm753, %v740, 0
        %v773 = vsel %vm753, %v741, 0
        %v776 = vsel %vm753, %v742, 0
        %778 = vmatprep.subr.bf16.mxu0 0
        %779 = vmatpush1.bf16.msra.mxu0 0
        %780 = vmatprep.subr.bf16.mxu0 0
        %781 = vmatpush1.bf16.msra.mxu0 0
        %782 = vmatprep.subr.bf16.mxu0 0
        %783 = vmatpush1.bf16.msra.mxu0 0
        %784 = vmatprep.subr.bf16.mxu0 0
        %785 = vmatpush1.bf16.msra.mxu0 0
        %786 = vmatprep.subr.bf16.mxu0 0
        %787 = vmatpush1.bf16.msra.mxu0 0
        %788 = vmatprep.subr.bf16.mxu0 0
        %789 = vmatpush1.bf16.msra.mxu0 0
        %790 = vmatprep.subr.bf16.mxu0 0
        %791 = vmatpush1.bf16.msra.mxu0 0
        %792 = vmatprep.subr.bf16.mxu0 %v750
        %793 = vmatpush1.bf16.msra.mxu0 %v749
        %794 = vmatprep.subr.bf16.mxu0 0
        %795 = vmatpush2.bf16.msra.mxu0 0
        %796 = vmatprep.subr.bf16.mxu0 0
        %797 = vmatpush2.bf16.msra.mxu0 0
        %798 = vmatprep.subr.bf16.mxu0 0
        %799 = vmatpush2.bf16.msra.mxu0 0
        %800 = vmatprep.subr.bf16.mxu0 0
        %801 = vmatpush2.bf16.msra.mxu0 0
        %802 = vmatprep.subr.bf16.mxu0 0
        %803 = vmatpush2.bf16.msra.mxu0 0
        %804 = vmatprep.subr.bf16.mxu0 0
        %805 = vmatpush2.bf16.msra.mxu0 0
        %806 = vmatprep.subr.bf16.mxu0 0
        %807 = vmatpush2.bf16.msra.mxu0 0
        %808 = vmatprep.subr.bf16.mxu0 0
        %809 = vmatpush2.bf16.msra.mxu0 0
        %810 = vmatprep.mubr.bf16.mxu0 0
        %811 = vmatmul.mubr.bf16.gmra.mxu0 %v755
        %v812 = vpop.f32.mrf.mxu0
        %v813 = vadd.f32 0.0, %v812
        %v814 = vpop.f32.mrf.mxu0
        %v815 = vadd.f32 0.0, %v814
        %v816 = vpop.f32.mrf.mxu0
        %v817 = vadd.f32 0.0, %v816
        %v818 = vpop.f32.mrf.mxu0
        %v819 = vadd.f32 0.0, %v818
        %820 = vmatprep.mubr.bf16.mxu0 0
        %821 = vmatmul.mubr.bf16.gmra.mxu0 %v758
        %v822 = vpop.f32.mrf.mxu0
        %v823 = vadd.f32 0.0, %v822
        %v824 = vpop.f32.mrf.mxu0
        %v825 = vadd.f32 0.0, %v824
        %v826 = vpop.f32.mrf.mxu0
        %v827 = vadd.f32 0.0, %v826
        %v828 = vpop.f32.mrf.mxu0
        %v829 = vadd.f32 0.0, %v828
        %830 = vmatprep.mubr.bf16.mxu0 0
        %831 = vmatmul.mubr.bf16.gmra.mxu0 %v761
        %v832 = vpop.f32.mrf.mxu0
        %v833 = vadd.f32 0.0, %v832
        %v834 = vpop.f32.mrf.mxu0
        %v835 = vadd.f32 0.0, %v834
        %v836 = vpop.f32.mrf.mxu0
        %v837 = vadd.f32 0.0, %v836
        %v838 = vpop.f32.mrf.mxu0
        %v839 = vadd.f32 0.0, %v838
        %840 = vmatprep.mubr.bf16.mxu0 0
        %841 = vmatmul.mubr.bf16.gmra.mxu0 %v764
        %v842 = vpop.f32.mrf.mxu0
        %v843 = vadd.f32 0.0, %v842
        %v844 = vpop.f32.mrf.mxu0
        %v845 = vadd.f32 0.0, %v844
        %v846 = vpop.f32.mrf.mxu0
        %v847 = vadd.f32 0.0, %v846
        %v848 = vpop.f32.mrf.mxu0
        %v849 = vadd.f32 0.0, %v848
        %850 = vmatprep.mubr.bf16.mxu0 0
        %851 = vmatmul.mubr.bf16.gmra.mxu0 %v767
        %v852 = vpop.f32.mrf.mxu0
        %v853 = vadd.f32 0.0, %v852
        %v854 = vpop.f32.mrf.mxu0
        %v855 = vadd.f32 0.0, %v854
        %v856 = vpop.f32.mrf.mxu0
        %v857 = vadd.f32 0.0, %v856
        %v858 = vpop.f32.mrf.mxu0
        %v859 = vadd.f32 0.0, %v858
        %860 = vmatprep.mubr.bf16.mxu0 0
        %861 = vmatmul.mubr.bf16.gmra.mxu0 %v770
        %v862 = vpop.f32.mrf.mxu0
        %v863 = vadd.f32 0.0, %v862
        %v864 = vpop.f32.mrf.mxu0
        %v865 = vadd.f32 0.0, %v864
        %v866 = vpop.f32.mrf.mxu0
        %v867 = vadd.f32 0.0, %v866
        %v868 = vpop.f32.mrf.mxu0
        %v869 = vadd.f32 0.0, %v868
        %870 = vmatprep.mubr.bf16.mxu0 0
        %871 = vmatmul.mubr.bf16.gmra.mxu0 %v773
        %v872 = vpop.f32.mrf.mxu0
        %v873 = vadd.f32 0.0, %v872
        %v874 = vpop.f32.mrf.mxu0
        %v875 = vadd.f32 0.0, %v874
        %v876 = vpop.f32.mrf.mxu0
        %v877 = vadd.f32 0.0, %v876
        %v878 = vpop.f32.mrf.mxu0
        %v879 = vadd.f32 0.0, %v878
        %880 = vmatprep.mubr.bf16.mxu0 0
        %881 = vmatmul.mubr.bf16.gmra.mxu0 %v776
        %v882 = vpop.f32.mrf.mxu0
        %v883 = vadd.f32 0.0, %v882
        %v884 = vpop.f32.mrf.mxu0
        %v885 = vadd.f32 0.0, %v884
        %v886 = vpop.f32.mrf.mxu0
        %v887 = vadd.f32 0.0, %v886
        %v888 = vpop.f32.mrf.mxu0
        %v889 = vadd.f32 0.0, %v888
        %890 = vdwg.mxu0
        %v891 = vpack.c.bf16 %v817, %v813
        %v892 = vpack.c.bf16 %v819, %v815
        %v893 = vpack.c.bf16 %v827, %v823
        %v894 = vpack.c.bf16 %v829, %v825
        %v895 = vpack.c.bf16 %v837, %v833
        %v896 = vpack.c.bf16 %v839, %v835
        %v897 = vpack.c.bf16 %v847, %v843
        %v898 = vpack.c.bf16 %v849, %v845
        %v899 = vpack.c.bf16 %v857, %v853
        %v900 = vpack.c.bf16 %v859, %v855
        %v901 = vpack.c.bf16 %v867, %v863
        %v902 = vpack.c.bf16 %v869, %v865
        %v903 = vpack.c.bf16 %v877, %v873
        %v904 = vpack.c.bf16 %v879, %v875
        %v905 = vpack.c.bf16 %v887, %v883
        %v906 = vpack.c.bf16 %v889, %v885
        %v907 = vld [vmem:[%s7] sm:$0xf]
        %v908 = vld [vmem:[%s491] sm:$0xf]
        %v909 = vld [vmem:[%s491 + $0x4] sm:$0xf]
        %v912 = vunpack.c.l.b16 %v908
        %v913 = vunpack.c.l.b16 %v909
        %v914 = vpack.c.b16 %v913, %v912
        %v917 = vsel %vm753, %v907, 0
        %919 = vmatprep.subr.bf16.mxu0 0
        %920 = vmatpush1.bf16.msra.mxu0 0
        %921 = vmatprep.subr.bf16.mxu0 0
        %922 = vmatpush1.bf16.msra.mxu0 0
        %923 = vmatprep.subr.bf16.mxu0 0
        %924 = vmatpush1.bf16.msra.mxu0 0
        %925 = vmatprep.subr.bf16.mxu0 0
        %926 = vmatpush1.bf16.msra.mxu0 0
        %927 = vmatprep.subr.bf16.mxu0 0
        %928 = vmatpush1.bf16.msra.mxu0 0
        %929 = vmatprep.subr.bf16.mxu0 0
        %930 = vmatpush1.bf16.msra.mxu0 0
        %931 = vmatprep.subr.bf16.mxu0 0
        %932 = vmatpush1.bf16.msra.mxu0 0
        %933 = vmatprep.subr.bf16.mxu0 0
        %934 = vmatpush1.bf16.msra.mxu0 %v914
        %935 = vmatprep.subr.bf16.mxu0 0
        %936 = vmatpush2.bf16.msra.mxu0 0
        %937 = vmatprep.subr.bf16.mxu0 0
        %938 = vmatpush2.bf16.msra.mxu0 0
        %939 = vmatprep.subr.bf16.mxu0 0
        %940 = vmatpush2.bf16.msra.mxu0 0
        %941 = vmatprep.subr.bf16.mxu0 0
        %942 = vmatpush2.bf16.msra.mxu0 0
        %943 = vmatprep.subr.bf16.mxu0 0
        %944 = vmatpush2.bf16.msra.mxu0 0
        %945 = vmatprep.subr.bf16.mxu0 0
        %946 = vmatpush2.bf16.msra.mxu0 0
        %947 = vmatprep.subr.bf16.mxu0 0
        %948 = vmatpush2.bf16.msra.mxu0 0
        %949 = vmatprep.subr.bf16.mxu0 0
        %950 = vmatpush2.bf16.msra.mxu0 0
        %951 = vmatprep.mubr.bf16.mxu0 0
        %952 = vmatmul.mubr.bf16.gmra.mxu0 %v917
        %v953 = vpop.f32.mrf.mxu0
        %v954 = vadd.f32 0.0, %v953
        %v955 = vpop.f32.mrf.mxu0
        %v956 = vpop.f32.mrf.mxu0
        %v957 = vpop.f32.mrf.mxu0
        %958 = vdwg.mxu0
        %v959 = vld [vmem:[%s542] sm:$0xf]
        %v960 = vld [vmem:[%s542 + $0x4] sm:$0xf]
        %v961 = vld [vmem:[%s542 + $0x8] sm:$0xf]
        %v962 = vld [vmem:[%s542 + $0xc] sm:$0xf]
        %v963 = vld [vmem:[%s542 + $0x10] sm:$0xf]
        %v964 = vld [vmem:[%s542 + $0x14] sm:$0xf]
        %v965 = vld [vmem:[%s542 + $0x18] sm:$0xf]
        %v966 = vld [vmem:[%s542 + $0x1c] sm:$0xf]
        %v967 = vld [vmem:[%s542 + $0x20] sm:$0xf]
        %v968 = vld [vmem:[%s542 + $0x24] sm:$0xf]
        %v969 = vld [vmem:[%s542 + $0x28] sm:$0xf]
        %v970 = vld [vmem:[%s542 + $0x2c] sm:$0xf]
        %v971 = vld [vmem:[%s542 + $0x30] sm:$0xf]
        %v972 = vld [vmem:[%s542 + $0x34] sm:$0xf]
        %v973 = vld [vmem:[%s542 + $0x38] sm:$0xf]
        %v974 = vld [vmem:[%s542 + $0x3c] sm:$0xf]
        %v975 = vld [vmem:[%s6] sm:$0xf]
        %v976 = vld [vmem:[%s6 + $0x4] sm:$0xf]
        %v993 = vunpack.c.l.b16 %v959
        %v994 = vunpack.c.l.b16 %v960
        %v995 = vunpack.c.l.b16 %v961
        %v996 = vunpack.c.l.b16 %v962
        %v997 = vunpack.c.l.b16 %v963
        %v998 = vunpack.c.l.b16 %v964
        %v999 = vunpack.c.l.b16 %v965
        %v1000 = vunpack.c.l.b16 %v966
        %v1001 = vunpack.c.l.b16 %v967
        %v1002 = vunpack.c.l.b16 %v968
        %v1003 = vunpack.c.l.b16 %v969
        %v1004 = vunpack.c.l.b16 %v970
        %v1005 = vunpack.c.l.b16 %v971
        %v1006 = vunpack.c.l.b16 %v972
        %v1007 = vunpack.c.l.b16 %v973
        %v1008 = vunpack.c.l.b16 %v974
        %v1009 = vpack.c.b16 %v994, %v993
        %v1010 = vpack.c.b16 %v996, %v995
        %v1011 = vpack.c.b16 %v998, %v997
        %v1012 = vpack.c.b16 %v1000, %v999
        %v1013 = vpack.c.b16 %v1002, %v1001
        %v1014 = vpack.c.b16 %v1004, %v1003
        %v1015 = vpack.c.b16 %v1006, %v1005
        %v1016 = vpack.c.b16 %v1008, %v1007
        %v1019 = vunpack.c.l.b16 %v975
        %v1020 = vunpack.c.l.b16 %v976
        %v1021 = vpack.c.b16 %v1020, %v1019
        %v1024 = vsel %vm753, %v1009, 0
        %v1027 = vsel %vm753, %v1010, 0
        %v1030 = vsel %vm753, %v1011, 0
        %v1033 = vsel %vm753, %v1012, 0
        %v1036 = vsel %vm753, %v1013, 0
        %v1039 = vsel %vm753, %v1014, 0
        %v1042 = vsel %vm753, %v1015, 0
        %v1045 = vsel %vm753, %v1016, 0
        %1047 = vmatprep.subr.bf16.mxu0 0
        %1048 = vmatpush1.bf16.msra.mxu0 0
        %1049 = vmatprep.subr.bf16.mxu0 0
        %1050 = vmatpush1.bf16.msra.mxu0 0
        %1051 = vmatprep.subr.bf16.mxu0 0
        %1052 = vmatpush1.bf16.msra.mxu0 0
        %1053 = vmatprep.subr.bf16.mxu0 0
        %1054 = vmatpush1.bf16.msra.mxu0 0
        %1055 = vmatprep.subr.bf16.mxu0 0
        %1056 = vmatpush1.bf16.msra.mxu0 0
        %1057 = vmatprep.subr.bf16.mxu0 0
        %1058 = vmatpush1.bf16.msra.mxu0 0
        %1059 = vmatprep.subr.bf16.mxu0 0
        %1060 = vmatpush1.bf16.msra.mxu0 0
        %1061 = vmatprep.subr.bf16.mxu0 0
        %1062 = vmatpush1.bf16.msra.mxu0 %v1021
        %1063 = vmatprep.subr.bf16.mxu0 0
        %1064 = vmatpush2.bf16.msra.mxu0 0
        %1065 = vmatprep.subr.bf16.mxu0 0
        %1066 = vmatpush2.bf16.msra.mxu0 0
        %1067 = vmatprep.subr.bf16.mxu0 0
        %1068 = vmatpush2.bf16.msra.mxu0 0
        %1069 = vmatprep.subr.bf16.mxu0 0
        %1070 = vmatpush2.bf16.msra.mxu0 0
        %1071 = vmatprep.subr.bf16.mxu0 0
        %1072 = vmatpush2.bf16.msra.mxu0 0
        %1073 = vmatprep.subr.bf16.mxu0 0
        %1074 = vmatpush2.bf16.msra.mxu0 0
        %1075 = vmatprep.subr.bf16.mxu0 0
        %1076 = vmatpush2.bf16.msra.mxu0 0
        %1077 = vmatprep.subr.bf16.mxu0 0
        %1078 = vmatpush2.bf16.msra.mxu0 0
        %1079 = vmatprep.mubr.bf16.mxu0 0
        %1080 = vmatmul.mubr.bf16.gmra.mxu0 %v1024
        %v1081 = vpop.f32.mrf.mxu0
        %v1082 = vadd.f32 0.0, %v1081
        %v1083 = vpop.f32.mrf.mxu0
        %v1084 = vpop.f32.mrf.mxu0
        %v1085 = vadd.f32 0.0, %v1084
        %v1086 = vpop.f32.mrf.mxu0
        %1087 = vmatprep.mubr.bf16.mxu0 0
        %1088 = vmatmul.mubr.bf16.gmra.mxu0 %v1027
        %v1089 = vpop.f32.mrf.mxu0
        %v1090 = vadd.f32 0.0, %v1089
        %v1091 = vpop.f32.mrf.mxu0
        %v1092 = vpop.f32.mrf.mxu0
        %v1093 = vadd.f32 0.0, %v1092
        %v1094 = vpop.f32.mrf.mxu0
        %1095 = vmatprep.mubr.bf16.mxu0 0
        %1096 = vmatmul.mubr.bf16.gmra.mxu0 %v1030
        %v1097 = vpop.f32.mrf.mxu0
        %v1098 = vadd.f32 0.0, %v1097
        %v1099 = vpop.f32.mrf.mxu0
        %v1100 = vpop.f32.mrf.mxu0
        %v1101 = vadd.f32 0.0, %v1100
        %v1102 = vpop.f32.mrf.mxu0
        %1103 = vmatprep.mubr.bf16.mxu0 0
        %1104 = vmatmul.mubr.bf16.gmra.mxu0 %v1033
        %v1105 = vpop.f32.mrf.mxu0
        %v1106 = vadd.f32 0.0, %v1105
        %v1107 = vpop.f32.mrf.mxu0
        %v1108 = vpop.f32.mrf.mxu0
        %v1109 = vadd.f32 0.0, %v1108
        %v1110 = vpop.f32.mrf.mxu0
        %1111 = vmatprep.mubr.bf16.mxu0 0
        %1112 = vmatmul.mubr.bf16.gmra.mxu0 %v1036
        %v1113 = vpop.f32.mrf.mxu0
        %v1114 = vadd.f32 0.0, %v1113
        %v1115 = vpop.f32.mrf.mxu0
        %v1116 = vpop.f32.mrf.mxu0
        %v1117 = vadd.f32 0.0, %v1116
        %v1118 = vpop.f32.mrf.mxu0
        %1119 = vmatprep.mubr.bf16.mxu0 0
        %1120 = vmatmul.mubr.bf16.gmra.mxu0 %v1039
        %v1121 = vpop.f32.mrf.mxu0
        %v1122 = vadd.f32 0.0, %v1121
        %v1123 = vpop.f32.mrf.mxu0
        %v1124 = vpop.f32.mrf.mxu0
        %v1125 = vadd.f32 0.0, %v1124
        %v1126 = vpop.f32.mrf.mxu0
        %1127 = vmatprep.mubr.bf16.mxu0 0
        %1128 = vmatmul.mubr.bf16.gmra.mxu0 %v1042
        %v1129 = vpop.f32.mrf.mxu0
        %v1130 = vadd.f32 0.0, %v1129
        %v1131 = vpop.f32.mrf.mxu0
        %v1132 = vpop.f32.mrf.mxu0
        %v1133 = vadd.f32 0.0, %v1132
        %v1134 = vpop.f32.mrf.mxu0
        %1135 = vmatprep.mubr.bf16.mxu0 0
        %1136 = vmatmul.mubr.bf16.gmra.mxu0 %v1045
        %v1137 = vpop.f32.mrf.mxu0
        %v1138 = vadd.f32 0.0, %v1137
        %v1139 = vpop.f32.mrf.mxu0
        %v1140 = vpop.f32.mrf.mxu0
        %v1141 = vadd.f32 0.0, %v1140
        %v1142 = vpop.f32.mrf.mxu0
        %1143 = vdwg.mxu0
        %1145 = vset.pattern.permute.xlu0 0
        %1146 = vperm.xlu0 %1145, %v1082
        %v1147 = vpop.permute.xlu0 %1146
        %1150 = vset.pattern.permute.xlu0 0
        %1151 = vperm.xlu0 %1150, %v1085
        %v1152 = vpop.permute.xlu0 %1151
        %1155 = vset.pattern.permute.xlu0 0
        %1156 = vperm.xlu0 %1155, %v1090
        %v1157 = vpop.permute.xlu0 %1156
        %1160 = vset.pattern.permute.xlu0 0
        %1161 = vperm.xlu0 %1160, %v1093
        %v1162 = vpop.permute.xlu0 %1161
        %1165 = vset.pattern.permute.xlu0 0
        %1166 = vperm.xlu0 %1165, %v1098
        %v1167 = vpop.permute.xlu0 %1166
        %1170 = vset.pattern.permute.xlu0 0
        %1171 = vperm.xlu0 %1170, %v1101
        %v1172 = vpop.permute.xlu0 %1171
        %1175 = vset.pattern.permute.xlu0 0
        %1176 = vperm.xlu0 %1175, %v1106
        %v1177 = vpop.permute.xlu0 %1176
        %1180 = vset.pattern.permute.xlu0 0
        %1181 = vperm.xlu0 %1180, %v1109
        %v1182 = vpop.permute.xlu0 %1181
        %1185 = vset.pattern.permute.xlu0 0
        %1186 = vperm.xlu0 %1185, %v1114
        %v1187 = vpop.permute.xlu0 %1186
        %1190 = vset.pattern.permute.xlu0 0
        %1191 = vperm.xlu0 %1190, %v1117
        %v1192 = vpop.permute.xlu0 %1191
        %1195 = vset.pattern.permute.xlu0 0
        %1196 = vperm.xlu0 %1195, %v1122
        %v1197 = vpop.permute.xlu0 %1196
        %1200 = vset.pattern.permute.xlu0 0
        %1201 = vperm.xlu0 %1200, %v1125
        %v1202 = vpop.permute.xlu0 %1201
        %1205 = vset.pattern.permute.xlu0 0
        %1206 = vperm.xlu0 %1205, %v1130
        %v1207 = vpop.permute.xlu0 %1206
        %1210 = vset.pattern.permute.xlu0 0
        %1211 = vperm.xlu0 %1210, %v1133
        %v1212 = vpop.permute.xlu0 %1211
        %1215 = vset.pattern.permute.xlu0 0
        %1216 = vperm.xlu0 %1215, %v1138
        %v1217 = vpop.permute.xlu0 %1216
        %1220 = vset.pattern.permute.xlu0 0
        %1221 = vperm.xlu0 %1220, %v1141
        %v1222 = vpop.permute.xlu0 %1221
        %v1224 = vlaneseq
        %v1225 = vshrl.u32 %v1224, 7
        %v1226 = vsub.s32 0, %v1225
        %v1227 = vrot.slane %v954, %v1226
        %v1228 = vadd.f32 %v1147, %v1227
        %v1229 = vadd.f32 %v1152, %v1227
        %v1230 = vadd.f32 %v1157, %v1227
        %v1231 = vadd.f32 %v1162, %v1227
        %v1232 = vadd.f32 %v1167, %v1227
        %v1233 = vadd.f32 %v1172, %v1227
        %v1234 = vadd.f32 %v1177, %v1227
        %v1235 = vadd.f32 %v1182, %v1227
        %v1236 = vadd.f32 %v1187, %v1227
        %v1237 = vadd.f32 %v1192, %v1227
        %v1238 = vadd.f32 %v1197, %v1227
        %v1239 = vadd.f32 %v1202, %v1227
        %v1240 = vadd.f32 %v1207, %v1227
        %v1241 = vadd.f32 %v1212, %v1227
        %v1242 = vadd.f32 %v1217, %v1227
        %v1243 = vadd.f32 %v1222, %v1227
        %vm1244 = vcmp.gt.f32.partialorder %v1228, 0.0
        %vm1245 = vcmp.gt.f32.partialorder %v1229, 0.0
        %vm1246 = vcmp.gt.f32.partialorder %v1230, 0.0
        %vm1247 = vcmp.gt.f32.partialorder %v1231, 0.0
        %vm1248 = vcmp.gt.f32.partialorder %v1232, 0.0
        %vm1249 = vcmp.gt.f32.partialorder %v1233, 0.0
        %vm1250 = vcmp.gt.f32.partialorder %v1234, 0.0
        %vm1251 = vcmp.gt.f32.partialorder %v1235, 0.0
        %vm1252 = vcmp.gt.f32.partialorder %v1236, 0.0
        %vm1253 = vcmp.gt.f32.partialorder %v1237, 0.0
        %vm1254 = vcmp.gt.f32.partialorder %v1238, 0.0
        %vm1255 = vcmp.gt.f32.partialorder %v1239, 0.0
        %vm1256 = vcmp.gt.f32.partialorder %v1240, 0.0
        %vm1257 = vcmp.gt.f32.partialorder %v1241, 0.0
        %vm1258 = vcmp.gt.f32.partialorder %v1242, 0.0
        %vm1259 = vcmp.gt.f32.partialorder %v1243, 0.0
        %v1260 = vmul.f32 %v1228, 0.01
        %v1261 = vmul.f32 %v1229, 0.01
        %v1262 = vmul.f32 %v1230, 0.01
        %v1263 = vmul.f32 %v1231, 0.01
        %v1264 = vmul.f32 %v1232, 0.01
        %v1265 = vmul.f32 %v1233, 0.01
        %v1266 = vmul.f32 %v1234, 0.01
        %v1267 = vmul.f32 %v1235, 0.01
        %v1268 = vmul.f32 %v1236, 0.01
        %v1269 = vmul.f32 %v1237, 0.01
        %v1270 = vmul.f32 %v1238, 0.01
        %v1271 = vmul.f32 %v1239, 0.01
        %v1272 = vmul.f32 %v1240, 0.01
        %v1273 = vmul.f32 %v1241, 0.01
        %v1274 = vmul.f32 %v1242, 0.01
        %v1275 = vmul.f32 %v1243, 0.01
        %v1276 = vsel %vm1244, %v1228, %v1260
        %v1277 = vsel %vm1245, %v1229, %v1261
        %v1278 = vsel %vm1246, %v1230, %v1262
        %v1279 = vsel %vm1247, %v1231, %v1263
        %v1280 = vsel %vm1248, %v1232, %v1264
        %v1281 = vsel %vm1249, %v1233, %v1265
        %v1282 = vsel %vm1250, %v1234, %v1266
        %v1283 = vsel %vm1251, %v1235, %v1267
        %v1284 = vsel %vm1252, %v1236, %v1268
        %v1285 = vsel %vm1253, %v1237, %v1269
        %v1286 = vsel %vm1254, %v1238, %v1270
        %v1287 = vsel %vm1255, %v1239, %v1271
        %v1288 = vsel %vm1256, %v1240, %v1272
        %v1289 = vsel %vm1257, %v1241, %v1273
        %v1290 = vsel %vm1258, %v1242, %v1274
        %v1291 = vsel %vm1259, %v1243, %v1275
        %v1292 = vmul.f32 %v1276, %v669
        %v1293 = vmul.f32 %v1277, %v670
        %v1294 = vmul.f32 %v1278, %v671
        %v1295 = vmul.f32 %v1279, %v672
        %v1296 = vmul.f32 %v1280, %v673
        %v1297 = vmul.f32 %v1281, %v674
        %v1298 = vmul.f32 %v1282, %v675
        %v1299 = vmul.f32 %v1283, %v676
        %v1300 = vmul.f32 %v1284, %v677
        %v1301 = vmul.f32 %v1285, %v678
        %v1302 = vmul.f32 %v1286, %v679
        %v1303 = vmul.f32 %v1287, %v680
        %v1304 = vmul.f32 %v1288, %v681
        %v1305 = vmul.f32 %v1289, %v682
        %v1306 = vmul.f32 %v1290, %v683
        %v1307 = vmul.f32 %v1291, %v684
        %v1308 = vsel %vm653, %v1292, -1e+30
        %v1309 = vsel %vm654, %v1293, -1e+30
        %v1310 = vsel %vm655, %v1294, -1e+30
        %v1311 = vsel %vm656, %v1295, -1e+30
        %v1312 = vsel %vm657, %v1296, -1e+30
        %v1313 = vsel %vm658, %v1297, -1e+30
        %v1314 = vsel %vm659, %v1298, -1e+30
        %v1315 = vsel %vm660, %v1299, -1e+30
        %v1316 = vsel %vm661, %v1300, -1e+30
        %v1317 = vsel %vm662, %v1301, -1e+30
        %v1318 = vsel %vm663, %v1302, -1e+30
        %v1319 = vsel %vm664, %v1303, -1e+30
        %v1320 = vsel %vm665, %v1304, -1e+30
        %v1321 = vsel %vm666, %v1305, -1e+30
        %v1322 = vsel %vm667, %v1306, -1e+30
        %v1323 = vsel %vm668, %v1307, -1e+30
        %v1324 = vld [vmem:[#allocation2] sm:$0xff]
        %v1325 = vld [vmem:[#allocation2 + $0x8] sm:$0xff]
        %v1326 = vld [vmem:[#allocation2 + $0x10] sm:$0xff]
        %v1327 = vld [vmem:[#allocation2 + $0x18] sm:$0xff]
        %v1328 = vld [vmem:[#allocation2 + $0x20] sm:$0xff]
        %v1329 = vld [vmem:[#allocation2 + $0x28] sm:$0xff]
        %v1330 = vld [vmem:[#allocation2 + $0x30] sm:$0xff]
        %v1331 = vld [vmem:[#allocation2 + $0x38] sm:$0xff]
        %v1332 = vld [vmem:[#allocation2 + $0x40] sm:$0xff]
        %v1333 = vld [vmem:[#allocation2 + $0x48] sm:$0xff]
        %v1334 = vld [vmem:[#allocation2 + $0x50] sm:$0xff]
        %v1335 = vld [vmem:[#allocation2 + $0x58] sm:$0xff]
        %v1336 = vld [vmem:[#allocation2 + $0x60] sm:$0xff]
        %v1337 = vld [vmem:[#allocation2 + $0x68] sm:$0xff]
        %v1338 = vld [vmem:[#allocation2 + $0x70] sm:$0xff]
        %v1339 = vld [vmem:[#allocation2 + $0x78] sm:$0xff]
        %1340 = vmax.xlane.f32.xlu0 %v1308
        %v1341 = vpop.xlane.xlu0 %1340
        %1342 = vmax.xlane.f32.xlu0 %v1309
        %v1343 = vpop.xlane.xlu0 %1342
        %1344 = vmax.xlane.f32.xlu0 %v1310
        %v1345 = vpop.xlane.xlu0 %1344
        %1346 = vmax.xlane.f32.xlu0 %v1311
        %v1347 = vpop.xlane.xlu0 %1346
        %1348 = vmax.xlane.f32.xlu0 %v1312
        %v1349 = vpop.xlane.xlu0 %1348
        %1350 = vmax.xlane.f32.xlu0 %v1313
        %v1351 = vpop.xlane.xlu0 %1350
        %1352 = vmax.xlane.f32.xlu0 %v1314
        %v1353 = vpop.xlane.xlu0 %1352
        %1354 = vmax.xlane.f32.xlu0 %v1315
        %v1355 = vpop.xlane.xlu0 %1354
        %1356 = vmax.xlane.f32.xlu0 %v1316
        %v1357 = vpop.xlane.xlu0 %1356
        %1358 = vmax.xlane.f32.xlu0 %v1317
        %v1359 = vpop.xlane.xlu0 %1358
        %1360 = vmax.xlane.f32.xlu0 %v1318
        %v1361 = vpop.xlane.xlu0 %1360
        %1362 = vmax.xlane.f32.xlu0 %v1319
        %v1363 = vpop.xlane.xlu0 %1362
        %1364 = vmax.xlane.f32.xlu0 %v1320
        %v1365 = vpop.xlane.xlu0 %1364
        %1366 = vmax.xlane.f32.xlu0 %v1321
        %v1367 = vpop.xlane.xlu0 %1366
        %1368 = vmax.xlane.f32.xlu0 %v1322
        %v1369 = vpop.xlane.xlu0 %1368
        %1370 = vmax.xlane.f32.xlu0 %v1323
        %v1371 = vpop.xlane.xlu0 %1370
        %v1372 = vmax.f32 %v1324, %v1341
        %v1373 = vmax.f32 %v1325, %v1343
        %v1374 = vmax.f32 %v1326, %v1345
        %v1375 = vmax.f32 %v1327, %v1347
        %v1376 = vmax.f32 %v1328, %v1349
        %v1377 = vmax.f32 %v1329, %v1351
        %v1378 = vmax.f32 %v1330, %v1353
        %v1379 = vmax.f32 %v1331, %v1355
        %v1380 = vmax.f32 %v1332, %v1357
        %v1381 = vmax.f32 %v1333, %v1359
        %v1382 = vmax.f32 %v1334, %v1361
        %v1383 = vmax.f32 %v1335, %v1363
        %v1384 = vmax.f32 %v1336, %v1365
        %v1385 = vmax.f32 %v1337, %v1367
        %v1386 = vmax.f32 %v1338, %v1369
        %v1387 = vmax.f32 %v1339, %v1371
        %vm1388 = vcmp.gt.f32.partialorder %v1372, -5e+29
        %vm1389 = vcmp.gt.f32.partialorder %v1373, -5e+29
        %vm1390 = vcmp.gt.f32.partialorder %v1374, -5e+29
        %vm1391 = vcmp.gt.f32.partialorder %v1375, -5e+29
        %vm1392 = vcmp.gt.f32.partialorder %v1376, -5e+29
        %vm1393 = vcmp.gt.f32.partialorder %v1377, -5e+29
        %vm1394 = vcmp.gt.f32.partialorder %v1378, -5e+29
        %vm1395 = vcmp.gt.f32.partialorder %v1379, -5e+29
        %vm1396 = vcmp.gt.f32.partialorder %v1380, -5e+29
        %vm1397 = vcmp.gt.f32.partialorder %v1381, -5e+29
        %vm1398 = vcmp.gt.f32.partialorder %v1382, -5e+29
        %vm1399 = vcmp.gt.f32.partialorder %v1383, -5e+29
        %vm1400 = vcmp.gt.f32.partialorder %v1384, -5e+29
        %vm1401 = vcmp.gt.f32.partialorder %v1385, -5e+29
        %vm1402 = vcmp.gt.f32.partialorder %v1386, -5e+29
        %vm1403 = vcmp.gt.f32.partialorder %v1387, -5e+29
        %v1404 = vsel %vm1388, %v1372, 0.0
        %v1405 = vsel %vm1389, %v1373, 0.0
        %v1406 = vsel %vm1390, %v1374, 0.0
        %v1407 = vsel %vm1391, %v1375, 0.0
        %v1408 = vsel %vm1392, %v1376, 0.0
        %v1409 = vsel %vm1393, %v1377, 0.0
        %v1410 = vsel %vm1394, %v1378, 0.0
        %v1411 = vsel %vm1395, %v1379, 0.0
        %v1412 = vsel %vm1396, %v1380, 0.0
        %v1413 = vsel %vm1397, %v1381, 0.0
        %v1414 = vsel %vm1398, %v1382, 0.0
        %v1415 = vsel %vm1399, %v1383, 0.0
        %v1416 = vsel %vm1400, %v1384, 0.0
        %v1417 = vsel %vm1401, %v1385, 0.0
        %v1418 = vsel %vm1402, %v1386, 0.0
        %v1419 = vsel %vm1403, %v1387, 0.0
        %1421 = vset.pattern.permute.xlu0 0
        %1422 = vperm.xlu0 %1421, %v1404
        %v1423 = vpop.permute.xlu0 %1422
        %1426 = vset.pattern.permute.xlu0 0
        %1427 = vperm.xlu0 %1426, %v1405
        %v1428 = vpop.permute.xlu0 %1427
        %1431 = vset.pattern.permute.xlu0 0
        %1432 = vperm.xlu0 %1431, %v1406
        %v1433 = vpop.permute.xlu0 %1432
        %1436 = vset.pattern.permute.xlu0 0
        %1437 = vperm.xlu0 %1436, %v1407
        %v1438 = vpop.permute.xlu0 %1437
        %1441 = vset.pattern.permute.xlu0 0
        %1442 = vperm.xlu0 %1441, %v1408
        %v1443 = vpop.permute.xlu0 %1442
        %1446 = vset.pattern.permute.xlu0 0
        %1447 = vperm.xlu0 %1446, %v1409
        %v1448 = vpop.permute.xlu0 %1447
        %1451 = vset.pattern.permute.xlu0 0
        %1452 = vperm.xlu0 %1451, %v1410
        %v1453 = vpop.permute.xlu0 %1452
        %1456 = vset.pattern.permute.xlu0 0
        %1457 = vperm.xlu0 %1456, %v1411
        %v1458 = vpop.permute.xlu0 %1457
        %1461 = vset.pattern.permute.xlu0 0
        %1462 = vperm.xlu0 %1461, %v1412
        %v1463 = vpop.permute.xlu0 %1462
        %1466 = vset.pattern.permute.xlu0 0
        %1467 = vperm.xlu0 %1466, %v1413
        %v1468 = vpop.permute.xlu0 %1467
        %1471 = vset.pattern.permute.xlu0 0
        %1472 = vperm.xlu0 %1471, %v1414
        %v1473 = vpop.permute.xlu0 %1472
        %1476 = vset.pattern.permute.xlu0 0
        %1477 = vperm.xlu0 %1476, %v1415
        %v1478 = vpop.permute.xlu0 %1477
        %1481 = vset.pattern.permute.xlu0 0
        %1482 = vperm.xlu0 %1481, %v1416
        %v1483 = vpop.permute.xlu0 %1482
        %1486 = vset.pattern.permute.xlu0 0
        %1487 = vperm.xlu0 %1486, %v1417
        %v1488 = vpop.permute.xlu0 %1487
        %1491 = vset.pattern.permute.xlu0 0
        %1492 = vperm.xlu0 %1491, %v1418
        %v1493 = vpop.permute.xlu0 %1492
        %1496 = vset.pattern.permute.xlu0 0
        %1497 = vperm.xlu0 %1496, %v1419
        %v1498 = vpop.permute.xlu0 %1497
        %v1500 = vsub.f32 %v1292, %v1423
        %v1501 = vsub.f32 %v1293, %v1428
        %v1502 = vsub.f32 %v1294, %v1433
        %v1503 = vsub.f32 %v1295, %v1438
        %v1504 = vsub.f32 %v1296, %v1443
        %v1505 = vsub.f32 %v1297, %v1448
        %v1506 = vsub.f32 %v1298, %v1453
        %v1507 = vsub.f32 %v1299, %v1458
        %v1508 = vsub.f32 %v1300, %v1463
        %v1509 = vsub.f32 %v1301, %v1468
        %v1510 = vsub.f32 %v1302, %v1473
        %v1511 = vsub.f32 %v1303, %v1478
        %v1512 = vsub.f32 %v1304, %v1483
        %v1513 = vsub.f32 %v1305, %v1488
        %v1514 = vsub.f32 %v1306, %v1493
        %v1515 = vsub.f32 %v1307, %v1498
        %v1516 = vmul.f32 %v1500, 1.442695
        %v1517 = vpow.pop %v1516
        %v1518 = vmul.f32 %v1501, 1.442695
        %v1519 = vpow.pop %v1518
        %v1520 = vmul.f32 %v1502, 1.442695
        %v1521 = vpow.pop %v1520
        %v1522 = vmul.f32 %v1503, 1.442695
        %v1523 = vpow.pop %v1522
        %v1524 = vmul.f32 %v1504, 1.442695
        %v1525 = vpow.pop %v1524
        %v1526 = vmul.f32 %v1505, 1.442695
        %v1527 = vpow.pop %v1526
        %v1528 = vmul.f32 %v1506, 1.442695
        %v1529 = vpow.pop %v1528
        %v1530 = vmul.f32 %v1507, 1.442695
        %v1531 = vpow.pop %v1530
        %v1532 = vmul.f32 %v1508, 1.442695
        %v1533 = vpow.pop %v1532
        %v1534 = vmul.f32 %v1509, 1.442695
        %v1535 = vpow.pop %v1534
        %v1536 = vmul.f32 %v1510, 1.442695
        %v1537 = vpow.pop %v1536
        %v1538 = vmul.f32 %v1511, 1.442695
        %v1539 = vpow.pop %v1538
        %v1540 = vmul.f32 %v1512, 1.442695
        %v1541 = vpow.pop %v1540
        %v1542 = vmul.f32 %v1513, 1.442695
        %v1543 = vpow.pop %v1542
        %v1544 = vmul.f32 %v1514, 1.442695
        %v1545 = vpow.pop %v1544
        %v1546 = vmul.f32 %v1515, 1.442695
        %v1547 = vpow.pop %v1546
        %v1548 = vsel %vm653, %v1517, 0.0
        %v1549 = vsel %vm654, %v1519, 0.0
        %v1550 = vsel %vm655, %v1521, 0.0
        %v1551 = vsel %vm656, %v1523, 0.0
        %v1552 = vsel %vm657, %v1525, 0.0
        %v1553 = vsel %vm658, %v1527, 0.0
        %v1554 = vsel %vm659, %v1529, 0.0
        %v1555 = vsel %vm660, %v1531, 0.0
        %v1556 = vsel %vm661, %v1533, 0.0
        %v1557 = vsel %vm662, %v1535, 0.0
        %v1558 = vsel %vm663, %v1537, 0.0
        %v1559 = vsel %vm664, %v1539, 0.0
        %v1560 = vsel %vm665, %v1541, 0.0
        %v1561 = vsel %vm666, %v1543, 0.0
        %v1562 = vsel %vm667, %v1545, 0.0
        %v1563 = vsel %vm668, %v1547, 0.0
        %v1564 = vsub.f32 %v1324, %v1372
        %v1565 = vsub.f32 %v1325, %v1373
        %v1566 = vsub.f32 %v1326, %v1374
        %v1567 = vsub.f32 %v1327, %v1375
        %v1568 = vsub.f32 %v1328, %v1376
        %v1569 = vsub.f32 %v1329, %v1377
        %v1570 = vsub.f32 %v1330, %v1378
        %v1571 = vsub.f32 %v1331, %v1379
        %v1572 = vsub.f32 %v1332, %v1380
        %v1573 = vsub.f32 %v1333, %v1381
        %v1574 = vsub.f32 %v1334, %v1382
        %v1575 = vsub.f32 %v1335, %v1383
        %v1576 = vsub.f32 %v1336, %v1384
        %v1577 = vsub.f32 %v1337, %v1385
        %v1578 = vsub.f32 %v1338, %v1386
        %v1579 = vsub.f32 %v1339, %v1387
        %v1580 = vmul.f32 %v1564, 1.442695
        %v1581 = vpow.pop %v1580
        %v1582 = vmul.f32 %v1565, 1.442695
        %v1583 = vpow.pop %v1582
        %v1584 = vmul.f32 %v1566, 1.442695
        %v1585 = vpow.pop %v1584
        %v1586 = vmul.f32 %v1567, 1.442695
        %v1587 = vpow.pop %v1586
        %v1588 = vmul.f32 %v1568, 1.442695
        %v1589 = vpow.pop %v1588
        %v1590 = vmul.f32 %v1569, 1.442695
        %v1591 = vpow.pop %v1590
        %v1592 = vmul.f32 %v1570, 1.442695
        %v1593 = vpow.pop %v1592
        %v1594 = vmul.f32 %v1571, 1.442695
        %v1595 = vpow.pop %v1594
        %v1596 = vmul.f32 %v1572, 1.442695
        %v1597 = vpow.pop %v1596
        %v1598 = vmul.f32 %v1573, 1.442695
        %v1599 = vpow.pop %v1598
        %v1600 = vmul.f32 %v1574, 1.442695
        %v1601 = vpow.pop %v1600
        %v1602 = vmul.f32 %v1575, 1.442695
        %v1603 = vpow.pop %v1602
        %v1604 = vmul.f32 %v1576, 1.442695
        %v1605 = vpow.pop %v1604
        %v1606 = vmul.f32 %v1577, 1.442695
        %v1607 = vpow.pop %v1606
        %v1608 = vmul.f32 %v1578, 1.442695
        %v1609 = vpow.pop %v1608
        %v1610 = vmul.f32 %v1579, 1.442695
        %v1611 = vpow.pop %v1610
        %vm1612 = vcmask 7168
        %1613 = vst.msk [vmem:[#allocation2] sm:$0xff] %vm1612, %v1372
        %1614 = vst.msk [vmem:[#allocation2 + $0x8] sm:$0xff] %vm1612, %v1373
        %1615 = vst.msk [vmem:[#allocation2 + $0x10] sm:$0xff] %vm1612, %v1374
        %1616 = vst.msk [vmem:[#allocation2 + $0x18] sm:$0xff] %vm1612, %v1375
        %1617 = vst.msk [vmem:[#allocation2 + $0x20] sm:$0xff] %vm1612, %v1376
        %1618 = vst.msk [vmem:[#allocation2 + $0x28] sm:$0xff] %vm1612, %v1377
        %1619 = vst.msk [vmem:[#allocation2 + $0x30] sm:$0xff] %vm1612, %v1378
        %1620 = vst.msk [vmem:[#allocation2 + $0x38] sm:$0xff] %vm1612, %v1379
        %1621 = vst.msk [vmem:[#allocation2 + $0x40] sm:$0xff] %vm1612, %v1380
        %1622 = vst.msk [vmem:[#allocation2 + $0x48] sm:$0xff] %vm1612, %v1381
        %1623 = vst.msk [vmem:[#allocation2 + $0x50] sm:$0xff] %vm1612, %v1382
        %1624 = vst.msk [vmem:[#allocation2 + $0x58] sm:$0xff] %vm1612, %v1383
        %1625 = vst.msk [vmem:[#allocation2 + $0x60] sm:$0xff] %vm1612, %v1384
        %1626 = vst.msk [vmem:[#allocation2 + $0x68] sm:$0xff] %vm1612, %v1385
        %1627 = vst.msk [vmem:[#allocation2 + $0x70] sm:$0xff] %vm1612, %v1386
        %1628 = vst.msk [vmem:[#allocation2 + $0x78] sm:$0xff] %vm1612, %v1387
        %v1629 = vld [vmem:[#allocation3] sm:$0xff]
        %v1630 = vld [vmem:[#allocation3 + $0x8] sm:$0xff]
        %v1631 = vld [vmem:[#allocation3 + $0x10] sm:$0xff]
        %v1632 = vld [vmem:[#allocation3 + $0x18] sm:$0xff]
        %v1633 = vld [vmem:[#allocation3 + $0x20] sm:$0xff]
        %v1634 = vld [vmem:[#allocation3 + $0x28] sm:$0xff]
        %v1635 = vld [vmem:[#allocation3 + $0x30] sm:$0xff]
        %v1636 = vld [vmem:[#allocation3 + $0x38] sm:$0xff]
        %v1637 = vld [vmem:[#allocation3 + $0x40] sm:$0xff]
        %v1638 = vld [vmem:[#allocation3 + $0x48] sm:$0xff]
        %v1639 = vld [vmem:[#allocation3 + $0x50] sm:$0xff]
        %v1640 = vld [vmem:[#allocation3 + $0x58] sm:$0xff]
        %v1641 = vld [vmem:[#allocation3 + $0x60] sm:$0xff]
        %v1642 = vld [vmem:[#allocation3 + $0x68] sm:$0xff]
        %v1643 = vld [vmem:[#allocation3 + $0x70] sm:$0xff]
        %v1644 = vld [vmem:[#allocation3 + $0x78] sm:$0xff]
        %v1645 = vmul.f32 %v1581, %v1629
        %v1646 = vmul.f32 %v1583, %v1630
        %v1647 = vmul.f32 %v1585, %v1631
        %v1648 = vmul.f32 %v1587, %v1632
        %v1649 = vmul.f32 %v1589, %v1633
        %v1650 = vmul.f32 %v1591, %v1634
        %v1651 = vmul.f32 %v1593, %v1635
        %v1652 = vmul.f32 %v1595, %v1636
        %v1653 = vmul.f32 %v1597, %v1637
        %v1654 = vmul.f32 %v1599, %v1638
        %v1655 = vmul.f32 %v1601, %v1639
        %v1656 = vmul.f32 %v1603, %v1640
        %v1657 = vmul.f32 %v1605, %v1641
        %v1658 = vmul.f32 %v1607, %v1642
        %v1659 = vmul.f32 %v1609, %v1643
        %v1660 = vmul.f32 %v1611, %v1644
        %1661 = vadd.xlane.f32.xlu0 %v1548
        %v1662 = vpop.xlane.xlu0 %1661
        %1663 = vadd.xlane.f32.xlu0 %v1549
        %v1664 = vpop.xlane.xlu0 %1663
        %1665 = vadd.xlane.f32.xlu0 %v1550
        %v1666 = vpop.xlane.xlu0 %1665
        %1667 = vadd.xlane.f32.xlu0 %v1551
        %v1668 = vpop.xlane.xlu0 %1667
        %1669 = vadd.xlane.f32.xlu0 %v1552
        %v1670 = vpop.xlane.xlu0 %1669
        %1671 = vadd.xlane.f32.xlu0 %v1553
        %v1672 = vpop.xlane.xlu0 %1671
        %1673 = vadd.xlane.f32.xlu0 %v1554
        %v1674 = vpop.xlane.xlu0 %1673
        %1675 = vadd.xlane.f32.xlu0 %v1555
        %v1676 = vpop.xlane.xlu0 %1675
        %1677 = vadd.xlane.f32.xlu0 %v1556
        %v1678 = vpop.xlane.xlu0 %1677
        %1679 = vadd.xlane.f32.xlu0 %v1557
        %v1680 = vpop.xlane.xlu0 %1679
        %1681 = vadd.xlane.f32.xlu0 %v1558
        %v1682 = vpop.xlane.xlu0 %1681
        %1683 = vadd.xlane.f32.xlu0 %v1559
        %v1684 = vpop.xlane.xlu0 %1683
        %1685 = vadd.xlane.f32.xlu0 %v1560
        %v1686 = vpop.xlane.xlu0 %1685
        %1687 = vadd.xlane.f32.xlu0 %v1561
        %v1688 = vpop.xlane.xlu0 %1687
        %1689 = vadd.xlane.f32.xlu0 %v1562
        %v1690 = vpop.xlane.xlu0 %1689
        %1691 = vadd.xlane.f32.xlu0 %v1563
        %v1692 = vpop.xlane.xlu0 %1691
        %v1693 = vadd.f32 %v1645, %v1662
        %v1694 = vadd.f32 %v1646, %v1664
        %v1695 = vadd.f32 %v1647, %v1666
        %v1696 = vadd.f32 %v1648, %v1668
        %v1697 = vadd.f32 %v1649, %v1670
        %v1698 = vadd.f32 %v1650, %v1672
        %v1699 = vadd.f32 %v1651, %v1674
        %v1700 = vadd.f32 %v1652, %v1676
        %v1701 = vadd.f32 %v1653, %v1678
        %v1702 = vadd.f32 %v1654, %v1680
        %v1703 = vadd.f32 %v1655, %v1682
        %v1704 = vadd.f32 %v1656, %v1684
        %v1705 = vadd.f32 %v1657, %v1686
        %v1706 = vadd.f32 %v1658, %v1688
        %v1707 = vadd.f32 %v1659, %v1690
        %v1708 = vadd.f32 %v1660, %v1692
        %1709 = vst.msk [vmem:[#allocation3] sm:$0xff] %vm1612, %v1693
        %1710 = vst.msk [vmem:[#allocation3 + $0x8] sm:$0xff] %vm1612, %v1694
        %1711 = vst.msk [vmem:[#allocation3 + $0x10] sm:$0xff] %vm1612, %v1695
        %1712 = vst.msk [vmem:[#allocation3 + $0x18] sm:$0xff] %vm1612, %v1696
        %1713 = vst.msk [vmem:[#allocation3 + $0x20] sm:$0xff] %vm1612, %v1697
        %1714 = vst.msk [vmem:[#allocation3 + $0x28] sm:$0xff] %vm1612, %v1698
        %1715 = vst.msk [vmem:[#allocation3 + $0x30] sm:$0xff] %vm1612, %v1699
        %1716 = vst.msk [vmem:[#allocation3 + $0x38] sm:$0xff] %vm1612, %v1700
        %1717 = vst.msk [vmem:[#allocation3 + $0x40] sm:$0xff] %vm1612, %v1701
        %1718 = vst.msk [vmem:[#allocation3 + $0x48] sm:$0xff] %vm1612, %v1702
        %1719 = vst.msk [vmem:[#allocation3 + $0x50] sm:$0xff] %vm1612, %v1703
        %1720 = vst.msk [vmem:[#allocation3 + $0x58] sm:$0xff] %vm1612, %v1704
        %1721 = vst.msk [vmem:[#allocation3 + $0x60] sm:$0xff] %vm1612, %v1705
        %1722 = vst.msk [vmem:[#allocation3 + $0x68] sm:$0xff] %vm1612, %v1706
        %1723 = vst.msk [vmem:[#allocation3 + $0x70] sm:$0xff] %vm1612, %v1707
        %1724 = vst.msk [vmem:[#allocation3 + $0x78] sm:$0xff] %vm1612, %v1708
        %v1725 = vld [vmem:[#allocation4] sm:$0xff]
        %v1726 = vld [vmem:[#allocation4 + $0x10] sm:$0xff]
        %v1727 = vld [vmem:[#allocation4 + $0x20] sm:$0xff]
        %v1728 = vld [vmem:[#allocation4 + $0x30] sm:$0xff]
        %v1729 = vld [vmem:[#allocation4 + $0x40] sm:$0xff]
        %v1730 = vld [vmem:[#allocation4 + $0x50] sm:$0xff]
        %v1731 = vld [vmem:[#allocation4 + $0x60] sm:$0xff]
        %v1732 = vld [vmem:[#allocation4 + $0x70] sm:$0xff]
        %v1733 = vld [vmem:[#allocation4 + $0x80] sm:$0xff]
        %v1734 = vld [vmem:[#allocation4 + $0x90] sm:$0xff]
        %v1735 = vld [vmem:[#allocation4 + $0xa0] sm:$0xff]
        %v1736 = vld [vmem:[#allocation4 + $0xb0] sm:$0xff]
        %v1737 = vld [vmem:[#allocation4 + $0xc0] sm:$0xff]
        %v1738 = vld [vmem:[#allocation4 + $0xd0] sm:$0xff]
        %v1739 = vld [vmem:[#allocation4 + $0xe0] sm:$0xff]
        %v1740 = vld [vmem:[#allocation4 + $0xf0] sm:$0xff]
        %1742 = vset.pattern.permute.xlu0 0
        %1743 = vperm.xlu0 %1742, %v1581
        %v1744 = vpop.permute.xlu0 %1743
        %1747 = vset.pattern.permute.xlu0 0
        %1748 = vperm.xlu0 %1747, %v1583
        %v1749 = vpop.permute.xlu0 %1748
        %1752 = vset.pattern.permute.xlu0 0
        %1753 = vperm.xlu0 %1752, %v1585
        %v1754 = vpop.permute.xlu0 %1753
        %1757 = vset.pattern.permute.xlu0 0
        %1758 = vperm.xlu0 %1757, %v1587
        %v1759 = vpop.permute.xlu0 %1758
        %1762 = vset.pattern.permute.xlu0 0
        %1763 = vperm.xlu0 %1762, %v1589
        %v1764 = vpop.permute.xlu0 %1763
        %1767 = vset.pattern.permute.xlu0 0
        %1768 = vperm.xlu0 %1767, %v1591
        %v1769 = vpop.permute.xlu0 %1768
        %1772 = vset.pattern.permute.xlu0 0
        %1773 = vperm.xlu0 %1772, %v1593
        %v1774 = vpop.permute.xlu0 %1773
        %1777 = vset.pattern.permute.xlu0 0
        %1778 = vperm.xlu0 %1777, %v1595
        %v1779 = vpop.permute.xlu0 %1778
        %1782 = vset.pattern.permute.xlu0 0
        %1783 = vperm.xlu0 %1782, %v1597
        %v1784 = vpop.permute.xlu0 %1783
        %1787 = vset.pattern.permute.xlu0 0
        %1788 = vperm.xlu0 %1787, %v1599
        %v1789 = vpop.permute.xlu0 %1788
        %1792 = vset.pattern.permute.xlu0 0
        %1793 = vperm.xlu0 %1792, %v1601
        %v1794 = vpop.permute.xlu0 %1793
        %1797 = vset.pattern.permute.xlu0 0
        %1798 = vperm.xlu0 %1797, %v1603
        %v1799 = vpop.permute.xlu0 %1798
        %1802 = vset.pattern.permute.xlu0 0
        %1803 = vperm.xlu0 %1802, %v1605
        %v1804 = vpop.permute.xlu0 %1803
        %1807 = vset.pattern.permute.xlu0 0
        %1808 = vperm.xlu0 %1807, %v1607
        %v1809 = vpop.permute.xlu0 %1808
        %1812 = vset.pattern.permute.xlu0 0
        %1813 = vperm.xlu0 %1812, %v1609
        %v1814 = vpop.permute.xlu0 %1813
        %1817 = vset.pattern.permute.xlu0 0
        %1818 = vperm.xlu0 %1817, %v1611
        %v1819 = vpop.permute.xlu0 %1818
        %v1821 = vmul.f32 %v1744, %v1725
        %v1822 = vmul.f32 %v1749, %v1726
        %v1823 = vmul.f32 %v1754, %v1727
        %v1824 = vmul.f32 %v1759, %v1728
        %v1825 = vmul.f32 %v1764, %v1729
        %v1826 = vmul.f32 %v1769, %v1730
        %v1827 = vmul.f32 %v1774, %v1731
        %v1828 = vmul.f32 %v1779, %v1732
        %v1829 = vmul.f32 %v1784, %v1733
        %v1830 = vmul.f32 %v1789, %v1734
        %v1831 = vmul.f32 %v1794, %v1735
        %v1832 = vmul.f32 %v1799, %v1736
        %v1833 = vmul.f32 %v1804, %v1737
        %v1834 = vmul.f32 %v1809, %v1738
        %v1835 = vmul.f32 %v1814, %v1739
        %v1836 = vmul.f32 %v1819, %v1740
        %v1837 = vpack.c.bf16 %v1549, %v1548
        %v1838 = vpack.c.bf16 %v1551, %v1550
        %v1839 = vpack.c.bf16 %v1553, %v1552
        %v1840 = vpack.c.bf16 %v1555, %v1554
        %v1841 = vpack.c.bf16 %v1557, %v1556
        %v1842 = vpack.c.bf16 %v1559, %v1558
        %v1843 = vpack.c.bf16 %v1561, %v1560
        %v1844 = vpack.c.bf16 %v1563, %v1562
        %1845 = vmatprep.subr.bf16.mxu0 0
        %1846 = vmatpush1.bf16.msra.mxu0 %v905
        %1847 = vmatprep.subr.bf16.mxu0 0
        %1848 = vmatpush1.bf16.msra.mxu0 %v903
        %1849 = vmatprep.subr.bf16.mxu0 0
        %1850 = vmatpush1.bf16.msra.mxu0 %v901
        %1851 = vmatprep.subr.bf16.mxu0 0
        %1852 = vmatpush1.bf16.msra.mxu0 %v899
        %1853 = vmatprep.subr.bf16.mxu0 0
        %1854 = vmatpush1.bf16.msra.mxu0 %v897
        %1855 = vmatprep.subr.bf16.mxu0 0
        %1856 = vmatpush1.bf16.msra.mxu0 %v895
        %1857 = vmatprep.subr.bf16.mxu0 0
        %1858 = vmatpush1.bf16.msra.mxu0 %v893
        %1859 = vmatprep.subr.bf16.mxu0 0
        %1860 = vmatpush1.bf16.msra.mxu0 %v891
        %1861 = vmatprep.subr.bf16.mxu0 0
        %1862 = vmatpush2.bf16.msra.mxu0 0
        %1863 = vmatprep.subr.bf16.mxu0 0
        %1864 = vmatpush2.bf16.msra.mxu0 0
        %1865 = vmatprep.subr.bf16.mxu0 0
        %1866 = vmatpush2.bf16.msra.mxu0 0
        %1867 = vmatprep.subr.bf16.mxu0 0
        %1868 = vmatpush2.bf16.msra.mxu0 0
        %1869 = vmatprep.subr.bf16.mxu0 0
        %1870 = vmatpush2.bf16.msra.mxu0 0
        %1871 = vmatprep.subr.bf16.mxu0 0
        %1872 = vmatpush2.bf16.msra.mxu0 0
        %1873 = vmatprep.subr.bf16.mxu0 0
        %1874 = vmatpush2.bf16.msra.mxu0 0
        %1875 = vmatprep.subr.bf16.mxu0 0
        %1876 = vmatpush2.bf16.msra.mxu0 0
        %1877 = vmatprep.mubr.bf16.mxu0 0
        %1878 = vmatmul.mubr.bf16.gmra.mxu0 %v1837
        %v1879 = vpop.f32.mrf.mxu0
        %v1880 = vadd.f32 0.0, %v1879
        %v1881 = vpop.f32.mrf.mxu0
        %v1882 = vpop.f32.mrf.mxu0
        %v1883 = vadd.f32 0.0, %v1882
        %v1884 = vpop.f32.mrf.mxu0
        %1885 = vmatprep.mubr.bf16.mxu0 0
        %1886 = vmatmul.mubr.bf16.gmra.mxu0 %v1838
        %v1887 = vpop.f32.mrf.mxu0
        %v1888 = vadd.f32 0.0, %v1887
        %v1889 = vpop.f32.mrf.mxu0
        %v1890 = vpop.f32.mrf.mxu0
        %v1891 = vadd.f32 0.0, %v1890
        %v1892 = vpop.f32.mrf.mxu0
        %1893 = vmatprep.mubr.bf16.mxu0 0
        %1894 = vmatmul.mubr.bf16.gmra.mxu0 %v1839
        %v1895 = vpop.f32.mrf.mxu0
        %v1896 = vadd.f32 0.0, %v1895
        %v1897 = vpop.f32.mrf.mxu0
        %v1898 = vpop.f32.mrf.mxu0
        %v1899 = vadd.f32 0.0, %v1898
        %v1900 = vpop.f32.mrf.mxu0
        %1901 = vmatprep.mubr.bf16.mxu0 0
        %1902 = vmatmul.mubr.bf16.gmra.mxu0 %v1840
        %v1903 = vpop.f32.mrf.mxu0
        %v1904 = vadd.f32 0.0, %v1903
        %v1905 = vpop.f32.mrf.mxu0
        %v1906 = vpop.f32.mrf.mxu0
        %v1907 = vadd.f32 0.0, %v1906
        %v1908 = vpop.f32.mrf.mxu0
        %1909 = vmatprep.mubr.bf16.mxu0 0
        %1910 = vmatmul.mubr.bf16.gmra.mxu0 %v1841
        %v1911 = vpop.f32.mrf.mxu0
        %v1912 = vadd.f32 0.0, %v1911
        %v1913 = vpop.f32.mrf.mxu0
        %v1914 = vpop.f32.mrf.mxu0
        %v1915 = vadd.f32 0.0, %v1914
        %v1916 = vpop.f32.mrf.mxu0
        %1917 = vmatprep.mubr.bf16.mxu0 0
        %1918 = vmatmul.mubr.bf16.gmra.mxu0 %v1842
        %v1919 = vpop.f32.mrf.mxu0
        %v1920 = vadd.f32 0.0, %v1919
        %v1921 = vpop.f32.mrf.mxu0
        %v1922 = vpop.f32.mrf.mxu0
        %v1923 = vadd.f32 0.0, %v1922
        %v1924 = vpop.f32.mrf.mxu0
        %1925 = vmatprep.mubr.bf16.mxu0 0
        %1926 = vmatmul.mubr.bf16.gmra.mxu0 %v1843
        %v1927 = vpop.f32.mrf.mxu0
        %v1928 = vadd.f32 0.0, %v1927
        %v1929 = vpop.f32.mrf.mxu0
        %v1930 = vpop.f32.mrf.mxu0
        %v1931 = vadd.f32 0.0, %v1930
        %v1932 = vpop.f32.mrf.mxu0
        %1933 = vmatprep.mubr.bf16.mxu0 0
        %1934 = vmatmul.mubr.bf16.gmra.mxu0 %v1844
        %v1935 = vpop.f32.mrf.mxu0
        %v1936 = vadd.f32 0.0, %v1935
        %v1937 = vpop.f32.mrf.mxu0
        %v1938 = vpop.f32.mrf.mxu0
        %v1939 = vadd.f32 0.0, %v1938
        %v1940 = vpop.f32.mrf.mxu0
        %1941 = vdwg.mxu0
        %v1942 = vadd.f32 %v1821, %v1880
        %v1943 = vadd.f32 %v1822, %v1883
        %v1944 = vadd.f32 %v1823, %v1888
        %v1945 = vadd.f32 %v1824, %v1891
        %v1946 = vadd.f32 %v1825, %v1896
        %v1947 = vadd.f32 %v1826, %v1899
        %v1948 = vadd.f32 %v1827, %v1904
        %v1949 = vadd.f32 %v1828, %v1907
        %v1950 = vadd.f32 %v1829, %v1912
        %v1951 = vadd.f32 %v1830, %v1915
        %v1952 = vadd.f32 %v1831, %v1920
        %v1953 = vadd.f32 %v1832, %v1923
        %v1954 = vadd.f32 %v1833, %v1928
        %v1955 = vadd.f32 %v1834, %v1931
        %v1956 = vadd.f32 %v1835, %v1936
        %v1957 = vadd.f32 %v1836, %v1939
        %vm1958 = vcmask 261120
        %1959 = vst.msk [vmem:[#allocation4] sm:$0xff] %vm1958, %v1942
        %1960 = vst.msk [vmem:[#allocation4 + $0x10] sm:$0xff] %vm1958, %v1943
        %1961 = vst.msk [vmem:[#allocation4 + $0x20] sm:$0xff] %vm1958, %v1944
        %1962 = vst.msk [vmem:[#allocation4 + $0x30] sm:$0xff] %vm1958, %v1945
        %1963 = vst.msk [vmem:[#allocation4 + $0x40] sm:$0xff] %vm1958, %v1946
        %1964 = vst.msk [vmem:[#allocation4 + $0x50] sm:$0xff] %vm1958, %v1947
        %1965 = vst.msk [vmem:[#allocation4 + $0x60] sm:$0xff] %vm1958, %v1948
        %1966 = vst.msk [vmem:[#allocation4 + $0x70] sm:$0xff] %vm1958, %v1949
        %1967 = vst.msk [vmem:[#allocation4 + $0x80] sm:$0xff] %vm1958, %v1950
        %1968 = vst.msk [vmem:[#allocation4 + $0x90] sm:$0xff] %vm1958, %v1951
        %1969 = vst.msk [vmem:[#allocation4 + $0xa0] sm:$0xff] %vm1958, %v1952
        %1970 = vst.msk [vmem:[#allocation4 + $0xb0] sm:$0xff] %vm1958, %v1953
        %1971 = vst.msk [vmem:[#allocation4 + $0xc0] sm:$0xff] %vm1958, %v1954
        %1972 = vst.msk [vmem:[#allocation4 + $0xd0] sm:$0xff] %vm1958, %v1955
        %1973 = vst.msk [vmem:[#allocation4 + $0xe0] sm:$0xff] %vm1958, %v1956
        %1974 = vst.msk [vmem:[#allocation4 + $0xf0] sm:$0xff] %vm1958, %v1957
        %1975 = vset.pattern.permute.xlu0 1
        %1976 = vperm.xlu0 %1975, %v1082
        %v1977 = vpop.permute.xlu0 %1976
        %1979 = vset.pattern.permute.xlu0 1
        %1980 = vperm.xlu0 %1979, %v1085
        %v1981 = vpop.permute.xlu0 %1980
        %1983 = vset.pattern.permute.xlu0 1
        %1984 = vperm.xlu0 %1983, %v1090
        %v1985 = vpop.permute.xlu0 %1984
        %1987 = vset.pattern.permute.xlu0 1
        %1988 = vperm.xlu0 %1987, %v1093
        %v1989 = vpop.permute.xlu0 %1988
        %1991 = vset.pattern.permute.xlu0 1
        %1992 = vperm.xlu0 %1991, %v1098
        %v1993 = vpop.permute.xlu0 %1992
        %1995 = vset.pattern.permute.xlu0 1
        %1996 = vperm.xlu0 %1995, %v1101
        %v1997 = vpop.permute.xlu0 %1996
        %1999 = vset.pattern.permute.xlu0 1
        %2000 = vperm.xlu0 %1999, %v1106
        %v2001 = vpop.permute.xlu0 %2000
        %2003 = vset.pattern.permute.xlu0 1
        %2004 = vperm.xlu0 %2003, %v1109
        %v2005 = vpop.permute.xlu0 %2004
        %2007 = vset.pattern.permute.xlu0 1
        %2008 = vperm.xlu0 %2007, %v1114
        %v2009 = vpop.permute.xlu0 %2008
        %2011 = vset.pattern.permute.xlu0 1
        %2012 = vperm.xlu0 %2011, %v1117
        %v2013 = vpop.permute.xlu0 %2012
        %2015 = vset.pattern.permute.xlu0 1
        %2016 = vperm.xlu0 %2015, %v1122
        %v2017 = vpop.permute.xlu0 %2016
        %2019 = vset.pattern.permute.xlu0 1
        %2020 = vperm.xlu0 %2019, %v1125
        %v2021 = vpop.permute.xlu0 %2020
        %2023 = vset.pattern.permute.xlu0 1
        %2024 = vperm.xlu0 %2023, %v1130
        %v2025 = vpop.permute.xlu0 %2024
        %2027 = vset.pattern.permute.xlu0 1
        %2028 = vperm.xlu0 %2027, %v1133
        %v2029 = vpop.permute.xlu0 %2028
        %2031 = vset.pattern.permute.xlu0 1
        %2032 = vperm.xlu0 %2031, %v1138
        %v2033 = vpop.permute.xlu0 %2032
        %2035 = vset.pattern.permute.xlu0 1
        %2036 = vperm.xlu0 %2035, %v1141
        %v2037 = vpop.permute.xlu0 %2036
        %v2039 = vlaneseq
        %v2040 = vshrl.u32 %v2039, 7
        %v2041 = vsub.s32 1, %v2040
        %v2042 = vrot.slane %v954, %v2041
        %v2043 = vadd.f32 %v1977, %v2042
        %v2044 = vadd.f32 %v1981, %v2042
        %v2045 = vadd.f32 %v1985, %v2042
        %v2046 = vadd.f32 %v1989, %v2042
        %v2047 = vadd.f32 %v1993, %v2042
        %v2048 = vadd.f32 %v1997, %v2042
        %v2049 = vadd.f32 %v2001, %v2042
        %v2050 = vadd.f32 %v2005, %v2042
        %v2051 = vadd.f32 %v2009, %v2042
        %v2052 = vadd.f32 %v2013, %v2042
        %v2053 = vadd.f32 %v2017, %v2042
        %v2054 = vadd.f32 %v2021, %v2042
        %v2055 = vadd.f32 %v2025, %v2042
        %v2056 = vadd.f32 %v2029, %v2042
        %v2057 = vadd.f32 %v2033, %v2042
        %v2058 = vadd.f32 %v2037, %v2042
        %vm2059 = vcmp.gt.f32.partialorder %v2043, 0.0
        %vm2060 = vcmp.gt.f32.partialorder %v2044, 0.0
        %vm2061 = vcmp.gt.f32.partialorder %v2045, 0.0
        %vm2062 = vcmp.gt.f32.partialorder %v2046, 0.0
        %vm2063 = vcmp.gt.f32.partialorder %v2047, 0.0
        %vm2064 = vcmp.gt.f32.partialorder %v2048, 0.0
        %vm2065 = vcmp.gt.f32.partialorder %v2049, 0.0
        %vm2066 = vcmp.gt.f32.partialorder %v2050, 0.0
        %vm2067 = vcmp.gt.f32.partialorder %v2051, 0.0
        %vm2068 = vcmp.gt.f32.partialorder %v2052, 0.0
        %vm2069 = vcmp.gt.f32.partialorder %v2053, 0.0
        %vm2070 = vcmp.gt.f32.partialorder %v2054, 0.0
        %vm2071 = vcmp.gt.f32.partialorder %v2055, 0.0
        %vm2072 = vcmp.gt.f32.partialorder %v2056, 0.0
        %vm2073 = vcmp.gt.f32.partialorder %v2057, 0.0
        %vm2074 = vcmp.gt.f32.partialorder %v2058, 0.0
        %v2075 = vmul.f32 %v2043, 0.01
        %v2076 = vmul.f32 %v2044, 0.01
        %v2077 = vmul.f32 %v2045, 0.01
        %v2078 = vmul.f32 %v2046, 0.01
        %v2079 = vmul.f32 %v2047, 0.01
        %v2080 = vmul.f32 %v2048, 0.01
        %v2081 = vmul.f32 %v2049, 0.01
        %v2082 = vmul.f32 %v2050, 0.01
        %v2083 = vmul.f32 %v2051, 0.01
        %v2084 = vmul.f32 %v2052, 0.01
        %v2085 = vmul.f32 %v2053, 0.01
        %v2086 = vmul.f32 %v2054, 0.01
        %v2087 = vmul.f32 %v2055, 0.01
        %v2088 = vmul.f32 %v2056, 0.01
        %v2089 = vmul.f32 %v2057, 0.01
        %v2090 = vmul.f32 %v2058, 0.01
        %v2091 = vsel %vm2059, %v2043, %v2075
        %v2092 = vsel %vm2060, %v2044, %v2076
        %v2093 = vsel %vm2061, %v2045, %v2077
        %v2094 = vsel %vm2062, %v2046, %v2078
        %v2095 = vsel %vm2063, %v2047, %v2079
        %v2096 = vsel %vm2064, %v2048, %v2080
        %v2097 = vsel %vm2065, %v2049, %v2081
        %v2098 = vsel %vm2066, %v2050, %v2082
        %v2099 = vsel %vm2067, %v2051, %v2083
        %v2100 = vsel %vm2068, %v2052, %v2084
        %v2101 = vsel %vm2069, %v2053, %v2085
        %v2102 = vsel %vm2070, %v2054, %v2086
        %v2103 = vsel %vm2071, %v2055, %v2087
        %v2104 = vsel %vm2072, %v2056, %v2088
        %v2105 = vsel %vm2073, %v2057, %v2089
        %v2106 = vsel %vm2074, %v2058, %v2090
        %v2107 = vmul.f32 %v2091, %v669
        %v2108 = vmul.f32 %v2092, %v670
        %v2109 = vmul.f32 %v2093, %v671
        %v2110 = vmul.f32 %v2094, %v672
        %v2111 = vmul.f32 %v2095, %v673
        %v2112 = vmul.f32 %v2096, %v674
        %v2113 = vmul.f32 %v2097, %v675
        %v2114 = vmul.f32 %v2098, %v676
        %v2115 = vmul.f32 %v2099, %v677
        %v2116 = vmul.f32 %v2100, %v678
        %v2117 = vmul.f32 %v2101, %v679
        %v2118 = vmul.f32 %v2102, %v680
        %v2119 = vmul.f32 %v2103, %v681
        %v2120 = vmul.f32 %v2104, %v682
        %v2121 = vmul.f32 %v2105, %v683
        %v2122 = vmul.f32 %v2106, %v684
        %v2123 = vsel %vm653, %v2107, -1e+30
        %v2124 = vsel %vm654, %v2108, -1e+30
        %v2125 = vsel %vm655, %v2109, -1e+30
        %v2126 = vsel %vm656, %v2110, -1e+30
        %v2127 = vsel %vm657, %v2111, -1e+30
        %v2128 = vsel %vm658, %v2112, -1e+30
        %v2129 = vsel %vm659, %v2113, -1e+30
        %v2130 = vsel %vm660, %v2114, -1e+30
        %v2131 = vsel %vm661, %v2115, -1e+30
        %v2132 = vsel %vm662, %v2116, -1e+30
        %v2133 = vsel %vm663, %v2117, -1e+30
        %v2134 = vsel %vm664, %v2118, -1e+30
        %v2135 = vsel %vm665, %v2119, -1e+30
        %v2136 = vsel %vm666, %v2120, -1e+30
        %v2137 = vsel %vm667, %v2121, -1e+30
        %v2138 = vsel %vm668, %v2122, -1e+30
        %v2139 = vld [vmem:[#allocation2] sm:$0xff]
        %v2140 = vld [vmem:[#allocation2 + $0x8] sm:$0xff]
        %v2141 = vld [vmem:[#allocation2 + $0x10] sm:$0xff]
        %v2142 = vld [vmem:[#allocation2 + $0x18] sm:$0xff]
        %v2143 = vld [vmem:[#allocation2 + $0x20] sm:$0xff]
        %v2144 = vld [vmem:[#allocation2 + $0x28] sm:$0xff]
        %v2145 = vld [vmem:[#allocation2 + $0x30] sm:$0xff]
        %v2146 = vld [vmem:[#allocation2 + $0x38] sm:$0xff]
        %v2147 = vld [vmem:[#allocation2 + $0x40] sm:$0xff]
        %v2148 = vld [vmem:[#allocation2 + $0x48] sm:$0xff]
        %v2149 = vld [vmem:[#allocation2 + $0x50] sm:$0xff]
        %v2150 = vld [vmem:[#allocation2 + $0x58] sm:$0xff]
        %v2151 = vld [vmem:[#allocation2 + $0x60] sm:$0xff]
        %v2152 = vld [vmem:[#allocation2 + $0x68] sm:$0xff]
        %v2153 = vld [vmem:[#allocation2 + $0x70] sm:$0xff]
        %v2154 = vld [vmem:[#allocation2 + $0x78] sm:$0xff]
        %2155 = vmax.xlane.f32.xlu0 %v2123
        %v2156 = vpop.xlane.xlu0 %2155
        %2157 = vmax.xlane.f32.xlu0 %v2124
        %v2158 = vpop.xlane.xlu0 %2157
        %2159 = vmax.xlane.f32.xlu0 %v2125
        %v2160 = vpop.xlane.xlu0 %2159
        %2161 = vmax.xlane.f32.xlu0 %v2126
        %v2162 = vpop.xlane.xlu0 %2161
        %2163 = vmax.xlane.f32.xlu0 %v2127
        %v2164 = vpop.xlane.xlu0 %2163
        %2165 = vmax.xlane.f32.xlu0 %v2128
        %v2166 = vpop.xlane.xlu0 %2165
        %2167 = vmax.xlane.f32.xlu0 %v2129
        %v2168 = vpop.xlane.xlu0 %2167
        %2169 = vmax.xlane.f32.xlu0 %v2130
        %v2170 = vpop.xlane.xlu0 %2169
        %2171 = vmax.xlane.f32.xlu0 %v2131
        %v2172 = vpop.xlane.xlu0 %2171
        %2173 = vmax.xlane.f32.xlu0 %v2132
        %v2174 = vpop.xlane.xlu0 %2173
        %2175 = vmax.xlane.f32.xlu0 %v2133
        %v2176 = vpop.xlane.xlu0 %2175
        %2177 = vmax.xlane.f32.xlu0 %v2134
        %v2178 = vpop.xlane.xlu0 %2177
        %2179 = vmax.xlane.f32.xlu0 %v2135
        %v2180 = vpop.xlane.xlu0 %2179
        %2181 = vmax.xlane.f32.xlu0 %v2136
        %v2182 = vpop.xlane.xlu0 %2181
        %2183 = vmax.xlane.f32.xlu0 %v2137
        %v2184 = vpop.xlane.xlu0 %2183
        %2185 = vmax.xlane.f32.xlu0 %v2138
        %v2186 = vpop.xlane.xlu0 %2185
        %v2187 = vmax.f32 %v2139, %v2156
        %v2188 = vmax.f32 %v2140, %v2158
        %v2189 = vmax.f32 %v2141, %v2160
        %v2190 = vmax.f32 %v2142, %v2162
        %v2191 = vmax.f32 %v2143, %v2164
        %v2192 = vmax.f32 %v2144, %v2166
        %v2193 = vmax.f32 %v2145, %v2168
        %v2194 = vmax.f32 %v2146, %v2170
        %v2195 = vmax.f32 %v2147, %v2172
        %v2196 = vmax.f32 %v2148, %v2174
        %v2197 = vmax.f32 %v2149, %v2176
        %v2198 = vmax.f32 %v2150, %v2178
        %v2199 = vmax.f32 %v2151, %v2180
        %v2200 = vmax.f32 %v2152, %v2182
        %v2201 = vmax.f32 %v2153, %v2184
        %v2202 = vmax.f32 %v2154, %v2186
        %vm2203 = vcmp.gt.f32.partialorder %v2187, -5e+29
        %vm2204 = vcmp.gt.f32.partialorder %v2188, -5e+29
        %vm2205 = vcmp.gt.f32.partialorder %v2189, -5e+29
        %vm2206 = vcmp.gt.f32.partialorder %v2190, -5e+29
        %vm2207 = vcmp.gt.f32.partialorder %v2191, -5e+29
        %vm2208 = vcmp.gt.f32.partialorder %v2192, -5e+29
        %vm2209 = vcmp.gt.f32.partialorder %v2193, -5e+29
        %vm2210 = vcmp.gt.f32.partialorder %v2194, -5e+29
        %vm2211 = vcmp.gt.f32.partialorder %v2195, -5e+29
        %vm2212 = vcmp.gt.f32.partialorder %v2196, -5e+29
        %vm2213 = vcmp.gt.f32.partialorder %v2197, -5e+29
        %vm2214 = vcmp.gt.f32.partialorder %v2198, -5e+29
        %vm2215 = vcmp.gt.f32.partialorder %v2199, -5e+29
        %vm2216 = vcmp.gt.f32.partialorder %v2200, -5e+29
        %vm2217 = vcmp.gt.f32.partialorder %v2201, -5e+29
        %vm2218 = vcmp.gt.f32.partialorder %v2202, -5e+29
        %v2219 = vsel %vm2203, %v2187, 0.0
        %v2220 = vsel %vm2204, %v2188, 0.0
        %v2221 = vsel %vm2205, %v2189, 0.0
        %v2222 = vsel %vm2206, %v2190, 0.0
        %v2223 = vsel %vm2207, %v2191, 0.0
        %v2224 = vsel %vm2208, %v2192, 0.0
        %v2225 = vsel %vm2209, %v2193, 0.0
        %v2226 = vsel %vm2210, %v2194, 0.0
        %v2227 = vsel %vm2211, %v2195, 0.0
        %v2228 = vsel %vm2212, %v2196, 0.0
        %v2229 = vsel %vm2213, %v2197, 0.0
        %v2230 = vsel %vm2214, %v2198, 0.0
        %v2231 = vsel %vm2215, %v2199, 0.0
        %v2232 = vsel %vm2216, %v2200, 0.0
        %v2233 = vsel %vm2217, %v2201, 0.0
        %v2234 = vsel %vm2218, %v2202, 0.0
        %2236 = vset.pattern.permute.xlu0 1
        %2237 = vperm.xlu0 %2236, %v2219
        %v2238 = vpop.permute.xlu0 %2237
        %2241 = vset.pattern.permute.xlu0 1
        %2242 = vperm.xlu0 %2241, %v2220
        %v2243 = vpop.permute.xlu0 %2242
        %2246 = vset.pattern.permute.xlu0 1
        %2247 = vperm.xlu0 %2246, %v2221
        %v2248 = vpop.permute.xlu0 %2247
        %2251 = vset.pattern.permute.xlu0 1
        %2252 = vperm.xlu0 %2251, %v2222
        %v2253 = vpop.permute.xlu0 %2252
        %2256 = vset.pattern.permute.xlu0 1
        %2257 = vperm.xlu0 %2256, %v2223
        %v2258 = vpop.permute.xlu0 %2257
        %2261 = vset.pattern.permute.xlu0 1
        %2262 = vperm.xlu0 %2261, %v2224
        %v2263 = vpop.permute.xlu0 %2262
        %2266 = vset.pattern.permute.xlu0 1
        %2267 = vperm.xlu0 %2266, %v2225
        %v2268 = vpop.permute.xlu0 %2267
        %2271 = vset.pattern.permute.xlu0 1
        %2272 = vperm.xlu0 %2271, %v2226
        %v2273 = vpop.permute.xlu0 %2272
        %2276 = vset.pattern.permute.xlu0 1
        %2277 = vperm.xlu0 %2276, %v2227
        %v2278 = vpop.permute.xlu0 %2277
        %2281 = vset.pattern.permute.xlu0 1
        %2282 = vperm.xlu0 %2281, %v2228
        %v2283 = vpop.permute.xlu0 %2282
        %2286 = vset.pattern.permute.xlu0 1
        %2287 = vperm.xlu0 %2286, %v2229
        %v2288 = vpop.permute.xlu0 %2287
        %2291 = vset.pattern.permute.xlu0 1
        %2292 = vperm.xlu0 %2291, %v2230
        %v2293 = vpop.permute.xlu0 %2292
        %2296 = vset.pattern.permute.xlu0 1
        %2297 = vperm.xlu0 %2296, %v2231
        %v2298 = vpop.permute.xlu0 %2297
        %2301 = vset.pattern.permute.xlu0 1
        %2302 = vperm.xlu0 %2301, %v2232
        %v2303 = vpop.permute.xlu0 %2302
        %2306 = vset.pattern.permute.xlu0 1
        %2307 = vperm.xlu0 %2306, %v2233
        %v2308 = vpop.permute.xlu0 %2307
        %2311 = vset.pattern.permute.xlu0 1
        %2312 = vperm.xlu0 %2311, %v2234
        %v2313 = vpop.permute.xlu0 %2312
        %v2315 = vsub.f32 %v2107, %v2238
        %v2316 = vsub.f32 %v2108, %v2243
        %v2317 = vsub.f32 %v2109, %v2248
        %v2318 = vsub.f32 %v2110, %v2253
        %v2319 = vsub.f32 %v2111, %v2258
        %v2320 = vsub.f32 %v2112, %v2263
        %v2321 = vsub.f32 %v2113, %v2268
        %v2322 = vsub.f32 %v2114, %v2273
        %v2323 = vsub.f32 %v2115, %v2278
        %v2324 = vsub.f32 %v2116, %v2283
        %v2325 = vsub.f32 %v2117, %v2288
        %v2326 = vsub.f32 %v2118, %v2293
        %v2327 = vsub.f32 %v2119, %v2298
        %v2328 = vsub.f32 %v2120, %v2303
        %v2329 = vsub.f32 %v2121, %v2308
        %v2330 = vsub.f32 %v2122, %v2313
        %v2331 = vmul.f32 %v2315, 1.442695
        %v2332 = vpow.pop %v2331
        %v2333 = vmul.f32 %v2316, 1.442695
        %v2334 = vpow.pop %v2333
        %v2335 = vmul.f32 %v2317, 1.442695
        %v2336 = vpow.pop %v2335
        %v2337 = vmul.f32 %v2318, 1.442695
        %v2338 = vpow.pop %v2337
        %v2339 = vmul.f32 %v2319, 1.442695
        %v2340 = vpow.pop %v2339
        %v2341 = vmul.f32 %v2320, 1.442695
        %v2342 = vpow.pop %v2341
        %v2343 = vmul.f32 %v2321, 1.442695
        %v2344 = vpow.pop %v2343
        %v2345 = vmul.f32 %v2322, 1.442695
        %v2346 = vpow.pop %v2345
        %v2347 = vmul.f32 %v2323, 1.442695
        %v2348 = vpow.pop %v2347
        %v2349 = vmul.f32 %v2324, 1.442695
        %v2350 = vpow.pop %v2349
        %v2351 = vmul.f32 %v2325, 1.442695
        %v2352 = vpow.pop %v2351
        %v2353 = vmul.f32 %v2326, 1.442695
        %v2354 = vpow.pop %v2353
        %v2355 = vmul.f32 %v2327, 1.442695
        %v2356 = vpow.pop %v2355
        %v2357 = vmul.f32 %v2328, 1.442695
        %v2358 = vpow.pop %v2357
        %v2359 = vmul.f32 %v2329, 1.442695
        %v2360 = vpow.pop %v2359
        %v2361 = vmul.f32 %v2330, 1.442695
        %v2362 = vpow.pop %v2361
        %v2363 = vsel %vm653, %v2332, 0.0
        %v2364 = vsel %vm654, %v2334, 0.0
        %v2365 = vsel %vm655, %v2336, 0.0
        %v2366 = vsel %vm656, %v2338, 0.0
        %v2367 = vsel %vm657, %v2340, 0.0
        %v2368 = vsel %vm658, %v2342, 0.0
        %v2369 = vsel %vm659, %v2344, 0.0
        %v2370 = vsel %vm660, %v2346, 0.0
        %v2371 = vsel %vm661, %v2348, 0.0
        %v2372 = vsel %vm662, %v2350, 0.0
        %v2373 = vsel %vm663, %v2352, 0.0
        %v2374 = vsel %vm664, %v2354, 0.0
        %v2375 = vsel %vm665, %v2356, 0.0
        %v2376 = vsel %vm666, %v2358, 0.0
        %v2377 = vsel %vm667, %v2360, 0.0
        %v2378 = vsel %vm668, %v2362, 0.0
        %v2379 = vsub.f32 %v2139, %v2187
        %v2380 = vsub.f32 %v2140, %v2188
        %v2381 = vsub.f32 %v2141, %v2189
        %v2382 = vsub.f32 %v2142, %v2190
        %v2383 = vsub.f32 %v2143, %v2191
        %v2384 = vsub.f32 %v2144, %v2192
        %v2385 = vsub.f32 %v2145, %v2193
        %v2386 = vsub.f32 %v2146, %v2194
        %v2387 = vsub.f32 %v2147, %v2195
        %v2388 = vsub.f32 %v2148, %v2196
        %v2389 = vsub.f32 %v2149, %v2197
        %v2390 = vsub.f32 %v2150, %v2198
        %v2391 = vsub.f32 %v2151, %v2199
        %v2392 = vsub.f32 %v2152, %v2200
        %v2393 = vsub.f32 %v2153, %v2201
        %v2394 = vsub.f32 %v2154, %v2202
        %v2395 = vmul.f32 %v2379, 1.442695
        %v2396 = vpow.pop %v2395
        %v2397 = vmul.f32 %v2380, 1.442695
        %v2398 = vpow.pop %v2397
        %v2399 = vmul.f32 %v2381, 1.442695
        %v2400 = vpow.pop %v2399
        %v2401 = vmul.f32 %v2382, 1.442695
        %v2402 = vpow.pop %v2401
        %v2403 = vmul.f32 %v2383, 1.442695
        %v2404 = vpow.pop %v2403
        %v2405 = vmul.f32 %v2384, 1.442695
        %v2406 = vpow.pop %v2405
        %v2407 = vmul.f32 %v2385, 1.442695
        %v2408 = vpow.pop %v2407
        %v2409 = vmul.f32 %v2386, 1.442695
        %v2410 = vpow.pop %v2409
        %v2411 = vmul.f32 %v2387, 1.442695
        %v2412 = vpow.pop %v2411
        %v2413 = vmul.f32 %v2388, 1.442695
        %v2414 = vpow.pop %v2413
        %v2415 = vmul.f32 %v2389, 1.442695
        %v2416 = vpow.pop %v2415
        %v2417 = vmul.f32 %v2390, 1.442695
        %v2418 = vpow.pop %v2417
        %v2419 = vmul.f32 %v2391, 1.442695
        %v2420 = vpow.pop %v2419
        %v2421 = vmul.f32 %v2392, 1.442695
        %v2422 = vpow.pop %v2421
        %v2423 = vmul.f32 %v2393, 1.442695
        %v2424 = vpow.pop %v2423
        %v2425 = vmul.f32 %v2394, 1.442695
        %v2426 = vpow.pop %v2425
        %vm2427 = vcmask 15368
        %2428 = vst.msk [vmem:[#allocation2] sm:$0xff] %vm2427, %v2187
        %2429 = vst.msk [vmem:[#allocation2 + $0x8] sm:$0xff] %vm2427, %v2188
        %2430 = vst.msk [vmem:[#allocation2 + $0x10] sm:$0xff] %vm2427, %v2189
        %2431 = vst.msk [vmem:[#allocation2 + $0x18] sm:$0xff] %vm2427, %v2190
        %2432 = vst.msk [vmem:[#allocation2 + $0x20] sm:$0xff] %vm2427, %v2191
        %2433 = vst.msk [vmem:[#allocation2 + $0x28] sm:$0xff] %vm2427, %v2192
        %2434 = vst.msk [vmem:[#allocation2 + $0x30] sm:$0xff] %vm2427, %v2193
        %2435 = vst.msk [vmem:[#allocation2 + $0x38] sm:$0xff] %vm2427, %v2194
        %2436 = vst.msk [vmem:[#allocation2 + $0x40] sm:$0xff] %vm2427, %v2195
        %2437 = vst.msk [vmem:[#allocation2 + $0x48] sm:$0xff] %vm2427, %v2196
        %2438 = vst.msk [vmem:[#allocation2 + $0x50] sm:$0xff] %vm2427, %v2197
        %2439 = vst.msk [vmem:[#allocation2 + $0x58] sm:$0xff] %vm2427, %v2198
        %2440 = vst.msk [vmem:[#allocation2 + $0x60] sm:$0xff] %vm2427, %v2199
        %2441 = vst.msk [vmem:[#allocation2 + $0x68] sm:$0xff] %vm2427, %v2200
        %2442 = vst.msk [vmem:[#allocation2 + $0x70] sm:$0xff] %vm2427, %v2201
        %2443 = vst.msk [vmem:[#allocation2 + $0x78] sm:$0xff] %vm2427, %v2202
        %v2444 = vld [vmem:[#allocation3] sm:$0xff]
        %v2445 = vld [vmem:[#allocation3 + $0x8] sm:$0xff]
        %v2446 = vld [vmem:[#allocation3 + $0x10] sm:$0xff]
        %v2447 = vld [vmem:[#allocation3 + $0x18] sm:$0xff]
        %v2448 = vld [vmem:[#allocation3 + $0x20] sm:$0xff]
        %v2449 = vld [vmem:[#allocation3 + $0x28] sm:$0xff]
        %v2450 = vld [vmem:[#allocation3 + $0x30] sm:$0xff]
        %v2451 = vld [vmem:[#allocation3 + $0x38] sm:$0xff]
        %v2452 = vld [vmem:[#allocation3 + $0x40] sm:$0xff]
        %v2453 = vld [vmem:[#allocation3 + $0x48] sm:$0xff]
        %v2454 = vld [vmem:[#allocation3 + $0x50] sm:$0xff]
        %v2455 = vld [vmem:[#allocation3 + $0x58] sm:$0xff]
        %v2456 = vld [vmem:[#allocation3 + $0x60] sm:$0xff]
        %v2457 = vld [vmem:[#allocation3 + $0x68] sm:$0xff]
        %v2458 = vld [vmem:[#allocation3 + $0x70] sm:$0xff]
        %v2459 = vld [vmem:[#allocation3 + $0x78] sm:$0xff]
        %v2460 = vmul.f32 %v2396, %v2444
        %v2461 = vmul.f32 %v2398, %v2445
        %v2462 = vmul.f32 %v2400, %v2446
        %v2463 = vmul.f32 %v2402, %v2447
        %v2464 = vmul.f32 %v2404, %v2448
        %v2465 = vmul.f32 %v2406, %v2449
        %v2466 = vmul.f32 %v2408, %v2450
        %v2467 = vmul.f32 %v2410, %v2451
        %v2468 = vmul.f32 %v2412, %v2452
        %v2469 = vmul.f32 %v2414, %v2453
        %v2470 = vmul.f32 %v2416, %v2454
        %v2471 = vmul.f32 %v2418, %v2455
        %v2472 = vmul.f32 %v2420, %v2456
        %v2473 = vmul.f32 %v2422, %v2457
        %v2474 = vmul.f32 %v2424, %v2458
        %v2475 = vmul.f32 %v2426, %v2459
        %2476 = vadd.xlane.f32.xlu0 %v2363
        %v2477 = vpop.xlane.xlu0 %2476
        %2478 = vadd.xlane.f32.xlu0 %v2364
        %v2479 = vpop.xlane.xlu0 %2478
        %2480 = vadd.xlane.f32.xlu0 %v2365
        %v2481 = vpop.xlane.xlu0 %2480
        %2482 = vadd.xlane.f32.xlu0 %v2366
        %v2483 = vpop.xlane.xlu0 %2482
        %2484 = vadd.xlane.f32.xlu0 %v2367
        %v2485 = vpop.xlane.xlu0 %2484
        %2486 = vadd.xlane.f32.xlu0 %v2368
        %v2487 = vpop.xlane.xlu0 %2486
        %2488 = vadd.xlane.f32.xlu0 %v2369
        %v2489 = vpop.xlane.xlu0 %2488
        %2490 = vadd.xlane.f32.xlu0 %v2370
        %v2491 = vpop.xlane.xlu0 %2490
        %2492 = vadd.xlane.f32.xlu0 %v2371
        %v2493 = vpop.xlane.xlu0 %2492
        %2494 = vadd.xlane.f32.xlu0 %v2372
        %v2495 = vpop.xlane.xlu0 %2494
        %2496 = vadd.xlane.f32.xlu0 %v2373
        %v2497 = vpop.xlane.xlu0 %2496
        %2498 = vadd.xlane.f32.xlu0 %v2374
        %v2499 = vpop.xlane.xlu0 %2498
        %2500 = vadd.xlane.f32.xlu0 %v2375
        %v2501 = vpop.xlane.xlu0 %2500
        %2502 = vadd.xlane.f32.xlu0 %v2376
        %v2503 = vpop.xlane.xlu0 %2502
        %2504 = vadd.xlane.f32.xlu0 %v2377
        %v2505 = vpop.xlane.xlu0 %2504
        %2506 = vadd.xlane.f32.xlu0 %v2378
        %v2507 = vpop.xlane.xlu0 %2506
        %v2508 = vadd.f32 %v2460, %v2477
        %v2509 = vadd.f32 %v2461, %v2479
        %v2510 = vadd.f32 %v2462, %v2481
        %v2511 = vadd.f32 %v2463, %v2483
        %v2512 = vadd.f32 %v2464, %v2485
        %v2513 = vadd.f32 %v2465, %v2487
        %v2514 = vadd.f32 %v2466, %v2489
        %v2515 = vadd.f32 %v2467, %v2491
        %v2516 = vadd.f32 %v2468, %v2493
        %v2517 = vadd.f32 %v2469, %v2495
        %v2518 = vadd.f32 %v2470, %v2497
        %v2519 = vadd.f32 %v2471, %v2499
        %v2520 = vadd.f32 %v2472, %v2501
        %v2521 = vadd.f32 %v2473, %v2503
        %v2522 = vadd.f32 %v2474, %v2505
        %v2523 = vadd.f32 %v2475, %v2507
        %2524 = vst.msk [vmem:[#allocation3] sm:$0xff] %vm2427, %v2508
        %2525 = vst.msk [vmem:[#allocation3 + $0x8] sm:$0xff] %vm2427, %v2509
        %2526 = vst.msk [vmem:[#allocation3 + $0x10] sm:$0xff] %vm2427, %v2510
        %2527 = vst.msk [vmem:[#allocation3 + $0x18] sm:$0xff] %vm2427, %v2511
        %2528 = vst.msk [vmem:[#allocation3 + $0x20] sm:$0xff] %vm2427, %v2512
        %2529 = vst.msk [vmem:[#allocation3 + $0x28] sm:$0xff] %vm2427, %v2513
        %2530 = vst.msk [vmem:[#allocation3 + $0x30] sm:$0xff] %vm2427, %v2514
        %2531 = vst.msk [vmem:[#allocation3 + $0x38] sm:$0xff] %vm2427, %v2515
        %2532 = vst.msk [vmem:[#allocation3 + $0x40] sm:$0xff] %vm2427, %v2516
        %2533 = vst.msk [vmem:[#allocation3 + $0x48] sm:$0xff] %vm2427, %v2517
        %2534 = vst.msk [vmem:[#allocation3 + $0x50] sm:$0xff] %vm2427, %v2518
        %2535 = vst.msk [vmem:[#allocation3 + $0x58] sm:$0xff] %vm2427, %v2519
        %2536 = vst.msk [vmem:[#allocation3 + $0x60] sm:$0xff] %vm2427, %v2520
        %2537 = vst.msk [vmem:[#allocation3 + $0x68] sm:$0xff] %vm2427, %v2521
        %2538 = vst.msk [vmem:[#allocation3 + $0x70] sm:$0xff] %vm2427, %v2522
        %2539 = vst.msk [vmem:[#allocation3 + $0x78] sm:$0xff] %vm2427, %v2523
        %v2540 = vld [vmem:[#allocation4] sm:$0xff]
        %v2541 = vld [vmem:[#allocation4 + $0x10] sm:$0xff]
        %v2542 = vld [vmem:[#allocation4 + $0x20] sm:$0xff]
        %v2543 = vld [vmem:[#allocation4 + $0x30] sm:$0xff]
        %v2544 = vld [vmem:[#allocation4 + $0x40] sm:$0xff]
        %v2545 = vld [vmem:[#allocation4 + $0x50] sm:$0xff]
        %v2546 = vld [vmem:[#allocation4 + $0x60] sm:$0xff]
        %v2547 = vld [vmem:[#allocation4 + $0x70] sm:$0xff]
        %v2548 = vld [vmem:[#allocation4 + $0x80] sm:$0xff]
        %v2549 = vld [vmem:[#allocation4 + $0x90] sm:$0xff]
        %v2550 = vld [vmem:[#allocation4 + $0xa0] sm:$0xff]
        %v2551 = vld [vmem:[#allocation4 + $0xb0] sm:$0xff]
        %v2552 = vld [vmem:[#allocation4 + $0xc0] sm:$0xff]
        %v2553 = vld [vmem:[#allocation4 + $0xd0] sm:$0xff]
        %v2554 = vld [vmem:[#allocation4 + $0xe0] sm:$0xff]
        %v2555 = vld [vmem:[#allocation4 + $0xf0] sm:$0xff]
        %2557 = vset.pattern.permute.xlu0 1
        %2558 = vperm.xlu0 %2557, %v2396
        %v2559 = vpop.permute.xlu0 %2558
        %2562 = vset.pattern.permute.xlu0 1
        %2563 = vperm.xlu0 %2562, %v2398
        %v2564 = vpop.permute.xlu0 %2563
        %2567 = vset.pattern.permute.xlu0 1
        %2568 = vperm.xlu0 %2567, %v2400
        %v2569 = vpop.permute.xlu0 %2568
        %2572 = vset.pattern.permute.xlu0 1
        %2573 = vperm.xlu0 %2572, %v2402
        %v2574 = vpop.permute.xlu0 %2573
        %2577 = vset.pattern.permute.xlu0 1
        %2578 = vperm.xlu0 %2577, %v2404
        %v2579 = vpop.permute.xlu0 %2578
        %2582 = vset.pattern.permute.xlu0 1
        %2583 = vperm.xlu0 %2582, %v2406
        %v2584 = vpop.permute.xlu0 %2583
        %2587 = vset.pattern.permute.xlu0 1
        %2588 = vperm.xlu0 %2587, %v2408
        %v2589 = vpop.permute.xlu0 %2588
        %2592 = vset.pattern.permute.xlu0 1
        %2593 = vperm.xlu0 %2592, %v2410
        %v2594 = vpop.permute.xlu0 %2593
        %2597 = vset.pattern.permute.xlu0 1
        %2598 = vperm.xlu0 %2597, %v2412
        %v2599 = vpop.permute.xlu0 %2598
        %2602 = vset.pattern.permute.xlu0 1
        %2603 = vperm.xlu0 %2602, %v2414
        %v2604 = vpop.permute.xlu0 %2603
        %2607 = vset.pattern.permute.xlu0 1
        %2608 = vperm.xlu0 %2607, %v2416
        %v2609 = vpop.permute.xlu0 %2608
        %2612 = vset.pattern.permute.xlu0 1
        %2613 = vperm.xlu0 %2612, %v2418
        %v2614 = vpop.permute.xlu0 %2613
        %2617 = vset.pattern.permute.xlu0 1
        %2618 = vperm.xlu0 %2617, %v2420
        %v2619 = vpop.permute.xlu0 %2618
        %2622 = vset.pattern.permute.xlu0 1
        %2623 = vperm.xlu0 %2622, %v2422
        %v2624 = vpop.permute.xlu0 %2623
        %2627 = vset.pattern.permute.xlu0 1
        %2628 = vperm.xlu0 %2627, %v2424
        %v2629 = vpop.permute.xlu0 %2628
        %2632 = vset.pattern.permute.xlu0 1
        %2633 = vperm.xlu0 %2632, %v2426
        %v2634 = vpop.permute.xlu0 %2633
        %v2636 = vmul.f32 %v2559, %v2540
        %v2637 = vmul.f32 %v2564, %v2541
        %v2638 = vmul.f32 %v2569, %v2542
        %v2639 = vmul.f32 %v2574, %v2543
        %v2640 = vmul.f32 %v2579, %v2544
        %v2641 = vmul.f32 %v2584, %v2545
        %v2642 = vmul.f32 %v2589, %v2546
        %v2643 = vmul.f32 %v2594, %v2547
        %v2644 = vmul.f32 %v2599, %v2548
        %v2645 = vmul.f32 %v2604, %v2549
        %v2646 = vmul.f32 %v2609, %v2550
        %v2647 = vmul.f32 %v2614, %v2551
        %v2648 = vmul.f32 %v2619, %v2552
        %v2649 = vmul.f32 %v2624, %v2553
        %v2650 = vmul.f32 %v2629, %v2554
        %v2651 = vmul.f32 %v2634, %v2555
        %v2652 = vpack.c.bf16 %v2364, %v2363
        %v2653 = vpack.c.bf16 %v2366, %v2365
        %v2654 = vpack.c.bf16 %v2368, %v2367
        %v2655 = vpack.c.bf16 %v2370, %v2369
        %v2656 = vpack.c.bf16 %v2372, %v2371
        %v2657 = vpack.c.bf16 %v2374, %v2373
        %v2658 = vpack.c.bf16 %v2376, %v2375
        %v2659 = vpack.c.bf16 %v2378, %v2377
        %2668 = vrot.lane.b32.xlu0 %v891, 96
        %v2669 = vpop.permute.xlu0 %2668
        %2670 = vrot.lane.b32.xlu0 %v893, 96
        %v2671 = vpop.permute.xlu0 %2670
        %2672 = vrot.lane.b32.xlu0 %v895, 96
        %v2673 = vpop.permute.xlu0 %2672
        %2674 = vrot.lane.b32.xlu0 %v897, 96
        %v2675 = vpop.permute.xlu0 %2674
        %2676 = vrot.lane.b32.xlu0 %v899, 96
        %v2677 = vpop.permute.xlu0 %2676
        %2678 = vrot.lane.b32.xlu0 %v901, 96
        %v2679 = vpop.permute.xlu0 %2678
        %2680 = vrot.lane.b32.xlu0 %v903, 96
        %v2681 = vpop.permute.xlu0 %2680
        %2682 = vrot.lane.b32.xlu0 %v905, 96
        %v2683 = vpop.permute.xlu0 %2682
        %2692 = vmatprep.subr.bf16.mxu0 0
        %2693 = vmatpush1.bf16.msra.mxu0 %v2683
        %2694 = vmatprep.subr.bf16.mxu0 0
        %2695 = vmatpush1.bf16.msra.mxu0 %v2681
        %2696 = vmatprep.subr.bf16.mxu0 0
        %2697 = vmatpush1.bf16.msra.mxu0 %v2679
        %2698 = vmatprep.subr.bf16.mxu0 0
        %2699 = vmatpush1.bf16.msra.mxu0 %v2677
        %2700 = vmatprep.subr.bf16.mxu0 0
        %2701 = vmatpush1.bf16.msra.mxu0 %v2675
        %2702 = vmatprep.subr.bf16.mxu0 0
        %2703 = vmatpush1.bf16.msra.mxu0 %v2673
        %2704 = vmatprep.subr.bf16.mxu0 0
        %2705 = vmatpush1.bf16.msra.mxu0 %v2671
        %2706 = vmatprep.subr.bf16.mxu0 0
        %2707 = vmatpush1.bf16.msra.mxu0 %v2669
        %2708 = vmatprep.subr.bf16.mxu0 0
        %2709 = vmatpush2.bf16.msra.mxu0 0
        %2710 = vmatprep.subr.bf16.mxu0 0
        %2711 = vmatpush2.bf16.msra.mxu0 0
        %2712 = vmatprep.subr.bf16.mxu0 0
        %2713 = vmatpush2.bf16.msra.mxu0 0
        %2714 = vmatprep.subr.bf16.mxu0 0
        %2715 = vmatpush2.bf16.msra.mxu0 0
        %2716 = vmatprep.subr.bf16.mxu0 0
        %2717 = vmatpush2.bf16.msra.mxu0 0
        %2718 = vmatprep.subr.bf16.mxu0 0
        %2719 = vmatpush2.bf16.msra.mxu0 0
        %2720 = vmatprep.subr.bf16.mxu0 0
        %2721 = vmatpush2.bf16.msra.mxu0 0
        %2722 = vmatprep.subr.bf16.mxu0 0
        %2723 = vmatpush2.bf16.msra.mxu0 0
        %2724 = vmatprep.mubr.bf16.mxu0 0
        %2725 = vmatmul.mubr.bf16.gmra.mxu0 %v2652
        %v2726 = vpop.f32.mrf.mxu0
        %v2727 = vadd.f32 0.0, %v2726
        %v2728 = vpop.f32.mrf.mxu0
        %v2729 = vpop.f32.mrf.mxu0
        %v2730 = vadd.f32 0.0, %v2729
        %v2731 = vpop.f32.mrf.mxu0
        %2732 = vmatprep.mubr.bf16.mxu0 0
        %2733 = vmatmul.mubr.bf16.gmra.mxu0 %v2653
        %v2734 = vpop.f32.mrf.mxu0
        %v2735 = vadd.f32 0.0, %v2734
        %v2736 = vpop.f32.mrf.mxu0
        %v2737 = vpop.f32.mrf.mxu0
        %v2738 = vadd.f32 0.0, %v2737
        %v2739 = vpop.f32.mrf.mxu0
        %2740 = vmatprep.mubr.bf16.mxu0 0
        %2741 = vmatmul.mubr.bf16.gmra.mxu0 %v2654
        %v2742 = vpop.f32.mrf.mxu0
        %v2743 = vadd.f32 0.0, %v2742
        %v2744 = vpop.f32.mrf.mxu0
        %v2745 = vpop.f32.mrf.mxu0
        %v2746 = vadd.f32 0.0, %v2745
        %v2747 = vpop.f32.mrf.mxu0
        %2748 = vmatprep.mubr.bf16.mxu0 0
        %2749 = vmatmul.mubr.bf16.gmra.mxu0 %v2655
        %v2750 = vpop.f32.mrf.mxu0
        %v2751 = vadd.f32 0.0, %v2750
        %v2752 = vpop.f32.mrf.mxu0
        %v2753 = vpop.f32.mrf.mxu0
        %v2754 = vadd.f32 0.0, %v2753
        %v2755 = vpop.f32.mrf.mxu0
        %2756 = vmatprep.mubr.bf16.mxu0 0
        %2757 = vmatmul.mubr.bf16.gmra.mxu0 %v2656
        %v2758 = vpop.f32.mrf.mxu0
        %v2759 = vadd.f32 0.0, %v2758
        %v2760 = vpop.f32.mrf.mxu0
        %v2761 = vpop.f32.mrf.mxu0
        %v2762 = vadd.f32 0.0, %v2761
        %v2763 = vpop.f32.mrf.mxu0
        %2764 = vmatprep.mubr.bf16.mxu0 0
        %2765 = vmatmul.mubr.bf16.gmra.mxu0 %v2657
        %v2766 = vpop.f32.mrf.mxu0
        %v2767 = vadd.f32 0.0, %v2766
        %v2768 = vpop.f32.mrf.mxu0
        %v2769 = vpop.f32.mrf.mxu0
        %v2770 = vadd.f32 0.0, %v2769
        %v2771 = vpop.f32.mrf.mxu0
        %2772 = vmatprep.mubr.bf16.mxu0 0
        %2773 = vmatmul.mubr.bf16.gmra.mxu0 %v2658
        %v2774 = vpop.f32.mrf.mxu0
        %v2775 = vadd.f32 0.0, %v2774
        %v2776 = vpop.f32.mrf.mxu0
        %v2777 = vpop.f32.mrf.mxu0
        %v2778 = vadd.f32 0.0, %v2777
        %v2779 = vpop.f32.mrf.mxu0
        %2780 = vmatprep.mubr.bf16.mxu0 0
        %2781 = vmatmul.mubr.bf16.gmra.mxu0 %v2659
        %v2782 = vpop.f32.mrf.mxu0
        %v2783 = vadd.f32 0.0, %v2782
        %v2784 = vpop.f32.mrf.mxu0
        %v2785 = vpop.f32.mrf.mxu0
        %v2786 = vadd.f32 0.0, %v2785
        %v2787 = vpop.f32.mrf.mxu0
        %2788 = vdwg.mxu0
        %2805 = vrot.lane.b32.xlu0 %v2727, 32
        %v2806 = vpop.permute.xlu0 %2805
        %2807 = vrot.lane.b32.xlu0 %v2730, 32
        %v2808 = vpop.permute.xlu0 %2807
        %2809 = vrot.lane.b32.xlu0 %v2735, 32
        %v2810 = vpop.permute.xlu0 %2809
        %2811 = vrot.lane.b32.xlu0 %v2738, 32
        %v2812 = vpop.permute.xlu0 %2811
        %2813 = vrot.lane.b32.xlu0 %v2743, 32
        %v2814 = vpop.permute.xlu0 %2813
        %2815 = vrot.lane.b32.xlu0 %v2746, 32
        %v2816 = vpop.permute.xlu0 %2815
        %2817 = vrot.lane.b32.xlu0 %v2751, 32
        %v2818 = vpop.permute.xlu0 %2817
        %2819 = vrot.lane.b32.xlu0 %v2754, 32
        %v2820 = vpop.permute.xlu0 %2819
        %2821 = vrot.lane.b32.xlu0 %v2759, 32
        %v2822 = vpop.permute.xlu0 %2821
        %2823 = vrot.lane.b32.xlu0 %v2762, 32
        %v2824 = vpop.permute.xlu0 %2823
        %2825 = vrot.lane.b32.xlu0 %v2767, 32
        %v2826 = vpop.permute.xlu0 %2825
        %2827 = vrot.lane.b32.xlu0 %v2770, 32
        %v2828 = vpop.permute.xlu0 %2827
        %2829 = vrot.lane.b32.xlu0 %v2775, 32
        %v2830 = vpop.permute.xlu0 %2829
        %2831 = vrot.lane.b32.xlu0 %v2778, 32
        %v2832 = vpop.permute.xlu0 %2831
        %2833 = vrot.lane.b32.xlu0 %v2783, 32
        %v2834 = vpop.permute.xlu0 %2833
        %2835 = vrot.lane.b32.xlu0 %v2786, 32
        %v2836 = vpop.permute.xlu0 %2835
        %v2853 = vadd.f32 %v2636, %v2806
        %v2854 = vadd.f32 %v2637, %v2808
        %v2855 = vadd.f32 %v2638, %v2810
        %v2856 = vadd.f32 %v2639, %v2812
        %v2857 = vadd.f32 %v2640, %v2814
        %v2858 = vadd.f32 %v2641, %v2816
        %v2859 = vadd.f32 %v2642, %v2818
        %v2860 = vadd.f32 %v2643, %v2820
        %v2861 = vadd.f32 %v2644, %v2822
        %v2862 = vadd.f32 %v2645, %v2824
        %v2863 = vadd.f32 %v2646, %v2826
        %v2864 = vadd.f32 %v2647, %v2828
        %v2865 = vadd.f32 %v2648, %v2830
        %v2866 = vadd.f32 %v2649, %v2832
        %v2867 = vadd.f32 %v2650, %v2834
        %v2868 = vadd.f32 %v2651, %v2836
        %vm2869 = vcmask 523520
        %2870 = vst.msk [vmem:[#allocation4] sm:$0xff] %vm2869, %v2853
        %2871 = vst.msk [vmem:[#allocation4 + $0x10] sm:$0xff] %vm2869, %v2854
        %2872 = vst.msk [vmem:[#allocation4 + $0x20] sm:$0xff] %vm2869, %v2855
        %2873 = vst.msk [vmem:[#allocation4 + $0x30] sm:$0xff] %vm2869, %v2856
        %2874 = vst.msk [vmem:[#allocation4 + $0x40] sm:$0xff] %vm2869, %v2857
        %2875 = vst.msk [vmem:[#allocation4 + $0x50] sm:$0xff] %vm2869, %v2858
        %2876 = vst.msk [vmem:[#allocation4 + $0x60] sm:$0xff] %vm2869, %v2859
        %2877 = vst.msk [vmem:[#allocation4 + $0x70] sm:$0xff] %vm2869, %v2860
        %2878 = vst.msk [vmem:[#allocation4 + $0x80] sm:$0xff] %vm2869, %v2861
        %2879 = vst.msk [vmem:[#allocation4 + $0x90] sm:$0xff] %vm2869, %v2862
        %2880 = vst.msk [vmem:[#allocation4 + $0xa0] sm:$0xff] %vm2869, %v2863
        %2881 = vst.msk [vmem:[#allocation4 + $0xb0] sm:$0xff] %vm2869, %v2864
        %2882 = vst.msk [vmem:[#allocation4 + $0xc0] sm:$0xff] %vm2869, %v2865
        %2883 = vst.msk [vmem:[#allocation4 + $0xd0] sm:$0xff] %vm2869, %v2866
        %2884 = vst.msk [vmem:[#allocation4 + $0xe0] sm:$0xff] %vm2869, %v2867
        %2885 = vst.msk [vmem:[#allocation4 + $0xf0] sm:$0xff] %vm2869, %v2868
        %2886 = vset.pattern.permute.xlu0 2
        %2887 = vperm.xlu0 %2886, %v1082
        %v2888 = vpop.permute.xlu0 %2887
        %2890 = vset.pattern.permute.xlu0 2
        %2891 = vperm.xlu0 %2890, %v1085
        %v2892 = vpop.permute.xlu0 %2891
        %2894 = vset.pattern.permute.xlu0 2
        %2895 = vperm.xlu0 %2894, %v1090
        %v2896 = vpop.permute.xlu0 %2895
        %2898 = vset.pattern.permute.xlu0 2
        %2899 = vperm.xlu0 %2898, %v1093
        %v2900 = vpop.permute.xlu0 %2899
        %2902 = vset.pattern.permute.xlu0 2
        %2903 = vperm.xlu0 %2902, %v1098
        %v2904 = vpop.permute.xlu0 %2903
        %2906 = vset.pattern.permute.xlu0 2
        %2907 = vperm.xlu0 %2906, %v1101
        %v2908 = vpop.permute.xlu0 %2907
        %2910 = vset.pattern.permute.xlu0 2
        %2911 = vperm.xlu0 %2910, %v1106
        %v2912 = vpop.permute.xlu0 %2911
        %2914 = vset.pattern.permute.xlu0 2
        %2915 = vperm.xlu0 %2914, %v1109
        %v2916 = vpop.permute.xlu0 %2915
        %2918 = vset.pattern.permute.xlu0 2
        %2919 = vperm.xlu0 %2918, %v1114
        %v2920 = vpop.permute.xlu0 %2919
        %2922 = vset.pattern.permute.xlu0 2
        %2923 = vperm.xlu0 %2922, %v1117
        %v2924 = vpop.permute.xlu0 %2923
        %2926 = vset.pattern.permute.xlu0 2
        %2927 = vperm.xlu0 %2926, %v1122
        %v2928 = vpop.permute.xlu0 %2927
        %2930 = vset.pattern.permute.xlu0 2
        %2931 = vperm.xlu0 %2930, %v1125
        %v2932 = vpop.permute.xlu0 %2931
        %2934 = vset.pattern.permute.xlu0 2
        %2935 = vperm.xlu0 %2934, %v1130
        %v2936 = vpop.permute.xlu0 %2935
        %2938 = vset.pattern.permute.xlu0 2
        %2939 = vperm.xlu0 %2938, %v1133
        %v2940 = vpop.permute.xlu0 %2939
        %2942 = vset.pattern.permute.xlu0 2
        %2943 = vperm.xlu0 %2942, %v1138
        %v2944 = vpop.permute.xlu0 %2943
        %2946 = vset.pattern.permute.xlu0 2
        %2947 = vperm.xlu0 %2946, %v1141
        %v2948 = vpop.permute.xlu0 %2947
        %v2950 = vlaneseq
        %v2951 = vshrl.u32 %v2950, 7
        %v2952 = vsub.s32 2, %v2951
        %v2953 = vrot.slane %v954, %v2952
        %v2954 = vadd.f32 %v2888, %v2953
        %v2955 = vadd.f32 %v2892, %v2953
        %v2956 = vadd.f32 %v2896, %v2953
        %v2957 = vadd.f32 %v2900, %v2953
        %v2958 = vadd.f32 %v2904, %v2953
        %v2959 = vadd.f32 %v2908, %v2953
        %v2960 = vadd.f32 %v2912, %v2953
        %v2961 = vadd.f32 %v2916, %v2953
        %v2962 = vadd.f32 %v2920, %v2953
        %v2963 = vadd.f32 %v2924, %v2953
        %v2964 = vadd.f32 %v2928, %v2953
        %v2965 = vadd.f32 %v2932, %v2953
        %v2966 = vadd.f32 %v2936, %v2953
        %v2967 = vadd.f32 %v2940, %v2953
        %v2968 = vadd.f32 %v2944, %v2953
        %v2969 = vadd.f32 %v2948, %v2953
        %vm2970 = vcmp.gt.f32.partialorder %v2954, 0.0
        %vm2971 = vcmp.gt.f32.partialorder %v2955, 0.0
        %vm2972 = vcmp.gt.f32.partialorder %v2956, 0.0
        %vm2973 = vcmp.gt.f32.partialorder %v2957, 0.0
        %vm2974 = vcmp.gt.f32.partialorder %v2958, 0.0
        %vm2975 = vcmp.gt.f32.partialorder %v2959, 0.0
        %vm2976 = vcmp.gt.f32.partialorder %v2960, 0.0
        %vm2977 = vcmp.gt.f32.partialorder %v2961, 0.0
        %vm2978 = vcmp.gt.f32.partialorder %v2962, 0.0
        %vm2979 = vcmp.gt.f32.partialorder %v2963, 0.0
        %vm2980 = vcmp.gt.f32.partialorder %v2964, 0.0
        %vm2981 = vcmp.gt.f32.partialorder %v2965, 0.0
        %vm2982 = vcmp.gt.f32.partialorder %v2966, 0.0
        %vm2983 = vcmp.gt.f32.partialorder %v2967, 0.0
        %vm2984 = vcmp.gt.f32.partialorder %v2968, 0.0
        %vm2985 = vcmp.gt.f32.partialorder %v2969, 0.0
        %v2986 = vmul.f32 %v2954, 0.01
        %v2987 = vmul.f32 %v2955, 0.01
        %v2988 = vmul.f32 %v2956, 0.01
        %v2989 = vmul.f32 %v2957, 0.01
        %v2990 = vmul.f32 %v2958, 0.01
        %v2991 = vmul.f32 %v2959, 0.01
        %v2992 = vmul.f32 %v2960, 0.01
        %v2993 = vmul.f32 %v2961, 0.01
        %v2994 = vmul.f32 %v2962, 0.01
        %v2995 = vmul.f32 %v2963, 0.01
        %v2996 = vmul.f32 %v2964, 0.01
        %v2997 = vmul.f32 %v2965, 0.01
        %v2998 = vmul.f32 %v2966, 0.01
        %v2999 = vmul.f32 %v2967, 0.01
        %v3000 = vmul.f32 %v2968, 0.01
        %v3001 = vmul.f32 %v2969, 0.01
        %v3002 = vsel %vm2970, %v2954, %v2986
        %v3003 = vsel %vm2971, %v2955, %v2987
        %v3004 = vsel %vm2972, %v2956, %v2988
        %v3005 = vsel %vm2973, %v2957, %v2989
        %v3006 = vsel %vm2974, %v2958, %v2990
        %v3007 = vsel %vm2975, %v2959, %v2991
        %v3008 = vsel %vm2976, %v2960, %v2992
        %v3009 = vsel %vm2977, %v2961, %v2993
        %v3010 = vsel %vm2978, %v2962, %v2994
        %v3011 = vsel %vm2979, %v2963, %v2995
        %v3012 = vsel %vm2980, %v2964, %v2996
        %v3013 = vsel %vm2981, %v2965, %v2997
        %v3014 = vsel %vm2982, %v2966, %v2998
        %v3015 = vsel %vm2983, %v2967, %v2999
        %v3016 = vsel %vm2984, %v2968, %v3000
        %v3017 = vsel %vm2985, %v2969, %v3001
        %v3018 = vmul.f32 %v3002, %v669
        %v3019 = vmul.f32 %v3003, %v670
        %v3020 = vmul.f32 %v3004, %v671
        %v3021 = vmul.f32 %v3005, %v672
        %v3022 = vmul.f32 %v3006, %v673
        %v3023 = vmul.f32 %v3007, %v674
        %v3024 = vmul.f32 %v3008, %v675
        %v3025 = vmul.f32 %v3009, %v676
        %v3026 = vmul.f32 %v3010, %v677
        %v3027 = vmul.f32 %v3011, %v678
        %v3028 = vmul.f32 %v3012, %v679
        %v3029 = vmul.f32 %v3013, %v680
        %v3030 = vmul.f32 %v3014, %v681
        %v3031 = vmul.f32 %v3015, %v682
        %v3032 = vmul.f32 %v3016, %v683
        %v3033 = vmul.f32 %v3017, %v684
        %v3034 = vsel %vm653, %v3018, -1e+30
        %v3035 = vsel %vm654, %v3019, -1e+30
        %v3036 = vsel %vm655, %v3020, -1e+30
        %v3037 = vsel %vm656, %v3021, -1e+30
        %v3038 = vsel %vm657, %v3022, -1e+30
        %v3039 = vsel %vm658, %v3023, -1e+30
        %v3040 = vsel %vm659, %v3024, -1e+30
        %v3041 = vsel %vm660, %v3025, -1e+30
        %v3042 = vsel %vm661, %v3026, -1e+30
        %v3043 = vsel %vm662, %v3027, -1e+30
        %v3044 = vsel %vm663, %v3028, -1e+30
        %v3045 = vsel %vm664, %v3029, -1e+30
        %v3046 = vsel %vm665, %v3030, -1e+30
        %v3047 = vsel %vm666, %v3031, -1e+30
        %v3048 = vsel %vm667, %v3032, -1e+30
        %v3049 = vsel %vm668, %v3033, -1e+30
        %v3050 = vld [vmem:[#allocation2] sm:$0xff]
        %v3051 = vld [vmem:[#allocation2 + $0x8] sm:$0xff]
        %v3052 = vld [vmem:[#allocation2 + $0x10] sm:$0xff]
        %v3053 = vld [vmem:[#allocation2 + $0x18] sm:$0xff]
        %v3054 = vld [vmem:[#allocation2 + $0x20] sm:$0xff]
        %v3055 = vld [vmem:[#allocation2 + $0x28] sm:$0xff]
        %v3056 = vld [vmem:[#allocation2 + $0x30] sm:$0xff]
        %v3057 = vld [vmem:[#allocation2 + $0x38] sm:$0xff]
        %v3058 = vld [vmem:[#allocation2 + $0x40] sm:$0xff]
        %v3059 = vld [vmem:[#allocation2 + $0x48] sm:$0xff]
        %v3060 = vld [vmem:[#allocation2 + $0x50] sm:$0xff]
        %v3061 = vld [vmem:[#allocation2 + $0x58] sm:$0xff]
        %v3062 = vld [vmem:[#allocation2 + $0x60] sm:$0xff]
        %v3063 = vld [vmem:[#allocation2 + $0x68] sm:$0xff]
        %v3064 = vld [vmem:[#allocation2 + $0x70] sm:$0xff]
        %v3065 = vld [vmem:[#allocation2 + $0x78] sm:$0xff]
        %3066 = vmax.xlane.f32.xlu0 %v3034
        %v3067 = vpop.xlane.xlu0 %3066
        %3068 = vmax.xlane.f32.xlu0 %v3035
        %v3069 = vpop.xlane.xlu0 %3068
        %3070 = vmax.xlane.f32.xlu0 %v3036
        %v3071 = vpop.xlane.xlu0 %3070
        %3072 = vmax.xlane.f32.xlu0 %v3037
        %v3073 = vpop.xlane.xlu0 %3072
        %3074 = vmax.xlane.f32.xlu0 %v3038
        %v3075 = vpop.xlane.xlu0 %3074
        %3076 = vmax.xlane.f32.xlu0 %v3039
        %v3077 = vpop.xlane.xlu0 %3076
        %3078 = vmax.xlane.f32.xlu0 %v3040
        %v3079 = vpop.xlane.xlu0 %3078
        %3080 = vmax.xlane.f32.xlu0 %v3041
        %v3081 = vpop.xlane.xlu0 %3080
        %3082 = vmax.xlane.f32.xlu0 %v3042
        %v3083 = vpop.xlane.xlu0 %3082
        %3084 = vmax.xlane.f32.xlu0 %v3043
        %v3085 = vpop.xlane.xlu0 %3084
        %3086 = vmax.xlane.f32.xlu0 %v3044
        %v3087 = vpop.xlane.xlu0 %3086
        %3088 = vmax.xlane.f32.xlu0 %v3045
        %v3089 = vpop.xlane.xlu0 %3088
        %3090 = vmax.xlane.f32.xlu0 %v3046
        %v3091 = vpop.xlane.xlu0 %3090
        %3092 = vmax.xlane.f32.xlu0 %v3047
        %v3093 = vpop.xlane.xlu0 %3092
        %3094 = vmax.xlane.f32.xlu0 %v3048
        %v3095 = vpop.xlane.xlu0 %3094
        %3096 = vmax.xlane.f32.xlu0 %v3049
        %v3097 = vpop.xlane.xlu0 %3096
        %v3098 = vmax.f32 %v3050, %v3067
        %v3099 = vmax.f32 %v3051, %v3069
        %v3100 = vmax.f32 %v3052, %v3071
        %v3101 = vmax.f32 %v3053, %v3073
        %v3102 = vmax.f32 %v3054, %v3075
        %v3103 = vmax.f32 %v3055, %v3077
        %v3104 = vmax.f32 %v3056, %v3079
        %v3105 = vmax.f32 %v3057, %v3081
        %v3106 = vmax.f32 %v3058, %v3083
        %v3107 = vmax.f32 %v3059, %v3085
        %v3108 = vmax.f32 %v3060, %v3087
        %v3109 = vmax.f32 %v3061, %v3089
        %v3110 = vmax.f32 %v3062, %v3091
        %v3111 = vmax.f32 %v3063, %v3093
        %v3112 = vmax.f32 %v3064, %v3095
        %v3113 = vmax.f32 %v3065, %v3097
        %vm3114 = vcmp.gt.f32.partialorder %v3098, -5e+29
        %vm3115 = vcmp.gt.f32.partialorder %v3099, -5e+29
        %vm3116 = vcmp.gt.f32.partialorder %v3100, -5e+29
        %vm3117 = vcmp.gt.f32.partialorder %v3101, -5e+29
        %vm3118 = vcmp.gt.f32.partialorder %v3102, -5e+29
        %vm3119 = vcmp.gt.f32.partialorder %v3103, -5e+29
        %vm3120 = vcmp.gt.f32.partialorder %v3104, -5e+29
        %vm3121 = vcmp.gt.f32.partialorder %v3105, -5e+29
        %vm3122 = vcmp.gt.f32.partialorder %v3106, -5e+29
        %vm3123 = vcmp.gt.f32.partialorder %v3107, -5e+29
        %vm3124 = vcmp.gt.f32.partialorder %v3108, -5e+29
        %vm3125 = vcmp.gt.f32.partialorder %v3109, -5e+29
        %vm3126 = vcmp.gt.f32.partialorder %v3110, -5e+29
        %vm3127 = vcmp.gt.f32.partialorder %v3111, -5e+29
        %vm3128 = vcmp.gt.f32.partialorder %v3112, -5e+29
        %vm3129 = vcmp.gt.f32.partialorder %v3113, -5e+29
        %v3130 = vsel %vm3114, %v3098, 0.0
        %v3131 = vsel %vm3115, %v3099, 0.0
        %v3132 = vsel %vm3116, %v3100, 0.0
        %v3133 = vsel %vm3117, %v3101, 0.0
        %v3134 = vsel %vm3118, %v3102, 0.0
        %v3135 = vsel %vm3119, %v3103, 0.0
        %v3136 = vsel %vm3120, %v3104, 0.0
        %v3137 = vsel %vm3121, %v3105, 0.0
        %v3138 = vsel %vm3122, %v3106, 0.0
        %v3139 = vsel %vm3123, %v3107, 0.0
        %v3140 = vsel %vm3124, %v3108, 0.0
        %v3141 = vsel %vm3125, %v3109, 0.0
        %v3142 = vsel %vm3126, %v3110, 0.0
        %v3143 = vsel %vm3127, %v3111, 0.0
        %v3144 = vsel %vm3128, %v3112, 0.0
        %v3145 = vsel %vm3129, %v3113, 0.0
        %3147 = vset.pattern.permute.xlu0 2
        %3148 = vperm.xlu0 %3147, %v3130
        %v3149 = vpop.permute.xlu0 %3148
        %3152 = vset.pattern.permute.xlu0 2
        %3153 = vperm.xlu0 %3152, %v3131
        %v3154 = vpop.permute.xlu0 %3153
        %3157 = vset.pattern.permute.xlu0 2
        %3158 = vperm.xlu0 %3157, %v3132
        %v3159 = vpop.permute.xlu0 %3158
        %3162 = vset.pattern.permute.xlu0 2
        %3163 = vperm.xlu0 %3162, %v3133
        %v3164 = vpop.permute.xlu0 %3163
        %3167 = vset.pattern.permute.xlu0 2
        %3168 = vperm.xlu0 %3167, %v3134
        %v3169 = vpop.permute.xlu0 %3168
        %3172 = vset.pattern.permute.xlu0 2
        %3173 = vperm.xlu0 %3172, %v3135
        %v3174 = vpop.permute.xlu0 %3173
        %3177 = vset.pattern.permute.xlu0 2
        %3178 = vperm.xlu0 %3177, %v3136
        %v3179 = vpop.permute.xlu0 %3178
        %3182 = vset.pattern.permute.xlu0 2
        %3183 = vperm.xlu0 %3182, %v3137
        %v3184 = vpop.permute.xlu0 %3183
        %3187 = vset.pattern.permute.xlu0 2
        %3188 = vperm.xlu0 %3187, %v3138
        %v3189 = vpop.permute.xlu0 %3188
        %3192 = vset.pattern.permute.xlu0 2
        %3193 = vperm.xlu0 %3192, %v3139
        %v3194 = vpop.permute.xlu0 %3193
        %3197 = vset.pattern.permute.xlu0 2
        %3198 = vperm.xlu0 %3197, %v3140
        %v3199 = vpop.permute.xlu0 %3198
        %3202 = vset.pattern.permute.xlu0 2
        %3203 = vperm.xlu0 %3202, %v3141
        %v3204 = vpop.permute.xlu0 %3203
        %3207 = vset.pattern.permute.xlu0 2
        %3208 = vperm.xlu0 %3207, %v3142
        %v3209 = vpop.permute.xlu0 %3208
        %3212 = vset.pattern.permute.xlu0 2
        %3213 = vperm.xlu0 %3212, %v3143
        %v3214 = vpop.permute.xlu0 %3213
        %3217 = vset.pattern.permute.xlu0 2
        %3218 = vperm.xlu0 %3217, %v3144
        %v3219 = vpop.permute.xlu0 %3218
        %3222 = vset.pattern.permute.xlu0 2
        %3223 = vperm.xlu0 %3222, %v3145
        %v3224 = vpop.permute.xlu0 %3223
        %v3226 = vsub.f32 %v3018, %v3149
        %v3227 = vsub.f32 %v3019, %v3154
        %v3228 = vsub.f32 %v3020, %v3159
        %v3229 = vsub.f32 %v3021, %v3164
        %v3230 = vsub.f32 %v3022, %v3169
        %v3231 = vsub.f32 %v3023, %v3174
        %v3232 = vsub.f32 %v3024, %v3179
        %v3233 = vsub.f32 %v3025, %v3184
        %v3234 = vsub.f32 %v3026, %v3189
        %v3235 = vsub.f32 %v3027, %v3194
        %v3236 = vsub.f32 %v3028, %v3199
        %v3237 = vsub.f32 %v3029, %v3204
        %v3238 = vsub.f32 %v3030, %v3209
        %v3239 = vsub.f32 %v3031, %v3214
        %v3240 = vsub.f32 %v3032, %v3219
        %v3241 = vsub.f32 %v3033, %v3224
        %v3242 = vmul.f32 %v3226, 1.442695
        %v3243 = vpow.pop %v3242
        %v3244 = vmul.f32 %v3227, 1.442695
        %v3245 = vpow.pop %v3244
        %v3246 = vmul.f32 %v3228, 1.442695
        %v3247 = vpow.pop %v3246
        %v3248 = vmul.f32 %v3229, 1.442695
        %v3249 = vpow.pop %v3248
        %v3250 = vmul.f32 %v3230, 1.442695
        %v3251 = vpow.pop %v3250
        %v3252 = vmul.f32 %v3231, 1.442695
        %v3253 = vpow.pop %v3252
        %v3254 = vmul.f32 %v3232, 1.442695
        %v3255 = vpow.pop %v3254
        %v3256 = vmul.f32 %v3233, 1.442695
        %v3257 = vpow.pop %v3256
        %v3258 = vmul.f32 %v3234, 1.442695
        %v3259 = vpow.pop %v3258
        %v3260 = vmul.f32 %v3235, 1.442695
        %v3261 = vpow.pop %v3260
        %v3262 = vmul.f32 %v3236, 1.442695
        %v3263 = vpow.pop %v3262
        %v3264 = vmul.f32 %v3237, 1.442695
        %v3265 = vpow.pop %v3264
        %v3266 = vmul.f32 %v3238, 1.442695
        %v3267 = vpow.pop %v3266
        %v3268 = vmul.f32 %v3239, 1.442695
        %v3269 = vpow.pop %v3268
        %v3270 = vmul.f32 %v3240, 1.442695
        %v3271 = vpow.pop %v3270
        %v3272 = vmul.f32 %v3241, 1.442695
        %v3273 = vpow.pop %v3272
        %v3274 = vsel %vm653, %v3243, 0.0
        %v3275 = vsel %vm654, %v3245, 0.0
        %v3276 = vsel %vm655, %v3247, 0.0
        %v3277 = vsel %vm656, %v3249, 0.0
        %v3278 = vsel %vm657, %v3251, 0.0
        %v3279 = vsel %vm658, %v3253, 0.0
        %v3280 = vsel %vm659, %v3255, 0.0
        %v3281 = vsel %vm660, %v3257, 0.0
        %v3282 = vsel %vm661, %v3259, 0.0
        %v3283 = vsel %vm662, %v3261, 0.0
        %v3284 = vsel %vm663, %v3263, 0.0
        %v3285 = vsel %vm664, %v3265, 0.0
        %v3286 = vsel %vm665, %v3267, 0.0
        %v3287 = vsel %vm666, %v3269, 0.0
        %v3288 = vsel %vm667, %v3271, 0.0
        %v3289 = vsel %vm668, %v3273, 0.0
        %v3290 = vsub.f32 %v3050, %v3098
        %v3291 = vsub.f32 %v3051, %v3099
        %v3292 = vsub.f32 %v3052, %v3100
        %v3293 = vsub.f32 %v3053, %v3101
        %v3294 = vsub.f32 %v3054, %v3102
        %v3295 = vsub.f32 %v3055, %v3103
        %v3296 = vsub.f32 %v3056, %v3104
        %v3297 = vsub.f32 %v3057, %v3105
        %v3298 = vsub.f32 %v3058, %v3106
        %v3299 = vsub.f32 %v3059, %v3107
        %v3300 = vsub.f32 %v3060, %v3108
        %v3301 = vsub.f32 %v3061, %v3109
        %v3302 = vsub.f32 %v3062, %v3110
        %v3303 = vsub.f32 %v3063, %v3111
        %v3304 = vsub.f32 %v3064, %v3112
        %v3305 = vsub.f32 %v3065, %v3113
        %v3306 = vmul.f32 %v3290, 1.442695
        %v3307 = vpow.pop %v3306
        %v3308 = vmul.f32 %v3291, 1.442695
        %v3309 = vpow.pop %v3308
        %v3310 = vmul.f32 %v3292, 1.442695
        %v3311 = vpow.pop %v3310
        %v3312 = vmul.f32 %v3293, 1.442695
        %v3313 = vpow.pop %v3312
        %v3314 = vmul.f32 %v3294, 1.442695
        %v3315 = vpow.pop %v3314
        %v3316 = vmul.f32 %v3295, 1.442695
        %v3317 = vpow.pop %v3316
        %v3318 = vmul.f32 %v3296, 1.442695
        %v3319 = vpow.pop %v3318
        %v3320 = vmul.f32 %v3297, 1.442695
        %v3321 = vpow.pop %v3320
        %v3322 = vmul.f32 %v3298, 1.442695
        %v3323 = vpow.pop %v3322
        %v3324 = vmul.f32 %v3299, 1.442695
        %v3325 = vpow.pop %v3324
        %v3326 = vmul.f32 %v3300, 1.442695
        %v3327 = vpow.pop %v3326
        %v3328 = vmul.f32 %v3301, 1.442695
        %v3329 = vpow.pop %v3328
        %v3330 = vmul.f32 %v3302, 1.442695
        %v3331 = vpow.pop %v3330
        %v3332 = vmul.f32 %v3303, 1.442695
        %v3333 = vpow.pop %v3332
        %v3334 = vmul.f32 %v3304, 1.442695
        %v3335 = vpow.pop %v3334
        %v3336 = vmul.f32 %v3305, 1.442695
        %v3337 = vpow.pop %v3336
        %vm3338 = vcmask 23568
        %3339 = vst.msk [vmem:[#allocation2] sm:$0xff] %vm3338, %v3098
        %3340 = vst.msk [vmem:[#allocation2 + $0x8] sm:$0xff] %vm3338, %v3099
        %3341 = vst.msk [vmem:[#allocation2 + $0x10] sm:$0xff] %vm3338, %v3100
        %3342 = vst.msk [vmem:[#allocation2 + $0x18] sm:$0xff] %vm3338, %v3101
        %3343 = vst.msk [vmem:[#allocation2 + $0x20] sm:$0xff] %vm3338, %v3102
        %3344 = vst.msk [vmem:[#allocation2 + $0x28] sm:$0xff] %vm3338, %v3103
        %3345 = vst.msk [vmem:[#allocation2 + $0x30] sm:$0xff] %vm3338, %v3104
        %3346 = vst.msk [vmem:[#allocation2 + $0x38] sm:$0xff] %vm3338, %v3105
        %3347 = vst.msk [vmem:[#allocation2 + $0x40] sm:$0xff] %vm3338, %v3106
        %3348 = vst.msk [vmem:[#allocation2 + $0x48] sm:$0xff] %vm3338, %v3107
        %3349 = vst.msk [vmem:[#allocation2 + $0x50] sm:$0xff] %vm3338, %v3108
        %3350 = vst.msk [vmem:[#allocation2 + $0x58] sm:$0xff] %vm3338, %v3109
        %3351 = vst.msk [vmem:[#allocation2 + $0x60] sm:$0xff] %vm3338, %v3110
        %3352 = vst.msk [vmem:[#allocation2 + $0x68] sm:$0xff] %vm3338, %v3111
        %3353 = vst.msk [vmem:[#allocation2 + $0x70] sm:$0xff] %vm3338, %v3112
        %3354 = vst.msk [vmem:[#allocation2 + $0x78] sm:$0xff] %vm3338, %v3113
        %v3355 = vld [vmem:[#allocation3] sm:$0xff]
        %v3356 = vld [vmem:[#allocation3 + $0x8] sm:$0xff]
        %v3357 = vld [vmem:[#allocation3 + $0x10] sm:$0xff]
        %v3358 = vld [vmem:[#allocation3 + $0x18] sm:$0xff]
        %v3359 = vld [vmem:[#allocation3 + $0x20] sm:$0xff]
        %v3360 = vld [vmem:[#allocation3 + $0x28] sm:$0xff]
        %v3361 = vld [vmem:[#allocation3 + $0x30] sm:$0xff]
        %v3362 = vld [vmem:[#allocation3 + $0x38] sm:$0xff]
        %v3363 = vld [vmem:[#allocation3 + $0x40] sm:$0xff]
        %v3364 = vld [vmem:[#allocation3 + $0x48] sm:$0xff]
        %v3365 = vld [vmem:[#allocation3 + $0x50] sm:$0xff]
        %v3366 = vld [vmem:[#allocation3 + $0x58] sm:$0xff]
        %v3367 = vld [vmem:[#allocation3 + $0x60] sm:$0xff]
        %v3368 = vld [vmem:[#allocation3 + $0x68] sm:$0xff]
        %v3369 = vld [vmem:[#allocation3 + $0x70] sm:$0xff]
        %v3370 = vld [vmem:[#allocation3 + $0x78] sm:$0xff]
        %v3371 = vmul.f32 %v3307, %v3355
        %v3372 = vmul.f32 %v3309, %v3356
        %v3373 = vmul.f32 %v3311, %v3357
        %v3374 = vmul.f32 %v3313, %v3358
        %v3375 = vmul.f32 %v3315, %v3359
        %v3376 = vmul.f32 %v3317, %v3360
        %v3377 = vmul.f32 %v3319, %v3361
        %v3378 = vmul.f32 %v3321, %v3362
        %v3379 = vmul.f32 %v3323, %v3363
        %v3380 = vmul.f32 %v3325, %v3364
        %v3381 = vmul.f32 %v3327, %v3365
        %v3382 = vmul.f32 %v3329, %v3366
        %v3383 = vmul.f32 %v3331, %v3367
        %v3384 = vmul.f32 %v3333, %v3368
        %v3385 = vmul.f32 %v3335, %v3369
        %v3386 = vmul.f32 %v3337, %v3370
        %3387 = vadd.xlane.f32.xlu0 %v3274
        %v3388 = vpop.xlane.xlu0 %3387
        %3389 = vadd.xlane.f32.xlu0 %v3275
        %v3390 = vpop.xlane.xlu0 %3389
        %3391 = vadd.xlane.f32.xlu0 %v3276
        %v3392 = vpop.xlane.xlu0 %3391
        %3393 = vadd.xlane.f32.xlu0 %v3277
        %v3394 = vpop.xlane.xlu0 %3393
        %3395 = vadd.xlane.f32.xlu0 %v3278
        %v3396 = vpop.xlane.xlu0 %3395
        %3397 = vadd.xlane.f32.xlu0 %v3279
        %v3398 = vpop.xlane.xlu0 %3397
        %3399 = vadd.xlane.f32.xlu0 %v3280
        %v3400 = vpop.xlane.xlu0 %3399
        %3401 = vadd.xlane.f32.xlu0 %v3281
        %v3402 = vpop.xlane.xlu0 %3401
        %3403 = vadd.xlane.f32.xlu0 %v3282
        %v3404 = vpop.xlane.xlu0 %3403
        %3405 = vadd.xlane.f32.xlu0 %v3283
        %v3406 = vpop.xlane.xlu0 %3405
        %3407 = vadd.xlane.f32.xlu0 %v3284
        %v3408 = vpop.xlane.xlu0 %3407
        %3409 = vadd.xlane.f32.xlu0 %v3285
        %v3410 = vpop.xlane.xlu0 %3409
        %3411 = vadd.xlane.f32.xlu0 %v3286
        %v3412 = vpop.xlane.xlu0 %3411
        %3413 = vadd.xlane.f32.xlu0 %v3287
        %v3414 = vpop.xlane.xlu0 %3413
        %3415 = vadd.xlane.f32.xlu0 %v3288
        %v3416 = vpop.xlane.xlu0 %3415
        %3417 = vadd.xlane.f32.xlu0 %v3289
        %v3418 = vpop.xlane.xlu0 %3417
        %v3419 = vadd.f32 %v3371, %v3388
        %v3420 = vadd.f32 %v3372, %v3390
        %v3421 = vadd.f32 %v3373, %v3392
        %v3422 = vadd.f32 %v3374, %v3394
        %v3423 = vadd.f32 %v3375, %v3396
        %v3424 = vadd.f32 %v3376, %v3398
        %v3425 = vadd.f32 %v3377, %v3400
        %v3426 = vadd.f32 %v3378, %v3402
        %v3427 = vadd.f32 %v3379, %v3404
        %v3428 = vadd.f32 %v3380, %v3406
        %v3429 = vadd.f32 %v3381, %v3408
        %v3430 = vadd.f32 %v3382, %v3410
        %v3431 = vadd.f32 %v3383, %v3412
        %v3432 = vadd.f32 %v3384, %v3414
        %v3433 = vadd.f32 %v3385, %v3416
        %v3434 = vadd.f32 %v3386, %v3418
        %3435 = vst.msk [vmem:[#allocation3] sm:$0xff] %vm3338, %v3419
        %3436 = vst.msk [vmem:[#allocation3 + $0x8] sm:$0xff] %vm3338, %v3420
        %3437 = vst.msk [vmem:[#allocation3 + $0x10] sm:$0xff] %vm3338, %v3421
        %3438 = vst.msk [vmem:[#allocation3 + $0x18] sm:$0xff] %vm3338, %v3422
        %3439 = vst.msk [vmem:[#allocation3 + $0x20] sm:$0xff] %vm3338, %v3423
        %3440 = vst.msk [vmem:[#allocation3 + $0x28] sm:$0xff] %vm3338, %v3424
        %3441 = vst.msk [vmem:[#allocation3 + $0x30] sm:$0xff] %vm3338, %v3425
        %3442 = vst.msk [vmem:[#allocation3 + $0x38] sm:$0xff] %vm3338, %v3426
        %3443 = vst.msk [vmem:[#allocation3 + $0x40] sm:$0xff] %vm3338, %v3427
        %3444 = vst.msk [vmem:[#allocation3 + $0x48] sm:$0xff] %vm3338, %v3428
        %3445 = vst.msk [vmem:[#allocation3 + $0x50] sm:$0xff] %vm3338, %v3429
        %3446 = vst.msk [vmem:[#allocation3 + $0x58] sm:$0xff] %vm3338, %v3430
        %3447 = vst.msk [vmem:[#allocation3 + $0x60] sm:$0xff] %vm3338, %v3431
        %3448 = vst.msk [vmem:[#allocation3 + $0x68] sm:$0xff] %vm3338, %v3432
        %3449 = vst.msk [vmem:[#allocation3 + $0x70] sm:$0xff] %vm3338, %v3433
        %3450 = vst.msk [vmem:[#allocation3 + $0x78] sm:$0xff] %vm3338, %v3434
        %v3451 = vld [vmem:[#allocation4] sm:$0xff]
        %v3452 = vld [vmem:[#allocation4 + $0x10] sm:$0xff]
        %v3453 = vld [vmem:[#allocation4 + $0x20] sm:$0xff]
        %v3454 = vld [vmem:[#allocation4 + $0x30] sm:$0xff]
        %v3455 = vld [vmem:[#allocation4 + $0x40] sm:$0xff]
        %v3456 = vld [vmem:[#allocation4 + $0x50] sm:$0xff]
        %v3457 = vld [vmem:[#allocation4 + $0x60] sm:$0xff]
        %v3458 = vld [vmem:[#allocation4 + $0x70] sm:$0xff]
        %v3459 = vld [vmem:[#allocation4 + $0x80] sm:$0xff]
        %v3460 = vld [vmem:[#allocation4 + $0x90] sm:$0xff]
        %v3461 = vld [vmem:[#allocation4 + $0xa0] sm:$0xff]
        %v3462 = vld [vmem:[#allocation4 + $0xb0] sm:$0xff]
        %v3463 = vld [vmem:[#allocation4 + $0xc0] sm:$0xff]
        %v3464 = vld [vmem:[#allocation4 + $0xd0] sm:$0xff]
        %v3465 = vld [vmem:[#allocation4 + $0xe0] sm:$0xff]
        %v3466 = vld [vmem:[#allocation4 + $0xf0] sm:$0xff]
        %3468 = vset.pattern.permute.xlu0 2
        %3469 = vperm.xlu0 %3468, %v3307
        %v3470 = vpop.permute.xlu0 %3469
        %3473 = vset.pattern.permute.xlu0 2
        %3474 = vperm.xlu0 %3473, %v3309
        %v3475 = vpop.permute.xlu0 %3474
        %3478 = vset.pattern.permute.xlu0 2
        %3479 = vperm.xlu0 %3478, %v3311
        %v3480 = vpop.permute.xlu0 %3479
        %3483 = vset.pattern.permute.xlu0 2
        %3484 = vperm.xlu0 %3483, %v3313
        %v3485 = vpop.permute.xlu0 %3484
        %3488 = vset.pattern.permute.xlu0 2
        %3489 = vperm.xlu0 %3488, %v3315
        %v3490 = vpop.permute.xlu0 %3489
        %3493 = vset.pattern.permute.xlu0 2
        %3494 = vperm.xlu0 %3493, %v3317
        %v3495 = vpop.permute.xlu0 %3494
        %3498 = vset.pattern.permute.xlu0 2
        %3499 = vperm.xlu0 %3498, %v3319
        %v3500 = vpop.permute.xlu0 %3499
        %3503 = vset.pattern.permute.xlu0 2
        %3504 = vperm.xlu0 %3503, %v3321
        %v3505 = vpop.permute.xlu0 %3504
        %3508 = vset.pattern.permute.xlu0 2
        %3509 = vperm.xlu0 %3508, %v3323
        %v3510 = vpop.permute.xlu0 %3509
        %3513 = vset.pattern.permute.xlu0 2
        %3514 = vperm.xlu0 %3513, %v3325
        %v3515 = vpop.permute.xlu0 %3514
        %3518 = vset.pattern.permute.xlu0 2
        %3519 = vperm.xlu0 %3518, %v3327
        %v3520 = vpop.permute.xlu0 %3519
        %3523 = vset.pattern.permute.xlu0 2
        %3524 = vperm.xlu0 %3523, %v3329
        %v3525 = vpop.permute.xlu0 %3524
        %3528 = vset.pattern.permute.xlu0 2
        %3529 = vperm.xlu0 %3528, %v3331
        %v3530 = vpop.permute.xlu0 %3529
        %3533 = vset.pattern.permute.xlu0 2
        %3534 = vperm.xlu0 %3533, %v3333
        %v3535 = vpop.permute.xlu0 %3534
        %3538 = vset.pattern.permute.xlu0 2
        %3539 = vperm.xlu0 %3538, %v3335
        %v3540 = vpop.permute.xlu0 %3539
        %3543 = vset.pattern.permute.xlu0 2
        %3544 = vperm.xlu0 %3543, %v3337
        %v3545 = vpop.permute.xlu0 %3544
        %v3547 = vmul.f32 %v3470, %v3451
        %v3548 = vmul.f32 %v3475, %v3452
        %v3549 = vmul.f32 %v3480, %v3453
        %v3550 = vmul.f32 %v3485, %v3454
        %v3551 = vmul.f32 %v3490, %v3455
        %v3552 = vmul.f32 %v3495, %v3456
        %v3553 = vmul.f32 %v3500, %v3457
        %v3554 = vmul.f32 %v3505, %v3458
        %v3555 = vmul.f32 %v3510, %v3459
        %v3556 = vmul.f32 %v3515, %v3460
        %v3557 = vmul.f32 %v3520, %v3461
        %v3558 = vmul.f32 %v3525, %v3462
        %v3559 = vmul.f32 %v3530, %v3463
        %v3560 = vmul.f32 %v3535, %v3464
        %v3561 = vmul.f32 %v3540, %v3465
        %v3562 = vmul.f32 %v3545, %v3466
        %v3563 = vpack.c.bf16 %v3275, %v3274
        %v3564 = vpack.c.bf16 %v3277, %v3276
        %v3565 = vpack.c.bf16 %v3279, %v3278
        %v3566 = vpack.c.bf16 %v3281, %v3280
        %v3567 = vpack.c.bf16 %v3283, %v3282
        %v3568 = vpack.c.bf16 %v3285, %v3284
        %v3569 = vpack.c.bf16 %v3287, %v3286
        %v3570 = vpack.c.bf16 %v3289, %v3288
        %3571 = vrot.lane.b32.xlu0 %v891, 64
        %v3572 = vpop.permute.xlu0 %3571
        %3573 = vrot.lane.b32.xlu0 %v893, 64
        %v3574 = vpop.permute.xlu0 %3573
        %3575 = vrot.lane.b32.xlu0 %v895, 64
        %v3576 = vpop.permute.xlu0 %3575
        %3577 = vrot.lane.b32.xlu0 %v897, 64
        %v3578 = vpop.permute.xlu0 %3577
        %3579 = vrot.lane.b32.xlu0 %v899, 64
        %v3580 = vpop.permute.xlu0 %3579
        %3581 = vrot.lane.b32.xlu0 %v901, 64
        %v3582 = vpop.permute.xlu0 %3581
        %3583 = vrot.lane.b32.xlu0 %v903, 64
        %v3584 = vpop.permute.xlu0 %3583
        %3585 = vrot.lane.b32.xlu0 %v905, 64
        %v3586 = vpop.permute.xlu0 %3585
        %3595 = vmatprep.subr.bf16.mxu0 0
        %3596 = vmatpush1.bf16.msra.mxu0 %v3586
        %3597 = vmatprep.subr.bf16.mxu0 0
        %3598 = vmatpush1.bf16.msra.mxu0 %v3584
        %3599 = vmatprep.subr.bf16.mxu0 0
        %3600 = vmatpush1.bf16.msra.mxu0 %v3582
        %3601 = vmatprep.subr.bf16.mxu0 0
        %3602 = vmatpush1.bf16.msra.mxu0 %v3580
        %3603 = vmatprep.subr.bf16.mxu0 0
        %3604 = vmatpush1.bf16.msra.mxu0 %v3578
        %3605 = vmatprep.subr.bf16.mxu0 0
        %3606 = vmatpush1.bf16.msra.mxu0 %v3576
        %3607 = vmatprep.subr.bf16.mxu0 0
        %3608 = vmatpush1.bf16.msra.mxu0 %v3574
        %3609 = vmatprep.subr.bf16.mxu0 0
        %3610 = vmatpush1.bf16.msra.mxu0 %v3572
        %3611 = vmatprep.subr.bf16.mxu0 0
        %3612 = vmatpush2.bf16.msra.mxu0 0
        %3613 = vmatprep.subr.bf16.mxu0 0
        %3614 = vmatpush2.bf16.msra.mxu0 0
        %3615 = vmatprep.subr.bf16.mxu0 0
        %3616 = vmatpush2.bf16.msra.mxu0 0
        %3617 = vmatprep.subr.bf16.mxu0 0
        %3618 = vmatpush2.bf16.msra.mxu0 0
        %3619 = vmatprep.subr.bf16.mxu0 0
        %3620 = vmatpush2.bf16.msra.mxu0 0
        %3621 = vmatprep.subr.bf16.mxu0 0
        %3622 = vmatpush2.bf16.msra.mxu0 0
        %3623 = vmatprep.subr.bf16.mxu0 0
        %3624 = vmatpush2.bf16.msra.mxu0 0
        %3625 = vmatprep.subr.bf16.mxu0 0
        %3626 = vmatpush2.bf16.msra.mxu0 0
        %3627 = vmatprep.mubr.bf16.mxu0 0
        %3628 = vmatmul.mubr.bf16.gmra.mxu0 %v3563
        %v3629 = vpop.f32.mrf.mxu0
        %v3630 = vadd.f32 0.0, %v3629
        %v3631 = vpop.f32.mrf.mxu0
        %v3632 = vpop.f32.mrf.mxu0
        %v3633 = vadd.f32 0.0, %v3632
        %v3634 = vpop.f32.mrf.mxu0
        %3635 = vmatprep.mubr.bf16.mxu0 0
        %3636 = vmatmul.mubr.bf16.gmra.mxu0 %v3564
        %v3637 = vpop.f32.mrf.mxu0
        %v3638 = vadd.f32 0.0, %v3637
        %v3639 = vpop.f32.mrf.mxu0
        %v3640 = vpop.f32.mrf.mxu0
        %v3641 = vadd.f32 0.0, %v3640
        %v3642 = vpop.f32.mrf.mxu0
        %3643 = vmatprep.mubr.bf16.mxu0 0
        %3644 = vmatmul.mubr.bf16.gmra.mxu0 %v3565
        %v3645 = vpop.f32.mrf.mxu0
        %v3646 = vadd.f32 0.0, %v3645
        %v3647 = vpop.f32.mrf.mxu0
        %v3648 = vpop.f32.mrf.mxu0
        %v3649 = vadd.f32 0.0, %v3648
        %v3650 = vpop.f32.mrf.mxu0
        %3651 = vmatprep.mubr.bf16.mxu0 0
        %3652 = vmatmul.mubr.bf16.gmra.mxu0 %v3566
        %v3653 = vpop.f32.mrf.mxu0
        %v3654 = vadd.f32 0.0, %v3653
        %v3655 = vpop.f32.mrf.mxu0
        %v3656 = vpop.f32.mrf.mxu0
        %v3657 = vadd.f32 0.0, %v3656
        %v3658 = vpop.f32.mrf.mxu0
        %3659 = vmatprep.mubr.bf16.mxu0 0
        %3660 = vmatmul.mubr.bf16.gmra.mxu0 %v3567
        %v3661 = vpop.f32.mrf.mxu0
        %v3662 = vadd.f32 0.0, %v3661
        %v3663 = vpop.f32.mrf.mxu0
        %v3664 = vpop.f32.mrf.mxu0
        %v3665 = vadd.f32 0.0, %v3664
        %v3666 = vpop.f32.mrf.mxu0
        %3667 = vmatprep.mubr.bf16.mxu0 0
        %3668 = vmatmul.mubr.bf16.gmra.mxu0 %v3568
        %v3669 = vpop.f32.mrf.mxu0
        %v3670 = vadd.f32 0.0, %v3669
        %v3671 = vpop.f32.mrf.mxu0
        %v3672 = vpop.f32.mrf.mxu0
        %v3673 = vadd.f32 0.0, %v3672
        %v3674 = vpop.f32.mrf.mxu0
        %3675 = vmatprep.mubr.bf16.mxu0 0
        %3676 = vmatmul.mubr.bf16.gmra.mxu0 %v3569
        %v3677 = vpop.f32.mrf.mxu0
        %v3678 = vadd.f32 0.0, %v3677
        %v3679 = vpop.f32.mrf.mxu0
        %v3680 = vpop.f32.mrf.mxu0
        %v3681 = vadd.f32 0.0, %v3680
        %v3682 = vpop.f32.mrf.mxu0
        %3683 = vmatprep.mubr.bf16.mxu0 0
        %3684 = vmatmul.mubr.bf16.gmra.mxu0 %v3570
        %v3685 = vpop.f32.mrf.mxu0
        %v3686 = vadd.f32 0.0, %v3685
        %v3687 = vpop.f32.mrf.mxu0
        %v3688 = vpop.f32.mrf.mxu0
        %v3689 = vadd.f32 0.0, %v3688
        %v3690 = vpop.f32.mrf.mxu0
        %3691 = vdwg.mxu0
        %3708 = vrot.lane.b32.xlu0 %v3630, 64
        %v3709 = vpop.permute.xlu0 %3708
        %3710 = vrot.lane.b32.xlu0 %v3633, 64
        %v3711 = vpop.permute.xlu0 %3710
        %3712 = vrot.lane.b32.xlu0 %v3638, 64
        %v3713 = vpop.permute.xlu0 %3712
        %3714 = vrot.lane.b32.xlu0 %v3641, 64
        %v3715 = vpop.permute.xlu0 %3714
        %3716 = vrot.lane.b32.xlu0 %v3646, 64
        %v3717 = vpop.permute.xlu0 %3716
        %3718 = vrot.lane.b32.xlu0 %v3649, 64
        %v3719 = vpop.permute.xlu0 %3718
        %3720 = vrot.lane.b32.xlu0 %v3654, 64
        %v3721 = vpop.permute.xlu0 %3720
        %3722 = vrot.lane.b32.xlu0 %v3657, 64
        %v3723 = vpop.permute.xlu0 %3722
        %3724 = vrot.lane.b32.xlu0 %v3662, 64
        %v3725 = vpop.permute.xlu0 %3724
        %3726 = vrot.lane.b32.xlu0 %v3665, 64
        %v3727 = vpop.permute.xlu0 %3726
        %3728 = vrot.lane.b32.xlu0 %v3670, 64
        %v3729 = vpop.permute.xlu0 %3728
        %3730 = vrot.lane.b32.xlu0 %v3673, 64
        %v3731 = vpop.permute.xlu0 %3730
        %3732 = vrot.lane.b32.xlu0 %v3678, 64
        %v3733 = vpop.permute.xlu0 %3732
        %3734 = vrot.lane.b32.xlu0 %v3681, 64
        %v3735 = vpop.permute.xlu0 %3734
        %3736 = vrot.lane.b32.xlu0 %v3686, 64
        %v3737 = vpop.permute.xlu0 %3736
        %3738 = vrot.lane.b32.xlu0 %v3689, 64
        %v3739 = vpop.permute.xlu0 %3738
        %v3756 = vadd.f32 %v3547, %v3709
        %v3757 = vadd.f32 %v3548, %v3711
        %v3758 = vadd.f32 %v3549, %v3713
        %v3759 = vadd.f32 %v3550, %v3715
        %v3760 = vadd.f32 %v3551, %v3717
        %v3761 = vadd.f32 %v3552, %v3719
        %v3762 = vadd.f32 %v3553, %v3721
        %v3763 = vadd.f32 %v3554, %v3723
        %v3764 = vadd.f32 %v3555, %v3725
        %v3765 = vadd.f32 %v3556, %v3727
        %v3766 = vadd.f32 %v3557, %v3729
        %v3767 = vadd.f32 %v3558, %v3731
        %v3768 = vadd.f32 %v3559, %v3733
        %v3769 = vadd.f32 %v3560, %v3735
        %v3770 = vadd.f32 %v3561, %v3737
        %v3771 = vadd.f32 %v3562, %v3739
        %vm3772 = vcmask 785920
        %3773 = vst.msk [vmem:[#allocation4] sm:$0xff] %vm3772, %v3756
        %3774 = vst.msk [vmem:[#allocation4 + $0x10] sm:$0xff] %vm3772, %v3757
        %3775 = vst.msk [vmem:[#allocation4 + $0x20] sm:$0xff] %vm3772, %v3758
        %3776 = vst.msk [vmem:[#allocation4 + $0x30] sm:$0xff] %vm3772, %v3759
        %3777 = vst.msk [vmem:[#allocation4 + $0x40] sm:$0xff] %vm3772, %v3760
        %3778 = vst.msk [vmem:[#allocation4 + $0x50] sm:$0xff] %vm3772, %v3761
        %3779 = vst.msk [vmem:[#allocation4 + $0x60] sm:$0xff] %vm3772, %v3762
        %3780 = vst.msk [vmem:[#allocation4 + $0x70] sm:$0xff] %vm3772, %v3763
        %3781 = vst.msk [vmem:[#allocation4 + $0x80] sm:$0xff] %vm3772, %v3764
        %3782 = vst.msk [vmem:[#allocation4 + $0x90] sm:$0xff] %vm3772, %v3765
        %3783 = vst.msk [vmem:[#allocation4 + $0xa0] sm:$0xff] %vm3772, %v3766
        %3784 = vst.msk [vmem:[#allocation4 + $0xb0] sm:$0xff] %vm3772, %v3767
        %3785 = vst.msk [vmem:[#allocation4 + $0xc0] sm:$0xff] %vm3772, %v3768
        %3786 = vst.msk [vmem:[#allocation4 + $0xd0] sm:$0xff] %vm3772, %v3769
        %3787 = vst.msk [vmem:[#allocation4 + $0xe0] sm:$0xff] %vm3772, %v3770
        %3788 = vst.msk [vmem:[#allocation4 + $0xf0] sm:$0xff] %vm3772, %v3771
        %3789 = vset.pattern.permute.xlu0 3
        %3790 = vperm.xlu0 %3789, %v1082
        %v3791 = vpop.permute.xlu0 %3790
        %3793 = vset.pattern.permute.xlu0 3
        %3794 = vperm.xlu0 %3793, %v1085
        %v3795 = vpop.permute.xlu0 %3794
        %3797 = vset.pattern.permute.xlu0 3
        %3798 = vperm.xlu0 %3797, %v1090
        %v3799 = vpop.permute.xlu0 %3798
        %3801 = vset.pattern.permute.xlu0 3
        %3802 = vperm.xlu0 %3801, %v1093
        %v3803 = vpop.permute.xlu0 %3802
        %3805 = vset.pattern.permute.xlu0 3
        %3806 = vperm.xlu0 %3805, %v1098
        %v3807 = vpop.permute.xlu0 %3806
        %3809 = vset.pattern.permute.xlu0 3
        %3810 = vperm.xlu0 %3809, %v1101
        %v3811 = vpop.permute.xlu0 %3810
        %3813 = vset.pattern.permute.xlu0 3
        %3814 = vperm.xlu0 %3813, %v1106
        %v3815 = vpop.permute.xlu0 %3814
        %3817 = vset.pattern.permute.xlu0 3
        %3818 = vperm.xlu0 %3817, %v1109
        %v3819 = vpop.permute.xlu0 %3818
        %3821 = vset.pattern.permute.xlu0 3
        %3822 = vperm.xlu0 %3821, %v1114
        %v3823 = vpop.permute.xlu0 %3822
        %3825 = vset.pattern.permute.xlu0 3
        %3826 = vperm.xlu0 %3825, %v1117
        %v3827 = vpop.permute.xlu0 %3826
        %3829 = vset.pattern.permute.xlu0 3
        %3830 = vperm.xlu0 %3829, %v1122
        %v3831 = vpop.permute.xlu0 %3830
        %3833 = vset.pattern.permute.xlu0 3
        %3834 = vperm.xlu0 %3833, %v1125
        %v3835 = vpop.permute.xlu0 %3834
        %3837 = vset.pattern.permute.xlu0 3
        %3838 = vperm.xlu0 %3837, %v1130
        %v3839 = vpop.permute.xlu0 %3838
        %3841 = vset.pattern.permute.xlu0 3
        %3842 = vperm.xlu0 %3841, %v1133
        %v3843 = vpop.permute.xlu0 %3842
        %3845 = vset.pattern.permute.xlu0 3
        %3846 = vperm.xlu0 %3845, %v1138
        %v3847 = vpop.permute.xlu0 %3846
        %3849 = vset.pattern.permute.xlu0 3
        %3850 = vperm.xlu0 %3849, %v1141
        %v3851 = vpop.permute.xlu0 %3850
        %v3853 = vlaneseq
        %v3854 = vshrl.u32 %v3853, 7
        %v3855 = vsub.s32 3, %v3854
        %v3856 = vrot.slane %v954, %v3855
        %v3857 = vadd.f32 %v3791, %v3856
        %v3858 = vadd.f32 %v3795, %v3856
        %v3859 = vadd.f32 %v3799, %v3856
        %v3860 = vadd.f32 %v3803, %v3856
        %v3861 = vadd.f32 %v3807, %v3856
        %v3862 = vadd.f32 %v3811, %v3856
        %v3863 = vadd.f32 %v3815, %v3856
        %v3864 = vadd.f32 %v3819, %v3856
        %v3865 = vadd.f32 %v3823, %v3856
        %v3866 = vadd.f32 %v3827, %v3856
        %v3867 = vadd.f32 %v3831, %v3856
        %v3868 = vadd.f32 %v3835, %v3856
        %v3869 = vadd.f32 %v3839, %v3856
        %v3870 = vadd.f32 %v3843, %v3856
        %v3871 = vadd.f32 %v3847, %v3856
        %v3872 = vadd.f32 %v3851, %v3856
        %vm3873 = vcmp.gt.f32.partialorder %v3857, 0.0
        %vm3874 = vcmp.gt.f32.partialorder %v3858, 0.0
        %vm3875 = vcmp.gt.f32.partialorder %v3859, 0.0
        %vm3876 = vcmp.gt.f32.partialorder %v3860, 0.0
        %vm3877 = vcmp.gt.f32.partialorder %v3861, 0.0
        %vm3878 = vcmp.gt.f32.partialorder %v3862, 0.0
        %vm3879 = vcmp.gt.f32.partialorder %v3863, 0.0
        %vm3880 = vcmp.gt.f32.partialorder %v3864, 0.0
        %vm3881 = vcmp.gt.f32.partialorder %v3865, 0.0
        %vm3882 = vcmp.gt.f32.partialorder %v3866, 0.0
        %vm3883 = vcmp.gt.f32.partialorder %v3867, 0.0
        %vm3884 = vcmp.gt.f32.partialorder %v3868, 0.0
        %vm3885 = vcmp.gt.f32.partialorder %v3869, 0.0
        %vm3886 = vcmp.gt.f32.partialorder %v3870, 0.0
        %vm3887 = vcmp.gt.f32.partialorder %v3871, 0.0
        %vm3888 = vcmp.gt.f32.partialorder %v3872, 0.0
        %v3889 = vmul.f32 %v3857, 0.01
        %v3890 = vmul.f32 %v3858, 0.01
        %v3891 = vmul.f32 %v3859, 0.01
        %v3892 = vmul.f32 %v3860, 0.01
        %v3893 = vmul.f32 %v3861, 0.01
        %v3894 = vmul.f32 %v3862, 0.01
        %v3895 = vmul.f32 %v3863, 0.01
        %v3896 = vmul.f32 %v3864, 0.01
        %v3897 = vmul.f32 %v3865, 0.01
        %v3898 = vmul.f32 %v3866, 0.01
        %v3899 = vmul.f32 %v3867, 0.01
        %v3900 = vmul.f32 %v3868, 0.01
        %v3901 = vmul.f32 %v3869, 0.01
        %v3902 = vmul.f32 %v3870, 0.01
        %v3903 = vmul.f32 %v3871, 0.01
        %v3904 = vmul.f32 %v3872, 0.01
        %v3905 = vsel %vm3873, %v3857, %v3889
        %v3906 = vsel %vm3874, %v3858, %v3890
        %v3907 = vsel %vm3875, %v3859, %v3891
        %v3908 = vsel %vm3876, %v3860, %v3892
        %v3909 = vsel %vm3877, %v3861, %v3893
        %v3910 = vsel %vm3878, %v3862, %v3894
        %v3911 = vsel %vm3879, %v3863, %v3895
        %v3912 = vsel %vm3880, %v3864, %v3896
        %v3913 = vsel %vm3881, %v3865, %v3897
        %v3914 = vsel %vm3882, %v3866, %v3898
        %v3915 = vsel %vm3883, %v3867, %v3899
        %v3916 = vsel %vm3884, %v3868, %v3900
        %v3917 = vsel %vm3885, %v3869, %v3901
        %v3918 = vsel %vm3886, %v3870, %v3902
        %v3919 = vsel %vm3887, %v3871, %v3903
        %v3920 = vsel %vm3888, %v3872, %v3904
        %v3921 = vmul.f32 %v3905, %v669
        %v3922 = vmul.f32 %v3906, %v670
        %v3923 = vmul.f32 %v3907, %v671
        %v3924 = vmul.f32 %v3908, %v672
        %v3925 = vmul.f32 %v3909, %v673
        %v3926 = vmul.f32 %v3910, %v674
        %v3927 = vmul.f32 %v3911, %v675
        %v3928 = vmul.f32 %v3912, %v676
        %v3929 = vmul.f32 %v3913, %v677
        %v3930 = vmul.f32 %v3914, %v678
        %v3931 = vmul.f32 %v3915, %v679
        %v3932 = vmul.f32 %v3916, %v680
        %v3933 = vmul.f32 %v3917, %v681
        %v3934 = vmul.f32 %v3918, %v682
        %v3935 = vmul.f32 %v3919, %v683
        %v3936 = vmul.f32 %v3920, %v684
        %v3937 = vsel %vm653, %v3921, -1e+30
        %v3938 = vsel %vm654, %v3922, -1e+30
        %v3939 = vsel %vm655, %v3923, -1e+30
        %v3940 = vsel %vm656, %v3924, -1e+30
        %v3941 = vsel %vm657, %v3925, -1e+30
        %v3942 = vsel %vm658, %v3926, -1e+30
        %v3943 = vsel %vm659, %v3927, -1e+30
        %v3944 = vsel %vm660, %v3928, -1e+30
        %v3945 = vsel %vm661, %v3929, -1e+30
        %v3946 = vsel %vm662, %v3930, -1e+30
        %v3947 = vsel %vm663, %v3931, -1e+30
        %v3948 = vsel %vm664, %v3932, -1e+30
        %v3949 = vsel %vm665, %v3933, -1e+30
        %v3950 = vsel %vm666, %v3934, -1e+30
        %v3951 = vsel %vm667, %v3935, -1e+30
        %v3952 = vsel %vm668, %v3936, -1e+30
        %v3953 = vld [vmem:[#allocation2] sm:$0xff]
        %v3954 = vld [vmem:[#allocation2 + $0x8] sm:$0xff]
        %v3955 = vld [vmem:[#allocation2 + $0x10] sm:$0xff]
        %v3956 = vld [vmem:[#allocation2 + $0x18] sm:$0xff]
        %v3957 = vld [vmem:[#allocation2 + $0x20] sm:$0xff]
        %v3958 = vld [vmem:[#allocation2 + $0x28] sm:$0xff]
        %v3959 = vld [vmem:[#allocation2 + $0x30] sm:$0xff]
        %v3960 = vld [vmem:[#allocation2 + $0x38] sm:$0xff]
        %v3961 = vld [vmem:[#allocation2 + $0x40] sm:$0xff]
        %v3962 = vld [vmem:[#allocation2 + $0x48] sm:$0xff]
        %v3963 = vld [vmem:[#allocation2 + $0x50] sm:$0xff]
        %v3964 = vld [vmem:[#allocation2 + $0x58] sm:$0xff]
        %v3965 = vld [vmem:[#allocation2 + $0x60] sm:$0xff]
        %v3966 = vld [vmem:[#allocation2 + $0x68] sm:$0xff]
        %v3967 = vld [vmem:[#allocation2 + $0x70] sm:$0xff]
        %v3968 = vld [vmem:[#allocation2 + $0x78] sm:$0xff]
        %3969 = vmax.xlane.f32.xlu0 %v3937
        %v3970 = vpop.xlane.xlu0 %3969
        %3971 = vmax.xlane.f32.xlu0 %v3938
        %v3972 = vpop.xlane.xlu0 %3971
        %3973 = vmax.xlane.f32.xlu0 %v3939
        %v3974 = vpop.xlane.xlu0 %3973
        %3975 = vmax.xlane.f32.xlu0 %v3940
        %v3976 = vpop.xlane.xlu0 %3975
        %3977 = vmax.xlane.f32.xlu0 %v3941
        %v3978 = vpop.xlane.xlu0 %3977
        %3979 = vmax.xlane.f32.xlu0 %v3942
        %v3980 = vpop.xlane.xlu0 %3979
        %3981 = vmax.xlane.f32.xlu0 %v3943
        %v3982 = vpop.xlane.xlu0 %3981
        %3983 = vmax.xlane.f32.xlu0 %v3944
        %v3984 = vpop.xlane.xlu0 %3983
        %3985 = vmax.xlane.f32.xlu0 %v3945
        %v3986 = vpop.xlane.xlu0 %3985
        %3987 = vmax.xlane.f32.xlu0 %v3946
        %v3988 = vpop.xlane.xlu0 %3987
        %3989 = vmax.xlane.f32.xlu0 %v3947
        %v3990 = vpop.xlane.xlu0 %3989
        %3991 = vmax.xlane.f32.xlu0 %v3948
        %v3992 = vpop.xlane.xlu0 %3991
        %3993 = vmax.xlane.f32.xlu0 %v3949
        %v3994 = vpop.xlane.xlu0 %3993
        %3995 = vmax.xlane.f32.xlu0 %v3950
        %v3996 = vpop.xlane.xlu0 %3995
        %3997 = vmax.xlane.f32.xlu0 %v3951
        %v3998 = vpop.xlane.xlu0 %3997
        %3999 = vmax.xlane.f32.xlu0 %v3952
        %v4000 = vpop.xlane.xlu0 %3999
        %v4001 = vmax.f32 %v3953, %v3970
        %v4002 = vmax.f32 %v3954, %v3972
        %v4003 = vmax.f32 %v3955, %v3974
        %v4004 = vmax.f32 %v3956, %v3976
        %v4005 = vmax.f32 %v3957, %v3978
        %v4006 = vmax.f32 %v3958, %v3980
        %v4007 = vmax.f32 %v3959, %v3982
        %v4008 = vmax.f32 %v3960, %v3984
        %v4009 = vmax.f32 %v3961, %v3986
        %v4010 = vmax.f32 %v3962, %v3988
        %v4011 = vmax.f32 %v3963, %v3990
        %v4012 = vmax.f32 %v3964, %v3992
        %v4013 = vmax.f32 %v3965, %v3994
        %v4014 = vmax.f32 %v3966, %v3996
        %v4015 = vmax.f32 %v3967, %v3998
        %v4016 = vmax.f32 %v3968, %v4000
        %vm4017 = vcmp.gt.f32.partialorder %v4001, -5e+29
        %vm4018 = vcmp.gt.f32.partialorder %v4002, -5e+29
        %vm4019 = vcmp.gt.f32.partialorder %v4003, -5e+29
        %vm4020 = vcmp.gt.f32.partialorder %v4004, -5e+29
        %vm4021 = vcmp.gt.f32.partialorder %v4005, -5e+29
        %vm4022 = vcmp.gt.f32.partialorder %v4006, -5e+29
        %vm4023 = vcmp.gt.f32.partialorder %v4007, -5e+29
        %vm4024 = vcmp.gt.f32.partialorder %v4008, -5e+29
        %vm4025 = vcmp.gt.f32.partialorder %v4009, -5e+29
        %vm4026 = vcmp.gt.f32.partialorder %v4010, -5e+29
        %vm4027 = vcmp.gt.f32.partialorder %v4011, -5e+29
        %vm4028 = vcmp.gt.f32.partialorder %v4012, -5e+29
        %vm4029 = vcmp.gt.f32.partialorder %v4013, -5e+29
        %vm4030 = vcmp.gt.f32.partialorder %v4014, -5e+29
        %vm4031 = vcmp.gt.f32.partialorder %v4015, -5e+29
        %vm4032 = vcmp.gt.f32.partialorder %v4016, -5e+29
        %v4033 = vsel %vm4017, %v4001, 0.0
        %v4034 = vsel %vm4018, %v4002, 0.0
        %v4035 = vsel %vm4019, %v4003, 0.0
        %v4036 = vsel %vm4020, %v4004, 0.0
        %v4037 = vsel %vm4021, %v4005, 0.0
        %v4038 = vsel %vm4022, %v4006, 0.0
        %v4039 = vsel %vm4023, %v4007, 0.0
        %v4040 = vsel %vm4024, %v4008, 0.0
        %v4041 = vsel %vm4025, %v4009, 0.0
        %v4042 = vsel %vm4026, %v4010, 0.0
        %v4043 = vsel %vm4027, %v4011, 0.0
        %v4044 = vsel %vm4028, %v4012, 0.0
        %v4045 = vsel %vm4029, %v4013, 0.0
        %v4046 = vsel %vm4030, %v4014, 0.0
        %v4047 = vsel %vm4031, %v4015, 0.0
        %v4048 = vsel %vm4032, %v4016, 0.0
        %4050 = vset.pattern.permute.xlu0 3
        %4051 = vperm.xlu0 %4050, %v4033
        %v4052 = vpop.permute.xlu0 %4051
        %4055 = vset.pattern.permute.xlu0 3
        %4056 = vperm.xlu0 %4055, %v4034
        %v4057 = vpop.permute.xlu0 %4056
        %4060 = vset.pattern.permute.xlu0 3
        %4061 = vperm.xlu0 %4060, %v4035
        %v4062 = vpop.permute.xlu0 %4061
        %4065 = vset.pattern.permute.xlu0 3
        %4066 = vperm.xlu0 %4065, %v4036
        %v4067 = vpop.permute.xlu0 %4066
        %4070 = vset.pattern.permute.xlu0 3
        %4071 = vperm.xlu0 %4070, %v4037
        %v4072 = vpop.permute.xlu0 %4071
        %4075 = vset.pattern.permute.xlu0 3
        %4076 = vperm.xlu0 %4075, %v4038
        %v4077 = vpop.permute.xlu0 %4076
        %4080 = vset.pattern.permute.xlu0 3
        %4081 = vperm.xlu0 %4080, %v4039
        %v4082 = vpop.permute.xlu0 %4081
        %4085 = vset.pattern.permute.xlu0 3
        %4086 = vperm.xlu0 %4085, %v4040
        %v4087 = vpop.permute.xlu0 %4086
        %4090 = vset.pattern.permute.xlu0 3
        %4091 = vperm.xlu0 %4090, %v4041
        %v4092 = vpop.permute.xlu0 %4091
        %4095 = vset.pattern.permute.xlu0 3
        %4096 = vperm.xlu0 %4095, %v4042
        %v4097 = vpop.permute.xlu0 %4096
        %4100 = vset.pattern.permute.xlu0 3
        %4101 = vperm.xlu0 %4100, %v4043
        %v4102 = vpop.permute.xlu0 %4101
        %4105 = vset.pattern.permute.xlu0 3
        %4106 = vperm.xlu0 %4105, %v4044
        %v4107 = vpop.permute.xlu0 %4106
        %4110 = vset.pattern.permute.xlu0 3
        %4111 = vperm.xlu0 %4110, %v4045
        %v4112 = vpop.permute.xlu0 %4111
        %4115 = vset.pattern.permute.xlu0 3
        %4116 = vperm.xlu0 %4115, %v4046
        %v4117 = vpop.permute.xlu0 %4116
        %4120 = vset.pattern.permute.xlu0 3
        %4121 = vperm.xlu0 %4120, %v4047
        %v4122 = vpop.permute.xlu0 %4121
        %4125 = vset.pattern.permute.xlu0 3
        %4126 = vperm.xlu0 %4125, %v4048
        %v4127 = vpop.permute.xlu0 %4126
        %v4129 = vsub.f32 %v3921, %v4052
        %v4130 = vsub.f32 %v3922, %v4057
        %v4131 = vsub.f32 %v3923, %v4062
        %v4132 = vsub.f32 %v3924, %v4067
        %v4133 = vsub.f32 %v3925, %v4072
        %v4134 = vsub.f32 %v3926, %v4077
        %v4135 = vsub.f32 %v3927, %v4082
        %v4136 = vsub.f32 %v3928, %v4087
        %v4137 = vsub.f32 %v3929, %v4092
        %v4138 = vsub.f32 %v3930, %v4097
        %v4139 = vsub.f32 %v3931, %v4102
        %v4140 = vsub.f32 %v3932, %v4107
        %v4141 = vsub.f32 %v3933, %v4112
        %v4142 = vsub.f32 %v3934, %v4117
        %v4143 = vsub.f32 %v3935, %v4122
        %v4144 = vsub.f32 %v3936, %v4127
        %v4145 = vmul.f32 %v4129, 1.442695
        %v4146 = vpow.pop %v4145
        %v4147 = vmul.f32 %v4130, 1.442695
        %v4148 = vpow.pop %v4147
        %v4149 = vmul.f32 %v4131, 1.442695
        %v4150 = vpow.pop %v4149
        %v4151 = vmul.f32 %v4132, 1.442695
        %v4152 = vpow.pop %v4151
        %v4153 = vmul.f32 %v4133, 1.442695
        %v4154 = vpow.pop %v4153
        %v4155 = vmul.f32 %v4134, 1.442695
        %v4156 = vpow.pop %v4155
        %v4157 = vmul.f32 %v4135, 1.442695
        %v4158 = vpow.pop %v4157
        %v4159 = vmul.f32 %v4136, 1.442695
        %v4160 = vpow.pop %v4159
        %v4161 = vmul.f32 %v4137, 1.442695
        %v4162 = vpow.pop %v4161
        %v4163 = vmul.f32 %v4138, 1.442695
        %v4164 = vpow.pop %v4163
        %v4165 = vmul.f32 %v4139, 1.442695
        %v4166 = vpow.pop %v4165
        %v4167 = vmul.f32 %v4140, 1.442695
        %v4168 = vpow.pop %v4167
        %v4169 = vmul.f32 %v4141, 1.442695
        %v4170 = vpow.pop %v4169
        %v4171 = vmul.f32 %v4142, 1.442695
        %v4172 = vpow.pop %v4171
        %v4173 = vmul.f32 %v4143, 1.442695
        %v4174 = vpow.pop %v4173
        %v4175 = vmul.f32 %v4144, 1.442695
        %v4176 = vpow.pop %v4175
        %v4177 = vsel %vm653, %v4146, 0.0
        %v4178 = vsel %vm654, %v4148, 0.0
        %v4179 = vsel %vm655, %v4150, 0.0
        %v4180 = vsel %vm656, %v4152, 0.0
        %v4181 = vsel %vm657, %v4154, 0.0
        %v4182 = vsel %vm658, %v4156, 0.0
        %v4183 = vsel %vm659, %v4158, 0.0
        %v4184 = vsel %vm660, %v4160, 0.0
        %v4185 = vsel %vm661, %v4162, 0.0
        %v4186 = vsel %vm662, %v4164, 0.0
        %v4187 = vsel %vm663, %v4166, 0.0
        %v4188 = vsel %vm664, %v4168, 0.0
        %v4189 = vsel %vm665, %v4170, 0.0
        %v4190 = vsel %vm666, %v4172, 0.0
        %v4191 = vsel %vm667, %v4174, 0.0
        %v4192 = vsel %vm668, %v4176, 0.0
        %v4193 = vsub.f32 %v3953, %v4001
        %v4194 = vsub.f32 %v3954, %v4002
        %v4195 = vsub.f32 %v3955, %v4003
        %v4196 = vsub.f32 %v3956, %v4004
        %v4197 = vsub.f32 %v3957, %v4005
        %v4198 = vsub.f32 %v3958, %v4006
        %v4199 = vsub.f32 %v3959, %v4007
        %v4200 = vsub.f32 %v3960, %v4008
        %v4201 = vsub.f32 %v3961, %v4009
        %v4202 = vsub.f32 %v3962, %v4010
        %v4203 = vsub.f32 %v3963, %v4011
        %v4204 = vsub.f32 %v3964, %v4012
        %v4205 = vsub.f32 %v3965, %v4013
        %v4206 = vsub.f32 %v3966, %v4014
        %v4207 = vsub.f32 %v3967, %v4015
        %v4208 = vsub.f32 %v3968, %v4016
        %v4209 = vmul.f32 %v4193, 1.442695
        %v4210 = vpow.pop %v4209
        %v4211 = vmul.f32 %v4194, 1.442695
        %v4212 = vpow.pop %v4211
        %v4213 = vmul.f32 %v4195, 1.442695
        %v4214 = vpow.pop %v4213
        %v4215 = vmul.f32 %v4196, 1.442695
        %v4216 = vpow.pop %v4215
        %v4217 = vmul.f32 %v4197, 1.442695
        %v4218 = vpow.pop %v4217
        %v4219 = vmul.f32 %v4198, 1.442695
        %v4220 = vpow.pop %v4219
        %v4221 = vmul.f32 %v4199, 1.442695
        %v4222 = vpow.pop %v4221
        %v4223 = vmul.f32 %v4200, 1.442695
        %v4224 = vpow.pop %v4223
        %v4225 = vmul.f32 %v4201, 1.442695
        %v4226 = vpow.pop %v4225
        %v4227 = vmul.f32 %v4202, 1.442695
        %v4228 = vpow.pop %v4227
        %v4229 = vmul.f32 %v4203, 1.442695
        %v4230 = vpow.pop %v4229
        %v4231 = vmul.f32 %v4204, 1.442695
        %v4232 = vpow.pop %v4231
        %v4233 = vmul.f32 %v4205, 1.442695
        %v4234 = vpow.pop %v4233
        %v4235 = vmul.f32 %v4206, 1.442695
        %v4236 = vpow.pop %v4235
        %v4237 = vmul.f32 %v4207, 1.442695
        %v4238 = vpow.pop %v4237
        %v4239 = vmul.f32 %v4208, 1.442695
        %v4240 = vpow.pop %v4239
        %vm4241 = vcmask 31768
        %4242 = vst.msk [vmem:[#allocation2] sm:$0xff] %vm4241, %v4001
        %4243 = vst.msk [vmem:[#allocation2 + $0x8] sm:$0xff] %vm4241, %v4002
        %4244 = vst.msk [vmem:[#allocation2 + $0x10] sm:$0xff] %vm4241, %v4003
        %4245 = vst.msk [vmem:[#allocation2 + $0x18] sm:$0xff] %vm4241, %v4004
        %4246 = vst.msk [vmem:[#allocation2 + $0x20] sm:$0xff] %vm4241, %v4005
        %4247 = vst.msk [vmem:[#allocation2 + $0x28] sm:$0xff] %vm4241, %v4006
        %4248 = vst.msk [vmem:[#allocation2 + $0x30] sm:$0xff] %vm4241, %v4007
        %4249 = vst.msk [vmem:[#allocation2 + $0x38] sm:$0xff] %vm4241, %v4008
        %4250 = vst.msk [vmem:[#allocation2 + $0x40] sm:$0xff] %vm4241, %v4009
        %4251 = vst.msk [vmem:[#allocation2 + $0x48] sm:$0xff] %vm4241, %v4010
        %4252 = vst.msk [vmem:[#allocation2 + $0x50] sm:$0xff] %vm4241, %v4011
        %4253 = vst.msk [vmem:[#allocation2 + $0x58] sm:$0xff] %vm4241, %v4012
        %4254 = vst.msk [vmem:[#allocation2 + $0x60] sm:$0xff] %vm4241, %v4013
        %4255 = vst.msk [vmem:[#allocation2 + $0x68] sm:$0xff] %vm4241, %v4014
        %4256 = vst.msk [vmem:[#allocation2 + $0x70] sm:$0xff] %vm4241, %v4015
        %4257 = vst.msk [vmem:[#allocation2 + $0x78] sm:$0xff] %vm4241, %v4016
        %v4258 = vld [vmem:[#allocation3] sm:$0xff]
        %v4259 = vld [vmem:[#allocation3 + $0x8] sm:$0xff]
        %v4260 = vld [vmem:[#allocation3 + $0x10] sm:$0xff]
        %v4261 = vld [vmem:[#allocation3 + $0x18] sm:$0xff]
        %v4262 = vld [vmem:[#allocation3 + $0x20] sm:$0xff]
        %v4263 = vld [vmem:[#allocation3 + $0x28] sm:$0xff]
        %v4264 = vld [vmem:[#allocation3 + $0x30] sm:$0xff]
        %v4265 = vld [vmem:[#allocation3 + $0x38] sm:$0xff]
        %v4266 = vld [vmem:[#allocation3 + $0x40] sm:$0xff]
        %v4267 = vld [vmem:[#allocation3 + $0x48] sm:$0xff]
        %v4268 = vld [vmem:[#allocation3 + $0x50] sm:$0xff]
        %v4269 = vld [vmem:[#allocation3 + $0x58] sm:$0xff]
        %v4270 = vld [vmem:[#allocation3 + $0x60] sm:$0xff]
        %v4271 = vld [vmem:[#allocation3 + $0x68] sm:$0xff]
        %v4272 = vld [vmem:[#allocation3 + $0x70] sm:$0xff]
        %v4273 = vld [vmem:[#allocation3 + $0x78] sm:$0xff]
        %v4274 = vmul.f32 %v4210, %v4258
        %v4275 = vmul.f32 %v4212, %v4259
        %v4276 = vmul.f32 %v4214, %v4260
        %v4277 = vmul.f32 %v4216, %v4261
        %v4278 = vmul.f32 %v4218, %v4262
        %v4279 = vmul.f32 %v4220, %v4263
        %v4280 = vmul.f32 %v4222, %v4264
        %v4281 = vmul.f32 %v4224, %v4265
        %v4282 = vmul.f32 %v4226, %v4266
        %v4283 = vmul.f32 %v4228, %v4267
        %v4284 = vmul.f32 %v4230, %v4268
        %v4285 = vmul.f32 %v4232, %v4269
        %v4286 = vmul.f32 %v4234, %v4270
        %v4287 = vmul.f32 %v4236, %v4271
        %v4288 = vmul.f32 %v4238, %v4272
        %v4289 = vmul.f32 %v4240, %v4273
        %4290 = vadd.xlane.f32.xlu0 %v4177
        %v4291 = vpop.xlane.xlu0 %4290
        %4292 = vadd.xlane.f32.xlu0 %v4178
        %v4293 = vpop.xlane.xlu0 %4292
        %4294 = vadd.xlane.f32.xlu0 %v4179
        %v4295 = vpop.xlane.xlu0 %4294
        %4296 = vadd.xlane.f32.xlu0 %v4180
        %v4297 = vpop.xlane.xlu0 %4296
        %4298 = vadd.xlane.f32.xlu0 %v4181
        %v4299 = vpop.xlane.xlu0 %4298
        %4300 = vadd.xlane.f32.xlu0 %v4182
        %v4301 = vpop.xlane.xlu0 %4300
        %4302 = vadd.xlane.f32.xlu0 %v4183
        %v4303 = vpop.xlane.xlu0 %4302
        %4304 = vadd.xlane.f32.xlu0 %v4184
        %v4305 = vpop.xlane.xlu0 %4304
        %4306 = vadd.xlane.f32.xlu0 %v4185
        %v4307 = vpop.xlane.xlu0 %4306
        %4308 = vadd.xlane.f32.xlu0 %v4186
        %v4309 = vpop.xlane.xlu0 %4308
        %4310 = vadd.xlane.f32.xlu0 %v4187
        %v4311 = vpop.xlane.xlu0 %4310
        %4312 = vadd.xlane.f32.xlu0 %v4188
        %v4313 = vpop.xlane.xlu0 %4312
        %4314 = vadd.xlane.f32.xlu0 %v4189
        %v4315 = vpop.xlane.xlu0 %4314
        %4316 = vadd.xlane.f32.xlu0 %v4190
        %v4317 = vpop.xlane.xlu0 %4316
        %4318 = vadd.xlane.f32.xlu0 %v4191
        %v4319 = vpop.xlane.xlu0 %4318
        %4320 = vadd.xlane.f32.xlu0 %v4192
        %v4321 = vpop.xlane.xlu0 %4320
        %v4322 = vadd.f32 %v4274, %v4291
        %v4323 = vadd.f32 %v4275, %v4293
        %v4324 = vadd.f32 %v4276, %v4295
        %v4325 = vadd.f32 %v4277, %v4297
        %v4326 = vadd.f32 %v4278, %v4299
        %v4327 = vadd.f32 %v4279, %v4301
        %v4328 = vadd.f32 %v4280, %v4303
        %v4329 = vadd.f32 %v4281, %v4305
        %v4330 = vadd.f32 %v4282, %v4307
        %v4331 = vadd.f32 %v4283, %v4309
        %v4332 = vadd.f32 %v4284, %v4311
        %v4333 = vadd.f32 %v4285, %v4313
        %v4334 = vadd.f32 %v4286, %v4315
        %v4335 = vadd.f32 %v4287, %v4317
        %v4336 = vadd.f32 %v4288, %v4319
        %v4337 = vadd.f32 %v4289, %v4321
        %4338 = vst.msk [vmem:[#allocation3] sm:$0xff] %vm4241, %v4322
        %4339 = vst.msk [vmem:[#allocation3 + $0x8] sm:$0xff] %vm4241, %v4323
        %4340 = vst.msk [vmem:[#allocation3 + $0x10] sm:$0xff] %vm4241, %v4324
        %4341 = vst.msk [vmem:[#allocation3 + $0x18] sm:$0xff] %vm4241, %v4325
        %4342 = vst.msk [vmem:[#allocation3 + $0x20] sm:$0xff] %vm4241, %v4326
        %4343 = vst.msk [vmem:[#allocation3 + $0x28] sm:$0xff] %vm4241, %v4327
        %4344 = vst.msk [vmem:[#allocation3 + $0x30] sm:$0xff] %vm4241, %v4328
        %4345 = vst.msk [vmem:[#allocation3 + $0x38] sm:$0xff] %vm4241, %v4329
        %4346 = vst.msk [vmem:[#allocation3 + $0x40] sm:$0xff] %vm4241, %v4330
        %4347 = vst.msk [vmem:[#allocation3 + $0x48] sm:$0xff] %vm4241, %v4331
        %4348 = vst.msk [vmem:[#allocation3 + $0x50] sm:$0xff] %vm4241, %v4332
        %4349 = vst.msk [vmem:[#allocation3 + $0x58] sm:$0xff] %vm4241, %v4333
        %4350 = vst.msk [vmem:[#allocation3 + $0x60] sm:$0xff] %vm4241, %v4334
        %4351 = vst.msk [vmem:[#allocation3 + $0x68] sm:$0xff] %vm4241, %v4335
        %4352 = vst.msk [vmem:[#allocation3 + $0x70] sm:$0xff] %vm4241, %v4336
        %4353 = vst.msk [vmem:[#allocation3 + $0x78] sm:$0xff] %vm4241, %v4337
        %v4354 = vld [vmem:[#allocation4] sm:$0xff]
        %v4355 = vld [vmem:[#allocation4 + $0x10] sm:$0xff]
        %v4356 = vld [vmem:[#allocation4 + $0x20] sm:$0xff]
        %v4357 = vld [vmem:[#allocation4 + $0x30] sm:$0xff]
        %v4358 = vld [vmem:[#allocation4 + $0x40] sm:$0xff]
        %v4359 = vld [vmem:[#allocation4 + $0x50] sm:$0xff]
        %v4360 = vld [vmem:[#allocation4 + $0x60] sm:$0xff]
        %v4361 = vld [vmem:[#allocation4 + $0x70] sm:$0xff]
        %v4362 = vld [vmem:[#allocation4 + $0x80] sm:$0xff]
        %v4363 = vld [vmem:[#allocation4 + $0x90] sm:$0xff]
        %v4364 = vld [vmem:[#allocation4 + $0xa0] sm:$0xff]
        %v4365 = vld [vmem:[#allocation4 + $0xb0] sm:$0xff]
        %v4366 = vld [vmem:[#allocation4 + $0xc0] sm:$0xff]
        %v4367 = vld [vmem:[#allocation4 + $0xd0] sm:$0xff]
        %v4368 = vld [vmem:[#allocation4 + $0xe0] sm:$0xff]
        %v4369 = vld [vmem:[#allocation4 + $0xf0] sm:$0xff]
        %4371 = vset.pattern.permute.xlu0 3
        %4372 = vperm.xlu0 %4371, %v4210
        %v4373 = vpop.permute.xlu0 %4372
        %4376 = vset.pattern.permute.xlu0 3
        %4377 = vperm.xlu0 %4376, %v4212
        %v4378 = vpop.permute.xlu0 %4377
        %4381 = vset.pattern.permute.xlu0 3
        %4382 = vperm.xlu0 %4381, %v4214
        %v4383 = vpop.permute.xlu0 %4382
        %4386 = vset.pattern.permute.xlu0 3
        %4387 = vperm.xlu0 %4386, %v4216
        %v4388 = vpop.permute.xlu0 %4387
        %4391 = vset.pattern.permute.xlu0 3
        %4392 = vperm.xlu0 %4391, %v4218
        %v4393 = vpop.permute.xlu0 %4392
        %4396 = vset.pattern.permute.xlu0 3
        %4397 = vperm.xlu0 %4396, %v4220
        %v4398 = vpop.permute.xlu0 %4397
        %4401 = vset.pattern.permute.xlu0 3
        %4402 = vperm.xlu0 %4401, %v4222
        %v4403 = vpop.permute.xlu0 %4402
        %4406 = vset.pattern.permute.xlu0 3
        %4407 = vperm.xlu0 %4406, %v4224
        %v4408 = vpop.permute.xlu0 %4407
        %4411 = vset.pattern.permute.xlu0 3
        %4412 = vperm.xlu0 %4411, %v4226
        %v4413 = vpop.permute.xlu0 %4412
        %4416 = vset.pattern.permute.xlu0 3
        %4417 = vperm.xlu0 %4416, %v4228
        %v4418 = vpop.permute.xlu0 %4417
        %4421 = vset.pattern.permute.xlu0 3
        %4422 = vperm.xlu0 %4421, %v4230
        %v4423 = vpop.permute.xlu0 %4422
        %4426 = vset.pattern.permute.xlu0 3
        %4427 = vperm.xlu0 %4426, %v4232
        %v4428 = vpop.permute.xlu0 %4427
        %4431 = vset.pattern.permute.xlu0 3
        %4432 = vperm.xlu0 %4431, %v4234
        %v4433 = vpop.permute.xlu0 %4432
        %4436 = vset.pattern.permute.xlu0 3
        %4437 = vperm.xlu0 %4436, %v4236
        %v4438 = vpop.permute.xlu0 %4437
        %4441 = vset.pattern.permute.xlu0 3
        %4442 = vperm.xlu0 %4441, %v4238
        %v4443 = vpop.permute.xlu0 %4442
        %4446 = vset.pattern.permute.xlu0 3
        %4447 = vperm.xlu0 %4446, %v4240
        %v4448 = vpop.permute.xlu0 %4447
        %v4450 = vmul.f32 %v4373, %v4354
        %v4451 = vmul.f32 %v4378, %v4355
        %v4452 = vmul.f32 %v4383, %v4356
        %v4453 = vmul.f32 %v4388, %v4357
        %v4454 = vmul.f32 %v4393, %v4358
        %v4455 = vmul.f32 %v4398, %v4359
        %v4456 = vmul.f32 %v4403, %v4360
        %v4457 = vmul.f32 %v4408, %v4361
        %v4458 = vmul.f32 %v4413, %v4362
        %v4459 = vmul.f32 %v4418, %v4363
        %v4460 = vmul.f32 %v4423, %v4364
        %v4461 = vmul.f32 %v4428, %v4365
        %v4462 = vmul.f32 %v4433, %v4366
        %v4463 = vmul.f32 %v4438, %v4367
        %v4464 = vmul.f32 %v4443, %v4368
        %v4465 = vmul.f32 %v4448, %v4369
        %v4466 = vpack.c.bf16 %v4178, %v4177
        %v4467 = vpack.c.bf16 %v4180, %v4179
        %v4468 = vpack.c.bf16 %v4182, %v4181
        %v4469 = vpack.c.bf16 %v4184, %v4183
        %v4470 = vpack.c.bf16 %v4186, %v4185
        %v4471 = vpack.c.bf16 %v4188, %v4187
        %v4472 = vpack.c.bf16 %v4190, %v4189
        %v4473 = vpack.c.bf16 %v4192, %v4191
        %4474 = vrot.lane.b32.xlu0 %v891, 32
        %v4475 = vpop.permute.xlu0 %4474
        %4476 = vrot.lane.b32.xlu0 %v893, 32
        %v4477 = vpop.permute.xlu0 %4476
        %4478 = vrot.lane.b32.xlu0 %v895, 32
        %v4479 = vpop.permute.xlu0 %4478
        %4480 = vrot.lane.b32.xlu0 %v897, 32
        %v4481 = vpop.permute.xlu0 %4480
        %4482 = vrot.lane.b32.xlu0 %v899, 32
        %v4483 = vpop.permute.xlu0 %4482
        %4484 = vrot.lane.b32.xlu0 %v901, 32
        %v4485 = vpop.permute.xlu0 %4484
        %4486 = vrot.lane.b32.xlu0 %v903, 32
        %v4487 = vpop.permute.xlu0 %4486
        %4488 = vrot.lane.b32.xlu0 %v905, 32
        %v4489 = vpop.permute.xlu0 %4488
        %4498 = vmatprep.subr.bf16.mxu0 0
        %4499 = vmatpush1.bf16.msra.mxu0 %v4489
        %4500 = vmatprep.subr.bf16.mxu0 0
        %4501 = vmatpush1.bf16.msra.mxu0 %v4487
        %4502 = vmatprep.subr.bf16.mxu0 0
        %4503 = vmatpush1.bf16.msra.mxu0 %v4485
        %4504 = vmatprep.subr.bf16.mxu0 0
        %4505 = vmatpush1.bf16.msra.mxu0 %v4483
        %4506 = vmatprep.subr.bf16.mxu0 0
        %4507 = vmatpush1.bf16.msra.mxu0 %v4481
        %4508 = vmatprep.subr.bf16.mxu0 0
        %4509 = vmatpush1.bf16.msra.mxu0 %v4479
        %4510 = vmatprep.subr.bf16.mxu0 0
        %4511 = vmatpush1.bf16.msra.mxu0 %v4477
        %4512 = vmatprep.subr.bf16.mxu0 0
        %4513 = vmatpush1.bf16.msra.mxu0 %v4475
        %4514 = vmatprep.subr.bf16.mxu0 0
        %4515 = vmatpush2.bf16.msra.mxu0 0
        %4516 = vmatprep.subr.bf16.mxu0 0
        %4517 = vmatpush2.bf16.msra.mxu0 0
        %4518 = vmatprep.subr.bf16.mxu0 0
        %4519 = vmatpush2.bf16.msra.mxu0 0
        %4520 = vmatprep.subr.bf16.mxu0 0
        %4521 = vmatpush2.bf16.msra.mxu0 0
        %4522 = vmatprep.subr.bf16.mxu0 0
        %4523 = vmatpush2.bf16.msra.mxu0 0
        %4524 = vmatprep.subr.bf16.mxu0 0
        %4525 = vmatpush2.bf16.msra.mxu0 0
        %4526 = vmatprep.subr.bf16.mxu0 0
        %4527 = vmatpush2.bf16.msra.mxu0 0
        %4528 = vmatprep.subr.bf16.mxu0 0
        %4529 = vmatpush2.bf16.msra.mxu0 0
        %4530 = vmatprep.mubr.bf16.mxu0 0
        %4531 = vmatmul.mubr.bf16.gmra.mxu0 %v4466
        %v4532 = vpop.f32.mrf.mxu0
        %v4533 = vadd.f32 0.0, %v4532
        %v4534 = vpop.f32.mrf.mxu0
        %v4535 = vpop.f32.mrf.mxu0
        %v4536 = vadd.f32 0.0, %v4535
        %v4537 = vpop.f32.mrf.mxu0
        %4538 = vmatprep.mubr.bf16.mxu0 0
        %4539 = vmatmul.mubr.bf16.gmra.mxu0 %v4467
        %v4540 = vpop.f32.mrf.mxu0
        %v4541 = vadd.f32 0.0, %v4540
        %v4542 = vpop.f32.mrf.mxu0
        %v4543 = vpop.f32.mrf.mxu0
        %v4544 = vadd.f32 0.0, %v4543
        %v4545 = vpop.f32.mrf.mxu0
        %4546 = vmatprep.mubr.bf16.mxu0 0
        %4547 = vmatmul.mubr.bf16.gmra.mxu0 %v4468
        %v4548 = vpop.f32.mrf.mxu0
        %v4549 = vadd.f32 0.0, %v4548
        %v4550 = vpop.f32.mrf.mxu0
        %v4551 = vpop.f32.mrf.mxu0
        %v4552 = vadd.f32 0.0, %v4551
        %v4553 = vpop.f32.mrf.mxu0
        %4554 = vmatprep.mubr.bf16.mxu0 0
        %4555 = vmatmul.mubr.bf16.gmra.mxu0 %v4469
        %v4556 = vpop.f32.mrf.mxu0
        %v4557 = vadd.f32 0.0, %v4556
        %v4558 = vpop.f32.mrf.mxu0
        %v4559 = vpop.f32.mrf.mxu0
        %v4560 = vadd.f32 0.0, %v4559
        %v4561 = vpop.f32.mrf.mxu0
        %4562 = vmatprep.mubr.bf16.mxu0 0
        %4563 = vmatmul.mubr.bf16.gmra.mxu0 %v4470
        %v4564 = vpop.f32.mrf.mxu0
        %v4565 = vadd.f32 0.0, %v4564
        %v4566 = vpop.f32.mrf.mxu0
        %v4567 = vpop.f32.mrf.mxu0
        %v4568 = vadd.f32 0.0, %v4567
        %v4569 = vpop.f32.mrf.mxu0
        %4570 = vmatprep.mubr.bf16.mxu0 0
        %4571 = vmatmul.mubr.bf16.gmra.mxu0 %v4471
        %v4572 = vpop.f32.mrf.mxu0
        %v4573 = vadd.f32 0.0, %v4572
        %v4574 = vpop.f32.mrf.mxu0
        %v4575 = vpop.f32.mrf.mxu0
        %v4576 = vadd.f32 0.0, %v4575
        %v4577 = vpop.f32.mrf.mxu0
        %4578 = vmatprep.mubr.bf16.mxu0 0
        %4579 = vmatmul.mubr.bf16.gmra.mxu0 %v4472
        %v4580 = vpop.f32.mrf.mxu0
        %v4581 = vadd.f32 0.0, %v4580
        %v4582 = vpop.f32.mrf.mxu0
        %v4583 = vpop.f32.mrf.mxu0
        %v4584 = vadd.f32 0.0, %v4583
        %v4585 = vpop.f32.mrf.mxu0
        %4586 = vmatprep.mubr.bf16.mxu0 0
        %4587 = vmatmul.mubr.bf16.gmra.mxu0 %v4473
        %v4588 = vpop.f32.mrf.mxu0
        %v4589 = vadd.f32 0.0, %v4588
        %v4590 = vpop.f32.mrf.mxu0
        %v4591 = vpop.f32.mrf.mxu0
        %v4592 = vadd.f32 0.0, %v4591
        %v4593 = vpop.f32.mrf.mxu0
        %4594 = vdwg.mxu0
        %4611 = vrot.lane.b32.xlu0 %v4533, 96
        %v4612 = vpop.permute.xlu0 %4611
        %4613 = vrot.lane.b32.xlu0 %v4536, 96
        %v4614 = vpop.permute.xlu0 %4613
        %4615 = vrot.lane.b32.xlu0 %v4541, 96
        %v4616 = vpop.permute.xlu0 %4615
        %4617 = vrot.lane.b32.xlu0 %v4544, 96
        %v4618 = vpop.permute.xlu0 %4617
        %4619 = vrot.lane.b32.xlu0 %v4549, 96
        %v4620 = vpop.permute.xlu0 %4619
        %4621 = vrot.lane.b32.xlu0 %v4552, 96
        %v4622 = vpop.permute.xlu0 %4621
        %4623 = vrot.lane.b32.xlu0 %v4557, 96
        %v4624 = vpop.permute.xlu0 %4623
        %4625 = vrot.lane.b32.xlu0 %v4560, 96
        %v4626 = vpop.permute.xlu0 %4625
        %4627 = vrot.lane.b32.xlu0 %v4565, 96
        %v4628 = vpop.permute.xlu0 %4627
        %4629 = vrot.lane.b32.xlu0 %v4568, 96
        %v4630 = vpop.permute.xlu0 %4629
        %4631 = vrot.lane.b32.xlu0 %v4573, 96
        %v4632 = vpop.permute.xlu0 %4631
        %4633 = vrot.lane.b32.xlu0 %v4576, 96
        %v4634 = vpop.permute.xlu0 %4633
        %4635 = vrot.lane.b32.xlu0 %v4581, 96
        %v4636 = vpop.permute.xlu0 %4635
        %4637 = vrot.lane.b32.xlu0 %v4584, 96
        %v4638 = vpop.permute.xlu0 %4637
        %4639 = vrot.lane.b32.xlu0 %v4589, 96
        %v4640 = vpop.permute.xlu0 %4639
        %4641 = vrot.lane.b32.xlu0 %v4592, 96
        %v4642 = vpop.permute.xlu0 %4641
        %v4659 = vadd.f32 %v4450, %v4612
        %v4660 = vadd.f32 %v4451, %v4614
        %v4661 = vadd.f32 %v4452, %v4616
        %v4662 = vadd.f32 %v4453, %v4618
        %v4663 = vadd.f32 %v4454, %v4620
        %v4664 = vadd.f32 %v4455, %v4622
        %v4665 = vadd.f32 %v4456, %v4624
        %v4666 = vadd.f32 %v4457, %v4626
        %v4667 = vadd.f32 %v4458, %v4628
        %v4668 = vadd.f32 %v4459, %v4630
        %v4669 = vadd.f32 %v4460, %v4632
        %v4670 = vadd.f32 %v4461, %v4634
        %v4671 = vadd.f32 %v4462, %v4636
        %v4672 = vadd.f32 %v4463, %v4638
        %v4673 = vadd.f32 %v4464, %v4640
        %v4674 = vadd.f32 %v4465, %v4642
        %vm4675 = vcmask 1048320
        %4676 = vst.msk [vmem:[#allocation4] sm:$0xff] %vm4675, %v4659
        %4677 = vst.msk [vmem:[#allocation4 + $0x10] sm:$0xff] %vm4675, %v4660
        %4678 = vst.msk [vmem:[#allocation4 + $0x20] sm:$0xff] %vm4675, %v4661
        %4679 = vst.msk [vmem:[#allocation4 + $0x30] sm:$0xff] %vm4675, %v4662
        %4680 = vst.msk [vmem:[#allocation4 + $0x40] sm:$0xff] %vm4675, %v4663
        %4681 = vst.msk [vmem:[#allocation4 + $0x50] sm:$0xff] %vm4675, %v4664
        %4682 = vst.msk [vmem:[#allocation4 + $0x60] sm:$0xff] %vm4675, %v4665
        %4683 = vst.msk [vmem:[#allocation4 + $0x70] sm:$0xff] %vm4675, %v4666
        %4684 = vst.msk [vmem:[#allocation4 + $0x80] sm:$0xff] %vm4675, %v4667
        %4685 = vst.msk [vmem:[#allocation4 + $0x90] sm:$0xff] %vm4675, %v4668
        %4686 = vst.msk [vmem:[#allocation4 + $0xa0] sm:$0xff] %vm4675, %v4669
        %4687 = vst.msk [vmem:[#allocation4 + $0xb0] sm:$0xff] %vm4675, %v4670
        %4688 = vst.msk [vmem:[#allocation4 + $0xc0] sm:$0xff] %vm4675, %v4671
        %4689 = vst.msk [vmem:[#allocation4 + $0xd0] sm:$0xff] %vm4675, %v4672
        %4690 = vst.msk [vmem:[#allocation4 + $0xe0] sm:$0xff] %vm4675, %v4673
        %4691 = vst.msk [vmem:[#allocation4 + $0xf0] sm:$0xff] %vm4675, %v4674
        %4692 = vset.pattern.permute.xlu0 4
        %4693 = vperm.xlu0 %4692, %v1082
        %v4694 = vpop.permute.xlu0 %4693
        %4696 = vset.pattern.permute.xlu0 4
        %4697 = vperm.xlu0 %4696, %v1085
        %v4698 = vpop.permute.xlu0 %4697
        %4700 = vset.pattern.permute.xlu0 4
        %4701 = vperm.xlu0 %4700, %v1090
        %v4702 = vpop.permute.xlu0 %4701
        %4704 = vset.pattern.permute.xlu0 4
        %4705 = vperm.xlu0 %4704, %v1093
        %v4706 = vpop.permute.xlu0 %4705
        %4708 = vset.pattern.permute.xlu0 4
        %4709 = vperm.xlu0 %4708, %v1098
        %v4710 = vpop.permute.xlu0 %4709
        %4712 = vset.pattern.permute.xlu0 4
        %4713 = vperm.xlu0 %4712, %v1101
        %v4714 = vpop.permute.xlu0 %4713
        %4716 = vset.pattern.permute.xlu0 4
        %4717 = vperm.xlu0 %4716, %v1106
        %v4718 = vpop.permute.xlu0 %4717
        %4720 = vset.pattern.permute.xlu0 4
        %4721 = vperm.xlu0 %4720, %v1109
        %v4722 = vpop.permute.xlu0 %4721
        %4724 = vset.pattern.permute.xlu0 4
        %4725 = vperm.xlu0 %4724, %v1114
        %v4726 = vpop.permute.xlu0 %4725
        %4728 = vset.pattern.permute.xlu0 4
        %4729 = vperm.xlu0 %4728, %v1117
        %v4730 = vpop.permute.xlu0 %4729
        %4732 = vset.pattern.permute.xlu0 4
        %4733 = vperm.xlu0 %4732, %v1122
        %v4734 = vpop.permute.xlu0 %4733
        %4736 = vset.pattern.permute.xlu0 4
        %4737 = vperm.xlu0 %4736, %v1125
        %v4738 = vpop.permute.xlu0 %4737
        %4740 = vset.pattern.permute.xlu0 4
        %4741 = vperm.xlu0 %4740, %v1130
        %v4742 = vpop.permute.xlu0 %4741
        %4744 = vset.pattern.permute.xlu0 4
        %4745 = vperm.xlu0 %4744, %v1133
        %v4746 = vpop.permute.xlu0 %4745
        %4748 = vset.pattern.permute.xlu0 4
        %4749 = vperm.xlu0 %4748, %v1138
        %v4750 = vpop.permute.xlu0 %4749
        %4752 = vset.pattern.permute.xlu0 4
        %4753 = vperm.xlu0 %4752, %v1141
        %v4754 = vpop.permute.xlu0 %4753
        %v4756 = vlaneseq
        %v4757 = vshrl.u32 %v4756, 7
        %v4758 = vsub.s32 4, %v4757
        %v4759 = vrot.slane %v954, %v4758
        %v4760 = vadd.f32 %v4694, %v4759
        %v4761 = vadd.f32 %v4698, %v4759
        %v4762 = vadd.f32 %v4702, %v4759
        %v4763 = vadd.f32 %v4706, %v4759
        %v4764 = vadd.f32 %v4710, %v4759
        %v4765 = vadd.f32 %v4714, %v4759
        %v4766 = vadd.f32 %v4718, %v4759
        %v4767 = vadd.f32 %v4722, %v4759
        %v4768 = vadd.f32 %v4726, %v4759
        %v4769 = vadd.f32 %v4730, %v4759
        %v4770 = vadd.f32 %v4734, %v4759
        %v4771 = vadd.f32 %v4738, %v4759
        %v4772 = vadd.f32 %v4742, %v4759
        %v4773 = vadd.f32 %v4746, %v4759
        %v4774 = vadd.f32 %v4750, %v4759
        %v4775 = vadd.f32 %v4754, %v4759
        %vm4776 = vcmp.gt.f32.partialorder %v4760, 0.0
        %vm4777 = vcmp.gt.f32.partialorder %v4761, 0.0
        %vm4778 = vcmp.gt.f32.partialorder %v4762, 0.0
        %vm4779 = vcmp.gt.f32.partialorder %v4763, 0.0
        %vm4780 = vcmp.gt.f32.partialorder %v4764, 0.0
        %vm4781 = vcmp.gt.f32.partialorder %v4765, 0.0
        %vm4782 = vcmp.gt.f32.partialorder %v4766, 0.0
        %vm4783 = vcmp.gt.f32.partialorder %v4767, 0.0
        %vm4784 = vcmp.gt.f32.partialorder %v4768, 0.0
        %vm4785 = vcmp.gt.f32.partialorder %v4769, 0.0
        %vm4786 = vcmp.gt.f32.partialorder %v4770, 0.0
        %vm4787 = vcmp.gt.f32.partialorder %v4771, 0.0
        %vm4788 = vcmp.gt.f32.partialorder %v4772, 0.0
        %vm4789 = vcmp.gt.f32.partialorder %v4773, 0.0
        %vm4790 = vcmp.gt.f32.partialorder %v4774, 0.0
        %vm4791 = vcmp.gt.f32.partialorder %v4775, 0.0
        %v4792 = vmul.f32 %v4760, 0.01
        %v4793 = vmul.f32 %v4761, 0.01
        %v4794 = vmul.f32 %v4762, 0.01
        %v4795 = vmul.f32 %v4763, 0.01
        %v4796 = vmul.f32 %v4764, 0.01
        %v4797 = vmul.f32 %v4765, 0.01
        %v4798 = vmul.f32 %v4766, 0.01
        %v4799 = vmul.f32 %v4767, 0.01
        %v4800 = vmul.f32 %v4768, 0.01
        %v4801 = vmul.f32 %v4769, 0.01
        %v4802 = vmul.f32 %v4770, 0.01
        %v4803 = vmul.f32 %v4771, 0.01
        %v4804 = vmul.f32 %v4772, 0.01
        %v4805 = vmul.f32 %v4773, 0.01
        %v4806 = vmul.f32 %v4774, 0.01
        %v4807 = vmul.f32 %v4775, 0.01
        %v4808 = vsel %vm4776, %v4760, %v4792
        %v4809 = vsel %vm4777, %v4761, %v4793
        %v4810 = vsel %vm4778, %v4762, %v4794
        %v4811 = vsel %vm4779, %v4763, %v4795
        %v4812 = vsel %vm4780, %v4764, %v4796
        %v4813 = vsel %vm4781, %v4765, %v4797
        %v4814 = vsel %vm4782, %v4766, %v4798
        %v4815 = vsel %vm4783, %v4767, %v4799
        %v4816 = vsel %vm4784, %v4768, %v4800
        %v4817 = vsel %vm4785, %v4769, %v4801
        %v4818 = vsel %vm4786, %v4770, %v4802
        %v4819 = vsel %vm4787, %v4771, %v4803
        %v4820 = vsel %vm4788, %v4772, %v4804
        %v4821 = vsel %vm4789, %v4773, %v4805
        %v4822 = vsel %vm4790, %v4774, %v4806
        %v4823 = vsel %vm4791, %v4775, %v4807
        %v4824 = vmul.f32 %v4808, %v669
        %v4825 = vmul.f32 %v4809, %v670
        %v4826 = vmul.f32 %v4810, %v671
        %v4827 = vmul.f32 %v4811, %v672
        %v4828 = vmul.f32 %v4812, %v673
        %v4829 = vmul.f32 %v4813, %v674
        %v4830 = vmul.f32 %v4814, %v675
        %v4831 = vmul.f32 %v4815, %v676
        %v4832 = vmul.f32 %v4816, %v677
        %v4833 = vmul.f32 %v4817, %v678
        %v4834 = vmul.f32 %v4818, %v679
        %v4835 = vmul.f32 %v4819, %v680
        %v4836 = vmul.f32 %v4820, %v681
        %v4837 = vmul.f32 %v4821, %v682
        %v4838 = vmul.f32 %v4822, %v683
        %v4839 = vmul.f32 %v4823, %v684
        %v4840 = vsel %vm653, %v4824, -1e+30
        %v4841 = vsel %vm654, %v4825, -1e+30
        %v4842 = vsel %vm655, %v4826, -1e+30
        %v4843 = vsel %vm656, %v4827, -1e+30
        %v4844 = vsel %vm657, %v4828, -1e+30
        %v4845 = vsel %vm658, %v4829, -1e+30
        %v4846 = vsel %vm659, %v4830, -1e+30
        %v4847 = vsel %vm660, %v4831, -1e+30
        %v4848 = vsel %vm661, %v4832, -1e+30
        %v4849 = vsel %vm662, %v4833, -1e+30
        %v4850 = vsel %vm663, %v4834, -1e+30
        %v4851 = vsel %vm664, %v4835, -1e+30
        %v4852 = vsel %vm665, %v4836, -1e+30
        %v4853 = vsel %vm666, %v4837, -1e+30
        %v4854 = vsel %vm667, %v4838, -1e+30
        %v4855 = vsel %vm668, %v4839, -1e+30
        %v4856 = vld [vmem:[#allocation2] sm:$0xff]
        %v4857 = vld [vmem:[#allocation2 + $0x8] sm:$0xff]
        %v4858 = vld [vmem:[#allocation2 + $0x10] sm:$0xff]
        %v4859 = vld [vmem:[#allocation2 + $0x18] sm:$0xff]
        %v4860 = vld [vmem:[#allocation2 + $0x20] sm:$0xff]
        %v4861 = vld [vmem:[#allocation2 + $0x28] sm:$0xff]
        %v4862 = vld [vmem:[#allocation2 + $0x30] sm:$0xff]
        %v4863 = vld [vmem:[#allocation2 + $0x38] sm:$0xff]
        %v4864 = vld [vmem:[#allocation2 + $0x40] sm:$0xff]
        %v4865 = vld [vmem:[#allocation2 + $0x48] sm:$0xff]
        %v4866 = vld [vmem:[#allocation2 + $0x50] sm:$0xff]
        %v4867 = vld [vmem:[#allocation2 + $0x58] sm:$0xff]
        %v4868 = vld [vmem:[#allocation2 + $0x60] sm:$0xff]
        %v4869 = vld [vmem:[#allocation2 + $0x68] sm:$0xff]
        %v4870 = vld [vmem:[#allocation2 + $0x70] sm:$0xff]
        %v4871 = vld [vmem:[#allocation2 + $0x78] sm:$0xff]
        %4872 = vmax.xlane.f32.xlu0 %v4840
        %v4873 = vpop.xlane.xlu0 %4872
        %4874 = vmax.xlane.f32.xlu0 %v4841
        %v4875 = vpop.xlane.xlu0 %4874
        %4876 = vmax.xlane.f32.xlu0 %v4842
        %v4877 = vpop.xlane.xlu0 %4876
        %4878 = vmax.xlane.f32.xlu0 %v4843
        %v4879 = vpop.xlane.xlu0 %4878
        %4880 = vmax.xlane.f32.xlu0 %v4844
        %v4881 = vpop.xlane.xlu0 %4880
        %4882 = vmax.xlane.f32.xlu0 %v4845
        %v4883 = vpop.xlane.xlu0 %4882
        %4884 = vmax.xlane.f32.xlu0 %v4846
        %v4885 = vpop.xlane.xlu0 %4884
        %4886 = vmax.xlane.f32.xlu0 %v4847
        %v4887 = vpop.xlane.xlu0 %4886
        %4888 = vmax.xlane.f32.xlu0 %v4848
        %v4889 = vpop.xlane.xlu0 %4888
        %4890 = vmax.xlane.f32.xlu0 %v4849
        %v4891 = vpop.xlane.xlu0 %4890
        %4892 = vmax.xlane.f32.xlu0 %v4850
        %v4893 = vpop.xlane.xlu0 %4892
        %4894 = vmax.xlane.f32.xlu0 %v4851
        %v4895 = vpop.xlane.xlu0 %4894
        %4896 = vmax.xlane.f32.xlu0 %v4852
        %v4897 = vpop.xlane.xlu0 %4896
        %4898 = vmax.xlane.f32.xlu0 %v4853
        %v4899 = vpop.xlane.xlu0 %4898
        %4900 = vmax.xlane.f32.xlu0 %v4854
        %v4901 = vpop.xlane.xlu0 %4900
        %4902 = vmax.xlane.f32.xlu0 %v4855
        %v4903 = vpop.xlane.xlu0 %4902
        %v4904 = vmax.f32 %v4856, %v4873
        %v4905 = vmax.f32 %v4857, %v4875
        %v4906 = vmax.f32 %v4858, %v4877
        %v4907 = vmax.f32 %v4859, %v4879
        %v4908 = vmax.f32 %v4860, %v4881
        %v4909 = vmax.f32 %v4861, %v4883
        %v4910 = vmax.f32 %v4862, %v4885
        %v4911 = vmax.f32 %v4863, %v4887
        %v4912 = vmax.f32 %v4864, %v4889
        %v4913 = vmax.f32 %v4865, %v4891
        %v4914 = vmax.f32 %v4866, %v4893
        %v4915 = vmax.f32 %v4867, %v4895
        %v4916 = vmax.f32 %v4868, %v4897
        %v4917 = vmax.f32 %v4869, %v4899
        %v4918 = vmax.f32 %v4870, %v4901
        %v4919 = vmax.f32 %v4871, %v4903
        %vm4920 = vcmp.gt.f32.partialorder %v4904, -5e+29
        %vm4921 = vcmp.gt.f32.partialorder %v4905, -5e+29
        %vm4922 = vcmp.gt.f32.partialorder %v4906, -5e+29
        %vm4923 = vcmp.gt.f32.partialorder %v4907, -5e+29
        %vm4924 = vcmp.gt.f32.partialorder %v4908, -5e+29
        %vm4925 = vcmp.gt.f32.partialorder %v4909, -5e+29
        %vm4926 = vcmp.gt.f32.partialorder %v4910, -5e+29
        %vm4927 = vcmp.gt.f32.partialorder %v4911, -5e+29
        %vm4928 = vcmp.gt.f32.partialorder %v4912, -5e+29
        %vm4929 = vcmp.gt.f32.partialorder %v4913, -5e+29
        %vm4930 = vcmp.gt.f32.partialorder %v4914, -5e+29
        %vm4931 = vcmp.gt.f32.partialorder %v4915, -5e+29
        %vm4932 = vcmp.gt.f32.partialorder %v4916, -5e+29
        %vm4933 = vcmp.gt.f32.partialorder %v4917, -5e+29
        %vm4934 = vcmp.gt.f32.partialorder %v4918, -5e+29
        %vm4935 = vcmp.gt.f32.partialorder %v4919, -5e+29
        %v4936 = vsel %vm4920, %v4904, 0.0
        %v4937 = vsel %vm4921, %v4905, 0.0
        %v4938 = vsel %vm4922, %v4906, 0.0
        %v4939 = vsel %vm4923, %v4907, 0.0
        %v4940 = vsel %vm4924, %v4908, 0.0
        %v4941 = vsel %vm4925, %v4909, 0.0
        %v4942 = vsel %vm4926, %v4910, 0.0
        %v4943 = vsel %vm4927, %v4911, 0.0
        %v4944 = vsel %vm4928, %v4912, 0.0
        %v4945 = vsel %vm4929, %v4913, 0.0
        %v4946 = vsel %vm4930, %v4914, 0.0
        %v4947 = vsel %vm4931, %v4915, 0.0
        %v4948 = vsel %vm4932, %v4916, 0.0
        %v4949 = vsel %vm4933, %v4917, 0.0
        %v4950 = vsel %vm4934, %v4918, 0.0
        %v4951 = vsel %vm4935, %v4919, 0.0
        %4953 = vset.pattern.permute.xlu0 4
        %4954 = vperm.xlu0 %4953, %v4936
        %v4955 = vpop.permute.xlu0 %4954
        %4958 = vset.pattern.permute.xlu0 4
        %4959 = vperm.xlu0 %4958, %v4937
        %v4960 = vpop.permute.xlu0 %4959
        %4963 = vset.pattern.permute.xlu0 4
        %4964 = vperm.xlu0 %4963, %v4938
        %v4965 = vpop.permute.xlu0 %4964
        %4968 = vset.pattern.permute.xlu0 4
        %4969 = vperm.xlu0 %4968, %v4939
        %v4970 = vpop.permute.xlu0 %4969
        %4973 = vset.pattern.permute.xlu0 4
        %4974 = vperm.xlu0 %4973, %v4940
        %v4975 = vpop.permute.xlu0 %4974
        %4978 = vset.pattern.permute.xlu0 4
        %4979 = vperm.xlu0 %4978, %v4941
        %v4980 = vpop.permute.xlu0 %4979
        %4983 = vset.pattern.permute.xlu0 4
        %4984 = vperm.xlu0 %4983, %v4942
        %v4985 = vpop.permute.xlu0 %4984
        %4988 = vset.pattern.permute.xlu0 4
        %4989 = vperm.xlu0 %4988, %v4943
        %v4990 = vpop.permute.xlu0 %4989
        %4993 = vset.pattern.permute.xlu0 4
        %4994 = vperm.xlu0 %4993, %v4944
        %v4995 = vpop.permute.xlu0 %4994
        %4998 = vset.pattern.permute.xlu0 4
        %4999 = vperm.xlu0 %4998, %v4945
        %v5000 = vpop.permute.xlu0 %4999
        %5003 = vset.pattern.permute.xlu0 4
        %5004 = vperm.xlu0 %5003, %v4946
        %v5005 = vpop.permute.xlu0 %5004
        %5008 = vset.pattern.permute.xlu0 4
        %5009 = vperm.xlu0 %5008, %v4947
        %v5010 = vpop.permute.xlu0 %5009
        %5013 = vset.pattern.permute.xlu0 4
        %5014 = vperm.xlu0 %5013, %v4948
        %v5015 = vpop.permute.xlu0 %5014
        %5018 = vset.pattern.permute.xlu0 4
        %5019 = vperm.xlu0 %5018, %v4949
        %v5020 = vpop.permute.xlu0 %5019
        %5023 = vset.pattern.permute.xlu0 4
        %5024 = vperm.xlu0 %5023, %v4950
        %v5025 = vpop.permute.xlu0 %5024
        %5028 = vset.pattern.permute.xlu0 4
        %5029 = vperm.xlu0 %5028, %v4951
        %v5030 = vpop.permute.xlu0 %5029
        %v5032 = vsub.f32 %v4824, %v4955
        %v5033 = vsub.f32 %v4825, %v4960
        %v5034 = vsub.f32 %v4826, %v4965
        %v5035 = vsub.f32 %v4827, %v4970
        %v5036 = vsub.f32 %v4828, %v4975
        %v5037 = vsub.f32 %v4829, %v4980
        %v5038 = vsub.f32 %v4830, %v4985
        %v5039 = vsub.f32 %v4831, %v4990
        %v5040 = vsub.f32 %v4832, %v4995
        %v5041 = vsub.f32 %v4833, %v5000
        %v5042 = vsub.f32 %v4834, %v5005
        %v5043 = vsub.f32 %v4835, %v5010
        %v5044 = vsub.f32 %v4836, %v5015
        %v5045 = vsub.f32 %v4837, %v5020
        %v5046 = vsub.f32 %v4838, %v5025
        %v5047 = vsub.f32 %v4839, %v5030
        %v5048 = vmul.f32 %v5032, 1.442695
        %v5049 = vpow.pop %v5048
        %v5050 = vmul.f32 %v5033, 1.442695
        %v5051 = vpow.pop %v5050
        %v5052 = vmul.f32 %v5034, 1.442695
        %v5053 = vpow.pop %v5052
        %v5054 = vmul.f32 %v5035, 1.442695
        %v5055 = vpow.pop %v5054
        %v5056 = vmul.f32 %v5036, 1.442695
        %v5057 = vpow.pop %v5056
        %v5058 = vmul.f32 %v5037, 1.442695
        %v5059 = vpow.pop %v5058
        %v5060 = vmul.f32 %v5038, 1.442695
        %v5061 = vpow.pop %v5060
        %v5062 = vmul.f32 %v5039, 1.442695
        %v5063 = vpow.pop %v5062
        %v5064 = vmul.f32 %v5040, 1.442695
        %v5065 = vpow.pop %v5064
        %v5066 = vmul.f32 %v5041, 1.442695
        %v5067 = vpow.pop %v5066
        %v5068 = vmul.f32 %v5042, 1.442695
        %v5069 = vpow.pop %v5068
        %v5070 = vmul.f32 %v5043, 1.442695
        %v5071 = vpow.pop %v5070
        %v5072 = vmul.f32 %v5044, 1.442695
        %v5073 = vpow.pop %v5072
        %v5074 = vmul.f32 %v5045, 1.442695
        %v5075 = vpow.pop %v5074
        %v5076 = vmul.f32 %v5046, 1.442695
        %v5077 = vpow.pop %v5076
        %v5078 = vmul.f32 %v5047, 1.442695
        %v5079 = vpow.pop %v5078
        %v5080 = vsel %vm653, %v5049, 0.0
        %v5081 = vsel %vm654, %v5051, 0.0
        %v5082 = vsel %vm655, %v5053, 0.0
        %v5083 = vsel %vm656, %v5055, 0.0
        %v5084 = vsel %vm657, %v5057, 0.0
        %v5085 = vsel %vm658, %v5059, 0.0
        %v5086 = vsel %vm659, %v5061, 0.0
        %v5087 = vsel %vm660, %v5063, 0.0
        %v5088 = vsel %vm661, %v5065, 0.0
        %v5089 = vsel %vm662, %v5067, 0.0
        %v5090 = vsel %vm663, %v5069, 0.0
        %v5091 = vsel %vm664, %v5071, 0.0
        %v5092 = vsel %vm665, %v5073, 0.0
        %v5093 = vsel %vm666, %v5075, 0.0
        %v5094 = vsel %vm667, %v5077, 0.0
        %v5095 = vsel %vm668, %v5079, 0.0
        %v5096 = vsub.f32 %v4856, %v4904
        %v5097 = vsub.f32 %v4857, %v4905
        %v5098 = vsub.f32 %v4858, %v4906
        %v5099 = vsub.f32 %v4859, %v4907
        %v5100 = vsub.f32 %v4860, %v4908
        %v5101 = vsub.f32 %v4861, %v4909
        %v5102 = vsub.f32 %v4862, %v4910
        %v5103 = vsub.f32 %v4863, %v4911
        %v5104 = vsub.f32 %v4864, %v4912
        %v5105 = vsub.f32 %v4865, %v4913
        %v5106 = vsub.f32 %v4866, %v4914
        %v5107 = vsub.f32 %v4867, %v4915
        %v5108 = vsub.f32 %v4868, %v4916
        %v5109 = vsub.f32 %v4869, %v4917
        %v5110 = vsub.f32 %v4870, %v4918
        %v5111 = vsub.f32 %v4871, %v4919
        %v5112 = vmul.f32 %v5096, 1.442695
        %v5113 = vpow.pop %v5112
        %v5114 = vmul.f32 %v5097, 1.442695
        %v5115 = vpow.pop %v5114
        %v5116 = vmul.f32 %v5098, 1.442695
        %v5117 = vpow.pop %v5116
        %v5118 = vmul.f32 %v5099, 1.442695
        %v5119 = vpow.pop %v5118
        %v5120 = vmul.f32 %v5100, 1.442695
        %v5121 = vpow.pop %v5120
        %v5122 = vmul.f32 %v5101, 1.442695
        %v5123 = vpow.pop %v5122
        %v5124 = vmul.f32 %v5102, 1.442695
        %v5125 = vpow.pop %v5124
        %v5126 = vmul.f32 %v5103, 1.442695
        %v5127 = vpow.pop %v5126
        %v5128 = vmul.f32 %v5104, 1.442695
        %v5129 = vpow.pop %v5128
        %v5130 = vmul.f32 %v5105, 1.442695
        %v5131 = vpow.pop %v5130
        %v5132 = vmul.f32 %v5106, 1.442695
        %v5133 = vpow.pop %v5132
        %v5134 = vmul.f32 %v5107, 1.442695
        %v5135 = vpow.pop %v5134
        %v5136 = vmul.f32 %v5108, 1.442695
        %v5137 = vpow.pop %v5136
        %v5138 = vmul.f32 %v5109, 1.442695
        %v5139 = vpow.pop %v5138
        %v5140 = vmul.f32 %v5110, 1.442695
        %v5141 = vpow.pop %v5140
        %v5142 = vmul.f32 %v5111, 1.442695
        %v5143 = vpow.pop %v5142
        %vm5144 = vcmask 39968
        %5145 = vst.msk [vmem:[#allocation2] sm:$0xff] %vm5144, %v4904
        %5146 = vst.msk [vmem:[#allocation2 + $0x8] sm:$0xff] %vm5144, %v4905
        %5147 = vst.msk [vmem:[#allocation2 + $0x10] sm:$0xff] %vm5144, %v4906
        %5148 = vst.msk [vmem:[#allocation2 + $0x18] sm:$0xff] %vm5144, %v4907
        %5149 = vst.msk [vmem:[#allocation2 + $0x20] sm:$0xff] %vm5144, %v4908
        %5150 = vst.msk [vmem:[#allocation2 + $0x28] sm:$0xff] %vm5144, %v4909
        %5151 = vst.msk [vmem:[#allocation2 + $0x30] sm:$0xff] %vm5144, %v4910
        %5152 = vst.msk [vmem:[#allocation2 + $0x38] sm:$0xff] %vm5144, %v4911
        %5153 = vst.msk [vmem:[#allocation2 + $0x40] sm:$0xff] %vm5144, %v4912
        %5154 = vst.msk [vmem:[#allocation2 + $0x48] sm:$0xff] %vm5144, %v4913
        %5155 = vst.msk [vmem:[#allocation2 + $0x50] sm:$0xff] %vm5144, %v4914
        %5156 = vst.msk [vmem:[#allocation2 + $0x58] sm:$0xff] %vm5144, %v4915
        %5157 = vst.msk [vmem:[#allocation2 + $0x60] sm:$0xff] %vm5144, %v4916
        %5158 = vst.msk [vmem:[#allocation2 + $0x68] sm:$0xff] %vm5144, %v4917
        %5159 = vst.msk [vmem:[#allocation2 + $0x70] sm:$0xff] %vm5144, %v4918
        %5160 = vst.msk [vmem:[#allocation2 + $0x78] sm:$0xff] %vm5144, %v4919
        %v5161 = vld [vmem:[#allocation3] sm:$0xff]
        %v5162 = vld [vmem:[#allocation3 + $0x8] sm:$0xff]
        %v5163 = vld [vmem:[#allocation3 + $0x10] sm:$0xff]
        %v5164 = vld [vmem:[#allocation3 + $0x18] sm:$0xff]
        %v5165 = vld [vmem:[#allocation3 + $0x20] sm:$0xff]
        %v5166 = vld [vmem:[#allocation3 + $0x28] sm:$0xff]
        %v5167 = vld [vmem:[#allocation3 + $0x30] sm:$0xff]
        %v5168 = vld [vmem:[#allocation3 + $0x38] sm:$0xff]
        %v5169 = vld [vmem:[#allocation3 + $0x40] sm:$0xff]
        %v5170 = vld [vmem:[#allocation3 + $0x48] sm:$0xff]
        %v5171 = vld [vmem:[#allocation3 + $0x50] sm:$0xff]
        %v5172 = vld [vmem:[#allocation3 + $0x58] sm:$0xff]
        %v5173 = vld [vmem:[#allocation3 + $0x60] sm:$0xff]
        %v5174 = vld [vmem:[#allocation3 + $0x68] sm:$0xff]
        %v5175 = vld [vmem:[#allocation3 + $0x70] sm:$0xff]
        %v5176 = vld [vmem:[#allocation3 + $0x78] sm:$0xff]
        %v5177 = vmul.f32 %v5113, %v5161
        %v5178 = vmul.f32 %v5115, %v5162
        %v5179 = vmul.f32 %v5117, %v5163
        %v5180 = vmul.f32 %v5119, %v5164
        %v5181 = vmul.f32 %v5121, %v5165
        %v5182 = vmul.f32 %v5123, %v5166
        %v5183 = vmul.f32 %v5125, %v5167
        %v5184 = vmul.f32 %v5127, %v5168
        %v5185 = vmul.f32 %v5129, %v5169
        %v5186 = vmul.f32 %v5131, %v5170
        %v5187 = vmul.f32 %v5133, %v5171
        %v5188 = vmul.f32 %v5135, %v5172
        %v5189 = vmul.f32 %v5137, %v5173
        %v5190 = vmul.f32 %v5139, %v5174
        %v5191 = vmul.f32 %v5141, %v5175
        %v5192 = vmul.f32 %v5143, %v5176
        %5193 = vadd.xlane.f32.xlu0 %v5080
        %v5194 = vpop.xlane.xlu0 %5193
        %5195 = vadd.xlane.f32.xlu0 %v5081
        %v5196 = vpop.xlane.xlu0 %5195
        %5197 = vadd.xlane.f32.xlu0 %v5082
        %v5198 = vpop.xlane.xlu0 %5197
        %5199 = vadd.xlane.f32.xlu0 %v5083
        %v5200 = vpop.xlane.xlu0 %5199
        %5201 = vadd.xlane.f32.xlu0 %v5084
        %v5202 = vpop.xlane.xlu0 %5201
        %5203 = vadd.xlane.f32.xlu0 %v5085
        %v5204 = vpop.xlane.xlu0 %5203
        %5205 = vadd.xlane.f32.xlu0 %v5086
        %v5206 = vpop.xlane.xlu0 %5205
        %5207 = vadd.xlane.f32.xlu0 %v5087
        %v5208 = vpop.xlane.xlu0 %5207
        %5209 = vadd.xlane.f32.xlu0 %v5088
        %v5210 = vpop.xlane.xlu0 %5209
        %5211 = vadd.xlane.f32.xlu0 %v5089
        %v5212 = vpop.xlane.xlu0 %5211
        %5213 = vadd.xlane.f32.xlu0 %v5090
        %v5214 = vpop.xlane.xlu0 %5213
        %5215 = vadd.xlane.f32.xlu0 %v5091
        %v5216 = vpop.xlane.xlu0 %5215
        %5217 = vadd.xlane.f32.xlu0 %v5092
        %v5218 = vpop.xlane.xlu0 %5217
        %5219 = vadd.xlane.f32.xlu0 %v5093
        %v5220 = vpop.xlane.xlu0 %5219
        %5221 = vadd.xlane.f32.xlu0 %v5094
        %v5222 = vpop.xlane.xlu0 %5221
        %5223 = vadd.xlane.f32.xlu0 %v5095
        %v5224 = vpop.xlane.xlu0 %5223
        %v5225 = vadd.f32 %v5177, %v5194
        %v5226 = vadd.f32 %v5178, %v5196
        %v5227 = vadd.f32 %v5179, %v5198
        %v5228 = vadd.f32 %v5180, %v5200
        %v5229 = vadd.f32 %v5181, %v5202
        %v5230 = vadd.f32 %v5182, %v5204
        %v5231 = vadd.f32 %v5183, %v5206
        %v5232 = vadd.f32 %v5184, %v5208
        %v5233 = vadd.f32 %v5185, %v5210
        %v5234 = vadd.f32 %v5186, %v5212
        %v5235 = vadd.f32 %v5187, %v5214
        %v5236 = vadd.f32 %v5188, %v5216
        %v5237 = vadd.f32 %v5189, %v5218
        %v5238 = vadd.f32 %v5190, %v5220
        %v5239 = vadd.f32 %v5191, %v5222
        %v5240 = vadd.f32 %v5192, %v5224
        %5241 = vst.msk [vmem:[#allocation3] sm:$0xff] %vm5144, %v5225
        %5242 = vst.msk [vmem:[#allocation3 + $0x8] sm:$0xff] %vm5144, %v5226
        %5243 = vst.msk [vmem:[#allocation3 + $0x10] sm:$0xff] %vm5144, %v5227
        %5244 = vst.msk [vmem:[#allocation3 + $0x18] sm:$0xff] %vm5144, %v5228
        %5245 = vst.msk [vmem:[#allocation3 + $0x20] sm:$0xff] %vm5144, %v5229
        %5246 = vst.msk [vmem:[#allocation3 + $0x28] sm:$0xff] %vm5144, %v5230
        %5247 = vst.msk [vmem:[#allocation3 + $0x30] sm:$0xff] %vm5144, %v5231
        %5248 = vst.msk [vmem:[#allocation3 + $0x38] sm:$0xff] %vm5144, %v5232
        %5249 = vst.msk [vmem:[#allocation3 + $0x40] sm:$0xff] %vm5144, %v5233
        %5250 = vst.msk [vmem:[#allocation3 + $0x48] sm:$0xff] %vm5144, %v5234
        %5251 = vst.msk [vmem:[#allocation3 + $0x50] sm:$0xff] %vm5144, %v5235
        %5252 = vst.msk [vmem:[#allocation3 + $0x58] sm:$0xff] %vm5144, %v5236
        %5253 = vst.msk [vmem:[#allocation3 + $0x60] sm:$0xff] %vm5144, %v5237
        %5254 = vst.msk [vmem:[#allocation3 + $0x68] sm:$0xff] %vm5144, %v5238
        %5255 = vst.msk [vmem:[#allocation3 + $0x70] sm:$0xff] %vm5144, %v5239
        %5256 = vst.msk [vmem:[#allocation3 + $0x78] sm:$0xff] %vm5144, %v5240
        %v5257 = vld [vmem:[#allocation4 + $0x8] sm:$0xff]
        %v5258 = vld [vmem:[#allocation4 + $0x18] sm:$0xff]
        %v5259 = vld [vmem:[#allocation4 + $0x28] sm:$0xff]
        %v5260 = vld [vmem:[#allocation4 + $0x38] sm:$0xff]
        %v5261 = vld [vmem:[#allocation4 + $0x48] sm:$0xff]
        %v5262 = vld [vmem:[#allocation4 + $0x58] sm:$0xff]
        %v5263 = vld [vmem:[#allocation4 + $0x68] sm:$0xff]
        %v5264 = vld [vmem:[#allocation4 + $0x78] sm:$0xff]
        %v5265 = vld [vmem:[#allocation4 + $0x88] sm:$0xff]
        %v5266 = vld [vmem:[#allocation4 + $0x98] sm:$0xff]
        %v5267 = vld [vmem:[#allocation4 + $0xa8] sm:$0xff]
        %v5268 = vld [vmem:[#allocation4 + $0xb8] sm:$0xff]
        %v5269 = vld [vmem:[#allocation4 + $0xc8] sm:$0xff]
        %v5270 = vld [vmem:[#allocation4 + $0xd8] sm:$0xff]
        %v5271 = vld [vmem:[#allocation4 + $0xe8] sm:$0xff]
        %v5272 = vld [vmem:[#allocation4 + $0xf8] sm:$0xff]
        %5274 = vset.pattern.permute.xlu0 4
        %5275 = vperm.xlu0 %5274, %v5113
        %v5276 = vpop.permute.xlu0 %5275
        %5279 = vset.pattern.permute.xlu0 4
        %5280 = vperm.xlu0 %5279, %v5115
        %v5281 = vpop.permute.xlu0 %5280
        %5284 = vset.pattern.permute.xlu0 4
        %5285 = vperm.xlu0 %5284, %v5117
        %v5286 = vpop.permute.xlu0 %5285
        %5289 = vset.pattern.permute.xlu0 4
        %5290 = vperm.xlu0 %5289, %v5119
        %v5291 = vpop.permute.xlu0 %5290
        %5294 = vset.pattern.permute.xlu0 4
        %5295 = vperm.xlu0 %5294, %v5121
        %v5296 = vpop.permute.xlu0 %5295
        %5299 = vset.pattern.permute.xlu0 4
        %5300 = vperm.xlu0 %5299, %v5123
        %v5301 = vpop.permute.xlu0 %5300
        %5304 = vset.pattern.permute.xlu0 4
        %5305 = vperm.xlu0 %5304, %v5125
        %v5306 = vpop.permute.xlu0 %5305
        %5309 = vset.pattern.permute.xlu0 4
        %5310 = vperm.xlu0 %5309, %v5127
        %v5311 = vpop.permute.xlu0 %5310
        %5314 = vset.pattern.permute.xlu0 4
        %5315 = vperm.xlu0 %5314, %v5129
        %v5316 = vpop.permute.xlu0 %5315
        %5319 = vset.pattern.permute.xlu0 4
        %5320 = vperm.xlu0 %5319, %v5131
        %v5321 = vpop.permute.xlu0 %5320
        %5324 = vset.pattern.permute.xlu0 4
        %5325 = vperm.xlu0 %5324, %v5133
        %v5326 = vpop.permute.xlu0 %5325
        %5329 = vset.pattern.permute.xlu0 4
        %5330 = vperm.xlu0 %5329, %v5135
        %v5331 = vpop.permute.xlu0 %5330
        %5334 = vset.pattern.permute.xlu0 4
        %5335 = vperm.xlu0 %5334, %v5137
        %v5336 = vpop.permute.xlu0 %5335
        %5339 = vset.pattern.permute.xlu0 4
        %5340 = vperm.xlu0 %5339, %v5139
        %v5341 = vpop.permute.xlu0 %5340
        %5344 = vset.pattern.permute.xlu0 4
        %5345 = vperm.xlu0 %5344, %v5141
        %v5346 = vpop.permute.xlu0 %5345
        %5349 = vset.pattern.permute.xlu0 4
        %5350 = vperm.xlu0 %5349, %v5143
        %v5351 = vpop.permute.xlu0 %5350
        %v5353 = vmul.f32 %v5276, %v5257
        %v5354 = vmul.f32 %v5281, %v5258
        %v5355 = vmul.f32 %v5286, %v5259
        %v5356 = vmul.f32 %v5291, %v5260
        %v5357 = vmul.f32 %v5296, %v5261
        %v5358 = vmul.f32 %v5301, %v5262
        %v5359 = vmul.f32 %v5306, %v5263
        %v5360 = vmul.f32 %v5311, %v5264
        %v5361 = vmul.f32 %v5316, %v5265
        %v5362 = vmul.f32 %v5321, %v5266
        %v5363 = vmul.f32 %v5326, %v5267
        %v5364 = vmul.f32 %v5331, %v5268
        %v5365 = vmul.f32 %v5336, %v5269
        %v5366 = vmul.f32 %v5341, %v5270
        %v5367 = vmul.f32 %v5346, %v5271
        %v5368 = vmul.f32 %v5351, %v5272
        %v5369 = vpack.c.bf16 %v5081, %v5080
        %v5370 = vpack.c.bf16 %v5083, %v5082
        %v5371 = vpack.c.bf16 %v5085, %v5084
        %v5372 = vpack.c.bf16 %v5087, %v5086
        %v5373 = vpack.c.bf16 %v5089, %v5088
        %v5374 = vpack.c.bf16 %v5091, %v5090
        %v5375 = vpack.c.bf16 %v5093, %v5092
        %v5376 = vpack.c.bf16 %v5095, %v5094
        %5377 = vmatprep.subr.bf16.mxu0 0
        %5378 = vmatpush1.bf16.msra.mxu0 %v906
        %5379 = vmatprep.subr.bf16.mxu0 0
        %5380 = vmatpush1.bf16.msra.mxu0 %v904
        %5381 = vmatprep.subr.bf16.mxu0 0
        %5382 = vmatpush1.bf16.msra.mxu0 %v902
        %5383 = vmatprep.subr.bf16.mxu0 0
        %5384 = vmatpush1.bf16.msra.mxu0 %v900
        %5385 = vmatprep.subr.bf16.mxu0 0
        %5386 = vmatpush1.bf16.msra.mxu0 %v898
        %5387 = vmatprep.subr.bf16.mxu0 0
        %5388 = vmatpush1.bf16.msra.mxu0 %v896
        %5389 = vmatprep.subr.bf16.mxu0 0
        %5390 = vmatpush1.bf16.msra.mxu0 %v894
        %5391 = vmatprep.subr.bf16.mxu0 0
        %5392 = vmatpush1.bf16.msra.mxu0 %v892
        %5393 = vmatprep.subr.bf16.mxu0 0
        %5394 = vmatpush2.bf16.msra.mxu0 0
        %5395 = vmatprep.subr.bf16.mxu0 0
        %5396 = vmatpush2.bf16.msra.mxu0 0
        %5397 = vmatprep.subr.bf16.mxu0 0
        %5398 = vmatpush2.bf16.msra.mxu0 0
        %5399 = vmatprep.subr.bf16.mxu0 0
        %5400 = vmatpush2.bf16.msra.mxu0 0
        %5401 = vmatprep.subr.bf16.mxu0 0
        %5402 = vmatpush2.bf16.msra.mxu0 0
        %5403 = vmatprep.subr.bf16.mxu0 0
        %5404 = vmatpush2.bf16.msra.mxu0 0
        %5405 = vmatprep.subr.bf16.mxu0 0
        %5406 = vmatpush2.bf16.msra.mxu0 0
        %5407 = vmatprep.subr.bf16.mxu0 0
        %5408 = vmatpush2.bf16.msra.mxu0 0
        %5409 = vmatprep.mubr.bf16.mxu0 0
        %5410 = vmatmul.mubr.bf16.gmra.mxu0 %v5369
        %v5411 = vpop.f32.mrf.mxu0
        %v5412 = vadd.f32 0.0, %v5411
        %v5413 = vpop.f32.mrf.mxu0
        %v5414 = vpop.f32.mrf.mxu0
        %v5415 = vadd.f32 0.0, %v5414
        %v5416 = vpop.f32.mrf.mxu0
        %5417 = vmatprep.mubr.bf16.mxu0 0
        %5418 = vmatmul.mubr.bf16.gmra.mxu0 %v5370
        %v5419 = vpop.f32.mrf.mxu0
        %v5420 = vadd.f32 0.0, %v5419
        %v5421 = vpop.f32.mrf.mxu0
        %v5422 = vpop.f32.mrf.mxu0
        %v5423 = vadd.f32 0.0, %v5422
        %v5424 = vpop.f32.mrf.mxu0
        %5425 = vmatprep.mubr.bf16.mxu0 0
        %5426 = vmatmul.mubr.bf16.gmra.mxu0 %v5371
        %v5427 = vpop.f32.mrf.mxu0
        %v5428 = vadd.f32 0.0, %v5427
        %v5429 = vpop.f32.mrf.mxu0
        %v5430 = vpop.f32.mrf.mxu0
        %v5431 = vadd.f32 0.0, %v5430
        %v5432 = vpop.f32.mrf.mxu0
        %5433 = vmatprep.mubr.bf16.mxu0 0
        %5434 = vmatmul.mubr.bf16.gmra.mxu0 %v5372
        %v5435 = vpop.f32.mrf.mxu0
        %v5436 = vadd.f32 0.0, %v5435
        %v5437 = vpop.f32.mrf.mxu0
        %v5438 = vpop.f32.mrf.mxu0
        %v5439 = vadd.f32 0.0, %v5438
        %v5440 = vpop.f32.mrf.mxu0
        %5441 = vmatprep.mubr.bf16.mxu0 0
        %5442 = vmatmul.mubr.bf16.gmra.mxu0 %v5373
        %v5443 = vpop.f32.mrf.mxu0
        %v5444 = vadd.f32 0.0, %v5443
        %v5445 = vpop.f32.mrf.mxu0
        %v5446 = vpop.f32.mrf.mxu0
        %v5447 = vadd.f32 0.0, %v5446
        %v5448 = vpop.f32.mrf.mxu0
        %5449 = vmatprep.mubr.bf16.mxu0 0
        %5450 = vmatmul.mubr.bf16.gmra.mxu0 %v5374
        %v5451 = vpop.f32.mrf.mxu0
        %v5452 = vadd.f32 0.0, %v5451
        %v5453 = vpop.f32.mrf.mxu0
        %v5454 = vpop.f32.mrf.mxu0
        %v5455 = vadd.f32 0.0, %v5454
        %v5456 = vpop.f32.mrf.mxu0
        %5457 = vmatprep.mubr.bf16.mxu0 0
        %5458 = vmatmul.mubr.bf16.gmra.mxu0 %v5375
        %v5459 = vpop.f32.mrf.mxu0
        %v5460 = vadd.f32 0.0, %v5459
        %v5461 = vpop.f32.mrf.mxu0
        %v5462 = vpop.f32.mrf.mxu0
        %v5463 = vadd.f32 0.0, %v5462
        %v5464 = vpop.f32.mrf.mxu0
        %5465 = vmatprep.mubr.bf16.mxu0 0
        %5466 = vmatmul.mubr.bf16.gmra.mxu0 %v5376
        %v5467 = vpop.f32.mrf.mxu0
        %v5468 = vadd.f32 0.0, %v5467
        %v5469 = vpop.f32.mrf.mxu0
        %v5470 = vpop.f32.mrf.mxu0
        %v5471 = vadd.f32 0.0, %v5470
        %v5472 = vpop.f32.mrf.mxu0
        %5473 = vdwg.mxu0
        %v5474 = vadd.f32 %v5353, %v5412
        %v5475 = vadd.f32 %v5354, %v5415
        %v5476 = vadd.f32 %v5355, %v5420
        %v5477 = vadd.f32 %v5356, %v5423
        %v5478 = vadd.f32 %v5357, %v5428
        %v5479 = vadd.f32 %v5358, %v5431
        %v5480 = vadd.f32 %v5359, %v5436
        %v5481 = vadd.f32 %v5360, %v5439
        %v5482 = vadd.f32 %v5361, %v5444
        %v5483 = vadd.f32 %v5362, %v5447
        %v5484 = vadd.f32 %v5363, %v5452
        %v5485 = vadd.f32 %v5364, %v5455
        %v5486 = vadd.f32 %v5365, %v5460
        %v5487 = vadd.f32 %v5366, %v5463
        %v5488 = vadd.f32 %v5367, %v5468
        %v5489 = vadd.f32 %v5368, %v5471
        %5490 = vst.msk [vmem:[#allocation4 + $0x8] sm:$0xff] %vm1958, %v5474
        %5491 = vst.msk [vmem:[#allocation4 + $0x18] sm:$0xff] %vm1958, %v5475
        %5492 = vst.msk [vmem:[#allocation4 + $0x28] sm:$0xff] %vm1958, %v5476
        %5493 = vst.msk [vmem:[#allocation4 + $0x38] sm:$0xff] %vm1958, %v5477
        %5494 = vst.msk [vmem:[#allocation4 + $0x48] sm:$0xff] %vm1958, %v5478
        %5495 = vst.msk [vmem:[#allocation4 + $0x58] sm:$0xff] %vm1958, %v5479
        %5496 = vst.msk [vmem:[#allocation4 + $0x68] sm:$0xff] %vm1958, %v5480
        %5497 = vst.msk [vmem:[#allocation4 + $0x78] sm:$0xff] %vm1958, %v5481
        %5498 = vst.msk [vmem:[#allocation4 + $0x88] sm:$0xff] %vm1958, %v5482
        %5499 = vst.msk [vmem:[#allocation4 + $0x98] sm:$0xff] %vm1958, %v5483
        %5500 = vst.msk [vmem:[#allocation4 + $0xa8] sm:$0xff] %vm1958, %v5484
        %5501 = vst.msk [vmem:[#allocation4 + $0xb8] sm:$0xff] %vm1958, %v5485
        %5502 = vst.msk [vmem:[#allocation4 + $0xc8] sm:$0xff] %vm1958, %v5486
        %5503 = vst.msk [vmem:[#allocation4 + $0xd8] sm:$0xff] %vm1958, %v5487
        %5504 = vst.msk [vmem:[#allocation4 + $0xe8] sm:$0xff] %vm1958, %v5488
        %5505 = vst.msk [vmem:[#allocation4 + $0xf8] sm:$0xff] %vm1958, %v5489
        %5506 = vset.pattern.permute.xlu0 5
        %5507 = vperm.xlu0 %5506, %v1082
        %v5508 = vpop.permute.xlu0 %5507
        %5510 = vset.pattern.permute.xlu0 5
        %5511 = vperm.xlu0 %5510, %v1085
        %v5512 = vpop.permute.xlu0 %5511
        %5514 = vset.pattern.permute.xlu0 5
        %5515 = vperm.xlu0 %5514, %v1090
        %v5516 = vpop.permute.xlu0 %5515
        %5518 = vset.pattern.permute.xlu0 5
        %5519 = vperm.xlu0 %5518, %v1093
        %v5520 = vpop.permute.xlu0 %5519
        %5522 = vset.pattern.permute.xlu0 5
        %5523 = vperm.xlu0 %5522, %v1098
        %v5524 = vpop.permute.xlu0 %5523
        %5526 = vset.pattern.permute.xlu0 5
        %5527 = vperm.xlu0 %5526, %v1101
        %v5528 = vpop.permute.xlu0 %5527
        %5530 = vset.pattern.permute.xlu0 5
        %5531 = vperm.xlu0 %5530, %v1106
        %v5532 = vpop.permute.xlu0 %5531
        %5534 = vset.pattern.permute.xlu0 5
        %5535 = vperm.xlu0 %5534, %v1109
        %v5536 = vpop.permute.xlu0 %5535
        %5538 = vset.pattern.permute.xlu0 5
        %5539 = vperm.xlu0 %5538, %v1114
        %v5540 = vpop.permute.xlu0 %5539
        %5542 = vset.pattern.permute.xlu0 5
        %5543 = vperm.xlu0 %5542, %v1117
        %v5544 = vpop.permute.xlu0 %5543
        %5546 = vset.pattern.permute.xlu0 5
        %5547 = vperm.xlu0 %5546, %v1122
        %v5548 = vpop.permute.xlu0 %5547
        %5550 = vset.pattern.permute.xlu0 5
        %5551 = vperm.xlu0 %5550, %v1125
        %v5552 = vpop.permute.xlu0 %5551
        %5554 = vset.pattern.permute.xlu0 5
        %5555 = vperm.xlu0 %5554, %v1130
        %v5556 = vpop.permute.xlu0 %5555
        %5558 = vset.pattern.permute.xlu0 5
        %5559 = vperm.xlu0 %5558, %v1133
        %v5560 = vpop.permute.xlu0 %5559
        %5562 = vset.pattern.permute.xlu0 5
        %5563 = vperm.xlu0 %5562, %v1138
        %v5564 = vpop.permute.xlu0 %5563
        %5566 = vset.pattern.permute.xlu0 5
        %5567 = vperm.xlu0 %5566, %v1141
        %v5568 = vpop.permute.xlu0 %5567
        %v5570 = vlaneseq
        %v5571 = vshrl.u32 %v5570, 7
        %v5572 = vsub.s32 5, %v5571
        %v5573 = vrot.slane %v954, %v5572
        %v5574 = vadd.f32 %v5508, %v5573
        %v5575 = vadd.f32 %v5512, %v5573
        %v5576 = vadd.f32 %v5516, %v5573
        %v5577 = vadd.f32 %v5520, %v5573
        %v5578 = vadd.f32 %v5524, %v5573
        %v5579 = vadd.f32 %v5528, %v5573
        %v5580 = vadd.f32 %v5532, %v5573
        %v5581 = vadd.f32 %v5536, %v5573
        %v5582 = vadd.f32 %v5540, %v5573
        %v5583 = vadd.f32 %v5544, %v5573
        %v5584 = vadd.f32 %v5548, %v5573
        %v5585 = vadd.f32 %v5552, %v5573
        %v5586 = vadd.f32 %v5556, %v5573
        %v5587 = vadd.f32 %v5560, %v5573
        %v5588 = vadd.f32 %v5564, %v5573
        %v5589 = vadd.f32 %v5568, %v5573
        %vm5590 = vcmp.gt.f32.partialorder %v5574, 0.0
        %vm5591 = vcmp.gt.f32.partialorder %v5575, 0.0
        %vm5592 = vcmp.gt.f32.partialorder %v5576, 0.0
        %vm5593 = vcmp.gt.f32.partialorder %v5577, 0.0
        %vm5594 = vcmp.gt.f32.partialorder %v5578, 0.0
        %vm5595 = vcmp.gt.f32.partialorder %v5579, 0.0
        %vm5596 = vcmp.gt.f32.partialorder %v5580, 0.0
        %vm5597 = vcmp.gt.f32.partialorder %v5581, 0.0
        %vm5598 = vcmp.gt.f32.partialorder %v5582, 0.0
        %vm5599 = vcmp.gt.f32.partialorder %v5583, 0.0
        %vm5600 = vcmp.gt.f32.partialorder %v5584, 0.0
        %vm5601 = vcmp.gt.f32.partialorder %v5585, 0.0
        %vm5602 = vcmp.gt.f32.partialorder %v5586, 0.0
        %vm5603 = vcmp.gt.f32.partialorder %v5587, 0.0
        %vm5604 = vcmp.gt.f32.partialorder %v5588, 0.0
        %vm5605 = vcmp.gt.f32.partialorder %v5589, 0.0
        %v5606 = vmul.f32 %v5574, 0.01
        %v5607 = vmul.f32 %v5575, 0.01
        %v5608 = vmul.f32 %v5576, 0.01
        %v5609 = vmul.f32 %v5577, 0.01
        %v5610 = vmul.f32 %v5578, 0.01
        %v5611 = vmul.f32 %v5579, 0.01
        %v5612 = vmul.f32 %v5580, 0.01
        %v5613 = vmul.f32 %v5581, 0.01
        %v5614 = vmul.f32 %v5582, 0.01
        %v5615 = vmul.f32 %v5583, 0.01
        %v5616 = vmul.f32 %v5584, 0.01
        %v5617 = vmul.f32 %v5585, 0.01
        %v5618 = vmul.f32 %v5586, 0.01
        %v5619 = vmul.f32 %v5587, 0.01
        %v5620 = vmul.f32 %v5588, 0.01
        %v5621 = vmul.f32 %v5589, 0.01
        %v5622 = vsel %vm5590, %v5574, %v5606
        %v5623 = vsel %vm5591, %v5575, %v5607
        %v5624 = vsel %vm5592, %v5576, %v5608
        %v5625 = vsel %vm5593, %v5577, %v5609
        %v5626 = vsel %vm5594, %v5578, %v5610
        %v5627 = vsel %vm5595, %v5579, %v5611
        %v5628 = vsel %vm5596, %v5580, %v5612
        %v5629 = vsel %vm5597, %v5581, %v5613
        %v5630 = vsel %vm5598, %v5582, %v5614
        %v5631 = vsel %vm5599, %v5583, %v5615
        %v5632 = vsel %vm5600, %v5584, %v5616
        %v5633 = vsel %vm5601, %v5585, %v5617
        %v5634 = vsel %vm5602, %v5586, %v5618
        %v5635 = vsel %vm5603, %v5587, %v5619
        %v5636 = vsel %vm5604, %v5588, %v5620
        %v5637 = vsel %vm5605, %v5589, %v5621
        %v5638 = vmul.f32 %v5622, %v669
        %v5639 = vmul.f32 %v5623, %v670
        %v5640 = vmul.f32 %v5624, %v671
        %v5641 = vmul.f32 %v5625, %v672
        %v5642 = vmul.f32 %v5626, %v673
        %v5643 = vmul.f32 %v5627, %v674
        %v5644 = vmul.f32 %v5628, %v675
        %v5645 = vmul.f32 %v5629, %v676
        %v5646 = vmul.f32 %v5630, %v677
        %v5647 = vmul.f32 %v5631, %v678
        %v5648 = vmul.f32 %v5632, %v679
        %v5649 = vmul.f32 %v5633, %v680
        %v5650 = vmul.f32 %v5634, %v681
        %v5651 = vmul.f32 %v5635, %v682
        %v5652 = vmul.f32 %v5636, %v683
        %v5653 = vmul.f32 %v5637, %v684
        %v5654 = vsel %vm653, %v5638, -1e+30
        %v5655 = vsel %vm654, %v5639, -1e+30
        %v5656 = vsel %vm655, %v5640, -1e+30
        %v5657 = vsel %vm656, %v5641, -1e+30
        %v5658 = vsel %vm657, %v5642, -1e+30
        %v5659 = vsel %vm658, %v5643, -1e+30
        %v5660 = vsel %vm659, %v5644, -1e+30
        %v5661 = vsel %vm660, %v5645, -1e+30
        %v5662 = vsel %vm661, %v5646, -1e+30
        %v5663 = vsel %vm662, %v5647, -1e+30
        %v5664 = vsel %vm663, %v5648, -1e+30
        %v5665 = vsel %vm664, %v5649, -1e+30
        %v5666 = vsel %vm665, %v5650, -1e+30
        %v5667 = vsel %vm666, %v5651, -1e+30
        %v5668 = vsel %vm667, %v5652, -1e+30
        %v5669 = vsel %vm668, %v5653, -1e+30
        %v5670 = vld [vmem:[#allocation2] sm:$0xff]
        %v5671 = vld [vmem:[#allocation2 + $0x8] sm:$0xff]
        %v5672 = vld [vmem:[#allocation2 + $0x10] sm:$0xff]
        %v5673 = vld [vmem:[#allocation2 + $0x18] sm:$0xff]
        %v5674 = vld [vmem:[#allocation2 + $0x20] sm:$0xff]
        %v5675 = vld [vmem:[#allocation2 + $0x28] sm:$0xff]
        %v5676 = vld [vmem:[#allocation2 + $0x30] sm:$0xff]
        %v5677 = vld [vmem:[#allocation2 + $0x38] sm:$0xff]
        %v5678 = vld [vmem:[#allocation2 + $0x40] sm:$0xff]
        %v5679 = vld [vmem:[#allocation2 + $0x48] sm:$0xff]
        %v5680 = vld [vmem:[#allocation2 + $0x50] sm:$0xff]
        %v5681 = vld [vmem:[#allocation2 + $0x58] sm:$0xff]
        %v5682 = vld [vmem:[#allocation2 + $0x60] sm:$0xff]
        %v5683 = vld [vmem:[#allocation2 + $0x68] sm:$0xff]
        %v5684 = vld [vmem:[#allocation2 + $0x70] sm:$0xff]
        %v5685 = vld [vmem:[#allocation2 + $0x78] sm:$0xff]
        %5686 = vmax.xlane.f32.xlu0 %v5654
        %v5687 = vpop.xlane.xlu0 %5686
        %5688 = vmax.xlane.f32.xlu0 %v5655
        %v5689 = vpop.xlane.xlu0 %5688
        %5690 = vmax.xlane.f32.xlu0 %v5656
        %v5691 = vpop.xlane.xlu0 %5690
        %5692 = vmax.xlane.f32.xlu0 %v5657
        %v5693 = vpop.xlane.xlu0 %5692
        %5694 = vmax.xlane.f32.xlu0 %v5658
        %v5695 = vpop.xlane.xlu0 %5694
        %5696 = vmax.xlane.f32.xlu0 %v5659
        %v5697 = vpop.xlane.xlu0 %5696
        %5698 = vmax.xlane.f32.xlu0 %v5660
        %v5699 = vpop.xlane.xlu0 %5698
        %5700 = vmax.xlane.f32.xlu0 %v5661
        %v5701 = vpop.xlane.xlu0 %5700
        %5702 = vmax.xlane.f32.xlu0 %v5662
        %v5703 = vpop.xlane.xlu0 %5702
        %5704 = vmax.xlane.f32.xlu0 %v5663
        %v5705 = vpop.xlane.xlu0 %5704
        %5706 = vmax.xlane.f32.xlu0 %v5664
        %v5707 = vpop.xlane.xlu0 %5706
        %5708 = vmax.xlane.f32.xlu0 %v5665
        %v5709 = vpop.xlane.xlu0 %5708
        %5710 = vmax.xlane.f32.xlu0 %v5666
        %v5711 = vpop.xlane.xlu0 %5710
        %5712 = vmax.xlane.f32.xlu0 %v5667
        %v5713 = vpop.xlane.xlu0 %5712
        %5714 = vmax.xlane.f32.xlu0 %v5668
        %v5715 = vpop.xlane.xlu0 %5714
        %5716 = vmax.xlane.f32.xlu0 %v5669
        %v5717 = vpop.xlane.xlu0 %5716
        %v5718 = vmax.f32 %v5670, %v5687
        %v5719 = vmax.f32 %v5671, %v5689
        %v5720 = vmax.f32 %v5672, %v5691
        %v5721 = vmax.f32 %v5673, %v5693
        %v5722 = vmax.f32 %v5674, %v5695
        %v5723 = vmax.f32 %v5675, %v5697
        %v5724 = vmax.f32 %v5676, %v5699
        %v5725 = vmax.f32 %v5677, %v5701
        %v5726 = vmax.f32 %v5678, %v5703
        %v5727 = vmax.f32 %v5679, %v5705
        %v5728 = vmax.f32 %v5680, %v5707
        %v5729 = vmax.f32 %v5681, %v5709
        %v5730 = vmax.f32 %v5682, %v5711
        %v5731 = vmax.f32 %v5683, %v5713
        %v5732 = vmax.f32 %v5684, %v5715
        %v5733 = vmax.f32 %v5685, %v5717
        %vm5734 = vcmp.gt.f32.partialorder %v5718, -5e+29
        %vm5735 = vcmp.gt.f32.partialorder %v5719, -5e+29
        %vm5736 = vcmp.gt.f32.partialorder %v5720, -5e+29
        %vm5737 = vcmp.gt.f32.partialorder %v5721, -5e+29
        %vm5738 = vcmp.gt.f32.partialorder %v5722, -5e+29
        %vm5739 = vcmp.gt.f32.partialorder %v5723, -5e+29
        %vm5740 = vcmp.gt.f32.partialorder %v5724, -5e+29
        %vm5741 = vcmp.gt.f32.partialorder %v5725, -5e+29
        %vm5742 = vcmp.gt.f32.partialorder %v5726, -5e+29
        %vm5743 = vcmp.gt.f32.partialorder %v5727, -5e+29
        %vm5744 = vcmp.gt.f32.partialorder %v5728, -5e+29
        %vm5745 = vcmp.gt.f32.partialorder %v5729, -5e+29
        %vm5746 = vcmp.gt.f32.partialorder %v5730, -5e+29
        %vm5747 = vcmp.gt.f32.partialorder %v5731, -5e+29
        %vm5748 = vcmp.gt.f32.partialorder %v5732, -5e+29
        %vm5749 = vcmp.gt.f32.partialorder %v5733, -5e+29
        %v5750 = vsel %vm5734, %v5718, 0.0
        %v5751 = vsel %vm5735, %v5719, 0.0
        %v5752 = vsel %vm5736, %v5720, 0.0
        %v5753 = vsel %vm5737, %v5721, 0.0
        %v5754 = vsel %vm5738, %v5722, 0.0
        %v5755 = vsel %vm5739, %v5723, 0.0
        %v5756 = vsel %vm5740, %v5724, 0.0
        %v5757 = vsel %vm5741, %v5725, 0.0
        %v5758 = vsel %vm5742, %v5726, 0.0
        %v5759 = vsel %vm5743, %v5727, 0.0
        %v5760 = vsel %vm5744, %v5728, 0.0
        %v5761 = vsel %vm5745, %v5729, 0.0
        %v5762 = vsel %vm5746, %v5730, 0.0
        %v5763 = vsel %vm5747, %v5731, 0.0
        %v5764 = vsel %vm5748, %v5732, 0.0
        %v5765 = vsel %vm5749, %v5733, 0.0
        %5767 = vset.pattern.permute.xlu0 5
        %5768 = vperm.xlu0 %5767, %v5750
        %v5769 = vpop.permute.xlu0 %5768
        %5772 = vset.pattern.permute.xlu0 5
        %5773 = vperm.xlu0 %5772, %v5751
        %v5774 = vpop.permute.xlu0 %5773
        %5777 = vset.pattern.permute.xlu0 5
        %5778 = vperm.xlu0 %5777, %v5752
        %v5779 = vpop.permute.xlu0 %5778
        %5782 = vset.pattern.permute.xlu0 5
        %5783 = vperm.xlu0 %5782, %v5753
        %v5784 = vpop.permute.xlu0 %5783
        %5787 = vset.pattern.permute.xlu0 5
        %5788 = vperm.xlu0 %5787, %v5754
        %v5789 = vpop.permute.xlu0 %5788
        %5792 = vset.pattern.permute.xlu0 5
        %5793 = vperm.xlu0 %5792, %v5755
        %v5794 = vpop.permute.xlu0 %5793
        %5797 = vset.pattern.permute.xlu0 5
        %5798 = vperm.xlu0 %5797, %v5756
        %v5799 = vpop.permute.xlu0 %5798
        %5802 = vset.pattern.permute.xlu0 5
        %5803 = vperm.xlu0 %5802, %v5757
        %v5804 = vpop.permute.xlu0 %5803
        %5807 = vset.pattern.permute.xlu0 5
        %5808 = vperm.xlu0 %5807, %v5758
        %v5809 = vpop.permute.xlu0 %5808
        %5812 = vset.pattern.permute.xlu0 5
        %5813 = vperm.xlu0 %5812, %v5759
        %v5814 = vpop.permute.xlu0 %5813
        %5817 = vset.pattern.permute.xlu0 5
        %5818 = vperm.xlu0 %5817, %v5760
        %v5819 = vpop.permute.xlu0 %5818
        %5822 = vset.pattern.permute.xlu0 5
        %5823 = vperm.xlu0 %5822, %v5761
        %v5824 = vpop.permute.xlu0 %5823
        %5827 = vset.pattern.permute.xlu0 5
        %5828 = vperm.xlu0 %5827, %v5762
        %v5829 = vpop.permute.xlu0 %5828
        %5832 = vset.pattern.permute.xlu0 5
        %5833 = vperm.xlu0 %5832, %v5763
        %v5834 = vpop.permute.xlu0 %5833
        %5837 = vset.pattern.permute.xlu0 5
        %5838 = vperm.xlu0 %5837, %v5764
        %v5839 = vpop.permute.xlu0 %5838
        %5842 = vset.pattern.permute.xlu0 5
        %5843 = vperm.xlu0 %5842, %v5765
        %v5844 = vpop.permute.xlu0 %5843
        %v5846 = vsub.f32 %v5638, %v5769
        %v5847 = vsub.f32 %v5639, %v5774
        %v5848 = vsub.f32 %v5640, %v5779
        %v5849 = vsub.f32 %v5641, %v5784
        %v5850 = vsub.f32 %v5642, %v5789
        %v5851 = vsub.f32 %v5643, %v5794
        %v5852 = vsub.f32 %v5644, %v5799
        %v5853 = vsub.f32 %v5645, %v5804
        %v5854 = vsub.f32 %v5646, %v5809
        %v5855 = vsub.f32 %v5647, %v5814
        %v5856 = vsub.f32 %v5648, %v5819
        %v5857 = vsub.f32 %v5649, %v5824
        %v5858 = vsub.f32 %v5650, %v5829
        %v5859 = vsub.f32 %v5651, %v5834
        %v5860 = vsub.f32 %v5652, %v5839
        %v5861 = vsub.f32 %v5653, %v5844
        %v5862 = vmul.f32 %v5846, 1.442695
        %v5863 = vpow.pop %v5862
        %v5864 = vmul.f32 %v5847, 1.442695
        %v5865 = vpow.pop %v5864
        %v5866 = vmul.f32 %v5848, 1.442695
        %v5867 = vpow.pop %v5866
        %v5868 = vmul.f32 %v5849, 1.442695
        %v5869 = vpow.pop %v5868
        %v5870 = vmul.f32 %v5850, 1.442695
        %v5871 = vpow.pop %v5870
        %v5872 = vmul.f32 %v5851, 1.442695
        %v5873 = vpow.pop %v5872
        %v5874 = vmul.f32 %v5852, 1.442695
        %v5875 = vpow.pop %v5874
        %v5876 = vmul.f32 %v5853, 1.442695
        %v5877 = vpow.pop %v5876
        %v5878 = vmul.f32 %v5854, 1.442695
        %v5879 = vpow.pop %v5878
        %v5880 = vmul.f32 %v5855, 1.442695
        %v5881 = vpow.pop %v5880
        %v5882 = vmul.f32 %v5856, 1.442695
        %v5883 = vpow.pop %v5882
        %v5884 = vmul.f32 %v5857, 1.442695
        %v5885 = vpow.pop %v5884
        %v5886 = vmul.f32 %v5858, 1.442695
        %v5887 = vpow.pop %v5886
        %v5888 = vmul.f32 %v5859, 1.442695
        %v5889 = vpow.pop %v5888
        %v5890 = vmul.f32 %v5860, 1.442695
        %v5891 = vpow.pop %v5890
        %v5892 = vmul.f32 %v5861, 1.442695
        %v5893 = vpow.pop %v5892
        %v5894 = vsel %vm653, %v5863, 0.0
        %v5895 = vsel %vm654, %v5865, 0.0
        %v5896 = vsel %vm655, %v5867, 0.0
        %v5897 = vsel %vm656, %v5869, 0.0
        %v5898 = vsel %vm657, %v5871, 0.0
        %v5899 = vsel %vm658, %v5873, 0.0
        %v5900 = vsel %vm659, %v5875, 0.0
        %v5901 = vsel %vm660, %v5877, 0.0
        %v5902 = vsel %vm661, %v5879, 0.0
        %v5903 = vsel %vm662, %v5881, 0.0
        %v5904 = vsel %vm663, %v5883, 0.0
        %v5905 = vsel %vm664, %v5885, 0.0
        %v5906 = vsel %vm665, %v5887, 0.0
        %v5907 = vsel %vm666, %v5889, 0.0
        %v5908 = vsel %vm667, %v5891, 0.0
        %v5909 = vsel %vm668, %v5893, 0.0
        %v5910 = vsub.f32 %v5670, %v5718
        %v5911 = vsub.f32 %v5671, %v5719
        %v5912 = vsub.f32 %v5672, %v5720
        %v5913 = vsub.f32 %v5673, %v5721
        %v5914 = vsub.f32 %v5674, %v5722
        %v5915 = vsub.f32 %v5675, %v5723
        %v5916 = vsub.f32 %v5676, %v5724
        %v5917 = vsub.f32 %v5677, %v5725
        %v5918 = vsub.f32 %v5678, %v5726
        %v5919 = vsub.f32 %v5679, %v5727
        %v5920 = vsub.f32 %v5680, %v5728
        %v5921 = vsub.f32 %v5681, %v5729
        %v5922 = vsub.f32 %v5682, %v5730
        %v5923 = vsub.f32 %v5683, %v5731
        %v5924 = vsub.f32 %v5684, %v5732
        %v5925 = vsub.f32 %v5685, %v5733
        %v5926 = vmul.f32 %v5910, 1.442695
        %v5927 = vpow.pop %v5926
        %v5928 = vmul.f32 %v5911, 1.442695
        %v5929 = vpow.pop %v5928
        %v5930 = vmul.f32 %v5912, 1.442695
        %v5931 = vpow.pop %v5930
        %v5932 = vmul.f32 %v5913, 1.442695
        %v5933 = vpow.pop %v5932
        %v5934 = vmul.f32 %v5914, 1.442695
        %v5935 = vpow.pop %v5934
        %v5936 = vmul.f32 %v5915, 1.442695
        %v5937 = vpow.pop %v5936
        %v5938 = vmul.f32 %v5916, 1.442695
        %v5939 = vpow.pop %v5938
        %v5940 = vmul.f32 %v5917, 1.442695
        %v5941 = vpow.pop %v5940
        %v5942 = vmul.f32 %v5918, 1.442695
        %v5943 = vpow.pop %v5942
        %v5944 = vmul.f32 %v5919, 1.442695
        %v5945 = vpow.pop %v5944
        %v5946 = vmul.f32 %v5920, 1.442695
        %v5947 = vpow.pop %v5946
        %v5948 = vmul.f32 %v5921, 1.442695
        %v5949 = vpow.pop %v5948
        %v5950 = vmul.f32 %v5922, 1.442695
        %v5951 = vpow.pop %v5950
        %v5952 = vmul.f32 %v5923, 1.442695
        %v5953 = vpow.pop %v5952
        %v5954 = vmul.f32 %v5924, 1.442695
        %v5955 = vpow.pop %v5954
        %v5956 = vmul.f32 %v5925, 1.442695
        %v5957 = vpow.pop %v5956
        %vm5958 = vcmask 48168
        %5959 = vst.msk [vmem:[#allocation2] sm:$0xff] %vm5958, %v5718
        %5960 = vst.msk [vmem:[#allocation2 + $0x8] sm:$0xff] %vm5958, %v5719
        %5961 = vst.msk [vmem:[#allocation2 + $0x10] sm:$0xff] %vm5958, %v5720
        %5962 = vst.msk [vmem:[#allocation2 + $0x18] sm:$0xff] %vm5958, %v5721
        %5963 = vst.msk [vmem:[#allocation2 + $0x20] sm:$0xff] %vm5958, %v5722
        %5964 = vst.msk [vmem:[#allocation2 + $0x28] sm:$0xff] %vm5958, %v5723
        %5965 = vst.msk [vmem:[#allocation2 + $0x30] sm:$0xff] %vm5958, %v5724
        %5966 = vst.msk [vmem:[#allocation2 + $0x38] sm:$0xff] %vm5958, %v5725
        %5967 = vst.msk [vmem:[#allocation2 + $0x40] sm:$0xff] %vm5958, %v5726
        %5968 = vst.msk [vmem:[#allocation2 + $0x48] sm:$0xff] %vm5958, %v5727
        %5969 = vst.msk [vmem:[#allocation2 + $0x50] sm:$0xff] %vm5958, %v5728
        %5970 = vst.msk [vmem:[#allocation2 + $0x58] sm:$0xff] %vm5958, %v5729
        %5971 = vst.msk [vmem:[#allocation2 + $0x60] sm:$0xff] %vm5958, %v5730
        %5972 = vst.msk [vmem:[#allocation2 + $0x68] sm:$0xff] %vm5958, %v5731
        %5973 = vst.msk [vmem:[#allocation2 + $0x70] sm:$0xff] %vm5958, %v5732
        %5974 = vst.msk [vmem:[#allocation2 + $0x78] sm:$0xff] %vm5958, %v5733
        %v5975 = vld [vmem:[#allocation3] sm:$0xff]
        %v5976 = vld [vmem:[#allocation3 + $0x8] sm:$0xff]
        %v5977 = vld [vmem:[#allocation3 + $0x10] sm:$0xff]
        %v5978 = vld [vmem:[#allocation3 + $0x18] sm:$0xff]
        %v5979 = vld [vmem:[#allocation3 + $0x20] sm:$0xff]
        %v5980 = vld [vmem:[#allocation3 + $0x28] sm:$0xff]
        %v5981 = vld [vmem:[#allocation3 + $0x30] sm:$0xff]
        %v5982 = vld [vmem:[#allocation3 + $0x38] sm:$0xff]
        %v5983 = vld [vmem:[#allocation3 + $0x40] sm:$0xff]
        %v5984 = vld [vmem:[#allocation3 + $0x48] sm:$0xff]
        %v5985 = vld [vmem:[#allocation3 + $0x50] sm:$0xff]
        %v5986 = vld [vmem:[#allocation3 + $0x58] sm:$0xff]
        %v5987 = vld [vmem:[#allocation3 + $0x60] sm:$0xff]
        %v5988 = vld [vmem:[#allocation3 + $0x68] sm:$0xff]
        %v5989 = vld [vmem:[#allocation3 + $0x70] sm:$0xff]
        %v5990 = vld [vmem:[#allocation3 + $0x78] sm:$0xff]
        %v5991 = vmul.f32 %v5927, %v5975
        %v5992 = vmul.f32 %v5929, %v5976
        %v5993 = vmul.f32 %v5931, %v5977
        %v5994 = vmul.f32 %v5933, %v5978
        %v5995 = vmul.f32 %v5935, %v5979
        %v5996 = vmul.f32 %v5937, %v5980
        %v5997 = vmul.f32 %v5939, %v5981
        %v5998 = vmul.f32 %v5941, %v5982
        %v5999 = vmul.f32 %v5943, %v5983
        %v6000 = vmul.f32 %v5945, %v5984
        %v6001 = vmul.f32 %v5947, %v5985
        %v6002 = vmul.f32 %v5949, %v5986
        %v6003 = vmul.f32 %v5951, %v5987
        %v6004 = vmul.f32 %v5953, %v5988
        %v6005 = vmul.f32 %v5955, %v5989
        %v6006 = vmul.f32 %v5957, %v5990
        %6007 = vadd.xlane.f32.xlu0 %v5894
        %v6008 = vpop.xlane.xlu0 %6007
        %6009 = vadd.xlane.f32.xlu0 %v5895
        %v6010 = vpop.xlane.xlu0 %6009
        %6011 = vadd.xlane.f32.xlu0 %v5896
        %v6012 = vpop.xlane.xlu0 %6011
        %6013 = vadd.xlane.f32.xlu0 %v5897
        %v6014 = vpop.xlane.xlu0 %6013
        %6015 = vadd.xlane.f32.xlu0 %v5898
        %v6016 = vpop.xlane.xlu0 %6015
        %6017 = vadd.xlane.f32.xlu0 %v5899
        %v6018 = vpop.xlane.xlu0 %6017
        %6019 = vadd.xlane.f32.xlu0 %v5900
        %v6020 = vpop.xlane.xlu0 %6019
        %6021 = vadd.xlane.f32.xlu0 %v5901
        %v6022 = vpop.xlane.xlu0 %6021
        %6023 = vadd.xlane.f32.xlu0 %v5902
        %v6024 = vpop.xlane.xlu0 %6023
        %6025 = vadd.xlane.f32.xlu0 %v5903
        %v6026 = vpop.xlane.xlu0 %6025
        %6027 = vadd.xlane.f32.xlu0 %v5904
        %v6028 = vpop.xlane.xlu0 %6027
        %6029 = vadd.xlane.f32.xlu0 %v5905
        %v6030 = vpop.xlane.xlu0 %6029
        %6031 = vadd.xlane.f32.xlu0 %v5906
        %v6032 = vpop.xlane.xlu0 %6031
        %6033 = vadd.xlane.f32.xlu0 %v5907
        %v6034 = vpop.xlane.xlu0 %6033
        %6035 = vadd.xlane.f32.xlu0 %v5908
        %v6036 = vpop.xlane.xlu0 %6035
        %6037 = vadd.xlane.f32.xlu0 %v5909
        %v6038 = vpop.xlane.xlu0 %6037
        %v6039 = vadd.f32 %v5991, %v6008
        %v6040 = vadd.f32 %v5992, %v6010
        %v6041 = vadd.f32 %v5993, %v6012
        %v6042 = vadd.f32 %v5994, %v6014
        %v6043 = vadd.f32 %v5995, %v6016
        %v6044 = vadd.f32 %v5996, %v6018
        %v6045 = vadd.f32 %v5997, %v6020
        %v6046 = vadd.f32 %v5998, %v6022
        %v6047 = vadd.f32 %v5999, %v6024
        %v6048 = vadd.f32 %v6000, %v6026
        %v6049 = vadd.f32 %v6001, %v6028
        %v6050 = vadd.f32 %v6002, %v6030
        %v6051 = vadd.f32 %v6003, %v6032
        %v6052 = vadd.f32 %v6004, %v6034
        %v6053 = vadd.f32 %v6005, %v6036
        %v6054 = vadd.f32 %v6006, %v6038
        %6055 = vst.msk [vmem:[#allocation3] sm:$0xff] %vm5958, %v6039
        %6056 = vst.msk [vmem:[#allocation3 + $0x8] sm:$0xff] %vm5958, %v6040
        %6057 = vst.msk [vmem:[#allocation3 + $0x10] sm:$0xff] %vm5958, %v6041
        %6058 = vst.msk [vmem:[#allocation3 + $0x18] sm:$0xff] %vm5958, %v6042
        %6059 = vst.msk [vmem:[#allocation3 + $0x20] sm:$0xff] %vm5958, %v6043
        %6060 = vst.msk [vmem:[#allocation3 + $0x28] sm:$0xff] %vm5958, %v6044
        %6061 = vst.msk [vmem:[#allocation3 + $0x30] sm:$0xff] %vm5958, %v6045
        %6062 = vst.msk [vmem:[#allocation3 + $0x38] sm:$0xff] %vm5958, %v6046
        %6063 = vst.msk [vmem:[#allocation3 + $0x40] sm:$0xff] %vm5958, %v6047
        %6064 = vst.msk [vmem:[#allocation3 + $0x48] sm:$0xff] %vm5958, %v6048
        %6065 = vst.msk [vmem:[#allocation3 + $0x50] sm:$0xff] %vm5958, %v6049
        %6066 = vst.msk [vmem:[#allocation3 + $0x58] sm:$0xff] %vm5958, %v6050
        %6067 = vst.msk [vmem:[#allocation3 + $0x60] sm:$0xff] %vm5958, %v6051
        %6068 = vst.msk [vmem:[#allocation3 + $0x68] sm:$0xff] %vm5958, %v6052
        %6069 = vst.msk [vmem:[#allocation3 + $0x70] sm:$0xff] %vm5958, %v6053
        %6070 = vst.msk [vmem:[#allocation3 + $0x78] sm:$0xff] %vm5958, %v6054
        %v6071 = vld [vmem:[#allocation4 + $0x8] sm:$0xff]
        %v6072 = vld [vmem:[#allocation4 + $0x18] sm:$0xff]
        %v6073 = vld [vmem:[#allocation4 + $0x28] sm:$0xff]
        %v6074 = vld [vmem:[#allocation4 + $0x38] sm:$0xff]
        %v6075 = vld [vmem:[#allocation4 + $0x48] sm:$0xff]
        %v6076 = vld [vmem:[#allocation4 + $0x58] sm:$0xff]
        %v6077 = vld [vmem:[#allocation4 + $0x68] sm:$0xff]
        %v6078 = vld [vmem:[#allocation4 + $0x78] sm:$0xff]
        %v6079 = vld [vmem:[#allocation4 + $0x88] sm:$0xff]
        %v6080 = vld [vmem:[#allocation4 + $0x98] sm:$0xff]
        %v6081 = vld [vmem:[#allocation4 + $0xa8] sm:$0xff]
        %v6082 = vld [vmem:[#allocation4 + $0xb8] sm:$0xff]
        %v6083 = vld [vmem:[#allocation4 + $0xc8] sm:$0xff]
        %v6084 = vld [vmem:[#allocation4 + $0xd8] sm:$0xff]
        %v6085 = vld [vmem:[#allocation4 + $0xe8] sm:$0xff]
        %v6086 = vld [vmem:[#allocation4 + $0xf8] sm:$0xff]
        %6088 = vset.pattern.permute.xlu0 5
        %6089 = vperm.xlu0 %6088, %v5927
        %v6090 = vpop.permute.xlu0 %6089
        %6093 = vset.pattern.permute.xlu0 5
        %6094 = vperm.xlu0 %6093, %v5929
        %v6095 = vpop.permute.xlu0 %6094
        %6098 = vset.pattern.permute.xlu0 5
        %6099 = vperm.xlu0 %6098, %v5931
        %v6100 = vpop.permute.xlu0 %6099
        %6103 = vset.pattern.permute.xlu0 5
        %6104 = vperm.xlu0 %6103, %v5933
        %v6105 = vpop.permute.xlu0 %6104
        %6108 = vset.pattern.permute.xlu0 5
        %6109 = vperm.xlu0 %6108, %v5935
        %v6110 = vpop.permute.xlu0 %6109
        %6113 = vset.pattern.permute.xlu0 5
        %6114 = vperm.xlu0 %6113, %v5937
        %v6115 = vpop.permute.xlu0 %6114
        %6118 = vset.pattern.permute.xlu0 5
        %6119 = vperm.xlu0 %6118, %v5939
        %v6120 = vpop.permute.xlu0 %6119
        %6123 = vset.pattern.permute.xlu0 5
        %6124 = vperm.xlu0 %6123, %v5941
        %v6125 = vpop.permute.xlu0 %6124
        %6128 = vset.pattern.permute.xlu0 5
        %6129 = vperm.xlu0 %6128, %v5943
        %v6130 = vpop.permute.xlu0 %6129
        %6133 = vset.pattern.permute.xlu0 5
        %6134 = vperm.xlu0 %6133, %v5945
        %v6135 = vpop.permute.xlu0 %6134
        %6138 = vset.pattern.permute.xlu0 5
        %6139 = vperm.xlu0 %6138, %v5947
        %v6140 = vpop.permute.xlu0 %6139
        %6143 = vset.pattern.permute.xlu0 5
        %6144 = vperm.xlu0 %6143, %v5949
        %v6145 = vpop.permute.xlu0 %6144
        %6148 = vset.pattern.permute.xlu0 5
        %6149 = vperm.xlu0 %6148, %v5951
        %v6150 = vpop.permute.xlu0 %6149
        %6153 = vset.pattern.permute.xlu0 5
        %6154 = vperm.xlu0 %6153, %v5953
        %v6155 = vpop.permute.xlu0 %6154
        %6158 = vset.pattern.permute.xlu0 5
        %6159 = vperm.xlu0 %6158, %v5955
        %v6160 = vpop.permute.xlu0 %6159
        %6163 = vset.pattern.permute.xlu0 5
        %6164 = vperm.xlu0 %6163, %v5957
        %v6165 = vpop.permute.xlu0 %6164
        %v6167 = vmul.f32 %v6090, %v6071
        %v6168 = vmul.f32 %v6095, %v6072
        %v6169 = vmul.f32 %v6100, %v6073
        %v6170 = vmul.f32 %v6105, %v6074
        %v6171 = vmul.f32 %v6110, %v6075
        %v6172 = vmul.f32 %v6115, %v6076
        %v6173 = vmul.f32 %v6120, %v6077
        %v6174 = vmul.f32 %v6125, %v6078
        %v6175 = vmul.f32 %v6130, %v6079
        %v6176 = vmul.f32 %v6135, %v6080
        %v6177 = vmul.f32 %v6140, %v6081
        %v6178 = vmul.f32 %v6145, %v6082
        %v6179 = vmul.f32 %v6150, %v6083
        %v6180 = vmul.f32 %v6155, %v6084
        %v6181 = vmul.f32 %v6160, %v6085
        %v6182 = vmul.f32 %v6165, %v6086
        %v6183 = vpack.c.bf16 %v5895, %v5894
        %v6184 = vpack.c.bf16 %v5897, %v5896
        %v6185 = vpack.c.bf16 %v5899, %v5898
        %v6186 = vpack.c.bf16 %v5901, %v5900
        %v6187 = vpack.c.bf16 %v5903, %v5902
        %v6188 = vpack.c.bf16 %v5905, %v5904
        %v6189 = vpack.c.bf16 %v5907, %v5906
        %v6190 = vpack.c.bf16 %v5909, %v5908
        %6199 = vrot.lane.b32.xlu0 %v892, 96
        %v6200 = vpop.permute.xlu0 %6199
        %6201 = vrot.lane.b32.xlu0 %v894, 96
        %v6202 = vpop.permute.xlu0 %6201
        %6203 = vrot.lane.b32.xlu0 %v896, 96
        %v6204 = vpop.permute.xlu0 %6203
        %6205 = vrot.lane.b32.xlu0 %v898, 96
        %v6206 = vpop.permute.xlu0 %6205
        %6207 = vrot.lane.b32.xlu0 %v900, 96
        %v6208 = vpop.permute.xlu0 %6207
        %6209 = vrot.lane.b32.xlu0 %v902, 96
        %v6210 = vpop.permute.xlu0 %6209
        %6211 = vrot.lane.b32.xlu0 %v904, 96
        %v6212 = vpop.permute.xlu0 %6211
        %6213 = vrot.lane.b32.xlu0 %v906, 96
        %v6214 = vpop.permute.xlu0 %6213
        %6223 = vmatprep.subr.bf16.mxu0 0
        %6224 = vmatpush1.bf16.msra.mxu0 %v6214
        %6225 = vmatprep.subr.bf16.mxu0 0
        %6226 = vmatpush1.bf16.msra.mxu0 %v6212
        %6227 = vmatprep.subr.bf16.mxu0 0
        %6228 = vmatpush1.bf16.msra.mxu0 %v6210
        %6229 = vmatprep.subr.bf16.mxu0 0
        %6230 = vmatpush1.bf16.msra.mxu0 %v6208
        %6231 = vmatprep.subr.bf16.mxu0 0
        %6232 = vmatpush1.bf16.msra.mxu0 %v6206
        %6233 = vmatprep.subr.bf16.mxu0 0
        %6234 = vmatpush1.bf16.msra.mxu0 %v6204
        %6235 = vmatprep.subr.bf16.mxu0 0
        %6236 = vmatpush1.bf16.msra.mxu0 %v6202
        %6237 = vmatprep.subr.bf16.mxu0 0
        %6238 = vmatpush1.bf16.msra.mxu0 %v6200
        %6239 = vmatprep.subr.bf16.mxu0 0
        %6240 = vmatpush2.bf16.msra.mxu0 0
        %6241 = vmatprep.subr.bf16.mxu0 0
        %6242 = vmatpush2.bf16.msra.mxu0 0
        %6243 = vmatprep.subr.bf16.mxu0 0
        %6244 = vmatpush2.bf16.msra.mxu0 0
        %6245 = vmatprep.subr.bf16.mxu0 0
        %6246 = vmatpush2.bf16.msra.mxu0 0
        %6247 = vmatprep.subr.bf16.mxu0 0
        %6248 = vmatpush2.bf16.msra.mxu0 0
        %6249 = vmatprep.subr.bf16.mxu0 0
        %6250 = vmatpush2.bf16.msra.mxu0 0
        %6251 = vmatprep.subr.bf16.mxu0 0
        %6252 = vmatpush2.bf16.msra.mxu0 0
        %6253 = vmatprep.subr.bf16.mxu0 0
        %6254 = vmatpush2.bf16.msra.mxu0 0
        %6255 = vmatprep.mubr.bf16.mxu0 0
        %6256 = vmatmul.mubr.bf16.gmra.mxu0 %v6183
        %v6257 = vpop.f32.mrf.mxu0
        %v6258 = vadd.f32 0.0, %v6257
        %v6259 = vpop.f32.mrf.mxu0
        %v6260 = vpop.f32.mrf.mxu0
        %v6261 = vadd.f32 0.0, %v6260
        %v6262 = vpop.f32.mrf.mxu0
        %6263 = vmatprep.mubr.bf16.mxu0 0
        %6264 = vmatmul.mubr.bf16.gmra.mxu0 %v6184
        %v6265 = vpop.f32.mrf.mxu0
        %v6266 = vadd.f32 0.0, %v6265
        %v6267 = vpop.f32.mrf.mxu0
        %v6268 = vpop.f32.mrf.mxu0
        %v6269 = vadd.f32 0.0, %v6268
        %v6270 = vpop.f32.mrf.mxu0
        %6271 = vmatprep.mubr.bf16.mxu0 0
        %6272 = vmatmul.mubr.bf16.gmra.mxu0 %v6185
        %v6273 = vpop.f32.mrf.mxu0
        %v6274 = vadd.f32 0.0, %v6273
        %v6275 = vpop.f32.mrf.mxu0
        %v6276 = vpop.f32.mrf.mxu0
        %v6277 = vadd.f32 0.0, %v6276
        %v6278 = vpop.f32.mrf.mxu0
        %6279 = vmatprep.mubr.bf16.mxu0 0
        %6280 = vmatmul.mubr.bf16.gmra.mxu0 %v6186
        %v6281 = vpop.f32.mrf.mxu0
        %v6282 = vadd.f32 0.0, %v6281
        %v6283 = vpop.f32.mrf.mxu0
        %v6284 = vpop.f32.mrf.mxu0
        %v6285 = vadd.f32 0.0, %v6284
        %v6286 = vpop.f32.mrf.mxu0
        %6287 = vmatprep.mubr.bf16.mxu0 0
        %6288 = vmatmul.mubr.bf16.gmra.mxu0 %v6187
        %v6289 = vpop.f32.mrf.mxu0
        %v6290 = vadd.f32 0.0, %v6289
        %v6291 = vpop.f32.mrf.mxu0
        %v6292 = vpop.f32.mrf.mxu0
        %v6293 = vadd.f32 0.0, %v6292
        %v6294 = vpop.f32.mrf.mxu0
        %6295 = vmatprep.mubr.bf16.mxu0 0
        %6296 = vmatmul.mubr.bf16.gmra.mxu0 %v6188
        %v6297 = vpop.f32.mrf.mxu0
        %v6298 = vadd.f32 0.0, %v6297
        %v6299 = vpop.f32.mrf.mxu0
        %v6300 = vpop.f32.mrf.mxu0
        %v6301 = vadd.f32 0.0, %v6300
        %v6302 = vpop.f32.mrf.mxu0
        %6303 = vmatprep.mubr.bf16.mxu0 0
        %6304 = vmatmul.mubr.bf16.gmra.mxu0 %v6189
        %v6305 = vpop.f32.mrf.mxu0
        %v6306 = vadd.f32 0.0, %v6305
        %v6307 = vpop.f32.mrf.mxu0
        %v6308 = vpop.f32.mrf.mxu0
        %v6309 = vadd.f32 0.0, %v6308
        %v6310 = vpop.f32.mrf.mxu0
        %6311 = vmatprep.mubr.bf16.mxu0 0
        %6312 = vmatmul.mubr.bf16.gmra.mxu0 %v6190
        %v6313 = vpop.f32.mrf.mxu0
        %v6314 = vadd.f32 0.0, %v6313
        %v6315 = vpop.f32.mrf.mxu0
        %v6316 = vpop.f32.mrf.mxu0
        %v6317 = vadd.f32 0.0, %v6316
        %v6318 = vpop.f32.mrf.mxu0
        %6319 = vdwg.mxu0
        %6336 = vrot.lane.b32.xlu0 %v6258, 32
        %v6337 = vpop.permute.xlu0 %6336
        %6338 = vrot.lane.b32.xlu0 %v6261, 32
        %v6339 = vpop.permute.xlu0 %6338
        %6340 = vrot.lane.b32.xlu0 %v6266, 32
        %v6341 = vpop.permute.xlu0 %6340
        %6342 = vrot.lane.b32.xlu0 %v6269, 32
        %v6343 = vpop.permute.xlu0 %6342
        %6344 = vrot.lane.b32.xlu0 %v6274, 32
        %v6345 = vpop.permute.xlu0 %6344
        %6346 = vrot.lane.b32.xlu0 %v6277, 32
        %v6347 = vpop.permute.xlu0 %6346
        %6348 = vrot.lane.b32.xlu0 %v6282, 32
        %v6349 = vpop.permute.xlu0 %6348
        %6350 = vrot.lane.b32.xlu0 %v6285, 32
        %v6351 = vpop.permute.xlu0 %6350
        %6352 = vrot.lane.b32.xlu0 %v6290, 32
        %v6353 = vpop.permute.xlu0 %6352
        %6354 = vrot.lane.b32.xlu0 %v6293, 32
        %v6355 = vpop.permute.xlu0 %6354
        %6356 = vrot.lane.b32.xlu0 %v6298, 32
        %v6357 = vpop.permute.xlu0 %6356
        %6358 = vrot.lane.b32.xlu0 %v6301, 32
        %v6359 = vpop.permute.xlu0 %6358
        %6360 = vrot.lane.b32.xlu0 %v6306, 32
        %v6361 = vpop.permute.xlu0 %6360
        %6362 = vrot.lane.b32.xlu0 %v6309, 32
        %v6363 = vpop.permute.xlu0 %6362
        %6364 = vrot.lane.b32.xlu0 %v6314, 32
        %v6365 = vpop.permute.xlu0 %6364
        %6366 = vrot.lane.b32.xlu0 %v6317, 32
        %v6367 = vpop.permute.xlu0 %6366
        %v6384 = vadd.f32 %v6167, %v6337
        %v6385 = vadd.f32 %v6168, %v6339
        %v6386 = vadd.f32 %v6169, %v6341
        %v6387 = vadd.f32 %v6170, %v6343
        %v6388 = vadd.f32 %v6171, %v6345
        %v6389 = vadd.f32 %v6172, %v6347
        %v6390 = vadd.f32 %v6173, %v6349
        %v6391 = vadd.f32 %v6174, %v6351
        %v6392 = vadd.f32 %v6175, %v6353
        %v6393 = vadd.f32 %v6176, %v6355
        %v6394 = vadd.f32 %v6177, %v6357
        %v6395 = vadd.f32 %v6178, %v6359
        %v6396 = vadd.f32 %v6179, %v6361
        %v6397 = vadd.f32 %v6180, %v6363
        %v6398 = vadd.f32 %v6181, %v6365
        %v6399 = vadd.f32 %v6182, %v6367
        %6400 = vst.msk [vmem:[#allocation4 + $0x8] sm:$0xff] %vm2869, %v6384
        %6401 = vst.msk [vmem:[#allocation4 + $0x18] sm:$0xff] %vm2869, %v6385
        %6402 = vst.msk [vmem:[#allocation4 + $0x28] sm:$0xff] %vm2869, %v6386
        %6403 = vst.msk [vmem:[#allocation4 + $0x38] sm:$0xff] %vm2869, %v6387
        %6404 = vst.msk [vmem:[#allocation4 + $0x48] sm:$0xff] %vm2869, %v6388
        %6405 = vst.msk [vmem:[#allocation4 + $0x58] sm:$0xff] %vm2869, %v6389
        %6406 = vst.msk [vmem:[#allocation4 + $0x68] sm:$0xff] %vm2869, %v6390
        %6407 = vst.msk [vmem:[#allocation4 + $0x78] sm:$0xff] %vm2869, %v6391
        %6408 = vst.msk [vmem:[#allocation4 + $0x88] sm:$0xff] %vm2869, %v6392
        %6409 = vst.msk [vmem:[#allocation4 + $0x98] sm:$0xff] %vm2869, %v6393
        %6410 = vst.msk [vmem:[#allocation4 + $0xa8] sm:$0xff] %vm2869, %v6394
        %6411 = vst.msk [vmem:[#allocation4 + $0xb8] sm:$0xff] %vm2869, %v6395
        %6412 = vst.msk [vmem:[#allocation4 + $0xc8] sm:$0xff] %vm2869, %v6396
        %6413 = vst.msk [vmem:[#allocation4 + $0xd8] sm:$0xff] %vm2869, %v6397
        %6414 = vst.msk [vmem:[#allocation4 + $0xe8] sm:$0xff] %vm2869, %v6398
        %6415 = vst.msk [vmem:[#allocation4 + $0xf8] sm:$0xff] %vm2869, %v6399
        %6416 = vset.pattern.permute.xlu0 6
        %6417 = vperm.xlu0 %6416, %v1082
        %v6418 = vpop.permute.xlu0 %6417
        %6420 = vset.pattern.permute.xlu0 6
        %6421 = vperm.xlu0 %6420, %v1085
        %v6422 = vpop.permute.xlu0 %6421
        %6424 = vset.pattern.permute.xlu0 6
        %6425 = vperm.xlu0 %6424, %v1090
        %v6426 = vpop.permute.xlu0 %6425
        %6428 = vset.pattern.permute.xlu0 6
        %6429 = vperm.xlu0 %6428, %v1093
        %v6430 = vpop.permute.xlu0 %6429
        %6432 = vset.pattern.permute.xlu0 6
        %6433 = vperm.xlu0 %6432, %v1098
        %v6434 = vpop.permute.xlu0 %6433
        %6436 = vset.pattern.permute.xlu0 6
        %6437 = vperm.xlu0 %6436, %v1101
        %v6438 = vpop.permute.xlu0 %6437
        %6440 = vset.pattern.permute.xlu0 6
        %6441 = vperm.xlu0 %6440, %v1106
        %v6442 = vpop.permute.xlu0 %6441
        %6444 = vset.pattern.permute.xlu0 6
        %6445 = vperm.xlu0 %6444, %v1109
        %v6446 = vpop.permute.xlu0 %6445
        %6448 = vset.pattern.permute.xlu0 6
        %6449 = vperm.xlu0 %6448, %v1114
        %v6450 = vpop.permute.xlu0 %6449
        %6452 = vset.pattern.permute.xlu0 6
        %6453 = vperm.xlu0 %6452, %v1117
        %v6454 = vpop.permute.xlu0 %6453
        %6456 = vset.pattern.permute.xlu0 6
        %6457 = vperm.xlu0 %6456, %v1122
        %v6458 = vpop.permute.xlu0 %6457
        %6460 = vset.pattern.permute.xlu0 6
        %6461 = vperm.xlu0 %6460, %v1125
        %v6462 = vpop.permute.xlu0 %6461
        %6464 = vset.pattern.permute.xlu0 6
        %6465 = vperm.xlu0 %6464, %v1130
        %v6466 = vpop.permute.xlu0 %6465
        %6468 = vset.pattern.permute.xlu0 6
        %6469 = vperm.xlu0 %6468, %v1133
        %v6470 = vpop.permute.xlu0 %6469
        %6472 = vset.pattern.permute.xlu0 6
        %6473 = vperm.xlu0 %6472, %v1138
        %v6474 = vpop.permute.xlu0 %6473
        %6476 = vset.pattern.permute.xlu0 6
        %6477 = vperm.xlu0 %6476, %v1141
        %v6478 = vpop.permute.xlu0 %6477
        %v6480 = vlaneseq
        %v6481 = vshrl.u32 %v6480, 7
        %v6482 = vsub.s32 6, %v6481
        %v6483 = vrot.slane %v954, %v6482
        %v6484 = vadd.f32 %v6418, %v6483
        %v6485 = vadd.f32 %v6422, %v6483
        %v6486 = vadd.f32 %v6426, %v6483
        %v6487 = vadd.f32 %v6430, %v6483
        %v6488 = vadd.f32 %v6434, %v6483
        %v6489 = vadd.f32 %v6438, %v6483
        %v6490 = vadd.f32 %v6442, %v6483
        %v6491 = vadd.f32 %v6446, %v6483
        %v6492 = vadd.f32 %v6450, %v6483
        %v6493 = vadd.f32 %v6454, %v6483
        %v6494 = vadd.f32 %v6458, %v6483
        %v6495 = vadd.f32 %v6462, %v6483
        %v6496 = vadd.f32 %v6466, %v6483
        %v6497 = vadd.f32 %v6470, %v6483
        %v6498 = vadd.f32 %v6474, %v6483
        %v6499 = vadd.f32 %v6478, %v6483
        %vm6500 = vcmp.gt.f32.partialorder %v6484, 0.0
        %vm6501 = vcmp.gt.f32.partialorder %v6485, 0.0
        %vm6502 = vcmp.gt.f32.partialorder %v6486, 0.0
        %vm6503 = vcmp.gt.f32.partialorder %v6487, 0.0
        %vm6504 = vcmp.gt.f32.partialorder %v6488, 0.0
        %vm6505 = vcmp.gt.f32.partialorder %v6489, 0.0
        %vm6506 = vcmp.gt.f32.partialorder %v6490, 0.0
        %vm6507 = vcmp.gt.f32.partialorder %v6491, 0.0
        %vm6508 = vcmp.gt.f32.partialorder %v6492, 0.0
        %vm6509 = vcmp.gt.f32.partialorder %v6493, 0.0
        %vm6510 = vcmp.gt.f32.partialorder %v6494, 0.0
        %vm6511 = vcmp.gt.f32.partialorder %v6495, 0.0
        %vm6512 = vcmp.gt.f32.partialorder %v6496, 0.0
        %vm6513 = vcmp.gt.f32.partialorder %v6497, 0.0
        %vm6514 = vcmp.gt.f32.partialorder %v6498, 0.0
        %vm6515 = vcmp.gt.f32.partialorder %v6499, 0.0
        %v6516 = vmul.f32 %v6484, 0.01
        %v6517 = vmul.f32 %v6485, 0.01
        %v6518 = vmul.f32 %v6486, 0.01
        %v6519 = vmul.f32 %v6487, 0.01
        %v6520 = vmul.f32 %v6488, 0.01
        %v6521 = vmul.f32 %v6489, 0.01
        %v6522 = vmul.f32 %v6490, 0.01
        %v6523 = vmul.f32 %v6491, 0.01
        %v6524 = vmul.f32 %v6492, 0.01
        %v6525 = vmul.f32 %v6493, 0.01
        %v6526 = vmul.f32 %v6494, 0.01
        %v6527 = vmul.f32 %v6495, 0.01
        %v6528 = vmul.f32 %v6496, 0.01
        %v6529 = vmul.f32 %v6497, 0.01
        %v6530 = vmul.f32 %v6498, 0.01
        %v6531 = vmul.f32 %v6499, 0.01
        %v6532 = vsel %vm6500, %v6484, %v6516
        %v6533 = vsel %vm6501, %v6485, %v6517
        %v6534 = vsel %vm6502, %v6486, %v6518
        %v6535 = vsel %vm6503, %v6487, %v6519
        %v6536 = vsel %vm6504, %v6488, %v6520
        %v6537 = vsel %vm6505, %v6489, %v6521
        %v6538 = vsel %vm6506, %v6490, %v6522
        %v6539 = vsel %vm6507, %v6491, %v6523
        %v6540 = vsel %vm6508, %v6492, %v6524
        %v6541 = vsel %vm6509, %v6493, %v6525
        %v6542 = vsel %vm6510, %v6494, %v6526
        %v6543 = vsel %vm6511, %v6495, %v6527
        %v6544 = vsel %vm6512, %v6496, %v6528
        %v6545 = vsel %vm6513, %v6497, %v6529
        %v6546 = vsel %vm6514, %v6498, %v6530
        %v6547 = vsel %vm6515, %v6499, %v6531
        %v6548 = vmul.f32 %v6532, %v669
        %v6549 = vmul.f32 %v6533, %v670
        %v6550 = vmul.f32 %v6534, %v671
        %v6551 = vmul.f32 %v6535, %v672
        %v6552 = vmul.f32 %v6536, %v673
        %v6553 = vmul.f32 %v6537, %v674
        %v6554 = vmul.f32 %v6538, %v675
        %v6555 = vmul.f32 %v6539, %v676
        %v6556 = vmul.f32 %v6540, %v677
        %v6557 = vmul.f32 %v6541, %v678
        %v6558 = vmul.f32 %v6542, %v679
        %v6559 = vmul.f32 %v6543, %v680
        %v6560 = vmul.f32 %v6544, %v681
        %v6561 = vmul.f32 %v6545, %v682
        %v6562 = vmul.f32 %v6546, %v683
        %v6563 = vmul.f32 %v6547, %v684
        %v6564 = vsel %vm653, %v6548, -1e+30
        %v6565 = vsel %vm654, %v6549, -1e+30
        %v6566 = vsel %vm655, %v6550, -1e+30
        %v6567 = vsel %vm656, %v6551, -1e+30
        %v6568 = vsel %vm657, %v6552, -1e+30
        %v6569 = vsel %vm658, %v6553, -1e+30
        %v6570 = vsel %vm659, %v6554, -1e+30
        %v6571 = vsel %vm660, %v6555, -1e+30
        %v6572 = vsel %vm661, %v6556, -1e+30
        %v6573 = vsel %vm662, %v6557, -1e+30
        %v6574 = vsel %vm663, %v6558, -1e+30
        %v6575 = vsel %vm664, %v6559, -1e+30
        %v6576 = vsel %vm665, %v6560, -1e+30
        %v6577 = vsel %vm666, %v6561, -1e+30
        %v6578 = vsel %vm667, %v6562, -1e+30
        %v6579 = vsel %vm668, %v6563, -1e+30
        %v6580 = vld [vmem:[#allocation2] sm:$0xff]
        %v6581 = vld [vmem:[#allocation2 + $0x8] sm:$0xff]
        %v6582 = vld [vmem:[#allocation2 + $0x10] sm:$0xff]
        %v6583 = vld [vmem:[#allocation2 + $0x18] sm:$0xff]
        %v6584 = vld [vmem:[#allocation2 + $0x20] sm:$0xff]
        %v6585 = vld [vmem:[#allocation2 + $0x28] sm:$0xff]
        %v6586 = vld [vmem:[#allocation2 + $0x30] sm:$0xff]
        %v6587 = vld [vmem:[#allocation2 + $0x38] sm:$0xff]
        %v6588 = vld [vmem:[#allocation2 + $0x40] sm:$0xff]
        %v6589 = vld [vmem:[#allocation2 + $0x48] sm:$0xff]
        %v6590 = vld [vmem:[#allocation2 + $0x50] sm:$0xff]
        %v6591 = vld [vmem:[#allocation2 + $0x58] sm:$0xff]
        %v6592 = vld [vmem:[#allocation2 + $0x60] sm:$0xff]
        %v6593 = vld [vmem:[#allocation2 + $0x68] sm:$0xff]
        %v6594 = vld [vmem:[#allocation2 + $0x70] sm:$0xff]
        %v6595 = vld [vmem:[#allocation2 + $0x78] sm:$0xff]
        %6596 = vmax.xlane.f32.xlu0 %v6564
        %v6597 = vpop.xlane.xlu0 %6596
        %6598 = vmax.xlane.f32.xlu0 %v6565
        %v6599 = vpop.xlane.xlu0 %6598
        %6600 = vmax.xlane.f32.xlu0 %v6566
        %v6601 = vpop.xlane.xlu0 %6600
        %6602 = vmax.xlane.f32.xlu0 %v6567
        %v6603 = vpop.xlane.xlu0 %6602
        %6604 = vmax.xlane.f32.xlu0 %v6568
        %v6605 = vpop.xlane.xlu0 %6604
        %6606 = vmax.xlane.f32.xlu0 %v6569
        %v6607 = vpop.xlane.xlu0 %6606
        %6608 = vmax.xlane.f32.xlu0 %v6570
        %v6609 = vpop.xlane.xlu0 %6608
        %6610 = vmax.xlane.f32.xlu0 %v6571
        %v6611 = vpop.xlane.xlu0 %6610
        %6612 = vmax.xlane.f32.xlu0 %v6572
        %v6613 = vpop.xlane.xlu0 %6612
        %6614 = vmax.xlane.f32.xlu0 %v6573
        %v6615 = vpop.xlane.xlu0 %6614
        %6616 = vmax.xlane.f32.xlu0 %v6574
        %v6617 = vpop.xlane.xlu0 %6616
        %6618 = vmax.xlane.f32.xlu0 %v6575
        %v6619 = vpop.xlane.xlu0 %6618
        %6620 = vmax.xlane.f32.xlu0 %v6576
        %v6621 = vpop.xlane.xlu0 %6620
        %6622 = vmax.xlane.f32.xlu0 %v6577
        %v6623 = vpop.xlane.xlu0 %6622
        %6624 = vmax.xlane.f32.xlu0 %v6578
        %v6625 = vpop.xlane.xlu0 %6624
        %6626 = vmax.xlane.f32.xlu0 %v6579
        %v6627 = vpop.xlane.xlu0 %6626
        %v6628 = vmax.f32 %v6580, %v6597
        %v6629 = vmax.f32 %v6581, %v6599
        %v6630 = vmax.f32 %v6582, %v6601
        %v6631 = vmax.f32 %v6583, %v6603
        %v6632 = vmax.f32 %v6584, %v6605
        %v6633 = vmax.f32 %v6585, %v6607
        %v6634 = vmax.f32 %v6586, %v6609
        %v6635 = vmax.f32 %v6587, %v6611
        %v6636 = vmax.f32 %v6588, %v6613
        %v6637 = vmax.f32 %v6589, %v6615
        %v6638 = vmax.f32 %v6590, %v6617
        %v6639 = vmax.f32 %v6591, %v6619
        %v6640 = vmax.f32 %v6592, %v6621
        %v6641 = vmax.f32 %v6593, %v6623
        %v6642 = vmax.f32 %v6594, %v6625
        %v6643 = vmax.f32 %v6595, %v6627
        %vm6644 = vcmp.gt.f32.partialorder %v6628, -5e+29
        %vm6645 = vcmp.gt.f32.partialorder %v6629, -5e+29
        %vm6646 = vcmp.gt.f32.partialorder %v6630, -5e+29
        %vm6647 = vcmp.gt.f32.partialorder %v6631, -5e+29
        %vm6648 = vcmp.gt.f32.partialorder %v6632, -5e+29
        %vm6649 = vcmp.gt.f32.partialorder %v6633, -5e+29
        %vm6650 = vcmp.gt.f32.partialorder %v6634, -5e+29
        %vm6651 = vcmp.gt.f32.partialorder %v6635, -5e+29
        %vm6652 = vcmp.gt.f32.partialorder %v6636, -5e+29
        %vm6653 = vcmp.gt.f32.partialorder %v6637, -5e+29
        %vm6654 = vcmp.gt.f32.partialorder %v6638, -5e+29
        %vm6655 = vcmp.gt.f32.partialorder %v6639, -5e+29
        %vm6656 = vcmp.gt.f32.partialorder %v6640, -5e+29
        %vm6657 = vcmp.gt.f32.partialorder %v6641, -5e+29
        %vm6658 = vcmp.gt.f32.partialorder %v6642, -5e+29
        %vm6659 = vcmp.gt.f32.partialorder %v6643, -5e+29
        %v6660 = vsel %vm6644, %v6628, 0.0
        %v6661 = vsel %vm6645, %v6629, 0.0
        %v6662 = vsel %vm6646, %v6630, 0.0
        %v6663 = vsel %vm6647, %v6631, 0.0
        %v6664 = vsel %vm6648, %v6632, 0.0
        %v6665 = vsel %vm6649, %v6633, 0.0
        %v6666 = vsel %vm6650, %v6634, 0.0
        %v6667 = vsel %vm6651, %v6635, 0.0
        %v6668 = vsel %vm6652, %v6636, 0.0
        %v6669 = vsel %vm6653, %v6637, 0.0
        %v6670 = vsel %vm6654, %v6638, 0.0
        %v6671 = vsel %vm6655, %v6639, 0.0
        %v6672 = vsel %vm6656, %v6640, 0.0
        %v6673 = vsel %vm6657, %v6641, 0.0
        %v6674 = vsel %vm6658, %v6642, 0.0
        %v6675 = vsel %vm6659, %v6643, 0.0
        %6677 = vset.pattern.permute.xlu0 6
        %6678 = vperm.xlu0 %6677, %v6660
        %v6679 = vpop.permute.xlu0 %6678
        %6682 = vset.pattern.permute.xlu0 6
        %6683 = vperm.xlu0 %6682, %v6661
        %v6684 = vpop.permute.xlu0 %6683
        %6687 = vset.pattern.permute.xlu0 6
        %6688 = vperm.xlu0 %6687, %v6662
        %v6689 = vpop.permute.xlu0 %6688
        %6692 = vset.pattern.permute.xlu0 6
        %6693 = vperm.xlu0 %6692, %v6663
        %v6694 = vpop.permute.xlu0 %6693
        %6697 = vset.pattern.permute.xlu0 6
        %6698 = vperm.xlu0 %6697, %v6664
        %v6699 = vpop.permute.xlu0 %6698
        %6702 = vset.pattern.permute.xlu0 6
        %6703 = vperm.xlu0 %6702, %v6665
        %v6704 = vpop.permute.xlu0 %6703
        %6707 = vset.pattern.permute.xlu0 6
        %6708 = vperm.xlu0 %6707, %v6666
        %v6709 = vpop.permute.xlu0 %6708
        %6712 = vset.pattern.permute.xlu0 6
        %6713 = vperm.xlu0 %6712, %v6667
        %v6714 = vpop.permute.xlu0 %6713
        %6717 = vset.pattern.permute.xlu0 6
        %6718 = vperm.xlu0 %6717, %v6668
        %v6719 = vpop.permute.xlu0 %6718
        %6722 = vset.pattern.permute.xlu0 6
        %6723 = vperm.xlu0 %6722, %v6669
        %v6724 = vpop.permute.xlu0 %6723
        %6727 = vset.pattern.permute.xlu0 6
        %6728 = vperm.xlu0 %6727, %v6670
        %v6729 = vpop.permute.xlu0 %6728
        %6732 = vset.pattern.permute.xlu0 6
        %6733 = vperm.xlu0 %6732, %v6671
        %v6734 = vpop.permute.xlu0 %6733
        %6737 = vset.pattern.permute.xlu0 6
        %6738 = vperm.xlu0 %6737, %v6672
        %v6739 = vpop.permute.xlu0 %6738
        %6742 = vset.pattern.permute.xlu0 6
        %6743 = vperm.xlu0 %6742, %v6673
        %v6744 = vpop.permute.xlu0 %6743
        %6747 = vset.pattern.permute.xlu0 6
        %6748 = vperm.xlu0 %6747, %v6674
        %v6749 = vpop.permute.xlu0 %6748
        %6752 = vset.pattern.permute.xlu0 6
        %6753 = vperm.xlu0 %6752, %v6675
        %v6754 = vpop.permute.xlu0 %6753
        %v6756 = vsub.f32 %v6548, %v6679
        %v6757 = vsub.f32 %v6549, %v6684
        %v6758 = vsub.f32 %v6550, %v6689
        %v6759 = vsub.f32 %v6551, %v6694
        %v6760 = vsub.f32 %v6552, %v6699
        %v6761 = vsub.f32 %v6553, %v6704
        %v6762 = vsub.f32 %v6554, %v6709
        %v6763 = vsub.f32 %v6555, %v6714
        %v6764 = vsub.f32 %v6556, %v6719
        %v6765 = vsub.f32 %v6557, %v6724
        %v6766 = vsub.f32 %v6558, %v6729
        %v6767 = vsub.f32 %v6559, %v6734
        %v6768 = vsub.f32 %v6560, %v6739
        %v6769 = vsub.f32 %v6561, %v6744
        %v6770 = vsub.f32 %v6562, %v6749
        %v6771 = vsub.f32 %v6563, %v6754
        %v6772 = vmul.f32 %v6756, 1.442695
        %v6773 = vpow.pop %v6772
        %v6774 = vmul.f32 %v6757, 1.442695
        %v6775 = vpow.pop %v6774
        %v6776 = vmul.f32 %v6758, 1.442695
        %v6777 = vpow.pop %v6776
        %v6778 = vmul.f32 %v6759, 1.442695
        %v6779 = vpow.pop %v6778
        %v6780 = vmul.f32 %v6760, 1.442695
        %v6781 = vpow.pop %v6780
        %v6782 = vmul.f32 %v6761, 1.442695
        %v6783 = vpow.pop %v6782
        %v6784 = vmul.f32 %v6762, 1.442695
        %v6785 = vpow.pop %v6784
        %v6786 = vmul.f32 %v6763, 1.442695
        %v6787 = vpow.pop %v6786
        %v6788 = vmul.f32 %v6764, 1.442695
        %v6789 = vpow.pop %v6788
        %v6790 = vmul.f32 %v6765, 1.442695
        %v6791 = vpow.pop %v6790
        %v6792 = vmul.f32 %v6766, 1.442695
        %v6793 = vpow.pop %v6792
        %v6794 = vmul.f32 %v6767, 1.442695
        %v6795 = vpow.pop %v6794
        %v6796 = vmul.f32 %v6768, 1.442695
        %v6797 = vpow.pop %v6796
        %v6798 = vmul.f32 %v6769, 1.442695
        %v6799 = vpow.pop %v6798
        %v6800 = vmul.f32 %v6770, 1.442695
        %v6801 = vpow.pop %v6800
        %v6802 = vmul.f32 %v6771, 1.442695
        %v6803 = vpow.pop %v6802
        %v6804 = vsel %vm653, %v6773, 0.0
        %v6805 = vsel %vm654, %v6775, 0.0
        %v6806 = vsel %vm655, %v6777, 0.0
        %v6807 = vsel %vm656, %v6779, 0.0
        %v6808 = vsel %vm657, %v6781, 0.0
        %v6809 = vsel %vm658, %v6783, 0.0
        %v6810 = vsel %vm659, %v6785, 0.0
        %v6811 = vsel %vm660, %v6787, 0.0
        %v6812 = vsel %vm661, %v6789, 0.0
        %v6813 = vsel %vm662, %v6791, 0.0
        %v6814 = vsel %vm663, %v6793, 0.0
        %v6815 = vsel %vm664, %v6795, 0.0
        %v6816 = vsel %vm665, %v6797, 0.0
        %v6817 = vsel %vm666, %v6799, 0.0
        %v6818 = vsel %vm667, %v6801, 0.0
        %v6819 = vsel %vm668, %v6803, 0.0
        %v6820 = vsub.f32 %v6580, %v6628
        %v6821 = vsub.f32 %v6581, %v6629
        %v6822 = vsub.f32 %v6582, %v6630
        %v6823 = vsub.f32 %v6583, %v6631
        %v6824 = vsub.f32 %v6584, %v6632
        %v6825 = vsub.f32 %v6585, %v6633
        %v6826 = vsub.f32 %v6586, %v6634
        %v6827 = vsub.f32 %v6587, %v6635
        %v6828 = vsub.f32 %v6588, %v6636
        %v6829 = vsub.f32 %v6589, %v6637
        %v6830 = vsub.f32 %v6590, %v6638
        %v6831 = vsub.f32 %v6591, %v6639
        %v6832 = vsub.f32 %v6592, %v6640
        %v6833 = vsub.f32 %v6593, %v6641
        %v6834 = vsub.f32 %v6594, %v6642
        %v6835 = vsub.f32 %v6595, %v6643
        %v6836 = vmul.f32 %v6820, 1.442695
        %v6837 = vpow.pop %v6836
        %v6838 = vmul.f32 %v6821, 1.442695
        %v6839 = vpow.pop %v6838
        %v6840 = vmul.f32 %v6822, 1.442695
        %v6841 = vpow.pop %v6840
        %v6842 = vmul.f32 %v6823, 1.442695
        %v6843 = vpow.pop %v6842
        %v6844 = vmul.f32 %v6824, 1.442695
        %v6845 = vpow.pop %v6844
        %v6846 = vmul.f32 %v6825, 1.442695
        %v6847 = vpow.pop %v6846
        %v6848 = vmul.f32 %v6826, 1.442695
        %v6849 = vpow.pop %v6848
        %v6850 = vmul.f32 %v6827, 1.442695
        %v6851 = vpow.pop %v6850
        %v6852 = vmul.f32 %v6828, 1.442695
        %v6853 = vpow.pop %v6852
        %v6854 = vmul.f32 %v6829, 1.442695
        %v6855 = vpow.pop %v6854
        %v6856 = vmul.f32 %v6830, 1.442695
        %v6857 = vpow.pop %v6856
        %v6858 = vmul.f32 %v6831, 1.442695
        %v6859 = vpow.pop %v6858
        %v6860 = vmul.f32 %v6832, 1.442695
        %v6861 = vpow.pop %v6860
        %v6862 = vmul.f32 %v6833, 1.442695
        %v6863 = vpow.pop %v6862
        %v6864 = vmul.f32 %v6834, 1.442695
        %v6865 = vpow.pop %v6864
        %v6866 = vmul.f32 %v6835, 1.442695
        %v6867 = vpow.pop %v6866
        %vm6868 = vcmask 56368
        %6869 = vst.msk [vmem:[#allocation2] sm:$0xff] %vm6868, %v6628
        %6870 = vst.msk [vmem:[#allocation2 + $0x8] sm:$0xff] %vm6868, %v6629
        %6871 = vst.msk [vmem:[#allocation2 + $0x10] sm:$0xff] %vm6868, %v6630
        %6872 = vst.msk [vmem:[#allocation2 + $0x18] sm:$0xff] %vm6868, %v6631
        %6873 = vst.msk [vmem:[#allocation2 + $0x20] sm:$0xff] %vm6868, %v6632
        %6874 = vst.msk [vmem:[#allocation2 + $0x28] sm:$0xff] %vm6868, %v6633
        %6875 = vst.msk [vmem:[#allocation2 + $0x30] sm:$0xff] %vm6868, %v6634
        %6876 = vst.msk [vmem:[#allocation2 + $0x38] sm:$0xff] %vm6868, %v6635
        %6877 = vst.msk [vmem:[#allocation2 + $0x40] sm:$0xff] %vm6868, %v6636
        %6878 = vst.msk [vmem:[#allocation2 + $0x48] sm:$0xff] %vm6868, %v6637
        %6879 = vst.msk [vmem:[#allocation2 + $0x50] sm:$0xff] %vm6868, %v6638
        %6880 = vst.msk [vmem:[#allocation2 + $0x58] sm:$0xff] %vm6868, %v6639
        %6881 = vst.msk [vmem:[#allocation2 + $0x60] sm:$0xff] %vm6868, %v6640
        %6882 = vst.msk [vmem:[#allocation2 + $0x68] sm:$0xff] %vm6868, %v6641
        %6883 = vst.msk [vmem:[#allocation2 + $0x70] sm:$0xff] %vm6868, %v6642
        %6884 = vst.msk [vmem:[#allocation2 + $0x78] sm:$0xff] %vm6868, %v6643
        %v6885 = vld [vmem:[#allocation3] sm:$0xff]
        %v6886 = vld [vmem:[#allocation3 + $0x8] sm:$0xff]
        %v6887 = vld [vmem:[#allocation3 + $0x10] sm:$0xff]
        %v6888 = vld [vmem:[#allocation3 + $0x18] sm:$0xff]
        %v6889 = vld [vmem:[#allocation3 + $0x20] sm:$0xff]
        %v6890 = vld [vmem:[#allocation3 + $0x28] sm:$0xff]
        %v6891 = vld [vmem:[#allocation3 + $0x30] sm:$0xff]
        %v6892 = vld [vmem:[#allocation3 + $0x38] sm:$0xff]
        %v6893 = vld [vmem:[#allocation3 + $0x40] sm:$0xff]
        %v6894 = vld [vmem:[#allocation3 + $0x48] sm:$0xff]
        %v6895 = vld [vmem:[#allocation3 + $0x50] sm:$0xff]
        %v6896 = vld [vmem:[#allocation3 + $0x58] sm:$0xff]
        %v6897 = vld [vmem:[#allocation3 + $0x60] sm:$0xff]
        %v6898 = vld [vmem:[#allocation3 + $0x68] sm:$0xff]
        %v6899 = vld [vmem:[#allocation3 + $0x70] sm:$0xff]
        %v6900 = vld [vmem:[#allocation3 + $0x78] sm:$0xff]
        %v6901 = vmul.f32 %v6837, %v6885
        %v6902 = vmul.f32 %v6839, %v6886
        %v6903 = vmul.f32 %v6841, %v6887
        %v6904 = vmul.f32 %v6843, %v6888
        %v6905 = vmul.f32 %v6845, %v6889
        %v6906 = vmul.f32 %v6847, %v6890
        %v6907 = vmul.f32 %v6849, %v6891
        %v6908 = vmul.f32 %v6851, %v6892
        %v6909 = vmul.f32 %v6853, %v6893
        %v6910 = vmul.f32 %v6855, %v6894
        %v6911 = vmul.f32 %v6857, %v6895
        %v6912 = vmul.f32 %v6859, %v6896
        %v6913 = vmul.f32 %v6861, %v6897
        %v6914 = vmul.f32 %v6863, %v6898
        %v6915 = vmul.f32 %v6865, %v6899
        %v6916 = vmul.f32 %v6867, %v6900
        %6917 = vadd.xlane.f32.xlu0 %v6804
        %v6918 = vpop.xlane.xlu0 %6917
        %6919 = vadd.xlane.f32.xlu0 %v6805
        %v6920 = vpop.xlane.xlu0 %6919
        %6921 = vadd.xlane.f32.xlu0 %v6806
        %v6922 = vpop.xlane.xlu0 %6921
        %6923 = vadd.xlane.f32.xlu0 %v6807
        %v6924 = vpop.xlane.xlu0 %6923
        %6925 = vadd.xlane.f32.xlu0 %v6808
        %v6926 = vpop.xlane.xlu0 %6925
        %6927 = vadd.xlane.f32.xlu0 %v6809
        %v6928 = vpop.xlane.xlu0 %6927
        %6929 = vadd.xlane.f32.xlu0 %v6810
        %v6930 = vpop.xlane.xlu0 %6929
        %6931 = vadd.xlane.f32.xlu0 %v6811
        %v6932 = vpop.xlane.xlu0 %6931
        %6933 = vadd.xlane.f32.xlu0 %v6812
        %v6934 = vpop.xlane.xlu0 %6933
        %6935 = vadd.xlane.f32.xlu0 %v6813
        %v6936 = vpop.xlane.xlu0 %6935
        %6937 = vadd.xlane.f32.xlu0 %v6814
        %v6938 = vpop.xlane.xlu0 %6937
        %6939 = vadd.xlane.f32.xlu0 %v6815
        %v6940 = vpop.xlane.xlu0 %6939
        %6941 = vadd.xlane.f32.xlu0 %v6816
        %v6942 = vpop.xlane.xlu0 %6941
        %6943 = vadd.xlane.f32.xlu0 %v6817
        %v6944 = vpop.xlane.xlu0 %6943
        %6945 = vadd.xlane.f32.xlu0 %v6818
        %v6946 = vpop.xlane.xlu0 %6945
        %6947 = vadd.xlane.f32.xlu0 %v6819
        %v6948 = vpop.xlane.xlu0 %6947
        %v6949 = vadd.f32 %v6901, %v6918
        %v6950 = vadd.f32 %v6902, %v6920
        %v6951 = vadd.f32 %v6903, %v6922
        %v6952 = vadd.f32 %v6904, %v6924
        %v6953 = vadd.f32 %v6905, %v6926
        %v6954 = vadd.f32 %v6906, %v6928
        %v6955 = vadd.f32 %v6907, %v6930
        %v6956 = vadd.f32 %v6908, %v6932
        %v6957 = vadd.f32 %v6909, %v6934
        %v6958 = vadd.f32 %v6910, %v6936
        %v6959 = vadd.f32 %v6911, %v6938
        %v6960 = vadd.f32 %v6912, %v6940
        %v6961 = vadd.f32 %v6913, %v6942
        %v6962 = vadd.f32 %v6914, %v6944
        %v6963 = vadd.f32 %v6915, %v6946
        %v6964 = vadd.f32 %v6916, %v6948
        %6965 = vst.msk [vmem:[#allocation3] sm:$0xff] %vm6868, %v6949
        %6966 = vst.msk [vmem:[#allocation3 + $0x8] sm:$0xff] %vm6868, %v6950
        %6967 = vst.msk [vmem:[#allocation3 + $0x10] sm:$0xff] %vm6868, %v6951
        %6968 = vst.msk [vmem:[#allocation3 + $0x18] sm:$0xff] %vm6868, %v6952
        %6969 = vst.msk [vmem:[#allocation3 + $0x20] sm:$0xff] %vm6868, %v6953
        %6970 = vst.msk [vmem:[#allocation3 + $0x28] sm:$0xff] %vm6868, %v6954
        %6971 = vst.msk [vmem:[#allocation3 + $0x30] sm:$0xff] %vm6868, %v6955
        %6972 = vst.msk [vmem:[#allocation3 + $0x38] sm:$0xff] %vm6868, %v6956
        %6973 = vst.msk [vmem:[#allocation3 + $0x40] sm:$0xff] %vm6868, %v6957
        %6974 = vst.msk [vmem:[#allocation3 + $0x48] sm:$0xff] %vm6868, %v6958
        %6975 = vst.msk [vmem:[#allocation3 + $0x50] sm:$0xff] %vm6868, %v6959
        %6976 = vst.msk [vmem:[#allocation3 + $0x58] sm:$0xff] %vm6868, %v6960
        %6977 = vst.msk [vmem:[#allocation3 + $0x60] sm:$0xff] %vm6868, %v6961
        %6978 = vst.msk [vmem:[#allocation3 + $0x68] sm:$0xff] %vm6868, %v6962
        %6979 = vst.msk [vmem:[#allocation3 + $0x70] sm:$0xff] %vm6868, %v6963
        %6980 = vst.msk [vmem:[#allocation3 + $0x78] sm:$0xff] %vm6868, %v6964
        %v6981 = vld [vmem:[#allocation4 + $0x8] sm:$0xff]
        %v6982 = vld [vmem:[#allocation4 + $0x18] sm:$0xff]
        %v6983 = vld [vmem:[#allocation4 + $0x28] sm:$0xff]
        %v6984 = vld [vmem:[#allocation4 + $0x38] sm:$0xff]
        %v6985 = vld [vmem:[#allocation4 + $0x48] sm:$0xff]
        %v6986 = vld [vmem:[#allocation4 + $0x58] sm:$0xff]
        %v6987 = vld [vmem:[#allocation4 + $0x68] sm:$0xff]
        %v6988 = vld [vmem:[#allocation4 + $0x78] sm:$0xff]
        %v6989 = vld [vmem:[#allocation4 + $0x88] sm:$0xff]
        %v6990 = vld [vmem:[#allocation4 + $0x98] sm:$0xff]
        %v6991 = vld [vmem:[#allocation4 + $0xa8] sm:$0xff]
        %v6992 = vld [vmem:[#allocation4 + $0xb8] sm:$0xff]
        %v6993 = vld [vmem:[#allocation4 + $0xc8] sm:$0xff]
        %v6994 = vld [vmem:[#allocation4 + $0xd8] sm:$0xff]
        %v6995 = vld [vmem:[#allocation4 + $0xe8] sm:$0xff]
        %v6996 = vld [vmem:[#allocation4 + $0xf8] sm:$0xff]
        %6998 = vset.pattern.permute.xlu0 6
        %6999 = vperm.xlu0 %6998, %v6837
        %v7000 = vpop.permute.xlu0 %6999
        %7003 = vset.pattern.permute.xlu0 6
        %7004 = vperm.xlu0 %7003, %v6839
        %v7005 = vpop.permute.xlu0 %7004
        %7008 = vset.pattern.permute.xlu0 6
        %7009 = vperm.xlu0 %7008, %v6841
        %v7010 = vpop.permute.xlu0 %7009
        %7013 = vset.pattern.permute.xlu0 6
        %7014 = vperm.xlu0 %7013, %v6843
        %v7015 = vpop.permute.xlu0 %7014
        %7018 = vset.pattern.permute.xlu0 6
        %7019 = vperm.xlu0 %7018, %v6845
        %v7020 = vpop.permute.xlu0 %7019
        %7023 = vset.pattern.permute.xlu0 6
        %7024 = vperm.xlu0 %7023, %v6847
        %v7025 = vpop.permute.xlu0 %7024
        %7028 = vset.pattern.permute.xlu0 6
        %7029 = vperm.xlu0 %7028, %v6849
        %v7030 = vpop.permute.xlu0 %7029
        %7033 = vset.pattern.permute.xlu0 6
        %7034 = vperm.xlu0 %7033, %v6851
        %v7035 = vpop.permute.xlu0 %7034
        %7038 = vset.pattern.permute.xlu0 6
        %7039 = vperm.xlu0 %7038, %v6853
        %v7040 = vpop.permute.xlu0 %7039
        %7043 = vset.pattern.permute.xlu0 6
        %7044 = vperm.xlu0 %7043, %v6855
        %v7045 = vpop.permute.xlu0 %7044
        %7048 = vset.pattern.permute.xlu0 6
        %7049 = vperm.xlu0 %7048, %v6857
        %v7050 = vpop.permute.xlu0 %7049
        %7053 = vset.pattern.permute.xlu0 6
        %7054 = vperm.xlu0 %7053, %v6859
        %v7055 = vpop.permute.xlu0 %7054
        %7058 = vset.pattern.permute.xlu0 6
        %7059 = vperm.xlu0 %7058, %v6861
        %v7060 = vpop.permute.xlu0 %7059
        %7063 = vset.pattern.permute.xlu0 6
        %7064 = vperm.xlu0 %7063, %v6863
        %v7065 = vpop.permute.xlu0 %7064
        %7068 = vset.pattern.permute.xlu0 6
        %7069 = vperm.xlu0 %7068, %v6865
        %v7070 = vpop.permute.xlu0 %7069
        %7073 = vset.pattern.permute.xlu0 6
        %7074 = vperm.xlu0 %7073, %v6867
        %v7075 = vpop.permute.xlu0 %7074
        %v7077 = vmul.f32 %v7000, %v6981
        %v7078 = vmul.f32 %v7005, %v6982
        %v7079 = vmul.f32 %v7010, %v6983
        %v7080 = vmul.f32 %v7015, %v6984
        %v7081 = vmul.f32 %v7020, %v6985
        %v7082 = vmul.f32 %v7025, %v6986
        %v7083 = vmul.f32 %v7030, %v6987
        %v7084 = vmul.f32 %v7035, %v6988
        %v7085 = vmul.f32 %v7040, %v6989
        %v7086 = vmul.f32 %v7045, %v6990
        %v7087 = vmul.f32 %v7050, %v6991
        %v7088 = vmul.f32 %v7055, %v6992
        %v7089 = vmul.f32 %v7060, %v6993
        %v7090 = vmul.f32 %v7065, %v6994
        %v7091 = vmul.f32 %v7070, %v6995
        %v7092 = vmul.f32 %v7075, %v6996
        %v7093 = vpack.c.bf16 %v6805, %v6804
        %v7094 = vpack.c.bf16 %v6807, %v6806
        %v7095 = vpack.c.bf16 %v6809, %v6808
        %v7096 = vpack.c.bf16 %v6811, %v6810
        %v7097 = vpack.c.bf16 %v6813, %v6812
        %v7098 = vpack.c.bf16 %v6815, %v6814
        %v7099 = vpack.c.bf16 %v6817, %v6816
        %v7100 = vpack.c.bf16 %v6819, %v6818
        %7101 = vrot.lane.b32.xlu0 %v892, 64
        %v7102 = vpop.permute.xlu0 %7101
        %7103 = vrot.lane.b32.xlu0 %v894, 64
        %v7104 = vpop.permute.xlu0 %7103
        %7105 = vrot.lane.b32.xlu0 %v896, 64
        %v7106 = vpop.permute.xlu0 %7105
        %7107 = vrot.lane.b32.xlu0 %v898, 64
        %v7108 = vpop.permute.xlu0 %7107
        %7109 = vrot.lane.b32.xlu0 %v900, 64
        %v7110 = vpop.permute.xlu0 %7109
        %7111 = vrot.lane.b32.xlu0 %v902, 64
        %v7112 = vpop.permute.xlu0 %7111
        %7113 = vrot.lane.b32.xlu0 %v904, 64
        %v7114 = vpop.permute.xlu0 %7113
        %7115 = vrot.lane.b32.xlu0 %v906, 64
        %v7116 = vpop.permute.xlu0 %7115
        %7125 = vmatprep.subr.bf16.mxu0 0
        %7126 = vmatpush1.bf16.msra.mxu0 %v7116
        %7127 = vmatprep.subr.bf16.mxu0 0
        %7128 = vmatpush1.bf16.msra.mxu0 %v7114
        %7129 = vmatprep.subr.bf16.mxu0 0
        %7130 = vmatpush1.bf16.msra.mxu0 %v7112
        %7131 = vmatprep.subr.bf16.mxu0 0
        %7132 = vmatpush1.bf16.msra.mxu0 %v7110
        %7133 = vmatprep.subr.bf16.mxu0 0
        %7134 = vmatpush1.bf16.msra.mxu0 %v7108
        %7135 = vmatprep.subr.bf16.mxu0 0
        %7136 = vmatpush1.bf16.msra.mxu0 %v7106
        %7137 = vmatprep.subr.bf16.mxu0 0
        %7138 = vmatpush1.bf16.msra.mxu0 %v7104
        %7139 = vmatprep.subr.bf16.mxu0 0
        %7140 = vmatpush1.bf16.msra.mxu0 %v7102
        %7141 = vmatprep.subr.bf16.mxu0 0
        %7142 = vmatpush2.bf16.msra.mxu0 0
        %7143 = vmatprep.subr.bf16.mxu0 0
        %7144 = vmatpush2.bf16.msra.mxu0 0
        %7145 = vmatprep.subr.bf16.mxu0 0
        %7146 = vmatpush2.bf16.msra.mxu0 0
        %7147 = vmatprep.subr.bf16.mxu0 0
        %7148 = vmatpush2.bf16.msra.mxu0 0
        %7149 = vmatprep.subr.bf16.mxu0 0
        %7150 = vmatpush2.bf16.msra.mxu0 0
        %7151 = vmatprep.subr.bf16.mxu0 0
        %7152 = vmatpush2.bf16.msra.mxu0 0
        %7153 = vmatprep.subr.bf16.mxu0 0
        %7154 = vmatpush2.bf16.msra.mxu0 0
        %7155 = vmatprep.subr.bf16.mxu0 0
        %7156 = vmatpush2.bf16.msra.mxu0 0
        %7157 = vmatprep.mubr.bf16.mxu0 0
        %7158 = vmatmul.mubr.bf16.gmra.mxu0 %v7093
        %v7159 = vpop.f32.mrf.mxu0
        %v7160 = vadd.f32 0.0, %v7159
        %v7161 = vpop.f32.mrf.mxu0
        %v7162 = vpop.f32.mrf.mxu0
        %v7163 = vadd.f32 0.0, %v7162
        %v7164 = vpop.f32.mrf.mxu0
        %7165 = vmatprep.mubr.bf16.mxu0 0
        %7166 = vmatmul.mubr.bf16.gmra.mxu0 %v7094
        %v7167 = vpop.f32.mrf.mxu0
        %v7168 = vadd.f32 0.0, %v7167
        %v7169 = vpop.f32.mrf.mxu0
        %v7170 = vpop.f32.mrf.mxu0
        %v7171 = vadd.f32 0.0, %v7170
        %v7172 = vpop.f32.mrf.mxu0
        %7173 = vmatprep.mubr.bf16.mxu0 0
        %7174 = vmatmul.mubr.bf16.gmra.mxu0 %v7095
        %v7175 = vpop.f32.mrf.mxu0
        %v7176 = vadd.f32 0.0, %v7175
        %v7177 = vpop.f32.mrf.mxu0
        %v7178 = vpop.f32.mrf.mxu0
        %v7179 = vadd.f32 0.0, %v7178
        %v7180 = vpop.f32.mrf.mxu0
        %7181 = vmatprep.mubr.bf16.mxu0 0
        %7182 = vmatmul.mubr.bf16.gmra.mxu0 %v7096
        %v7183 = vpop.f32.mrf.mxu0
        %v7184 = vadd.f32 0.0, %v7183
        %v7185 = vpop.f32.mrf.mxu0
        %v7186 = vpop.f32.mrf.mxu0
        %v7187 = vadd.f32 0.0, %v7186
        %v7188 = vpop.f32.mrf.mxu0
        %7189 = vmatprep.mubr.bf16.mxu0 0
        %7190 = vmatmul.mubr.bf16.gmra.mxu0 %v7097
        %v7191 = vpop.f32.mrf.mxu0
        %v7192 = vadd.f32 0.0, %v7191
        %v7193 = vpop.f32.mrf.mxu0
        %v7194 = vpop.f32.mrf.mxu0
        %v7195 = vadd.f32 0.0, %v7194
        %v7196 = vpop.f32.mrf.mxu0
        %7197 = vmatprep.mubr.bf16.mxu0 0
        %7198 = vmatmul.mubr.bf16.gmra.mxu0 %v7098
        %v7199 = vpop.f32.mrf.mxu0
        %v7200 = vadd.f32 0.0, %v7199
        %v7201 = vpop.f32.mrf.mxu0
        %v7202 = vpop.f32.mrf.mxu0
        %v7203 = vadd.f32 0.0, %v7202
        %v7204 = vpop.f32.mrf.mxu0
        %7205 = vmatprep.mubr.bf16.mxu0 0
        %7206 = vmatmul.mubr.bf16.gmra.mxu0 %v7099
        %v7207 = vpop.f32.mrf.mxu0
        %v7208 = vadd.f32 0.0, %v7207
        %v7209 = vpop.f32.mrf.mxu0
        %v7210 = vpop.f32.mrf.mxu0
        %v7211 = vadd.f32 0.0, %v7210
        %v7212 = vpop.f32.mrf.mxu0
        %7213 = vmatprep.mubr.bf16.mxu0 0
        %7214 = vmatmul.mubr.bf16.gmra.mxu0 %v7100
        %v7215 = vpop.f32.mrf.mxu0
        %v7216 = vadd.f32 0.0, %v7215
        %v7217 = vpop.f32.mrf.mxu0
        %v7218 = vpop.f32.mrf.mxu0
        %v7219 = vadd.f32 0.0, %v7218
        %v7220 = vpop.f32.mrf.mxu0
        %7221 = vdwg.mxu0
        %7238 = vrot.lane.b32.xlu0 %v7160, 64
        %v7239 = vpop.permute.xlu0 %7238
        %7240 = vrot.lane.b32.xlu0 %v7163, 64
        %v7241 = vpop.permute.xlu0 %7240
        %7242 = vrot.lane.b32.xlu0 %v7168, 64
        %v7243 = vpop.permute.xlu0 %7242
        %7244 = vrot.lane.b32.xlu0 %v7171, 64
        %v7245 = vpop.permute.xlu0 %7244
        %7246 = vrot.lane.b32.xlu0 %v7176, 64
        %v7247 = vpop.permute.xlu0 %7246
        %7248 = vrot.lane.b32.xlu0 %v7179, 64
        %v7249 = vpop.permute.xlu0 %7248
        %7250 = vrot.lane.b32.xlu0 %v7184, 64
        %v7251 = vpop.permute.xlu0 %7250
        %7252 = vrot.lane.b32.xlu0 %v7187, 64
        %v7253 = vpop.permute.xlu0 %7252
        %7254 = vrot.lane.b32.xlu0 %v7192, 64
        %v7255 = vpop.permute.xlu0 %7254
        %7256 = vrot.lane.b32.xlu0 %v7195, 64
        %v7257 = vpop.permute.xlu0 %7256
        %7258 = vrot.lane.b32.xlu0 %v7200, 64
        %v7259 = vpop.permute.xlu0 %7258
        %7260 = vrot.lane.b32.xlu0 %v7203, 64
        %v7261 = vpop.permute.xlu0 %7260
        %7262 = vrot.lane.b32.xlu0 %v7208, 64
        %v7263 = vpop.permute.xlu0 %7262
        %7264 = vrot.lane.b32.xlu0 %v7211, 64
        %v7265 = vpop.permute.xlu0 %7264
        %7266 = vrot.lane.b32.xlu0 %v7216, 64
        %v7267 = vpop.permute.xlu0 %7266
        %7268 = vrot.lane.b32.xlu0 %v7219, 64
        %v7269 = vpop.permute.xlu0 %7268
        %v7286 = vadd.f32 %v7077, %v7239
        %v7287 = vadd.f32 %v7078, %v7241
        %v7288 = vadd.f32 %v7079, %v7243
        %v7289 = vadd.f32 %v7080, %v7245
        %v7290 = vadd.f32 %v7081, %v7247
        %v7291 = vadd.f32 %v7082, %v7249
        %v7292 = vadd.f32 %v7083, %v7251
        %v7293 = vadd.f32 %v7084, %v7253
        %v7294 = vadd.f32 %v7085, %v7255
        %v7295 = vadd.f32 %v7086, %v7257
        %v7296 = vadd.f32 %v7087, %v7259
        %v7297 = vadd.f32 %v7088, %v7261
        %v7298 = vadd.f32 %v7089, %v7263
        %v7299 = vadd.f32 %v7090, %v7265
        %v7300 = vadd.f32 %v7091, %v7267
        %v7301 = vadd.f32 %v7092, %v7269
        %7302 = vst.msk [vmem:[#allocation4 + $0x8] sm:$0xff] %vm3772, %v7286
        %7303 = vst.msk [vmem:[#allocation4 + $0x18] sm:$0xff] %vm3772, %v7287
        %7304 = vst.msk [vmem:[#allocation4 + $0x28] sm:$0xff] %vm3772, %v7288
        %7305 = vst.msk [vmem:[#allocation4 + $0x38] sm:$0xff] %vm3772, %v7289
        %7306 = vst.msk [vmem:[#allocation4 + $0x48] sm:$0xff] %vm3772, %v7290
        %7307 = vst.msk [vmem:[#allocation4 + $0x58] sm:$0xff] %vm3772, %v7291
        %7308 = vst.msk [vmem:[#allocation4 + $0x68] sm:$0xff] %vm3772, %v7292
        %7309 = vst.msk [vmem:[#allocation4 + $0x78] sm:$0xff] %vm3772, %v7293
        %7310 = vst.msk [vmem:[#allocation4 + $0x88] sm:$0xff] %vm3772, %v7294
        %7311 = vst.msk [vmem:[#allocation4 + $0x98] sm:$0xff] %vm3772, %v7295
        %7312 = vst.msk [vmem:[#allocation4 + $0xa8] sm:$0xff] %vm3772, %v7296
        %7313 = vst.msk [vmem:[#allocation4 + $0xb8] sm:$0xff] %vm3772, %v7297
        %7314 = vst.msk [vmem:[#allocation4 + $0xc8] sm:$0xff] %vm3772, %v7298
        %7315 = vst.msk [vmem:[#allocation4 + $0xd8] sm:$0xff] %vm3772, %v7299
        %7316 = vst.msk [vmem:[#allocation4 + $0xe8] sm:$0xff] %vm3772, %v7300
        %7317 = vst.msk [vmem:[#allocation4 + $0xf8] sm:$0xff] %vm3772, %v7301
        %7318 = vset.pattern.permute.xlu0 7
        %7319 = vperm.xlu0 %7318, %v1082
        %v7320 = vpop.permute.xlu0 %7319
        %7322 = vset.pattern.permute.xlu0 7
        %7323 = vperm.xlu0 %7322, %v1085
        %v7324 = vpop.permute.xlu0 %7323
        %7326 = vset.pattern.permute.xlu0 7
        %7327 = vperm.xlu0 %7326, %v1090
        %v7328 = vpop.permute.xlu0 %7327
        %7330 = vset.pattern.permute.xlu0 7
        %7331 = vperm.xlu0 %7330, %v1093
        %v7332 = vpop.permute.xlu0 %7331
        %7334 = vset.pattern.permute.xlu0 7
        %7335 = vperm.xlu0 %7334, %v1098
        %v7336 = vpop.permute.xlu0 %7335
        %7338 = vset.pattern.permute.xlu0 7
        %7339 = vperm.xlu0 %7338, %v1101
        %v7340 = vpop.permute.xlu0 %7339
        %7342 = vset.pattern.permute.xlu0 7
        %7343 = vperm.xlu0 %7342, %v1106
        %v7344 = vpop.permute.xlu0 %7343
        %7346 = vset.pattern.permute.xlu0 7
        %7347 = vperm.xlu0 %7346, %v1109
        %v7348 = vpop.permute.xlu0 %7347
        %7350 = vset.pattern.permute.xlu0 7
        %7351 = vperm.xlu0 %7350, %v1114
        %v7352 = vpop.permute.xlu0 %7351
        %7354 = vset.pattern.permute.xlu0 7
        %7355 = vperm.xlu0 %7354, %v1117
        %v7356 = vpop.permute.xlu0 %7355
        %7358 = vset.pattern.permute.xlu0 7
        %7359 = vperm.xlu0 %7358, %v1122
        %v7360 = vpop.permute.xlu0 %7359
        %7362 = vset.pattern.permute.xlu0 7
        %7363 = vperm.xlu0 %7362, %v1125
        %v7364 = vpop.permute.xlu0 %7363
        %7366 = vset.pattern.permute.xlu0 7
        %7367 = vperm.xlu0 %7366, %v1130
        %v7368 = vpop.permute.xlu0 %7367
        %7370 = vset.pattern.permute.xlu0 7
        %7371 = vperm.xlu0 %7370, %v1133
        %v7372 = vpop.permute.xlu0 %7371
        %7374 = vset.pattern.permute.xlu0 7
        %7375 = vperm.xlu0 %7374, %v1138
        %v7376 = vpop.permute.xlu0 %7375
        %7378 = vset.pattern.permute.xlu0 7
        %7379 = vperm.xlu0 %7378, %v1141
        %v7380 = vpop.permute.xlu0 %7379
        %v7382 = vlaneseq
        %v7383 = vshrl.u32 %v7382, 7
        %v7384 = vsub.s32 7, %v7383
        %v7385 = vrot.slane %v954, %v7384
        %v7386 = vadd.f32 %v7320, %v7385
        %v7387 = vadd.f32 %v7324, %v7385
        %v7388 = vadd.f32 %v7328, %v7385
        %v7389 = vadd.f32 %v7332, %v7385
        %v7390 = vadd.f32 %v7336, %v7385
        %v7391 = vadd.f32 %v7340, %v7385
        %v7392 = vadd.f32 %v7344, %v7385
        %v7393 = vadd.f32 %v7348, %v7385
        %v7394 = vadd.f32 %v7352, %v7385
        %v7395 = vadd.f32 %v7356, %v7385
        %v7396 = vadd.f32 %v7360, %v7385
        %v7397 = vadd.f32 %v7364, %v7385
        %v7398 = vadd.f32 %v7368, %v7385
        %v7399 = vadd.f32 %v7372, %v7385
        %v7400 = vadd.f32 %v7376, %v7385
        %v7401 = vadd.f32 %v7380, %v7385
        %vm7402 = vcmp.gt.f32.partialorder %v7386, 0.0
        %vm7403 = vcmp.gt.f32.partialorder %v7387, 0.0
        %vm7404 = vcmp.gt.f32.partialorder %v7388, 0.0
        %vm7405 = vcmp.gt.f32.partialorder %v7389, 0.0
        %vm7406 = vcmp.gt.f32.partialorder %v7390, 0.0
        %vm7407 = vcmp.gt.f32.partialorder %v7391, 0.0
        %vm7408 = vcmp.gt.f32.partialorder %v7392, 0.0
        %vm7409 = vcmp.gt.f32.partialorder %v7393, 0.0
        %vm7410 = vcmp.gt.f32.partialorder %v7394, 0.0
        %vm7411 = vcmp.gt.f32.partialorder %v7395, 0.0
        %vm7412 = vcmp.gt.f32.partialorder %v7396, 0.0
        %vm7413 = vcmp.gt.f32.partialorder %v7397, 0.0
        %vm7414 = vcmp.gt.f32.partialorder %v7398, 0.0
        %vm7415 = vcmp.gt.f32.partialorder %v7399, 0.0
        %vm7416 = vcmp.gt.f32.partialorder %v7400, 0.0
        %vm7417 = vcmp.gt.f32.partialorder %v7401, 0.0
        %v7418 = vmul.f32 %v7386, 0.01
        %v7419 = vmul.f32 %v7387, 0.01
        %v7420 = vmul.f32 %v7388, 0.01
        %v7421 = vmul.f32 %v7389, 0.01
        %v7422 = vmul.f32 %v7390, 0.01
        %v7423 = vmul.f32 %v7391, 0.01
        %v7424 = vmul.f32 %v7392, 0.01
        %v7425 = vmul.f32 %v7393, 0.01
        %v7426 = vmul.f32 %v7394, 0.01
        %v7427 = vmul.f32 %v7395, 0.01
        %v7428 = vmul.f32 %v7396, 0.01
        %v7429 = vmul.f32 %v7397, 0.01
        %v7430 = vmul.f32 %v7398, 0.01
        %v7431 = vmul.f32 %v7399, 0.01
        %v7432 = vmul.f32 %v7400, 0.01
        %v7433 = vmul.f32 %v7401, 0.01
        %v7434 = vsel %vm7402, %v7386, %v7418
        %v7435 = vsel %vm7403, %v7387, %v7419
        %v7436 = vsel %vm7404, %v7388, %v7420
        %v7437 = vsel %vm7405, %v7389, %v7421
        %v7438 = vsel %vm7406, %v7390, %v7422
        %v7439 = vsel %vm7407, %v7391, %v7423
        %v7440 = vsel %vm7408, %v7392, %v7424
        %v7441 = vsel %vm7409, %v7393, %v7425
        %v7442 = vsel %vm7410, %v7394, %v7426
        %v7443 = vsel %vm7411, %v7395, %v7427
        %v7444 = vsel %vm7412, %v7396, %v7428
        %v7445 = vsel %vm7413, %v7397, %v7429
        %v7446 = vsel %vm7414, %v7398, %v7430
        %v7447 = vsel %vm7415, %v7399, %v7431
        %v7448 = vsel %vm7416, %v7400, %v7432
        %v7449 = vsel %vm7417, %v7401, %v7433
        %v7450 = vmul.f32 %v7434, %v669
        %v7451 = vmul.f32 %v7435, %v670
        %v7452 = vmul.f32 %v7436, %v671
        %v7453 = vmul.f32 %v7437, %v672
        %v7454 = vmul.f32 %v7438, %v673
        %v7455 = vmul.f32 %v7439, %v674
        %v7456 = vmul.f32 %v7440, %v675
        %v7457 = vmul.f32 %v7441, %v676
        %v7458 = vmul.f32 %v7442, %v677
        %v7459 = vmul.f32 %v7443, %v678
        %v7460 = vmul.f32 %v7444, %v679
        %v7461 = vmul.f32 %v7445, %v680
        %v7462 = vmul.f32 %v7446, %v681
        %v7463 = vmul.f32 %v7447, %v682
        %v7464 = vmul.f32 %v7448, %v683
        %v7465 = vmul.f32 %v7449, %v684
        %v7466 = vsel %vm653, %v7450, -1e+30
        %v7467 = vsel %vm654, %v7451, -1e+30
        %v7468 = vsel %vm655, %v7452, -1e+30
        %v7469 = vsel %vm656, %v7453, -1e+30
        %v7470 = vsel %vm657, %v7454, -1e+30
        %v7471 = vsel %vm658, %v7455, -1e+30
        %v7472 = vsel %vm659, %v7456, -1e+30
        %v7473 = vsel %vm660, %v7457, -1e+30
        %v7474 = vsel %vm661, %v7458, -1e+30
        %v7475 = vsel %vm662, %v7459, -1e+30
        %v7476 = vsel %vm663, %v7460, -1e+30
        %v7477 = vsel %vm664, %v7461, -1e+30
        %v7478 = vsel %vm665, %v7462, -1e+30
        %v7479 = vsel %vm666, %v7463, -1e+30
        %v7480 = vsel %vm667, %v7464, -1e+30
        %v7481 = vsel %vm668, %v7465, -1e+30
        %v7482 = vld [vmem:[#allocation2] sm:$0xff]
        %v7483 = vld [vmem:[#allocation2 + $0x8] sm:$0xff]
        %v7484 = vld [vmem:[#allocation2 + $0x10] sm:$0xff]
        %v7485 = vld [vmem:[#allocation2 + $0x18] sm:$0xff]
        %v7486 = vld [vmem:[#allocation2 + $0x20] sm:$0xff]
        %v7487 = vld [vmem:[#allocation2 + $0x28] sm:$0xff]
        %v7488 = vld [vmem:[#allocation2 + $0x30] sm:$0xff]
        %v7489 = vld [vmem:[#allocation2 + $0x38] sm:$0xff]
        %v7490 = vld [vmem:[#allocation2 + $0x40] sm:$0xff]
        %v7491 = vld [vmem:[#allocation2 + $0x48] sm:$0xff]
        %v7492 = vld [vmem:[#allocation2 + $0x50] sm:$0xff]
        %v7493 = vld [vmem:[#allocation2 + $0x58] sm:$0xff]
        %v7494 = vld [vmem:[#allocation2 + $0x60] sm:$0xff]
        %v7495 = vld [vmem:[#allocation2 + $0x68] sm:$0xff]
        %v7496 = vld [vmem:[#allocation2 + $0x70] sm:$0xff]
        %v7497 = vld [vmem:[#allocation2 + $0x78] sm:$0xff]
        %7498 = vmax.xlane.f32.xlu0 %v7466
        %v7499 = vpop.xlane.xlu0 %7498
        %7500 = vmax.xlane.f32.xlu0 %v7467
        %v7501 = vpop.xlane.xlu0 %7500
        %7502 = vmax.xlane.f32.xlu0 %v7468
        %v7503 = vpop.xlane.xlu0 %7502
        %7504 = vmax.xlane.f32.xlu0 %v7469
        %v7505 = vpop.xlane.xlu0 %7504
        %7506 = vmax.xlane.f32.xlu0 %v7470
        %v7507 = vpop.xlane.xlu0 %7506
        %7508 = vmax.xlane.f32.xlu0 %v7471
        %v7509 = vpop.xlane.xlu0 %7508
        %7510 = vmax.xlane.f32.xlu0 %v7472
        %v7511 = vpop.xlane.xlu0 %7510
        %7512 = vmax.xlane.f32.xlu0 %v7473
        %v7513 = vpop.xlane.xlu0 %7512
        %7514 = vmax.xlane.f32.xlu0 %v7474
        %v7515 = vpop.xlane.xlu0 %7514
        %7516 = vmax.xlane.f32.xlu0 %v7475
        %v7517 = vpop.xlane.xlu0 %7516
        %7518 = vmax.xlane.f32.xlu0 %v7476
        %v7519 = vpop.xlane.xlu0 %7518
        %7520 = vmax.xlane.f32.xlu0 %v7477
        %v7521 = vpop.xlane.xlu0 %7520
        %7522 = vmax.xlane.f32.xlu0 %v7478
        %v7523 = vpop.xlane.xlu0 %7522
        %7524 = vmax.xlane.f32.xlu0 %v7479
        %v7525 = vpop.xlane.xlu0 %7524
        %7526 = vmax.xlane.f32.xlu0 %v7480
        %v7527 = vpop.xlane.xlu0 %7526
        %7528 = vmax.xlane.f32.xlu0 %v7481
        %v7529 = vpop.xlane.xlu0 %7528
        %v7530 = vmax.f32 %v7482, %v7499
        %v7531 = vmax.f32 %v7483, %v7501
        %v7532 = vmax.f32 %v7484, %v7503
        %v7533 = vmax.f32 %v7485, %v7505
        %v7534 = vmax.f32 %v7486, %v7507
        %v7535 = vmax.f32 %v7487, %v7509
        %v7536 = vmax.f32 %v7488, %v7511
        %v7537 = vmax.f32 %v7489, %v7513
        %v7538 = vmax.f32 %v7490, %v7515
        %v7539 = vmax.f32 %v7491, %v7517
        %v7540 = vmax.f32 %v7492, %v7519
        %v7541 = vmax.f32 %v7493, %v7521
        %v7542 = vmax.f32 %v7494, %v7523
        %v7543 = vmax.f32 %v7495, %v7525
        %v7544 = vmax.f32 %v7496, %v7527
        %v7545 = vmax.f32 %v7497, %v7529
        %vm7546 = vcmp.gt.f32.partialorder %v7530, -5e+29
        %vm7547 = vcmp.gt.f32.partialorder %v7531, -5e+29
        %vm7548 = vcmp.gt.f32.partialorder %v7532, -5e+29
        %vm7549 = vcmp.gt.f32.partialorder %v7533, -5e+29
        %vm7550 = vcmp.gt.f32.partialorder %v7534, -5e+29
        %vm7551 = vcmp.gt.f32.partialorder %v7535, -5e+29
        %vm7552 = vcmp.gt.f32.partialorder %v7536, -5e+29
        %vm7553 = vcmp.gt.f32.partialorder %v7537, -5e+29
        %vm7554 = vcmp.gt.f32.partialorder %v7538, -5e+29
        %vm7555 = vcmp.gt.f32.partialorder %v7539, -5e+29
        %vm7556 = vcmp.gt.f32.partialorder %v7540, -5e+29
        %vm7557 = vcmp.gt.f32.partialorder %v7541, -5e+29
        %vm7558 = vcmp.gt.f32.partialorder %v7542, -5e+29
        %vm7559 = vcmp.gt.f32.partialorder %v7543, -5e+29
        %vm7560 = vcmp.gt.f32.partialorder %v7544, -5e+29
        %vm7561 = vcmp.gt.f32.partialorder %v7545, -5e+29
        %v7562 = vsel %vm7546, %v7530, 0.0
        %v7563 = vsel %vm7547, %v7531, 0.0
        %v7564 = vsel %vm7548, %v7532, 0.0
        %v7565 = vsel %vm7549, %v7533, 0.0
        %v7566 = vsel %vm7550, %v7534, 0.0
        %v7567 = vsel %vm7551, %v7535, 0.0
        %v7568 = vsel %vm7552, %v7536, 0.0
        %v7569 = vsel %vm7553, %v7537, 0.0
        %v7570 = vsel %vm7554, %v7538, 0.0
        %v7571 = vsel %vm7555, %v7539, 0.0
        %v7572 = vsel %vm7556, %v7540, 0.0
        %v7573 = vsel %vm7557, %v7541, 0.0
        %v7574 = vsel %vm7558, %v7542, 0.0
        %v7575 = vsel %vm7559, %v7543, 0.0
        %v7576 = vsel %vm7560, %v7544, 0.0
        %v7577 = vsel %vm7561, %v7545, 0.0
        %7579 = vset.pattern.permute.xlu0 7
        %7580 = vperm.xlu0 %7579, %v7562
        %v7581 = vpop.permute.xlu0 %7580
        %7584 = vset.pattern.permute.xlu0 7
        %7585 = vperm.xlu0 %7584, %v7563
        %v7586 = vpop.permute.xlu0 %7585
        %7589 = vset.pattern.permute.xlu0 7
        %7590 = vperm.xlu0 %7589, %v7564
        %v7591 = vpop.permute.xlu0 %7590
        %7594 = vset.pattern.permute.xlu0 7
        %7595 = vperm.xlu0 %7594, %v7565
        %v7596 = vpop.permute.xlu0 %7595
        %7599 = vset.pattern.permute.xlu0 7
        %7600 = vperm.xlu0 %7599, %v7566
        %v7601 = vpop.permute.xlu0 %7600
        %7604 = vset.pattern.permute.xlu0 7
        %7605 = vperm.xlu0 %7604, %v7567
        %v7606 = vpop.permute.xlu0 %7605
        %7609 = vset.pattern.permute.xlu0 7
        %7610 = vperm.xlu0 %7609, %v7568
        %v7611 = vpop.permute.xlu0 %7610
        %7614 = vset.pattern.permute.xlu0 7
        %7615 = vperm.xlu0 %7614, %v7569
        %v7616 = vpop.permute.xlu0 %7615
        %7619 = vset.pattern.permute.xlu0 7
        %7620 = vperm.xlu0 %7619, %v7570
        %v7621 = vpop.permute.xlu0 %7620
        %7624 = vset.pattern.permute.xlu0 7
        %7625 = vperm.xlu0 %7624, %v7571
        %v7626 = vpop.permute.xlu0 %7625
        %7629 = vset.pattern.permute.xlu0 7
        %7630 = vperm.xlu0 %7629, %v7572
        %v7631 = vpop.permute.xlu0 %7630
        %7634 = vset.pattern.permute.xlu0 7
        %7635 = vperm.xlu0 %7634, %v7573
        %v7636 = vpop.permute.xlu0 %7635
        %7639 = vset.pattern.permute.xlu0 7
        %7640 = vperm.xlu0 %7639, %v7574
        %v7641 = vpop.permute.xlu0 %7640
        %7644 = vset.pattern.permute.xlu0 7
        %7645 = vperm.xlu0 %7644, %v7575
        %v7646 = vpop.permute.xlu0 %7645
        %7649 = vset.pattern.permute.xlu0 7
        %7650 = vperm.xlu0 %7649, %v7576
        %v7651 = vpop.permute.xlu0 %7650
        %7654 = vset.pattern.permute.xlu0 7
        %7655 = vperm.xlu0 %7654, %v7577
        %v7656 = vpop.permute.xlu0 %7655
        %v7658 = vsub.f32 %v7450, %v7581
        %v7659 = vsub.f32 %v7451, %v7586
        %v7660 = vsub.f32 %v7452, %v7591
        %v7661 = vsub.f32 %v7453, %v7596
        %v7662 = vsub.f32 %v7454, %v7601
        %v7663 = vsub.f32 %v7455, %v7606
        %v7664 = vsub.f32 %v7456, %v7611
        %v7665 = vsub.f32 %v7457, %v7616
        %v7666 = vsub.f32 %v7458, %v7621
        %v7667 = vsub.f32 %v7459, %v7626
        %v7668 = vsub.f32 %v7460, %v7631
        %v7669 = vsub.f32 %v7461, %v7636
        %v7670 = vsub.f32 %v7462, %v7641
        %v7671 = vsub.f32 %v7463, %v7646
        %v7672 = vsub.f32 %v7464, %v7651
        %v7673 = vsub.f32 %v7465, %v7656
        %v7674 = vmul.f32 %v7658, 1.442695
        %v7675 = vpow.pop %v7674
        %v7676 = vmul.f32 %v7659, 1.442695
        %v7677 = vpow.pop %v7676
        %v7678 = vmul.f32 %v7660, 1.442695
        %v7679 = vpow.pop %v7678
        %v7680 = vmul.f32 %v7661, 1.442695
        %v7681 = vpow.pop %v7680
        %v7682 = vmul.f32 %v7662, 1.442695
        %v7683 = vpow.pop %v7682
        %v7684 = vmul.f32 %v7663, 1.442695
        %v7685 = vpow.pop %v7684
        %v7686 = vmul.f32 %v7664, 1.442695
        %v7687 = vpow.pop %v7686
        %v7688 = vmul.f32 %v7665, 1.442695
        %v7689 = vpow.pop %v7688
        %v7690 = vmul.f32 %v7666, 1.442695
        %v7691 = vpow.pop %v7690
        %v7692 = vmul.f32 %v7667, 1.442695
        %v7693 = vpow.pop %v7692
        %v7694 = vmul.f32 %v7668, 1.442695
        %v7695 = vpow.pop %v7694
        %v7696 = vmul.f32 %v7669, 1.442695
        %v7697 = vpow.pop %v7696
        %v7698 = vmul.f32 %v7670, 1.442695
        %v7699 = vpow.pop %v7698
        %v7700 = vmul.f32 %v7671, 1.442695
        %v7701 = vpow.pop %v7700
        %v7702 = vmul.f32 %v7672, 1.442695
        %v7703 = vpow.pop %v7702
        %v7704 = vmul.f32 %v7673, 1.442695
        %v7705 = vpow.pop %v7704
        %v7706 = vsel %vm653, %v7675, 0.0
        %v7707 = vsel %vm654, %v7677, 0.0
        %v7708 = vsel %vm655, %v7679, 0.0
        %v7709 = vsel %vm656, %v7681, 0.0
        %v7710 = vsel %vm657, %v7683, 0.0
        %v7711 = vsel %vm658, %v7685, 0.0
        %v7712 = vsel %vm659, %v7687, 0.0
        %v7713 = vsel %vm660, %v7689, 0.0
        %v7714 = vsel %vm661, %v7691, 0.0
        %v7715 = vsel %vm662, %v7693, 0.0
        %v7716 = vsel %vm663, %v7695, 0.0
        %v7717 = vsel %vm664, %v7697, 0.0
        %v7718 = vsel %vm665, %v7699, 0.0
        %v7719 = vsel %vm666, %v7701, 0.0
        %v7720 = vsel %vm667, %v7703, 0.0
        %v7721 = vsel %vm668, %v7705, 0.0
        %v7722 = vsub.f32 %v7482, %v7530
        %v7723 = vsub.f32 %v7483, %v7531
        %v7724 = vsub.f32 %v7484, %v7532
        %v7725 = vsub.f32 %v7485, %v7533
        %v7726 = vsub.f32 %v7486, %v7534
        %v7727 = vsub.f32 %v7487, %v7535
        %v7728 = vsub.f32 %v7488, %v7536
        %v7729 = vsub.f32 %v7489, %v7537
        %v7730 = vsub.f32 %v7490, %v7538
        %v7731 = vsub.f32 %v7491, %v7539
        %v7732 = vsub.f32 %v7492, %v7540
        %v7733 = vsub.f32 %v7493, %v7541
        %v7734 = vsub.f32 %v7494, %v7542
        %v7735 = vsub.f32 %v7495, %v7543
        %v7736 = vsub.f32 %v7496, %v7544
        %v7737 = vsub.f32 %v7497, %v7545
        %v7738 = vmul.f32 %v7722, 1.442695
        %v7739 = vpow.pop %v7738
        %v7740 = vmul.f32 %v7723, 1.442695
        %v7741 = vpow.pop %v7740
        %v7742 = vmul.f32 %v7724, 1.442695
        %v7743 = vpow.pop %v7742
        %v7744 = vmul.f32 %v7725, 1.442695
        %v7745 = vpow.pop %v7744
        %v7746 = vmul.f32 %v7726, 1.442695
        %v7747 = vpow.pop %v7746
        %v7748 = vmul.f32 %v7727, 1.442695
        %v7749 = vpow.pop %v7748
        %v7750 = vmul.f32 %v7728, 1.442695
        %v7751 = vpow.pop %v7750
        %v7752 = vmul.f32 %v7729, 1.442695
        %v7753 = vpow.pop %v7752
        %v7754 = vmul.f32 %v7730, 1.442695
        %v7755 = vpow.pop %v7754
        %v7756 = vmul.f32 %v7731, 1.442695
        %v7757 = vpow.pop %v7756
        %v7758 = vmul.f32 %v7732, 1.442695
        %v7759 = vpow.pop %v7758
        %v7760 = vmul.f32 %v7733, 1.442695
        %v7761 = vpow.pop %v7760
        %v7762 = vmul.f32 %v7734, 1.442695
        %v7763 = vpow.pop %v7762
        %v7764 = vmul.f32 %v7735, 1.442695
        %v7765 = vpow.pop %v7764
        %v7766 = vmul.f32 %v7736, 1.442695
        %v7767 = vpow.pop %v7766
        %v7768 = vmul.f32 %v7737, 1.442695
        %v7769 = vpow.pop %v7768
        %vm7770 = vcmask 64568
        %7771 = vst.msk [vmem:[#allocation2] sm:$0xff] %vm7770, %v7530
        %7772 = vst.msk [vmem:[#allocation2 + $0x8] sm:$0xff] %vm7770, %v7531
        %7773 = vst.msk [vmem:[#allocation2 + $0x10] sm:$0xff] %vm7770, %v7532
        %7774 = vst.msk [vmem:[#allocation2 + $0x18] sm:$0xff] %vm7770, %v7533
        %7775 = vst.msk [vmem:[#allocation2 + $0x20] sm:$0xff] %vm7770, %v7534
        %7776 = vst.msk [vmem:[#allocation2 + $0x28] sm:$0xff] %vm7770, %v7535
        %7777 = vst.msk [vmem:[#allocation2 + $0x30] sm:$0xff] %vm7770, %v7536
        %7778 = vst.msk [vmem:[#allocation2 + $0x38] sm:$0xff] %vm7770, %v7537
        %7779 = vst.msk [vmem:[#allocation2 + $0x40] sm:$0xff] %vm7770, %v7538
        %7780 = vst.msk [vmem:[#allocation2 + $0x48] sm:$0xff] %vm7770, %v7539
        %7781 = vst.msk [vmem:[#allocation2 + $0x50] sm:$0xff] %vm7770, %v7540
        %7782 = vst.msk [vmem:[#allocation2 + $0x58] sm:$0xff] %vm7770, %v7541
        %7783 = vst.msk [vmem:[#allocation2 + $0x60] sm:$0xff] %vm7770, %v7542
        %7784 = vst.msk [vmem:[#allocation2 + $0x68] sm:$0xff] %vm7770, %v7543
        %7785 = vst.msk [vmem:[#allocation2 + $0x70] sm:$0xff] %vm7770, %v7544
        %7786 = vst.msk [vmem:[#allocation2 + $0x78] sm:$0xff] %vm7770, %v7545
        %v7787 = vld [vmem:[#allocation3] sm:$0xff]
        %v7788 = vld [vmem:[#allocation3 + $0x8] sm:$0xff]
        %v7789 = vld [vmem:[#allocation3 + $0x10] sm:$0xff]
        %v7790 = vld [vmem:[#allocation3 + $0x18] sm:$0xff]
        %v7791 = vld [vmem:[#allocation3 + $0x20] sm:$0xff]
        %v7792 = vld [vmem:[#allocation3 + $0x28] sm:$0xff]
        %v7793 = vld [vmem:[#allocation3 + $0x30] sm:$0xff]
        %v7794 = vld [vmem:[#allocation3 + $0x38] sm:$0xff]
        %v7795 = vld [vmem:[#allocation3 + $0x40] sm:$0xff]
        %v7796 = vld [vmem:[#allocation3 + $0x48] sm:$0xff]
        %v7797 = vld [vmem:[#allocation3 + $0x50] sm:$0xff]
        %v7798 = vld [vmem:[#allocation3 + $0x58] sm:$0xff]
        %v7799 = vld [vmem:[#allocation3 + $0x60] sm:$0xff]
        %v7800 = vld [vmem:[#allocation3 + $0x68] sm:$0xff]
        %v7801 = vld [vmem:[#allocation3 + $0x70] sm:$0xff]
        %v7802 = vld [vmem:[#allocation3 + $0x78] sm:$0xff]
        %v7803 = vmul.f32 %v7739, %v7787
        %v7804 = vmul.f32 %v7741, %v7788
        %v7805 = vmul.f32 %v7743, %v7789
        %v7806 = vmul.f32 %v7745, %v7790
        %v7807 = vmul.f32 %v7747, %v7791
        %v7808 = vmul.f32 %v7749, %v7792
        %v7809 = vmul.f32 %v7751, %v7793
        %v7810 = vmul.f32 %v7753, %v7794
        %v7811 = vmul.f32 %v7755, %v7795
        %v7812 = vmul.f32 %v7757, %v7796
        %v7813 = vmul.f32 %v7759, %v7797
        %v7814 = vmul.f32 %v7761, %v7798
        %v7815 = vmul.f32 %v7763, %v7799
        %v7816 = vmul.f32 %v7765, %v7800
        %v7817 = vmul.f32 %v7767, %v7801
        %v7818 = vmul.f32 %v7769, %v7802
        %7819 = vadd.xlane.f32.xlu0 %v7706
        %v7820 = vpop.xlane.xlu0 %7819
        %7821 = vadd.xlane.f32.xlu0 %v7707
        %v7822 = vpop.xlane.xlu0 %7821
        %7823 = vadd.xlane.f32.xlu0 %v7708
        %v7824 = vpop.xlane.xlu0 %7823
        %7825 = vadd.xlane.f32.xlu0 %v7709
        %v7826 = vpop.xlane.xlu0 %7825
        %7827 = vadd.xlane.f32.xlu0 %v7710
        %v7828 = vpop.xlane.xlu0 %7827
        %7829 = vadd.xlane.f32.xlu0 %v7711
        %v7830 = vpop.xlane.xlu0 %7829
        %7831 = vadd.xlane.f32.xlu0 %v7712
        %v7832 = vpop.xlane.xlu0 %7831
        %7833 = vadd.xlane.f32.xlu0 %v7713
        %v7834 = vpop.xlane.xlu0 %7833
        %7835 = vadd.xlane.f32.xlu0 %v7714
        %v7836 = vpop.xlane.xlu0 %7835
        %7837 = vadd.xlane.f32.xlu0 %v7715
        %v7838 = vpop.xlane.xlu0 %7837
        %7839 = vadd.xlane.f32.xlu0 %v7716
        %v7840 = vpop.xlane.xlu0 %7839
        %7841 = vadd.xlane.f32.xlu0 %v7717
        %v7842 = vpop.xlane.xlu0 %7841
        %7843 = vadd.xlane.f32.xlu0 %v7718
        %v7844 = vpop.xlane.xlu0 %7843
        %7845 = vadd.xlane.f32.xlu0 %v7719
        %v7846 = vpop.xlane.xlu0 %7845
        %7847 = vadd.xlane.f32.xlu0 %v7720
        %v7848 = vpop.xlane.xlu0 %7847
        %7849 = vadd.xlane.f32.xlu0 %v7721
        %v7850 = vpop.xlane.xlu0 %7849
        %v7851 = vadd.f32 %v7803, %v7820
        %v7852 = vadd.f32 %v7804, %v7822
        %v7853 = vadd.f32 %v7805, %v7824
        %v7854 = vadd.f32 %v7806, %v7826
        %v7855 = vadd.f32 %v7807, %v7828
        %v7856 = vadd.f32 %v7808, %v7830
        %v7857 = vadd.f32 %v7809, %v7832
        %v7858 = vadd.f32 %v7810, %v7834
        %v7859 = vadd.f32 %v7811, %v7836
        %v7860 = vadd.f32 %v7812, %v7838
        %v7861 = vadd.f32 %v7813, %v7840
        %v7862 = vadd.f32 %v7814, %v7842
        %v7863 = vadd.f32 %v7815, %v7844
        %v7864 = vadd.f32 %v7816, %v7846
        %v7865 = vadd.f32 %v7817, %v7848
        %v7866 = vadd.f32 %v7818, %v7850
        %7867 = vst.msk [vmem:[#allocation3] sm:$0xff] %vm7770, %v7851
        %7868 = vst.msk [vmem:[#allocation3 + $0x8] sm:$0xff] %vm7770, %v7852
        %7869 = vst.msk [vmem:[#allocation3 + $0x10] sm:$0xff] %vm7770, %v7853
        %7870 = vst.msk [vmem:[#allocation3 + $0x18] sm:$0xff] %vm7770, %v7854
        %7871 = vst.msk [vmem:[#allocation3 + $0x20] sm:$0xff] %vm7770, %v7855
        %7872 = vst.msk [vmem:[#allocation3 + $0x28] sm:$0xff] %vm7770, %v7856
        %7873 = vst.msk [vmem:[#allocation3 + $0x30] sm:$0xff] %vm7770, %v7857
        %7874 = vst.msk [vmem:[#allocation3 + $0x38] sm:$0xff] %vm7770, %v7858
        %7875 = vst.msk [vmem:[#allocation3 + $0x40] sm:$0xff] %vm7770, %v7859
        %7876 = vst.msk [vmem:[#allocation3 + $0x48] sm:$0xff] %vm7770, %v7860
        %7877 = vst.msk [vmem:[#allocation3 + $0x50] sm:$0xff] %vm7770, %v7861
        %7878 = vst.msk [vmem:[#allocation3 + $0x58] sm:$0xff] %vm7770, %v7862
        %7879 = vst.msk [vmem:[#allocation3 + $0x60] sm:$0xff] %vm7770, %v7863
        %7880 = vst.msk [vmem:[#allocation3 + $0x68] sm:$0xff] %vm7770, %v7864
        %7881 = vst.msk [vmem:[#allocation3 + $0x70] sm:$0xff] %vm7770, %v7865
        %7882 = vst.msk [vmem:[#allocation3 + $0x78] sm:$0xff] %vm7770, %v7866
        %v7883 = vld [vmem:[#allocation4 + $0x8] sm:$0xff]
        %v7884 = vld [vmem:[#allocation4 + $0x18] sm:$0xff]
        %v7885 = vld [vmem:[#allocation4 + $0x28] sm:$0xff]
        %v7886 = vld [vmem:[#allocation4 + $0x38] sm:$0xff]
        %v7887 = vld [vmem:[#allocation4 + $0x48] sm:$0xff]
        %v7888 = vld [vmem:[#allocation4 + $0x58] sm:$0xff]
        %v7889 = vld [vmem:[#allocation4 + $0x68] sm:$0xff]
        %v7890 = vld [vmem:[#allocation4 + $0x78] sm:$0xff]
        %v7891 = vld [vmem:[#allocation4 + $0x88] sm:$0xff]
        %v7892 = vld [vmem:[#allocation4 + $0x98] sm:$0xff]
        %v7893 = vld [vmem:[#allocation4 + $0xa8] sm:$0xff]
        %v7894 = vld [vmem:[#allocation4 + $0xb8] sm:$0xff]
        %v7895 = vld [vmem:[#allocation4 + $0xc8] sm:$0xff]
        %v7896 = vld [vmem:[#allocation4 + $0xd8] sm:$0xff]
        %v7897 = vld [vmem:[#allocation4 + $0xe8] sm:$0xff]
        %v7898 = vld [vmem:[#allocation4 + $0xf8] sm:$0xff]
        %7900 = vset.pattern.permute.xlu0 7
        %7901 = vperm.xlu0 %7900, %v7739
        %v7902 = vpop.permute.xlu0 %7901
        %7905 = vset.pattern.permute.xlu0 7
        %7906 = vperm.xlu0 %7905, %v7741
        %v7907 = vpop.permute.xlu0 %7906
        %7910 = vset.pattern.permute.xlu0 7
        %7911 = vperm.xlu0 %7910, %v7743
        %v7912 = vpop.permute.xlu0 %7911
        %7915 = vset.pattern.permute.xlu0 7
        %7916 = vperm.xlu0 %7915, %v7745
        %v7917 = vpop.permute.xlu0 %7916
        %7920 = vset.pattern.permute.xlu0 7
        %7921 = vperm.xlu0 %7920, %v7747
        %v7922 = vpop.permute.xlu0 %7921
        %7925 = vset.pattern.permute.xlu0 7
        %7926 = vperm.xlu0 %7925, %v7749
        %v7927 = vpop.permute.xlu0 %7926
        %7930 = vset.pattern.permute.xlu0 7
        %7931 = vperm.xlu0 %7930, %v7751
        %v7932 = vpop.permute.xlu0 %7931
        %7935 = vset.pattern.permute.xlu0 7
        %7936 = vperm.xlu0 %7935, %v7753
        %v7937 = vpop.permute.xlu0 %7936
        %7940 = vset.pattern.permute.xlu0 7
        %7941 = vperm.xlu0 %7940, %v7755
        %v7942 = vpop.permute.xlu0 %7941
        %7945 = vset.pattern.permute.xlu0 7
        %7946 = vperm.xlu0 %7945, %v7757
        %v7947 = vpop.permute.xlu0 %7946
        %7950 = vset.pattern.permute.xlu0 7
        %7951 = vperm.xlu0 %7950, %v7759
        %v7952 = vpop.permute.xlu0 %7951
        %7955 = vset.pattern.permute.xlu0 7
        %7956 = vperm.xlu0 %7955, %v7761
        %v7957 = vpop.permute.xlu0 %7956
        %7960 = vset.pattern.permute.xlu0 7
        %7961 = vperm.xlu0 %7960, %v7763
        %v7962 = vpop.permute.xlu0 %7961
        %7965 = vset.pattern.permute.xlu0 7
        %7966 = vperm.xlu0 %7965, %v7765
        %v7967 = vpop.permute.xlu0 %7966
        %7970 = vset.pattern.permute.xlu0 7
        %7971 = vperm.xlu0 %7970, %v7767
        %v7972 = vpop.permute.xlu0 %7971
        %7975 = vset.pattern.permute.xlu0 7
        %7976 = vperm.xlu0 %7975, %v7769
        %v7977 = vpop.permute.xlu0 %7976
        %v7979 = vmul.f32 %v7902, %v7883
        %v7980 = vmul.f32 %v7907, %v7884
        %v7981 = vmul.f32 %v7912, %v7885
        %v7982 = vmul.f32 %v7917, %v7886
        %v7983 = vmul.f32 %v7922, %v7887
        %v7984 = vmul.f32 %v7927, %v7888
        %v7985 = vmul.f32 %v7932, %v7889
        %v7986 = vmul.f32 %v7937, %v7890
        %v7987 = vmul.f32 %v7942, %v7891
        %v7988 = vmul.f32 %v7947, %v7892
        %v7989 = vmul.f32 %v7952, %v7893
        %v7990 = vmul.f32 %v7957, %v7894
        %v7991 = vmul.f32 %v7962, %v7895
        %v7992 = vmul.f32 %v7967, %v7896
        %v7993 = vmul.f32 %v7972, %v7897
        %v7994 = vmul.f32 %v7977, %v7898
        %v7995 = vpack.c.bf16 %v7707, %v7706
        %v7996 = vpack.c.bf16 %v7709, %v7708
        %v7997 = vpack.c.bf16 %v7711, %v7710
        %v7998 = vpack.c.bf16 %v7713, %v7712
        %v7999 = vpack.c.bf16 %v7715, %v7714
        %v8000 = vpack.c.bf16 %v7717, %v7716
        %v8001 = vpack.c.bf16 %v7719, %v7718
        %v8002 = vpack.c.bf16 %v7721, %v7720
        %8003 = vrot.lane.b32.xlu0 %v892, 32
        %v8004 = vpop.permute.xlu0 %8003
        %8005 = vrot.lane.b32.xlu0 %v894, 32
        %v8006 = vpop.permute.xlu0 %8005
        %8007 = vrot.lane.b32.xlu0 %v896, 32
        %v8008 = vpop.permute.xlu0 %8007
        %8009 = vrot.lane.b32.xlu0 %v898, 32
        %v8010 = vpop.permute.xlu0 %8009
        %8011 = vrot.lane.b32.xlu0 %v900, 32
        %v8012 = vpop.permute.xlu0 %8011
        %8013 = vrot.lane.b32.xlu0 %v902, 32
        %v8014 = vpop.permute.xlu0 %8013
        %8015 = vrot.lane.b32.xlu0 %v904, 32
        %v8016 = vpop.permute.xlu0 %8015
        %8017 = vrot.lane.b32.xlu0 %v906, 32
        %v8018 = vpop.permute.xlu0 %8017
        %8027 = vmatprep.subr.bf16.mxu0 0
        %8028 = vmatpush1.bf16.msra.mxu0 %v8018
        %8029 = vmatprep.subr.bf16.mxu0 0
        %8030 = vmatpush1.bf16.msra.mxu0 %v8016
        %8031 = vmatprep.subr.bf16.mxu0 0
        %8032 = vmatpush1.bf16.msra.mxu0 %v8014
        %8033 = vmatprep.subr.bf16.mxu0 0
        %8034 = vmatpush1.bf16.msra.mxu0 %v8012
        %8035 = vmatprep.subr.bf16.mxu0 0
        %8036 = vmatpush1.bf16.msra.mxu0 %v8010
        %8037 = vmatprep.subr.bf16.mxu0 0
        %8038 = vmatpush1.bf16.msra.mxu0 %v8008
        %8039 = vmatprep.subr.bf16.mxu0 0
        %8040 = vmatpush1.bf16.msra.mxu0 %v8006
        %8041 = vmatprep.subr.bf16.mxu0 0
        %8042 = vmatpush1.bf16.msra.mxu0 %v8004
        %8043 = vmatprep.subr.bf16.mxu0 0
        %8044 = vmatpush2.bf16.msra.mxu0 0
        %8045 = vmatprep.subr.bf16.mxu0 0
        %8046 = vmatpush2.bf16.msra.mxu0 0
        %8047 = vmatprep.subr.bf16.mxu0 0
        %8048 = vmatpush2.bf16.msra.mxu0 0
        %8049 = vmatprep.subr.bf16.mxu0 0
        %8050 = vmatpush2.bf16.msra.mxu0 0
        %8051 = vmatprep.subr.bf16.mxu0 0
        %8052 = vmatpush2.bf16.msra.mxu0 0
        %8053 = vmatprep.subr.bf16.mxu0 0
        %8054 = vmatpush2.bf16.msra.mxu0 0
        %8055 = vmatprep.subr.bf16.mxu0 0
        %8056 = vmatpush2.bf16.msra.mxu0 0
        %8057 = vmatprep.subr.bf16.mxu0 0
        %8058 = vmatpush2.bf16.msra.mxu0 0
        %8059 = vmatprep.mubr.bf16.mxu0 0
        %8060 = vmatmul.mubr.bf16.gmra.mxu0 %v7995
        %v8061 = vpop.f32.mrf.mxu0
        %v8062 = vadd.f32 0.0, %v8061
        %v8063 = vpop.f32.mrf.mxu0
        %v8064 = vpop.f32.mrf.mxu0
        %v8065 = vadd.f32 0.0, %v8064
        %v8066 = vpop.f32.mrf.mxu0
        %8067 = vmatprep.mubr.bf16.mxu0 0
        %8068 = vmatmul.mubr.bf16.gmra.mxu0 %v7996
        %v8069 = vpop.f32.mrf.mxu0
        %v8070 = vadd.f32 0.0, %v8069
        %v8071 = vpop.f32.mrf.mxu0
        %v8072 = vpop.f32.mrf.mxu0
        %v8073 = vadd.f32 0.0, %v8072
        %v8074 = vpop.f32.mrf.mxu0
        %8075 = vmatprep.mubr.bf16.mxu0 0
        %8076 = vmatmul.mubr.bf16.gmra.mxu0 %v7997
        %v8077 = vpop.f32.mrf.mxu0
        %v8078 = vadd.f32 0.0, %v8077
        %v8079 = vpop.f32.mrf.mxu0
        %v8080 = vpop.f32.mrf.mxu0
        %v8081 = vadd.f32 0.0, %v8080
        %v8082 = vpop.f32.mrf.mxu0
        %8083 = vmatprep.mubr.bf16.mxu0 0
        %8084 = vmatmul.mubr.bf16.gmra.mxu0 %v7998
        %v8085 = vpop.f32.mrf.mxu0
        %v8086 = vadd.f32 0.0, %v8085
        %v8087 = vpop.f32.mrf.mxu0
        %v8088 = vpop.f32.mrf.mxu0
        %v8089 = vadd.f32 0.0, %v8088
        %v8090 = vpop.f32.mrf.mxu0
        %8091 = vmatprep.mubr.bf16.mxu0 0
        %8092 = vmatmul.mubr.bf16.gmra.mxu0 %v7999
        %v8093 = vpop.f32.mrf.mxu0
        %v8094 = vadd.f32 0.0, %v8093
        %v8095 = vpop.f32.mrf.mxu0
        %v8096 = vpop.f32.mrf.mxu0
        %v8097 = vadd.f32 0.0, %v8096
        %v8098 = vpop.f32.mrf.mxu0
        %8099 = vmatprep.mubr.bf16.mxu0 0
        %8100 = vmatmul.mubr.bf16.gmra.mxu0 %v8000
        %v8101 = vpop.f32.mrf.mxu0
        %v8102 = vadd.f32 0.0, %v8101
        %v8103 = vpop.f32.mrf.mxu0
        %v8104 = vpop.f32.mrf.mxu0
        %v8105 = vadd.f32 0.0, %v8104
        %v8106 = vpop.f32.mrf.mxu0
        %8107 = vmatprep.mubr.bf16.mxu0 0
        %8108 = vmatmul.mubr.bf16.gmra.mxu0 %v8001
        %v8109 = vpop.f32.mrf.mxu0
        %v8110 = vadd.f32 0.0, %v8109
        %v8111 = vpop.f32.mrf.mxu0
        %v8112 = vpop.f32.mrf.mxu0
        %v8113 = vadd.f32 0.0, %v8112
        %v8114 = vpop.f32.mrf.mxu0
        %8115 = vmatprep.mubr.bf16.mxu0 0
        %8116 = vmatmul.mubr.bf16.gmra.mxu0 %v8002
        %v8117 = vpop.f32.mrf.mxu0
        %v8118 = vadd.f32 0.0, %v8117
        %v8119 = vpop.f32.mrf.mxu0
        %v8120 = vpop.f32.mrf.mxu0
        %v8121 = vadd.f32 0.0, %v8120
        %v8122 = vpop.f32.mrf.mxu0
        %8123 = vdwg.mxu0
        %8140 = vrot.lane.b32.xlu0 %v8062, 96
        %v8141 = vpop.permute.xlu0 %8140
        %8142 = vrot.lane.b32.xlu0 %v8065, 96
        %v8143 = vpop.permute.xlu0 %8142
        %8144 = vrot.lane.b32.xlu0 %v8070, 96
        %v8145 = vpop.permute.xlu0 %8144
        %8146 = vrot.lane.b32.xlu0 %v8073, 96
        %v8147 = vpop.permute.xlu0 %8146
        %8148 = vrot.lane.b32.xlu0 %v8078, 96
        %v8149 = vpop.permute.xlu0 %8148
        %8150 = vrot.lane.b32.xlu0 %v8081, 96
        %v8151 = vpop.permute.xlu0 %8150
        %8152 = vrot.lane.b32.xlu0 %v8086, 96
        %v8153 = vpop.permute.xlu0 %8152
        %8154 = vrot.lane.b32.xlu0 %v8089, 96
        %v8155 = vpop.permute.xlu0 %8154
        %8156 = vrot.lane.b32.xlu0 %v8094, 96
        %v8157 = vpop.permute.xlu0 %8156
        %8158 = vrot.lane.b32.xlu0 %v8097, 96
        %v8159 = vpop.permute.xlu0 %8158
        %8160 = vrot.lane.b32.xlu0 %v8102, 96
        %v8161 = vpop.permute.xlu0 %8160
        %8162 = vrot.lane.b32.xlu0 %v8105, 96
        %v8163 = vpop.permute.xlu0 %8162
        %8164 = vrot.lane.b32.xlu0 %v8110, 96
        %v8165 = vpop.permute.xlu0 %8164
        %8166 = vrot.lane.b32.xlu0 %v8113, 96
        %v8167 = vpop.permute.xlu0 %8166
        %8168 = vrot.lane.b32.xlu0 %v8118, 96
        %v8169 = vpop.permute.xlu0 %8168
        %8170 = vrot.lane.b32.xlu0 %v8121, 96
        %v8171 = vpop.permute.xlu0 %8170
        %v8188 = vadd.f32 %v7979, %v8141
        %v8189 = vadd.f32 %v7980, %v8143
        %v8190 = vadd.f32 %v7981, %v8145
        %v8191 = vadd.f32 %v7982, %v8147
        %v8192 = vadd.f32 %v7983, %v8149
        %v8193 = vadd.f32 %v7984, %v8151
        %v8194 = vadd.f32 %v7985, %v8153
        %v8195 = vadd.f32 %v7986, %v8155
        %v8196 = vadd.f32 %v7987, %v8157
        %v8197 = vadd.f32 %v7988, %v8159
        %v8198 = vadd.f32 %v7989, %v8161
        %v8199 = vadd.f32 %v7990, %v8163
        %v8200 = vadd.f32 %v7991, %v8165
        %v8201 = vadd.f32 %v7992, %v8167
        %v8202 = vadd.f32 %v7993, %v8169
        %v8203 = vadd.f32 %v7994, %v8171
        %8204 = vst.msk [vmem:[#allocation4 + $0x8] sm:$0xff] %vm4675, %v8188
        %8205 = vst.msk [vmem:[#allocation4 + $0x18] sm:$0xff] %vm4675, %v8189
        %8206 = vst.msk [vmem:[#allocation4 + $0x28] sm:$0xff] %vm4675, %v8190
        %8207 = vst.msk [vmem:[#allocation4 + $0x38] sm:$0xff] %vm4675, %v8191
        %8208 = vst.msk [vmem:[#allocation4 + $0x48] sm:$0xff] %vm4675, %v8192
        %8209 = vst.msk [vmem:[#allocation4 + $0x58] sm:$0xff] %vm4675, %v8193
        %8210 = vst.msk [vmem:[#allocation4 + $0x68] sm:$0xff] %vm4675, %v8194
        %8211 = vst.msk [vmem:[#allocation4 + $0x78] sm:$0xff] %vm4675, %v8195
        %8212 = vst.msk [vmem:[#allocation4 + $0x88] sm:$0xff] %vm4675, %v8196
        %8213 = vst.msk [vmem:[#allocation4 + $0x98] sm:$0xff] %vm4675, %v8197
        %8214 = vst.msk [vmem:[#allocation4 + $0xa8] sm:$0xff] %vm4675, %v8198
        %8215 = vst.msk [vmem:[#allocation4 + $0xb8] sm:$0xff] %vm4675, %v8199
        %8216 = vst.msk [vmem:[#allocation4 + $0xc8] sm:$0xff] %vm4675, %v8200
        %8217 = vst.msk [vmem:[#allocation4 + $0xd8] sm:$0xff] %vm4675, %v8201
        %8218 = vst.msk [vmem:[#allocation4 + $0xe8] sm:$0xff] %vm4675, %v8202
        %8219 = vst.msk [vmem:[#allocation4 + $0xf8] sm:$0xff] %vm4675, %v8203
        %p8220 = scmp.eq.s32.totalorder %s28, 1
        // Predicated region
        $region143: #{tpu_custom_call.1} parent=125 // pred_check
          %p8221 = pneg %p8220
        $region144: #{tpu_custom_call.1} parent=125 // pred_check_branch
          %8223 = sbr.rel (%p8221) target = $region146
        $region145: #{tpu_custom_call.1} parent=125 // pred_region
          %v8224 = vld [vmem:[#allocation3] sm:$0xff]
          %v8225 = vld [vmem:[#allocation3 + $0x8] sm:$0xff]
          %v8226 = vld [vmem:[#allocation3 + $0x10] sm:$0xff]
          %v8227 = vld [vmem:[#allocation3 + $0x18] sm:$0xff]
          %v8228 = vld [vmem:[#allocation3 + $0x20] sm:$0xff]
          %v8229 = vld [vmem:[#allocation3 + $0x28] sm:$0xff]
          %v8230 = vld [vmem:[#allocation3 + $0x30] sm:$0xff]
          %v8231 = vld [vmem:[#allocation3 + $0x38] sm:$0xff]
          %v8232 = vld [vmem:[#allocation3 + $0x40] sm:$0xff]
          %v8233 = vld [vmem:[#allocation3 + $0x48] sm:$0xff]
          %v8234 = vld [vmem:[#allocation3 + $0x50] sm:$0xff]
          %v8235 = vld [vmem:[#allocation3 + $0x58] sm:$0xff]
          %v8236 = vld [vmem:[#allocation3 + $0x60] sm:$0xff]
          %v8237 = vld [vmem:[#allocation3 + $0x68] sm:$0xff]
          %v8238 = vld [vmem:[#allocation3 + $0x70] sm:$0xff]
          %v8239 = vld [vmem:[#allocation3 + $0x78] sm:$0xff]
          %v8240 = vmax.f32 %v8224, 1e-30
          %v8241 = vmax.f32 %v8225, 1e-30
          %v8242 = vmax.f32 %v8226, 1e-30
          %v8243 = vmax.f32 %v8227, 1e-30
          %v8244 = vmax.f32 %v8228, 1e-30
          %v8245 = vmax.f32 %v8229, 1e-30
          %v8246 = vmax.f32 %v8230, 1e-30
          %v8247 = vmax.f32 %v8231, 1e-30
          %v8248 = vmax.f32 %v8232, 1e-30
          %v8249 = vmax.f32 %v8233, 1e-30
          %v8250 = vmax.f32 %v8234, 1e-30
          %v8251 = vmax.f32 %v8235, 1e-30
          %v8252 = vmax.f32 %v8236, 1e-30
          %v8253 = vmax.f32 %v8237, 1e-30
          %v8254 = vmax.f32 %v8238, 1e-30
          %v8255 = vmax.f32 %v8239, 1e-30
          %v8256 = vrcp.pop %v8240
          %v8257 = vrcp.pop %v8241
          %v8258 = vrcp.pop %v8242
          %v8259 = vrcp.pop %v8243
          %v8260 = vrcp.pop %v8244
          %v8261 = vrcp.pop %v8245
          %v8262 = vrcp.pop %v8246
          %v8263 = vrcp.pop %v8247
          %v8264 = vrcp.pop %v8248
          %v8265 = vrcp.pop %v8249
          %v8266 = vrcp.pop %v8250
          %v8267 = vrcp.pop %v8251
          %v8268 = vrcp.pop %v8252
          %v8269 = vrcp.pop %v8253
          %v8270 = vrcp.pop %v8254
          %v8271 = vrcp.pop %v8255
          %vm8272 = vcmp.gt.f32.partialorder %v8224, 0.0
          %vm8273 = vcmp.gt.f32.partialorder %v8225, 0.0
          %vm8274 = vcmp.gt.f32.partialorder %v8226, 0.0
          %vm8275 = vcmp.gt.f32.partialorder %v8227, 0.0
          %vm8276 = vcmp.gt.f32.partialorder %v8228, 0.0
          %vm8277 = vcmp.gt.f32.partialorder %v8229, 0.0
          %vm8278 = vcmp.gt.f32.partialorder %v8230, 0.0
          %vm8279 = vcmp.gt.f32.partialorder %v8231, 0.0
          %vm8280 = vcmp.gt.f32.partialorder %v8232, 0.0
          %vm8281 = vcmp.gt.f32.partialorder %v8233, 0.0
          %vm8282 = vcmp.gt.f32.partialorder %v8234, 0.0
          %vm8283 = vcmp.gt.f32.partialorder %v8235, 0.0
          %vm8284 = vcmp.gt.f32.partialorder %v8236, 0.0
          %vm8285 = vcmp.gt.f32.partialorder %v8237, 0.0
          %vm8286 = vcmp.gt.f32.partialorder %v8238, 0.0
          %vm8287 = vcmp.gt.f32.partialorder %v8239, 0.0
          %v8288 = vsel %vm8272, %v8256, 0.0
          %v8289 = vsel %vm8273, %v8257, 0.0
          %v8290 = vsel %vm8274, %v8258, 0.0
          %v8291 = vsel %vm8275, %v8259, 0.0
          %v8292 = vsel %vm8276, %v8260, 0.0
          %v8293 = vsel %vm8277, %v8261, 0.0
          %v8294 = vsel %vm8278, %v8262, 0.0
          %v8295 = vsel %vm8279, %v8263, 0.0
          %v8296 = vsel %vm8280, %v8264, 0.0
          %v8297 = vsel %vm8281, %v8265, 0.0
          %v8298 = vsel %vm8282, %v8266, 0.0
          %v8299 = vsel %vm8283, %v8267, 0.0
          %v8300 = vsel %vm8284, %v8268, 0.0
          %v8301 = vsel %vm8285, %v8269, 0.0
          %v8302 = vsel %vm8286, %v8270, 0.0
          %v8303 = vsel %vm8287, %v8271, 0.0
          %v8304 = vld [vmem:[#allocation4] sm:$0xff]
          %v8305 = vld [vmem:[#allocation4 + $0x10] sm:$0xff]
          %v8306 = vld [vmem:[#allocation4 + $0x20] sm:$0xff]
          %v8307 = vld [vmem:[#allocation4 + $0x30] sm:$0xff]
          %v8308 = vld [vmem:[#allocation4 + $0x40] sm:$0xff]
          %v8309 = vld [vmem:[#allocation4 + $0x50] sm:$0xff]
          %v8310 = vld [vmem:[#allocation4 + $0x60] sm:$0xff]
          %v8311 = vld [vmem:[#allocation4 + $0x70] sm:$0xff]
          %v8312 = vld [vmem:[#allocation4 + $0x80] sm:$0xff]
          %v8313 = vld [vmem:[#allocation4 + $0x90] sm:$0xff]
          %v8314 = vld [vmem:[#allocation4 + $0xa0] sm:$0xff]
          %v8315 = vld [vmem:[#allocation4 + $0xb0] sm:$0xff]
          %v8316 = vld [vmem:[#allocation4 + $0xc0] sm:$0xff]
          %v8317 = vld [vmem:[#allocation4 + $0xd0] sm:$0xff]
          %v8318 = vld [vmem:[#allocation4 + $0xe0] sm:$0xff]
          %v8319 = vld [vmem:[#allocation4 + $0xf0] sm:$0xff]
          %8321 = vset.pattern.permute.xlu0 0
          %8322 = vperm.xlu0 %8321, %v8288
          %v8323 = vpop.permute.xlu0 %8322
          %8326 = vset.pattern.permute.xlu0 0
          %8327 = vperm.xlu0 %8326, %v8289
          %v8328 = vpop.permute.xlu0 %8327
          %8331 = vset.pattern.permute.xlu0 0
          %8332 = vperm.xlu0 %8331, %v8290
          %v8333 = vpop.permute.xlu0 %8332
          %8336 = vset.pattern.permute.xlu0 0
          %8337 = vperm.xlu0 %8336, %v8291
          %v8338 = vpop.permute.xlu0 %8337
          %8341 = vset.pattern.permute.xlu0 0
          %8342 = vperm.xlu0 %8341, %v8292
          %v8343 = vpop.permute.xlu0 %8342
          %8346 = vset.pattern.permute.xlu0 0
          %8347 = vperm.xlu0 %8346, %v8293
          %v8348 = vpop.permute.xlu0 %8347
          %8351 = vset.pattern.permute.xlu0 0
          %8352 = vperm.xlu0 %8351, %v8294
          %v8353 = vpop.permute.xlu0 %8352
          %8356 = vset.pattern.permute.xlu0 0
          %8357 = vperm.xlu0 %8356, %v8295
          %v8358 = vpop.permute.xlu0 %8357
          %8361 = vset.pattern.permute.xlu0 0
          %8362 = vperm.xlu0 %8361, %v8296
          %v8363 = vpop.permute.xlu0 %8362
          %8366 = vset.pattern.permute.xlu0 0
          %8367 = vperm.xlu0 %8366, %v8297
          %v8368 = vpop.permute.xlu0 %8367
          %8371 = vset.pattern.permute.xlu0 0
          %8372 = vperm.xlu0 %8371, %v8298
          %v8373 = vpop.permute.xlu0 %8372
          %8376 = vset.pattern.permute.xlu0 0
          %8377 = vperm.xlu0 %8376, %v8299
          %v8378 = vpop.permute.xlu0 %8377
          %8381 = vset.pattern.permute.xlu0 0
          %8382 = vperm.xlu0 %8381, %v8300
          %v8383 = vpop.permute.xlu0 %8382
          %8386 = vset.pattern.permute.xlu0 0
          %8387 = vperm.xlu0 %8386, %v8301
          %v8388 = vpop.permute.xlu0 %8387
          %8391 = vset.pattern.permute.xlu0 0
          %8392 = vperm.xlu0 %8391, %v8302
          %v8393 = vpop.permute.xlu0 %8392
          %8396 = vset.pattern.permute.xlu0 0
          %8397 = vperm.xlu0 %8396, %v8303
          %v8398 = vpop.permute.xlu0 %8397
          %v8400 = vmul.f32 %v8304, %v8323
          %v8401 = vmul.f32 %v8305, %v8328
          %v8402 = vmul.f32 %v8306, %v8333
          %v8403 = vmul.f32 %v8307, %v8338
          %v8404 = vmul.f32 %v8308, %v8343
          %v8405 = vmul.f32 %v8309, %v8348
          %v8406 = vmul.f32 %v8310, %v8353
          %v8407 = vmul.f32 %v8311, %v8358
          %v8408 = vmul.f32 %v8312, %v8363
          %v8409 = vmul.f32 %v8313, %v8368
          %v8410 = vmul.f32 %v8314, %v8373
          %v8411 = vmul.f32 %v8315, %v8378
          %v8412 = vmul.f32 %v8316, %v8383
          %v8413 = vmul.f32 %v8317, %v8388
          %v8414 = vmul.f32 %v8318, %v8393
          %v8415 = vmul.f32 %v8319, %v8398
          %vm8416 = vcmp.gt.f32.partialorder %v8400, 0.0
          %vm8417 = vcmp.gt.f32.partialorder %v8401, 0.0
          %vm8418 = vcmp.gt.f32.partialorder %v8402, 0.0
          %vm8419 = vcmp.gt.f32.partialorder %v8403, 0.0
          %vm8420 = vcmp.gt.f32.partialorder %v8404, 0.0
          %vm8421 = vcmp.gt.f32.partialorder %v8405, 0.0
          %vm8422 = vcmp.gt.f32.partialorder %v8406, 0.0
          %vm8423 = vcmp.gt.f32.partialorder %v8407, 0.0
          %vm8424 = vcmp.gt.f32.partialorder %v8408, 0.0
          %vm8425 = vcmp.gt.f32.partialorder %v8409, 0.0
          %vm8426 = vcmp.gt.f32.partialorder %v8410, 0.0
          %vm8427 = vcmp.gt.f32.partialorder %v8411, 0.0
          %vm8428 = vcmp.gt.f32.partialorder %v8412, 0.0
          %vm8429 = vcmp.gt.f32.partialorder %v8413, 0.0
          %vm8430 = vcmp.gt.f32.partialorder %v8414, 0.0
          %vm8431 = vcmp.gt.f32.partialorder %v8415, 0.0
          %s8432 = sld [smem:[#allocation5]]
          %v8433 = vstv %s8432
          %v8434 = vmul.f32 %v8433, %v8400
          %v8435 = vmul.f32 %v8433, %v8401
          %v8436 = vmul.f32 %v8433, %v8402
          %v8437 = vmul.f32 %v8433, %v8403
          %v8438 = vmul.f32 %v8433, %v8404
          %v8439 = vmul.f32 %v8433, %v8405
          %v8440 = vmul.f32 %v8433, %v8406
          %v8441 = vmul.f32 %v8433, %v8407
          %v8442 = vmul.f32 %v8433, %v8408
          %v8443 = vmul.f32 %v8433, %v8409
          %v8444 = vmul.f32 %v8433, %v8410
          %v8445 = vmul.f32 %v8433, %v8411
          %v8446 = vmul.f32 %v8433, %v8412
          %v8447 = vmul.f32 %v8433, %v8413
          %v8448 = vmul.f32 %v8433, %v8414
          %v8449 = vmul.f32 %v8433, %v8415
          %v8450 = vsel %vm8416, %v8400, %v8434
          %v8451 = vsel %vm8417, %v8401, %v8435
          %v8452 = vsel %vm8418, %v8402, %v8436
          %v8453 = vsel %vm8419, %v8403, %v8437
          %v8454 = vsel %vm8420, %v8404, %v8438
          %v8455 = vsel %vm8421, %v8405, %v8439
          %v8456 = vsel %vm8422, %v8406, %v8440
          %v8457 = vsel %vm8423, %v8407, %v8441
          %v8458 = vsel %vm8424, %v8408, %v8442
          %v8459 = vsel %vm8425, %v8409, %v8443
          %v8460 = vsel %vm8426, %v8410, %v8444
          %v8461 = vsel %vm8427, %v8411, %v8445
          %v8462 = vsel %vm8428, %v8412, %v8446
          %v8463 = vsel %vm8429, %v8413, %v8447
          %v8464 = vsel %vm8430, %v8414, %v8448
          %v8465 = vsel %vm8431, %v8415, %v8449
          %8466 = vset.pattern.permute.xlu0 1
          %8467 = vperm.xlu0 %8466, %v8288
          %v8468 = vpop.permute.xlu0 %8467
          %8470 = vset.pattern.permute.xlu0 1
          %8471 = vperm.xlu0 %8470, %v8289
          %v8472 = vpop.permute.xlu0 %8471
          %8474 = vset.pattern.permute.xlu0 1
          %8475 = vperm.xlu0 %8474, %v8290
          %v8476 = vpop.permute.xlu0 %8475
          %8478 = vset.pattern.permute.xlu0 1
          %8479 = vperm.xlu0 %8478, %v8291
          %v8480 = vpop.permute.xlu0 %8479
          %8482 = vset.pattern.permute.xlu0 1
          %8483 = vperm.xlu0 %8482, %v8292
          %v8484 = vpop.permute.xlu0 %8483
          %8486 = vset.pattern.permute.xlu0 1
          %8487 = vperm.xlu0 %8486, %v8293
          %v8488 = vpop.permute.xlu0 %8487
          %8490 = vset.pattern.permute.xlu0 1
          %8491 = vperm.xlu0 %8490, %v8294
          %v8492 = vpop.permute.xlu0 %8491
          %8494 = vset.pattern.permute.xlu0 1
          %8495 = vperm.xlu0 %8494, %v8295
          %v8496 = vpop.permute.xlu0 %8495
          %8498 = vset.pattern.permute.xlu0 1
          %8499 = vperm.xlu0 %8498, %v8296
          %v8500 = vpop.permute.xlu0 %8499
          %8502 = vset.pattern.permute.xlu0 1
          %8503 = vperm.xlu0 %8502, %v8297
          %v8504 = vpop.permute.xlu0 %8503
          %8506 = vset.pattern.permute.xlu0 1
          %8507 = vperm.xlu0 %8506, %v8298
          %v8508 = vpop.permute.xlu0 %8507
          %8510 = vset.pattern.permute.xlu0 1
          %8511 = vperm.xlu0 %8510, %v8299
          %v8512 = vpop.permute.xlu0 %8511
          %8514 = vset.pattern.permute.xlu0 1
          %8515 = vperm.xlu0 %8514, %v8300
          %v8516 = vpop.permute.xlu0 %8515
          %8518 = vset.pattern.permute.xlu0 1
          %8519 = vperm.xlu0 %8518, %v8301
          %v8520 = vpop.permute.xlu0 %8519
          %8522 = vset.pattern.permute.xlu0 1
          %8523 = vperm.xlu0 %8522, %v8302
          %v8524 = vpop.permute.xlu0 %8523
          %8526 = vset.pattern.permute.xlu0 1
          %8527 = vperm.xlu0 %8526, %v8303
          %v8528 = vpop.permute.xlu0 %8527
          %v8530 = vmul.f32 %v8304, %v8468
          %v8531 = vmul.f32 %v8305, %v8472
          %v8532 = vmul.f32 %v8306, %v8476
          %v8533 = vmul.f32 %v8307, %v8480
          %v8534 = vmul.f32 %v8308, %v8484
          %v8535 = vmul.f32 %v8309, %v8488
          %v8536 = vmul.f32 %v8310, %v8492
          %v8537 = vmul.f32 %v8311, %v8496
          %v8538 = vmul.f32 %v8312, %v8500
          %v8539 = vmul.f32 %v8313, %v8504
          %v8540 = vmul.f32 %v8314, %v8508
          %v8541 = vmul.f32 %v8315, %v8512
          %v8542 = vmul.f32 %v8316, %v8516
          %v8543 = vmul.f32 %v8317, %v8520
          %v8544 = vmul.f32 %v8318, %v8524
          %v8545 = vmul.f32 %v8319, %v8528
          %vm8546 = vcmp.gt.f32.partialorder %v8530, 0.0
          %vm8547 = vcmp.gt.f32.partialorder %v8531, 0.0
          %vm8548 = vcmp.gt.f32.partialorder %v8532, 0.0
          %vm8549 = vcmp.gt.f32.partialorder %v8533, 0.0
          %vm8550 = vcmp.gt.f32.partialorder %v8534, 0.0
          %vm8551 = vcmp.gt.f32.partialorder %v8535, 0.0
          %vm8552 = vcmp.gt.f32.partialorder %v8536, 0.0
          %vm8553 = vcmp.gt.f32.partialorder %v8537, 0.0
          %vm8554 = vcmp.gt.f32.partialorder %v8538, 0.0
          %vm8555 = vcmp.gt.f32.partialorder %v8539, 0.0
          %vm8556 = vcmp.gt.f32.partialorder %v8540, 0.0
          %vm8557 = vcmp.gt.f32.partialorder %v8541, 0.0
          %vm8558 = vcmp.gt.f32.partialorder %v8542, 0.0
          %vm8559 = vcmp.gt.f32.partialorder %v8543, 0.0
          %vm8560 = vcmp.gt.f32.partialorder %v8544, 0.0
          %vm8561 = vcmp.gt.f32.partialorder %v8545, 0.0
          %s8562 = sld [smem:[#allocation5 + $0x1]]
          %v8563 = vstv %s8562
          %v8564 = vmul.f32 %v8563, %v8530
          %v8565 = vmul.f32 %v8563, %v8531
          %v8566 = vmul.f32 %v8563, %v8532
          %v8567 = vmul.f32 %v8563, %v8533
          %v8568 = vmul.f32 %v8563, %v8534
          %v8569 = vmul.f32 %v8563, %v8535
          %v8570 = vmul.f32 %v8563, %v8536
          %v8571 = vmul.f32 %v8563, %v8537
          %v8572 = vmul.f32 %v8563, %v8538
          %v8573 = vmul.f32 %v8563, %v8539
          %v8574 = vmul.f32 %v8563, %v8540
          %v8575 = vmul.f32 %v8563, %v8541
          %v8576 = vmul.f32 %v8563, %v8542
          %v8577 = vmul.f32 %v8563, %v8543
          %v8578 = vmul.f32 %v8563, %v8544
          %v8579 = vmul.f32 %v8563, %v8545
          %v8580 = vsel %vm8546, %v8530, %v8564
          %v8581 = vsel %vm8547, %v8531, %v8565
          %v8582 = vsel %vm8548, %v8532, %v8566
          %v8583 = vsel %vm8549, %v8533, %v8567
          %v8584 = vsel %vm8550, %v8534, %v8568
          %v8585 = vsel %vm8551, %v8535, %v8569
          %v8586 = vsel %vm8552, %v8536, %v8570
          %v8587 = vsel %vm8553, %v8537, %v8571
          %v8588 = vsel %vm8554, %v8538, %v8572
          %v8589 = vsel %vm8555, %v8539, %v8573
          %v8590 = vsel %vm8556, %v8540, %v8574
          %v8591 = vsel %vm8557, %v8541, %v8575
          %v8592 = vsel %vm8558, %v8542, %v8576
          %v8593 = vsel %vm8559, %v8543, %v8577
          %v8594 = vsel %vm8560, %v8544, %v8578
          %v8595 = vsel %vm8561, %v8545, %v8579
          %8596 = vset.pattern.permute.xlu0 2
          %8597 = vperm.xlu0 %8596, %v8288
          %v8598 = vpop.permute.xlu0 %8597
          %8600 = vset.pattern.permute.xlu0 2
          %8601 = vperm.xlu0 %8600, %v8289
          %v8602 = vpop.permute.xlu0 %8601
          %8604 = vset.pattern.permute.xlu0 2
          %8605 = vperm.xlu0 %8604, %v8290
          %v8606 = vpop.permute.xlu0 %8605
          %8608 = vset.pattern.permute.xlu0 2
          %8609 = vperm.xlu0 %8608, %v8291
          %v8610 = vpop.permute.xlu0 %8609
          %8612 = vset.pattern.permute.xlu0 2
          %8613 = vperm.xlu0 %8612, %v8292
          %v8614 = vpop.permute.xlu0 %8613
          %8616 = vset.pattern.permute.xlu0 2
          %8617 = vperm.xlu0 %8616, %v8293
          %v8618 = vpop.permute.xlu0 %8617
          %8620 = vset.pattern.permute.xlu0 2
          %8621 = vperm.xlu0 %8620, %v8294
          %v8622 = vpop.permute.xlu0 %8621
          %8624 = vset.pattern.permute.xlu0 2
          %8625 = vperm.xlu0 %8624, %v8295
          %v8626 = vpop.permute.xlu0 %8625
          %8628 = vset.pattern.permute.xlu0 2
          %8629 = vperm.xlu0 %8628, %v8296
          %v8630 = vpop.permute.xlu0 %8629
          %8632 = vset.pattern.permute.xlu0 2
          %8633 = vperm.xlu0 %8632, %v8297
          %v8634 = vpop.permute.xlu0 %8633
          %8636 = vset.pattern.permute.xlu0 2
          %8637 = vperm.xlu0 %8636, %v8298
          %v8638 = vpop.permute.xlu0 %8637
          %8640 = vset.pattern.permute.xlu0 2
          %8641 = vperm.xlu0 %8640, %v8299
          %v8642 = vpop.permute.xlu0 %8641
          %8644 = vset.pattern.permute.xlu0 2
          %8645 = vperm.xlu0 %8644, %v8300
          %v8646 = vpop.permute.xlu0 %8645
          %8648 = vset.pattern.permute.xlu0 2
          %8649 = vperm.xlu0 %8648, %v8301
          %v8650 = vpop.permute.xlu0 %8649
          %8652 = vset.pattern.permute.xlu0 2
          %8653 = vperm.xlu0 %8652, %v8302
          %v8654 = vpop.permute.xlu0 %8653
          %8656 = vset.pattern.permute.xlu0 2
          %8657 = vperm.xlu0 %8656, %v8303
          %v8658 = vpop.permute.xlu0 %8657
          %v8660 = vmul.f32 %v8304, %v8598
          %v8661 = vmul.f32 %v8305, %v8602
          %v8662 = vmul.f32 %v8306, %v8606
          %v8663 = vmul.f32 %v8307, %v8610
          %v8664 = vmul.f32 %v8308, %v8614
          %v8665 = vmul.f32 %v8309, %v8618
          %v8666 = vmul.f32 %v8310, %v8622
          %v8667 = vmul.f32 %v8311, %v8626
          %v8668 = vmul.f32 %v8312, %v8630
          %v8669 = vmul.f32 %v8313, %v8634
          %v8670 = vmul.f32 %v8314, %v8638
          %v8671 = vmul.f32 %v8315, %v8642
          %v8672 = vmul.f32 %v8316, %v8646
          %v8673 = vmul.f32 %v8317, %v8650
          %v8674 = vmul.f32 %v8318, %v8654
          %v8675 = vmul.f32 %v8319, %v8658
          %vm8676 = vcmp.gt.f32.partialorder %v8660, 0.0
          %vm8677 = vcmp.gt.f32.partialorder %v8661, 0.0
          %vm8678 = vcmp.gt.f32.partialorder %v8662, 0.0
          %vm8679 = vcmp.gt.f32.partialorder %v8663, 0.0
          %vm8680 = vcmp.gt.f32.partialorder %v8664, 0.0
          %vm8681 = vcmp.gt.f32.partialorder %v8665, 0.0
          %vm8682 = vcmp.gt.f32.partialorder %v8666, 0.0
          %vm8683 = vcmp.gt.f32.partialorder %v8667, 0.0
          %vm8684 = vcmp.gt.f32.partialorder %v8668, 0.0
          %vm8685 = vcmp.gt.f32.partialorder %v8669, 0.0
          %vm8686 = vcmp.gt.f32.partialorder %v8670, 0.0
          %vm8687 = vcmp.gt.f32.partialorder %v8671, 0.0
          %vm8688 = vcmp.gt.f32.partialorder %v8672, 0.0
          %vm8689 = vcmp.gt.f32.partialorder %v8673, 0.0
          %vm8690 = vcmp.gt.f32.partialorder %v8674, 0.0
          %vm8691 = vcmp.gt.f32.partialorder %v8675, 0.0
          %s8692 = sld [smem:[#allocation5 + $0x2]]
          %v8693 = vstv %s8692
          %v8694 = vmul.f32 %v8693, %v8660
          %v8695 = vmul.f32 %v8693, %v8661
          %v8696 = vmul.f32 %v8693, %v8662
          %v8697 = vmul.f32 %v8693, %v8663
          %v8698 = vmul.f32 %v8693, %v8664
          %v8699 = vmul.f32 %v8693, %v8665
          %v8700 = vmul.f32 %v8693, %v8666
          %v8701 = vmul.f32 %v8693, %v8667
          %v8702 = vmul.f32 %v8693, %v8668
          %v8703 = vmul.f32 %v8693, %v8669
          %v8704 = vmul.f32 %v8693, %v8670
          %v8705 = vmul.f32 %v8693, %v8671
          %v8706 = vmul.f32 %v8693, %v8672
          %v8707 = vmul.f32 %v8693, %v8673
          %v8708 = vmul.f32 %v8693, %v8674
          %v8709 = vmul.f32 %v8693, %v8675
          %v8710 = vsel %vm8676, %v8660, %v8694
          %v8711 = vsel %vm8677, %v8661, %v8695
          %v8712 = vsel %vm8678, %v8662, %v8696
          %v8713 = vsel %vm8679, %v8663, %v8697
          %v8714 = vsel %vm8680, %v8664, %v8698
          %v8715 = vsel %vm8681, %v8665, %v8699
          %v8716 = vsel %vm8682, %v8666, %v8700
          %v8717 = vsel %vm8683, %v8667, %v8701
          %v8718 = vsel %vm8684, %v8668, %v8702
          %v8719 = vsel %vm8685, %v8669, %v8703
          %v8720 = vsel %vm8686, %v8670, %v8704
          %v8721 = vsel %vm8687, %v8671, %v8705
          %v8722 = vsel %vm8688, %v8672, %v8706
          %v8723 = vsel %vm8689, %v8673, %v8707
          %v8724 = vsel %vm8690, %v8674, %v8708
          %v8725 = vsel %vm8691, %v8675, %v8709
          %8726 = vset.pattern.permute.xlu0 3
          %8727 = vperm.xlu0 %8726, %v8288
          %v8728 = vpop.permute.xlu0 %8727
          %8730 = vset.pattern.permute.xlu0 3
          %8731 = vperm.xlu0 %8730, %v8289
          %v8732 = vpop.permute.xlu0 %8731
          %8734 = vset.pattern.permute.xlu0 3
          %8735 = vperm.xlu0 %8734, %v8290
          %v8736 = vpop.permute.xlu0 %8735
          %8738 = vset.pattern.permute.xlu0 3
          %8739 = vperm.xlu0 %8738, %v8291
          %v8740 = vpop.permute.xlu0 %8739
          %8742 = vset.pattern.permute.xlu0 3
          %8743 = vperm.xlu0 %8742, %v8292
          %v8744 = vpop.permute.xlu0 %8743
          %8746 = vset.pattern.permute.xlu0 3
          %8747 = vperm.xlu0 %8746, %v8293
          %v8748 = vpop.permute.xlu0 %8747
          %8750 = vset.pattern.permute.xlu0 3
          %8751 = vperm.xlu0 %8750, %v8294
          %v8752 = vpop.permute.xlu0 %8751
          %8754 = vset.pattern.permute.xlu0 3
          %8755 = vperm.xlu0 %8754, %v8295
          %v8756 = vpop.permute.xlu0 %8755
          %8758 = vset.pattern.permute.xlu0 3
          %8759 = vperm.xlu0 %8758, %v8296
          %v8760 = vpop.permute.xlu0 %8759
          %8762 = vset.pattern.permute.xlu0 3
          %8763 = vperm.xlu0 %8762, %v8297
          %v8764 = vpop.permute.xlu0 %8763
          %8766 = vset.pattern.permute.xlu0 3
          %8767 = vperm.xlu0 %8766, %v8298
          %v8768 = vpop.permute.xlu0 %8767
          %8770 = vset.pattern.permute.xlu0 3
          %8771 = vperm.xlu0 %8770, %v8299
          %v8772 = vpop.permute.xlu0 %8771
          %8774 = vset.pattern.permute.xlu0 3
          %8775 = vperm.xlu0 %8774, %v8300
          %v8776 = vpop.permute.xlu0 %8775
          %8778 = vset.pattern.permute.xlu0 3
          %8779 = vperm.xlu0 %8778, %v8301
          %v8780 = vpop.permute.xlu0 %8779
          %8782 = vset.pattern.permute.xlu0 3
          %8783 = vperm.xlu0 %8782, %v8302
          %v8784 = vpop.permute.xlu0 %8783
          %8786 = vset.pattern.permute.xlu0 3
          %8787 = vperm.xlu0 %8786, %v8303
          %v8788 = vpop.permute.xlu0 %8787
          %v8790 = vmul.f32 %v8304, %v8728
          %v8791 = vmul.f32 %v8305, %v8732
          %v8792 = vmul.f32 %v8306, %v8736
          %v8793 = vmul.f32 %v8307, %v8740
          %v8794 = vmul.f32 %v8308, %v8744
          %v8795 = vmul.f32 %v8309, %v8748
          %v8796 = vmul.f32 %v8310, %v8752
          %v8797 = vmul.f32 %v8311, %v8756
          %v8798 = vmul.f32 %v8312, %v8760
          %v8799 = vmul.f32 %v8313, %v8764
          %v8800 = vmul.f32 %v8314, %v8768
          %v8801 = vmul.f32 %v8315, %v8772
          %v8802 = vmul.f32 %v8316, %v8776
          %v8803 = vmul.f32 %v8317, %v8780
          %v8804 = vmul.f32 %v8318, %v8784
          %v8805 = vmul.f32 %v8319, %v8788
          %vm8806 = vcmp.gt.f32.partialorder %v8790, 0.0
          %vm8807 = vcmp.gt.f32.partialorder %v8791, 0.0
          %vm8808 = vcmp.gt.f32.partialorder %v8792, 0.0
          %vm8809 = vcmp.gt.f32.partialorder %v8793, 0.0
          %vm8810 = vcmp.gt.f32.partialorder %v8794, 0.0
          %vm8811 = vcmp.gt.f32.partialorder %v8795, 0.0
          %vm8812 = vcmp.gt.f32.partialorder %v8796, 0.0
          %vm8813 = vcmp.gt.f32.partialorder %v8797, 0.0
          %vm8814 = vcmp.gt.f32.partialorder %v8798, 0.0
          %vm8815 = vcmp.gt.f32.partialorder %v8799, 0.0
          %vm8816 = vcmp.gt.f32.partialorder %v8800, 0.0
          %vm8817 = vcmp.gt.f32.partialorder %v8801, 0.0
          %vm8818 = vcmp.gt.f32.partialorder %v8802, 0.0
          %vm8819 = vcmp.gt.f32.partialorder %v8803, 0.0
          %vm8820 = vcmp.gt.f32.partialorder %v8804, 0.0
          %vm8821 = vcmp.gt.f32.partialorder %v8805, 0.0
          %s8822 = sld [smem:[#allocation5 + $0x3]]
          %v8823 = vstv %s8822
          %v8824 = vmul.f32 %v8823, %v8790
          %v8825 = vmul.f32 %v8823, %v8791
          %v8826 = vmul.f32 %v8823, %v8792
          %v8827 = vmul.f32 %v8823, %v8793
          %v8828 = vmul.f32 %v8823, %v8794
          %v8829 = vmul.f32 %v8823, %v8795
          %v8830 = vmul.f32 %v8823, %v8796
          %v8831 = vmul.f32 %v8823, %v8797
          %v8832 = vmul.f32 %v8823, %v8798
          %v8833 = vmul.f32 %v8823, %v8799
          %v8834 = vmul.f32 %v8823, %v8800
          %v8835 = vmul.f32 %v8823, %v8801
          %v8836 = vmul.f32 %v8823, %v8802
          %v8837 = vmul.f32 %v8823, %v8803
          %v8838 = vmul.f32 %v8823, %v8804
          %v8839 = vmul.f32 %v8823, %v8805
          %v8840 = vsel %vm8806, %v8790, %v8824
          %v8841 = vsel %vm8807, %v8791, %v8825
          %v8842 = vsel %vm8808, %v8792, %v8826
          %v8843 = vsel %vm8809, %v8793, %v8827
          %v8844 = vsel %vm8810, %v8794, %v8828
          %v8845 = vsel %vm8811, %v8795, %v8829
          %v8846 = vsel %vm8812, %v8796, %v8830
          %v8847 = vsel %vm8813, %v8797, %v8831
          %v8848 = vsel %vm8814, %v8798, %v8832
          %v8849 = vsel %vm8815, %v8799, %v8833
          %v8850 = vsel %vm8816, %v8800, %v8834
          %v8851 = vsel %vm8817, %v8801, %v8835
          %v8852 = vsel %vm8818, %v8802, %v8836
          %v8853 = vsel %vm8819, %v8803, %v8837
          %v8854 = vsel %vm8820, %v8804, %v8838
          %v8855 = vsel %vm8821, %v8805, %v8839
          %v8856 = vld [vmem:[#allocation4 + $0x8] sm:$0xff]
          %v8857 = vld [vmem:[#allocation4 + $0x18] sm:$0xff]
          %v8858 = vld [vmem:[#allocation4 + $0x28] sm:$0xff]
          %v8859 = vld [vmem:[#allocation4 + $0x38] sm:$0xff]
          %v8860 = vld [vmem:[#allocation4 + $0x48] sm:$0xff]
          %v8861 = vld [vmem:[#allocation4 + $0x58] sm:$0xff]
          %v8862 = vld [vmem:[#allocation4 + $0x68] sm:$0xff]
          %v8863 = vld [vmem:[#allocation4 + $0x78] sm:$0xff]
          %v8864 = vld [vmem:[#allocation4 + $0x88] sm:$0xff]
          %v8865 = vld [vmem:[#allocation4 + $0x98] sm:$0xff]
          %v8866 = vld [vmem:[#allocation4 + $0xa8] sm:$0xff]
          %v8867 = vld [vmem:[#allocation4 + $0xb8] sm:$0xff]
          %v8868 = vld [vmem:[#allocation4 + $0xc8] sm:$0xff]
          %v8869 = vld [vmem:[#allocation4 + $0xd8] sm:$0xff]
          %v8870 = vld [vmem:[#allocation4 + $0xe8] sm:$0xff]
          %v8871 = vld [vmem:[#allocation4 + $0xf8] sm:$0xff]
          %8872 = vset.pattern.permute.xlu0 4
          %8873 = vperm.xlu0 %8872, %v8288
          %v8874 = vpop.permute.xlu0 %8873
          %8876 = vset.pattern.permute.xlu0 4
          %8877 = vperm.xlu0 %8876, %v8289
          %v8878 = vpop.permute.xlu0 %8877
          %8880 = vset.pattern.permute.xlu0 4
          %8881 = vperm.xlu0 %8880, %v8290
          %v8882 = vpop.permute.xlu0 %8881
          %8884 = vset.pattern.permute.xlu0 4
          %8885 = vperm.xlu0 %8884, %v8291
          %v8886 = vpop.permute.xlu0 %8885
          %8888 = vset.pattern.permute.xlu0 4
          %8889 = vperm.xlu0 %8888, %v8292
          %v8890 = vpop.permute.xlu0 %8889
          %8892 = vset.pattern.permute.xlu0 4
          %8893 = vperm.xlu0 %8892, %v8293
          %v8894 = vpop.permute.xlu0 %8893
          %8896 = vset.pattern.permute.xlu0 4
          %8897 = vperm.xlu0 %8896, %v8294
          %v8898 = vpop.permute.xlu0 %8897
          %8900 = vset.pattern.permute.xlu0 4
          %8901 = vperm.xlu0 %8900, %v8295
          %v8902 = vpop.permute.xlu0 %8901
          %8904 = vset.pattern.permute.xlu0 4
          %8905 = vperm.xlu0 %8904, %v8296
          %v8906 = vpop.permute.xlu0 %8905
          %8908 = vset.pattern.permute.xlu0 4
          %8909 = vperm.xlu0 %8908, %v8297
          %v8910 = vpop.permute.xlu0 %8909
          %8912 = vset.pattern.permute.xlu0 4
          %8913 = vperm.xlu0 %8912, %v8298
          %v8914 = vpop.permute.xlu0 %8913
          %8916 = vset.pattern.permute.xlu0 4
          %8917 = vperm.xlu0 %8916, %v8299
          %v8918 = vpop.permute.xlu0 %8917
          %8920 = vset.pattern.permute.xlu0 4
          %8921 = vperm.xlu0 %8920, %v8300
          %v8922 = vpop.permute.xlu0 %8921
          %8924 = vset.pattern.permute.xlu0 4
          %8925 = vperm.xlu0 %8924, %v8301
          %v8926 = vpop.permute.xlu0 %8925
          %8928 = vset.pattern.permute.xlu0 4
          %8929 = vperm.xlu0 %8928, %v8302
          %v8930 = vpop.permute.xlu0 %8929
          %8932 = vset.pattern.permute.xlu0 4
          %8933 = vperm.xlu0 %8932, %v8303
          %v8934 = vpop.permute.xlu0 %8933
          %v8936 = vmul.f32 %v8856, %v8874
          %v8937 = vmul.f32 %v8857, %v8878
          %v8938 = vmul.f32 %v8858, %v8882
          %v8939 = vmul.f32 %v8859, %v8886
          %v8940 = vmul.f32 %v8860, %v8890
          %v8941 = vmul.f32 %v8861, %v8894
          %v8942 = vmul.f32 %v8862, %v8898
          %v8943 = vmul.f32 %v8863, %v8902
          %v8944 = vmul.f32 %v8864, %v8906
          %v8945 = vmul.f32 %v8865, %v8910
          %v8946 = vmul.f32 %v8866, %v8914
          %v8947 = vmul.f32 %v8867, %v8918
          %v8948 = vmul.f32 %v8868, %v8922
          %v8949 = vmul.f32 %v8869, %v8926
          %v8950 = vmul.f32 %v8870, %v8930
          %v8951 = vmul.f32 %v8871, %v8934
          %vm8952 = vcmp.gt.f32.partialorder %v8936, 0.0
          %vm8953 = vcmp.gt.f32.partialorder %v8937, 0.0
          %vm8954 = vcmp.gt.f32.partialorder %v8938, 0.0
          %vm8955 = vcmp.gt.f32.partialorder %v8939, 0.0
          %vm8956 = vcmp.gt.f32.partialorder %v8940, 0.0
          %vm8957 = vcmp.gt.f32.partialorder %v8941, 0.0
          %vm8958 = vcmp.gt.f32.partialorder %v8942, 0.0
          %vm8959 = vcmp.gt.f32.partialorder %v8943, 0.0
          %vm8960 = vcmp.gt.f32.partialorder %v8944, 0.0
          %vm8961 = vcmp.gt.f32.partialorder %v8945, 0.0
          %vm8962 = vcmp.gt.f32.partialorder %v8946, 0.0
          %vm8963 = vcmp.gt.f32.partialorder %v8947, 0.0
          %vm8964 = vcmp.gt.f32.partialorder %v8948, 0.0
          %vm8965 = vcmp.gt.f32.partialorder %v8949, 0.0
          %vm8966 = vcmp.gt.f32.partialorder %v8950, 0.0
          %vm8967 = vcmp.gt.f32.partialorder %v8951, 0.0
          %s8968 = sld [smem:[#allocation5 + $0x4]]
          %v8969 = vstv %s8968
          %v8970 = vmul.f32 %v8969, %v8936
          %v8971 = vmul.f32 %v8969, %v8937
          %v8972 = vmul.f32 %v8969, %v8938
          %v8973 = vmul.f32 %v8969, %v8939
          %v8974 = vmul.f32 %v8969, %v8940
          %v8975 = vmul.f32 %v8969, %v8941
          %v8976 = vmul.f32 %v8969, %v8942
          %v8977 = vmul.f32 %v8969, %v8943
          %v8978 = vmul.f32 %v8969, %v8944
          %v8979 = vmul.f32 %v8969, %v8945
          %v8980 = vmul.f32 %v8969, %v8946
          %v8981 = vmul.f32 %v8969, %v8947
          %v8982 = vmul.f32 %v8969, %v8948
          %v8983 = vmul.f32 %v8969, %v8949
          %v8984 = vmul.f32 %v8969, %v8950
          %v8985 = vmul.f32 %v8969, %v8951
          %v8986 = vsel %vm8952, %v8936, %v8970
          %v8987 = vsel %vm8953, %v8937, %v8971
          %v8988 = vsel %vm8954, %v8938, %v8972
          %v8989 = vsel %vm8955, %v8939, %v8973
          %v8990 = vsel %vm8956, %v8940, %v8974
          %v8991 = vsel %vm8957, %v8941, %v8975
          %v8992 = vsel %vm8958, %v8942, %v8976
          %v8993 = vsel %vm8959, %v8943, %v8977
          %v8994 = vsel %vm8960, %v8944, %v8978
          %v8995 = vsel %vm8961, %v8945, %v8979
          %v8996 = vsel %vm8962, %v8946, %v8980
          %v8997 = vsel %vm8963, %v8947, %v8981
          %v8998 = vsel %vm8964, %v8948, %v8982
          %v8999 = vsel %vm8965, %v8949, %v8983
          %v9000 = vsel %vm8966, %v8950, %v8984
          %v9001 = vsel %vm8967, %v8951, %v8985
          %9002 = vset.pattern.permute.xlu0 5
          %9003 = vperm.xlu0 %9002, %v8288
          %v9004 = vpop.permute.xlu0 %9003
          %9006 = vset.pattern.permute.xlu0 5
          %9007 = vperm.xlu0 %9006, %v8289
          %v9008 = vpop.permute.xlu0 %9007
          %9010 = vset.pattern.permute.xlu0 5
          %9011 = vperm.xlu0 %9010, %v8290
          %v9012 = vpop.permute.xlu0 %9011
          %9014 = vset.pattern.permute.xlu0 5
          %9015 = vperm.xlu0 %9014, %v8291
          %v9016 = vpop.permute.xlu0 %9015
          %9018 = vset.pattern.permute.xlu0 5
          %9019 = vperm.xlu0 %9018, %v8292
          %v9020 = vpop.permute.xlu0 %9019
          %9022 = vset.pattern.permute.xlu0 5
          %9023 = vperm.xlu0 %9022, %v8293
          %v9024 = vpop.permute.xlu0 %9023
          %9026 = vset.pattern.permute.xlu0 5
          %9027 = vperm.xlu0 %9026, %v8294
          %v9028 = vpop.permute.xlu0 %9027
          %9030 = vset.pattern.permute.xlu0 5
          %9031 = vperm.xlu0 %9030, %v8295
          %v9032 = vpop.permute.xlu0 %9031
          %9034 = vset.pattern.permute.xlu0 5
          %9035 = vperm.xlu0 %9034, %v8296
          %v9036 = vpop.permute.xlu0 %9035
          %9038 = vset.pattern.permute.xlu0 5
          %9039 = vperm.xlu0 %9038, %v8297
          %v9040 = vpop.permute.xlu0 %9039
          %9042 = vset.pattern.permute.xlu0 5
          %9043 = vperm.xlu0 %9042, %v8298
          %v9044 = vpop.permute.xlu0 %9043
          %9046 = vset.pattern.permute.xlu0 5
          %9047 = vperm.xlu0 %9046, %v8299
          %v9048 = vpop.permute.xlu0 %9047
          %9050 = vset.pattern.permute.xlu0 5
          %9051 = vperm.xlu0 %9050, %v8300
          %v9052 = vpop.permute.xlu0 %9051
          %9054 = vset.pattern.permute.xlu0 5
          %9055 = vperm.xlu0 %9054, %v8301
          %v9056 = vpop.permute.xlu0 %9055
          %9058 = vset.pattern.permute.xlu0 5
          %9059 = vperm.xlu0 %9058, %v8302
          %v9060 = vpop.permute.xlu0 %9059
          %9062 = vset.pattern.permute.xlu0 5
          %9063 = vperm.xlu0 %9062, %v8303
          %v9064 = vpop.permute.xlu0 %9063
          %v9066 = vmul.f32 %v8856, %v9004
          %v9067 = vmul.f32 %v8857, %v9008
          %v9068 = vmul.f32 %v8858, %v9012
          %v9069 = vmul.f32 %v8859, %v9016
          %v9070 = vmul.f32 %v8860, %v9020
          %v9071 = vmul.f32 %v8861, %v9024
          %v9072 = vmul.f32 %v8862, %v9028
          %v9073 = vmul.f32 %v8863, %v9032
          %v9074 = vmul.f32 %v8864, %v9036
          %v9075 = vmul.f32 %v8865, %v9040
          %v9076 = vmul.f32 %v8866, %v9044
          %v9077 = vmul.f32 %v8867, %v9048
          %v9078 = vmul.f32 %v8868, %v9052
          %v9079 = vmul.f32 %v8869, %v9056
          %v9080 = vmul.f32 %v8870, %v9060
          %v9081 = vmul.f32 %v8871, %v9064
          %vm9082 = vcmp.gt.f32.partialorder %v9066, 0.0
          %vm9083 = vcmp.gt.f32.partialorder %v9067, 0.0
          %vm9084 = vcmp.gt.f32.partialorder %v9068, 0.0
          %vm9085 = vcmp.gt.f32.partialorder %v9069, 0.0
          %vm9086 = vcmp.gt.f32.partialorder %v9070, 0.0
          %vm9087 = vcmp.gt.f32.partialorder %v9071, 0.0
          %vm9088 = vcmp.gt.f32.partialorder %v9072, 0.0
          %vm9089 = vcmp.gt.f32.partialorder %v9073, 0.0
          %vm9090 = vcmp.gt.f32.partialorder %v9074, 0.0
          %vm9091 = vcmp.gt.f32.partialorder %v9075, 0.0
          %vm9092 = vcmp.gt.f32.partialorder %v9076, 0.0
          %vm9093 = vcmp.gt.f32.partialorder %v9077, 0.0
          %vm9094 = vcmp.gt.f32.partialorder %v9078, 0.0
          %vm9095 = vcmp.gt.f32.partialorder %v9079, 0.0
          %vm9096 = vcmp.gt.f32.partialorder %v9080, 0.0
          %vm9097 = vcmp.gt.f32.partialorder %v9081, 0.0
          %s9098 = sld [smem:[#allocation5 + $0x5]]
          %v9099 = vstv %s9098
          %v9100 = vmul.f32 %v9099, %v9066
          %v9101 = vmul.f32 %v9099, %v9067
          %v9102 = vmul.f32 %v9099, %v9068
          %v9103 = vmul.f32 %v9099, %v9069
          %v9104 = vmul.f32 %v9099, %v9070
          %v9105 = vmul.f32 %v9099, %v9071
          %v9106 = vmul.f32 %v9099, %v9072
          %v9107 = vmul.f32 %v9099, %v9073
          %v9108 = vmul.f32 %v9099, %v9074
          %v9109 = vmul.f32 %v9099, %v9075
          %v9110 = vmul.f32 %v9099, %v9076
          %v9111 = vmul.f32 %v9099, %v9077
          %v9112 = vmul.f32 %v9099, %v9078
          %v9113 = vmul.f32 %v9099, %v9079
          %v9114 = vmul.f32 %v9099, %v9080
          %v9115 = vmul.f32 %v9099, %v9081
          %v9116 = vsel %vm9082, %v9066, %v9100
          %v9117 = vsel %vm9083, %v9067, %v9101
          %v9118 = vsel %vm9084, %v9068, %v9102
          %v9119 = vsel %vm9085, %v9069, %v9103
          %v9120 = vsel %vm9086, %v9070, %v9104
          %v9121 = vsel %vm9087, %v9071, %v9105
          %v9122 = vsel %vm9088, %v9072, %v9106
          %v9123 = vsel %vm9089, %v9073, %v9107
          %v9124 = vsel %vm9090, %v9074, %v9108
          %v9125 = vsel %vm9091, %v9075, %v9109
          %v9126 = vsel %vm9092, %v9076, %v9110
          %v9127 = vsel %vm9093, %v9077, %v9111
          %v9128 = vsel %vm9094, %v9078, %v9112
          %v9129 = vsel %vm9095, %v9079, %v9113
          %v9130 = vsel %vm9096, %v9080, %v9114
          %v9131 = vsel %vm9097, %v9081, %v9115
          %9132 = vset.pattern.permute.xlu0 6
          %9133 = vperm.xlu0 %9132, %v8288
          %v9134 = vpop.permute.xlu0 %9133
          %9136 = vset.pattern.permute.xlu0 6
          %9137 = vperm.xlu0 %9136, %v8289
          %v9138 = vpop.permute.xlu0 %9137
          %9140 = vset.pattern.permute.xlu0 6
          %9141 = vperm.xlu0 %9140, %v8290
          %v9142 = vpop.permute.xlu0 %9141
          %9144 = vset.pattern.permute.xlu0 6
          %9145 = vperm.xlu0 %9144, %v8291
          %v9146 = vpop.permute.xlu0 %9145
          %9148 = vset.pattern.permute.xlu0 6
          %9149 = vperm.xlu0 %9148, %v8292
          %v9150 = vpop.permute.xlu0 %9149
          %9152 = vset.pattern.permute.xlu0 6
          %9153 = vperm.xlu0 %9152, %v8293
          %v9154 = vpop.permute.xlu0 %9153
          %9156 = vset.pattern.permute.xlu0 6
          %9157 = vperm.xlu0 %9156, %v8294
          %v9158 = vpop.permute.xlu0 %9157
          %9160 = vset.pattern.permute.xlu0 6
          %9161 = vperm.xlu0 %9160, %v8295
          %v9162 = vpop.permute.xlu0 %9161
          %9164 = vset.pattern.permute.xlu0 6
          %9165 = vperm.xlu0 %9164, %v8296
          %v9166 = vpop.permute.xlu0 %9165
          %9168 = vset.pattern.permute.xlu0 6
          %9169 = vperm.xlu0 %9168, %v8297
          %v9170 = vpop.permute.xlu0 %9169
          %9172 = vset.pattern.permute.xlu0 6
          %9173 = vperm.xlu0 %9172, %v8298
          %v9174 = vpop.permute.xlu0 %9173
          %9176 = vset.pattern.permute.xlu0 6
          %9177 = vperm.xlu0 %9176, %v8299
          %v9178 = vpop.permute.xlu0 %9177
          %9180 = vset.pattern.permute.xlu0 6
          %9181 = vperm.xlu0 %9180, %v8300
          %v9182 = vpop.permute.xlu0 %9181
          %9184 = vset.pattern.permute.xlu0 6
          %9185 = vperm.xlu0 %9184, %v8301
          %v9186 = vpop.permute.xlu0 %9185
          %9188 = vset.pattern.permute.xlu0 6
          %9189 = vperm.xlu0 %9188, %v8302
          %v9190 = vpop.permute.xlu0 %9189
          %9192 = vset.pattern.permute.xlu0 6
          %9193 = vperm.xlu0 %9192, %v8303
          %v9194 = vpop.permute.xlu0 %9193
          %v9196 = vmul.f32 %v8856, %v9134
          %v9197 = vmul.f32 %v8857, %v9138
          %v9198 = vmul.f32 %v8858, %v9142
          %v9199 = vmul.f32 %v8859, %v9146
          %v9200 = vmul.f32 %v8860, %v9150
          %v9201 = vmul.f32 %v8861, %v9154
          %v9202 = vmul.f32 %v8862, %v9158
          %v9203 = vmul.f32 %v8863, %v9162
          %v9204 = vmul.f32 %v8864, %v9166
          %v9205 = vmul.f32 %v8865, %v9170
          %v9206 = vmul.f32 %v8866, %v9174
          %v9207 = vmul.f32 %v8867, %v9178
          %v9208 = vmul.f32 %v8868, %v9182
          %v9209 = vmul.f32 %v8869, %v9186
          %v9210 = vmul.f32 %v8870, %v9190
          %v9211 = vmul.f32 %v8871, %v9194
          %vm9212 = vcmp.gt.f32.partialorder %v9196, 0.0
          %vm9213 = vcmp.gt.f32.partialorder %v9197, 0.0
          %vm9214 = vcmp.gt.f32.partialorder %v9198, 0.0
          %vm9215 = vcmp.gt.f32.partialorder %v9199, 0.0
          %vm9216 = vcmp.gt.f32.partialorder %v9200, 0.0
          %vm9217 = vcmp.gt.f32.partialorder %v9201, 0.0
          %vm9218 = vcmp.gt.f32.partialorder %v9202, 0.0
          %vm9219 = vcmp.gt.f32.partialorder %v9203, 0.0
          %vm9220 = vcmp.gt.f32.partialorder %v9204, 0.0
          %vm9221 = vcmp.gt.f32.partialorder %v9205, 0.0
          %vm9222 = vcmp.gt.f32.partialorder %v9206, 0.0
          %vm9223 = vcmp.gt.f32.partialorder %v9207, 0.0
          %vm9224 = vcmp.gt.f32.partialorder %v9208, 0.0
          %vm9225 = vcmp.gt.f32.partialorder %v9209, 0.0
          %vm9226 = vcmp.gt.f32.partialorder %v9210, 0.0
          %vm9227 = vcmp.gt.f32.partialorder %v9211, 0.0
          %s9228 = sld [smem:[#allocation5 + $0x6]]
          %v9229 = vstv %s9228
          %v9230 = vmul.f32 %v9229, %v9196
          %v9231 = vmul.f32 %v9229, %v9197
          %v9232 = vmul.f32 %v9229, %v9198
          %v9233 = vmul.f32 %v9229, %v9199
          %v9234 = vmul.f32 %v9229, %v9200
          %v9235 = vmul.f32 %v9229, %v9201
          %v9236 = vmul.f32 %v9229, %v9202
          %v9237 = vmul.f32 %v9229, %v9203
          %v9238 = vmul.f32 %v9229, %v9204
          %v9239 = vmul.f32 %v9229, %v9205
          %v9240 = vmul.f32 %v9229, %v9206
          %v9241 = vmul.f32 %v9229, %v9207
          %v9242 = vmul.f32 %v9229, %v9208
          %v9243 = vmul.f32 %v9229, %v9209
          %v9244 = vmul.f32 %v9229, %v9210
          %v9245 = vmul.f32 %v9229, %v9211
          %v9246 = vsel %vm9212, %v9196, %v9230
          %v9247 = vsel %vm9213, %v9197, %v9231
          %v9248 = vsel %vm9214, %v9198, %v9232
          %v9249 = vsel %vm9215, %v9199, %v9233
          %v9250 = vsel %vm9216, %v9200, %v9234
          %v9251 = vsel %vm9217, %v9201, %v9235
          %v9252 = vsel %vm9218, %v9202, %v9236
          %v9253 = vsel %vm9219, %v9203, %v9237
          %v9254 = vsel %vm9220, %v9204, %v9238
          %v9255 = vsel %vm9221, %v9205, %v9239
          %v9256 = vsel %vm9222, %v9206, %v9240
          %v9257 = vsel %vm9223, %v9207, %v9241
          %v9258 = vsel %vm9224, %v9208, %v9242
          %v9259 = vsel %vm9225, %v9209, %v9243
          %v9260 = vsel %vm9226, %v9210, %v9244
          %v9261 = vsel %vm9227, %v9211, %v9245
          %9262 = vset.pattern.permute.xlu0 7
          %9263 = vperm.xlu0 %9262, %v8288
          %v9264 = vpop.permute.xlu0 %9263
          %9266 = vset.pattern.permute.xlu0 7
          %9267 = vperm.xlu0 %9266, %v8289
          %v9268 = vpop.permute.xlu0 %9267
          %9270 = vset.pattern.permute.xlu0 7
          %9271 = vperm.xlu0 %9270, %v8290
          %v9272 = vpop.permute.xlu0 %9271
          %9274 = vset.pattern.permute.xlu0 7
          %9275 = vperm.xlu0 %9274, %v8291
          %v9276 = vpop.permute.xlu0 %9275
          %9278 = vset.pattern.permute.xlu0 7
          %9279 = vperm.xlu0 %9278, %v8292
          %v9280 = vpop.permute.xlu0 %9279
          %9282 = vset.pattern.permute.xlu0 7
          %9283 = vperm.xlu0 %9282, %v8293
          %v9284 = vpop.permute.xlu0 %9283
          %9286 = vset.pattern.permute.xlu0 7
          %9287 = vperm.xlu0 %9286, %v8294
          %v9288 = vpop.permute.xlu0 %9287
          %9290 = vset.pattern.permute.xlu0 7
          %9291 = vperm.xlu0 %9290, %v8295
          %v9292 = vpop.permute.xlu0 %9291
          %9294 = vset.pattern.permute.xlu0 7
          %9295 = vperm.xlu0 %9294, %v8296
          %v9296 = vpop.permute.xlu0 %9295
          %9298 = vset.pattern.permute.xlu0 7
          %9299 = vperm.xlu0 %9298, %v8297
          %v9300 = vpop.permute.xlu0 %9299
          %9302 = vset.pattern.permute.xlu0 7
          %9303 = vperm.xlu0 %9302, %v8298
          %v9304 = vpop.permute.xlu0 %9303
          %9306 = vset.pattern.permute.xlu0 7
          %9307 = vperm.xlu0 %9306, %v8299
          %v9308 = vpop.permute.xlu0 %9307
          %9310 = vset.pattern.permute.xlu0 7
          %9311 = vperm.xlu0 %9310, %v8300
          %v9312 = vpop.permute.xlu0 %9311
          %9314 = vset.pattern.permute.xlu0 7
          %9315 = vperm.xlu0 %9314, %v8301
          %v9316 = vpop.permute.xlu0 %9315
          %9318 = vset.pattern.permute.xlu0 7
          %9319 = vperm.xlu0 %9318, %v8302
          %v9320 = vpop.permute.xlu0 %9319
          %9322 = vset.pattern.permute.xlu0 7
          %9323 = vperm.xlu0 %9322, %v8303
          %v9324 = vpop.permute.xlu0 %9323
          %v9326 = vmul.f32 %v8856, %v9264
          %v9327 = vmul.f32 %v8857, %v9268
          %v9328 = vmul.f32 %v8858, %v9272
          %v9329 = vmul.f32 %v8859, %v9276
          %v9330 = vmul.f32 %v8860, %v9280
          %v9331 = vmul.f32 %v8861, %v9284
          %v9332 = vmul.f32 %v8862, %v9288
          %v9333 = vmul.f32 %v8863, %v9292
          %v9334 = vmul.f32 %v8864, %v9296
          %v9335 = vmul.f32 %v8865, %v9300
          %v9336 = vmul.f32 %v8866, %v9304
          %v9337 = vmul.f32 %v8867, %v9308
          %v9338 = vmul.f32 %v8868, %v9312
          %v9339 = vmul.f32 %v8869, %v9316
          %v9340 = vmul.f32 %v8870, %v9320
          %v9341 = vmul.f32 %v8871, %v9324
          %vm9342 = vcmp.gt.f32.partialorder %v9326, 0.0
          %vm9343 = vcmp.gt.f32.partialorder %v9327, 0.0
          %vm9344 = vcmp.gt.f32.partialorder %v9328, 0.0
          %vm9345 = vcmp.gt.f32.partialorder %v9329, 0.0
          %vm9346 = vcmp.gt.f32.partialorder %v9330, 0.0
          %vm9347 = vcmp.gt.f32.partialorder %v9331, 0.0
          %vm9348 = vcmp.gt.f32.partialorder %v9332, 0.0
          %vm9349 = vcmp.gt.f32.partialorder %v9333, 0.0
          %vm9350 = vcmp.gt.f32.partialorder %v9334, 0.0
          %vm9351 = vcmp.gt.f32.partialorder %v9335, 0.0
          %vm9352 = vcmp.gt.f32.partialorder %v9336, 0.0
          %vm9353 = vcmp.gt.f32.partialorder %v9337, 0.0
          %vm9354 = vcmp.gt.f32.partialorder %v9338, 0.0
          %vm9355 = vcmp.gt.f32.partialorder %v9339, 0.0
          %vm9356 = vcmp.gt.f32.partialorder %v9340, 0.0
          %vm9357 = vcmp.gt.f32.partialorder %v9341, 0.0
          %s9358 = sld [smem:[#allocation5 + $0x7]]
          %v9359 = vstv %s9358
          %v9360 = vmul.f32 %v9359, %v9326
          %v9361 = vmul.f32 %v9359, %v9327
          %v9362 = vmul.f32 %v9359, %v9328
          %v9363 = vmul.f32 %v9359, %v9329
          %v9364 = vmul.f32 %v9359, %v9330
          %v9365 = vmul.f32 %v9359, %v9331
          %v9366 = vmul.f32 %v9359, %v9332
          %v9367 = vmul.f32 %v9359, %v9333
          %v9368 = vmul.f32 %v9359, %v9334
          %v9369 = vmul.f32 %v9359, %v9335
          %v9370 = vmul.f32 %v9359, %v9336
          %v9371 = vmul.f32 %v9359, %v9337
          %v9372 = vmul.f32 %v9359, %v9338
          %v9373 = vmul.f32 %v9359, %v9339
          %v9374 = vmul.f32 %v9359, %v9340
          %v9375 = vmul.f32 %v9359, %v9341
          %v9376 = vsel %vm9342, %v9326, %v9360
          %v9377 = vsel %vm9343, %v9327, %v9361
          %v9378 = vsel %vm9344, %v9328, %v9362
          %v9379 = vsel %vm9345, %v9329, %v9363
          %v9380 = vsel %vm9346, %v9330, %v9364
          %v9381 = vsel %vm9347, %v9331, %v9365
          %v9382 = vsel %vm9348, %v9332, %v9366
          %v9383 = vsel %vm9349, %v9333, %v9367
          %v9384 = vsel %vm9350, %v9334, %v9368
          %v9385 = vsel %vm9351, %v9335, %v9369
          %v9386 = vsel %vm9352, %v9336, %v9370
          %v9387 = vsel %vm9353, %v9337, %v9371
          %v9388 = vsel %vm9354, %v9338, %v9372
          %v9389 = vsel %vm9355, %v9339, %v9373
          %v9390 = vsel %vm9356, %v9340, %v9374
          %v9391 = vsel %vm9357, %v9341, %v9375
          %v9392 = vsel %vm1958, %v8450, %v8580
          %v9393 = vsel %vm1958, %v8451, %v8581
          %v9394 = vsel %vm1958, %v8452, %v8582
          %v9395 = vsel %vm1958, %v8453, %v8583
          %v9396 = vsel %vm1958, %v8454, %v8584
          %v9397 = vsel %vm1958, %v8455, %v8585
          %v9398 = vsel %vm1958, %v8456, %v8586
          %v9399 = vsel %vm1958, %v8457, %v8587
          %v9400 = vsel %vm1958, %v8458, %v8588
          %v9401 = vsel %vm1958, %v8459, %v8589
          %v9402 = vsel %vm1958, %v8460, %v8590
          %v9403 = vsel %vm1958, %v8461, %v8591
          %v9404 = vsel %vm1958, %v8462, %v8592
          %v9405 = vsel %vm1958, %v8463, %v8593
          %v9406 = vsel %vm1958, %v8464, %v8594
          %v9407 = vsel %vm1958, %v8465, %v8595
          %vm9408 = vcmask 523264
          %v9409 = vsel %vm9408, %v9392, %v8710
          %v9410 = vsel %vm9408, %v9393, %v8711
          %v9411 = vsel %vm9408, %v9394, %v8712
          %v9412 = vsel %vm9408, %v9395, %v8713
          %v9413 = vsel %vm9408, %v9396, %v8714
          %v9414 = vsel %vm9408, %v9397, %v8715
          %v9415 = vsel %vm9408, %v9398, %v8716
          %v9416 = vsel %vm9408, %v9399, %v8717
          %v9417 = vsel %vm9408, %v9400, %v8718
          %v9418 = vsel %vm9408, %v9401, %v8719
          %v9419 = vsel %vm9408, %v9402, %v8720
          %v9420 = vsel %vm9408, %v9403, %v8721
          %v9421 = vsel %vm9408, %v9404, %v8722
          %v9422 = vsel %vm9408, %v9405, %v8723
          %v9423 = vsel %vm9408, %v9406, %v8724
          %v9424 = vsel %vm9408, %v9407, %v8725
          %vm9425 = vcmask 785408
          %v9426 = vsel %vm9425, %v9409, %v8840
          %v9427 = vsel %vm9425, %v9410, %v8841
          %v9428 = vsel %vm9425, %v9411, %v8842
          %v9429 = vsel %vm9425, %v9412, %v8843
          %v9430 = vsel %vm9425, %v9413, %v8844
          %v9431 = vsel %vm9425, %v9414, %v8845
          %v9432 = vsel %vm9425, %v9415, %v8846
          %v9433 = vsel %vm9425, %v9416, %v8847
          %v9434 = vsel %vm9425, %v9417, %v8848
          %v9435 = vsel %vm9425, %v9418, %v8849
          %v9436 = vsel %vm9425, %v9419, %v8850
          %v9437 = vsel %vm9425, %v9420, %v8851
          %v9438 = vsel %vm9425, %v9421, %v8852
          %v9439 = vsel %vm9425, %v9422, %v8853
          %v9440 = vsel %vm9425, %v9423, %v8854
          %v9441 = vsel %vm9425, %v9424, %v8855
          %v9442 = vsel %vm1958, %v8986, %v9116
          %v9443 = vsel %vm1958, %v8987, %v9117
          %v9444 = vsel %vm1958, %v8988, %v9118
          %v9445 = vsel %vm1958, %v8989, %v9119
          %v9446 = vsel %vm1958, %v8990, %v9120
          %v9447 = vsel %vm1958, %v8991, %v9121
          %v9448 = vsel %vm1958, %v8992, %v9122
          %v9449 = vsel %vm1958, %v8993, %v9123
          %v9450 = vsel %vm1958, %v8994, %v9124
          %v9451 = vsel %vm1958, %v8995, %v9125
          %v9452 = vsel %vm1958, %v8996, %v9126
          %v9453 = vsel %vm1958, %v8997, %v9127
          %v9454 = vsel %vm1958, %v8998, %v9128
          %v9455 = vsel %vm1958, %v8999, %v9129
          %v9456 = vsel %vm1958, %v9000, %v9130
          %v9457 = vsel %vm1958, %v9001, %v9131
          %v9458 = vsel %vm9408, %v9442, %v9246
          %v9459 = vsel %vm9408, %v9443, %v9247
          %v9460 = vsel %vm9408, %v9444, %v9248
          %v9461 = vsel %vm9408, %v9445, %v9249
          %v9462 = vsel %vm9408, %v9446, %v9250
          %v9463 = vsel %vm9408, %v9447, %v9251
          %v9464 = vsel %vm9408, %v9448, %v9252
          %v9465 = vsel %vm9408, %v9449, %v9253
          %v9466 = vsel %vm9408, %v9450, %v9254
          %v9467 = vsel %vm9408, %v9451, %v9255
          %v9468 = vsel %vm9408, %v9452, %v9256
          %v9469 = vsel %vm9408, %v9453, %v9257
          %v9470 = vsel %vm9408, %v9454, %v9258
          %v9471 = vsel %vm9408, %v9455, %v9259
          %v9472 = vsel %vm9408, %v9456, %v9260
          %v9473 = vsel %vm9408, %v9457, %v9261
          %v9474 = vsel %vm9425, %v9458, %v9376
          %v9475 = vsel %vm9425, %v9459, %v9377
          %v9476 = vsel %vm9425, %v9460, %v9378
          %v9477 = vsel %vm9425, %v9461, %v9379
          %v9478 = vsel %vm9425, %v9462, %v9380
          %v9479 = vsel %vm9425, %v9463, %v9381
          %v9480 = vsel %vm9425, %v9464, %v9382
          %v9481 = vsel %vm9425, %v9465, %v9383
          %v9482 = vsel %vm9425, %v9466, %v9384
          %v9483 = vsel %vm9425, %v9467, %v9385
          %v9484 = vsel %vm9425, %v9468, %v9386
          %v9485 = vsel %vm9425, %v9469, %v9387
          %v9486 = vsel %vm9425, %v9470, %v9388
          %v9487 = vsel %vm9425, %v9471, %v9389
          %v9488 = vsel %vm9425, %v9472, %v9390
          %v9489 = vsel %vm9425, %v9473, %v9391
          %9490 = vst [vmem:[%s536] sm:$0xff] %v9426
          %9491 = vst [vmem:[%s536 + $0x8] sm:$0xff] %v9474
          %9492 = vst [vmem:[%s536 + $0x10] sm:$0xff] %v9427
          %9493 = vst [vmem:[%s536 + $0x18] sm:$0xff] %v9475
          %9494 = vst [vmem:[%s536 + $0x20] sm:$0xff] %v9428
          %9495 = vst [vmem:[%s536 + $0x28] sm:$0xff] %v9476
          %9496 = vst [vmem:[%s536 + $0x30] sm:$0xff] %v9429
          %9497 = vst [vmem:[%s536 + $0x38] sm:$0xff] %v9477
          %9498 = vst [vmem:[%s536 + $0x40] sm:$0xff] %v9430
          %9499 = vst [vmem:[%s536 + $0x48] sm:$0xff] %v9478
          %9500 = vst [vmem:[%s536 + $0x50] sm:$0xff] %v9431
          %9501 = vst [vmem:[%s536 + $0x58] sm:$0xff] %v9479
          %9502 = vst [vmem:[%s536 + $0x60] sm:$0xff] %v9432
          %9503 = vst [vmem:[%s536 + $0x68] sm:$0xff] %v9480
          %9504 = vst [vmem:[%s536 + $0x70] sm:$0xff] %v9433
          %9505 = vst [vmem:[%s536 + $0x78] sm:$0xff] %v9481
          %9506 = vst [vmem:[%s536 + $0x80] sm:$0xff] %v9434
          %9507 = vst [vmem:[%s536 + $0x88] sm:$0xff] %v9482
          %9508 = vst [vmem:[%s536 + $0x90] sm:$0xff] %v9435
          %9509 = vst [vmem:[%s536 + $0x98] sm:$0xff] %v9483
          %9510 = vst [vmem:[%s536 + $0xa0] sm:$0xff] %v9436
          %9511 = vst [vmem:[%s536 + $0xa8] sm:$0xff] %v9484
          %9512 = vst [vmem:[%s536 + $0xb0] sm:$0xff] %v9437
          %9513 = vst [vmem:[%s536 + $0xb8] sm:$0xff] %v9485
          %9514 = vst [vmem:[%s536 + $0xc0] sm:$0xff] %v9438
          %9515 = vst [vmem:[%s536 + $0xc8] sm:$0xff] %v9486
          %9516 = vst [vmem:[%s536 + $0xd0] sm:$0xff] %v9439
          %9517 = vst [vmem:[%s536 + $0xd8] sm:$0xff] %v9487
          %9518 = vst [vmem:[%s536 + $0xe0] sm:$0xff] %v9440
          %9519 = vst [vmem:[%s536 + $0xe8] sm:$0xff] %v9488
          %9520 = vst [vmem:[%s536 + $0xf0] sm:$0xff] %v9441
          %9521 = vst [vmem:[%s536 + $0xf8] sm:$0xff] %v9489
        $region146: #{tpu_custom_call.1} parent=125 // pred_fallthru
          _
        %s9522 = sand.u32 %s233, 1
        %s9523 = scalar_lea.sflag [#allocation6], %s9522
        %s9524 = sand.u32 %s233, 1
        %s9525 = smul.addr %s9524, 256
        %s9526 = scalar_lea.vmem [#allocation10], %s9525
        // Predicated region
        $region147: #{tpu_custom_call.1} parent=125 // pred_check
          %p9527 = pneg %p243
        $region148: #{tpu_custom_call.1} parent=125 // pred_check_branch
          %9529 = sbr.rel (%p9527) target = $region150
        $region149: #{tpu_custom_call.1} parent=125 // pred_region
          %s9530 = smul.u32 16, %s27
          %s9532 = ssub.s32 4096, 4096
          %9533 = vsyncadd %s9523, %s9532
          %s9534 = smul.addr %s9530, 2
          %s9535 = smul.addr %s9534, 128
          %s9536 = scalar_lea.hbm %s8, %s9535
          %s9537 = sshll.u32 %s9526, 4
          %s9538 = int_to_ptr.vmem [resolvable:$true] %s9537
          %9543 = dma.vmem_to_hbm [thread:$0]  %s9538, 4096, %s9536, %s9523, 256, 256, 16
        $region150: #{tpu_custom_call.1} parent=125 // pred_fallthru
          _
      $region126: #{tpu_custom_call.1} parent=5 // pred_fallthru
        _
      %p9544 = scmp.le.s32.totalorder 2, %s18
      // Predicated region
      $region151: #{tpu_custom_call.1} parent=5 // pred_check
        %p9545 = pneg %p9544
      $region152: #{tpu_custom_call.1} parent=5 // pred_check_branch
        %9547 = sbr.rel (%p9545) target = $region154
      $region153: #{tpu_custom_call.1} parent=5 // pred_region
        %s9548 = ssub.s32 %s18, 2
        // Predicated region
        $region155: #{tpu_custom_call.1} parent=153 // pred_check
          %p9549 = pneg %p249
        $region156: #{tpu_custom_call.1} parent=153 // pred_check_branch
          %9551 = sbr.rel (%p9549) target = $region158
        $region157: #{tpu_custom_call.1} parent=153 // pred_region
          %s9552 = sand.u32 %s234, 1
          %s9553 = scalar_lea.sflag [#allocation6], %s9552
          %s9554 = sand.u32 %s234, 1
          %s9555 = smul.addr %s9554, 256
          %s9556 = scalar_lea.vmem [#allocation10], %s9555
          %9557 = dma.done %s9553, 4096
        $region158: #{tpu_custom_call.1} parent=153 // pred_fallthru
          _
      $region154: #{tpu_custom_call.1} parent=5 // pred_fallthru
        _
    $region6: #{tpu_custom_call.1} parent=1 // loop_footer
      %s22 = sadd.s32 1, %s18
    $region7: #{tpu_custom_call.1} parent=1 // loop_footer_branch
      %17 = sbr.rel target = $region3
    $region8: #{tpu_custom_call.1} parent=1 // loop_exit
      _
    %9558 = vsyncpa [#allocation6], 1
    %s9559 = scalar_lea.sflag [#allocation6], 1
    %9560 = vsyncpa %s9559, 1
    %9561 = vsyncpa [#allocation7], 1
    %s9562 = scalar_lea.sflag [#allocation7], 1
    %9563 = vsyncpa %s9562, 1

</llo_original>
